<compile_context>
chip_gen: v7x
topology: tpu7x:2x2x1
jax: 0.10.0
libtpu: 0.0.40
codegen_flags: <defaults>
</compile_context>

<pallas_src>
import jax
import jax.numpy as jnp
from jax import lax
from jax.experimental import pallas as pl
from jax.experimental.pallas import tpu as pltpu

BN_EPS = 1e-5


def _round_up(v, m):
    return (v + m - 1) // m * m


# ---------------------------------------------------------------------------
# Pass 1 kernel: stacked-tap Conv3d (single GEMM) + per-batch BN statistics
# ---------------------------------------------------------------------------
def _make_conv_stats_kernel(k, cstk, nout, wp):
    """One grid step = one batch element."""

    def kernel(wt_ref, mask_ref, x_ref, y_ref, stats_ref, xcol_ref):
        # wt_ref:    (Cout, k*k*cstk)   weights, in-plane-tap major, sublane-padded
        # mask_ref:  (1, nout) f32      1.0 on valid flat output positions
        # x_ref:     (cstk, F)          depth-stacked, channel-padded input slab
        # y_ref:     (Cout, nout) f32   conv output (flat, lane-dense)
        # stats_ref: (Cout, 2) f32      per-batch (sum, sum_sq) over valid positions
        # xcol_ref:  (k*k*cstk, nout)   VMEM scratch: stacked GEMM operand
        for kh in range(k):
            for kw in range(k):
                t = kh * k + kw
                s = kh * wp + kw
                # sublane-aligned 16/8-row block per in-plane tap; depth taps are
                # already stacked on the channel axis by the host-side layout.
                xcol_ref[t * cstk:(t + 1) * cstk, :] = x_ref[:, s:s + nout]

        # Single MXU GEMM with f32 accumulation.
        acc = jnp.dot(wt_ref[...], xcol_ref[...],
                      preferred_element_type=jnp.float32)
        y_ref[...] = acc

        yv = acc * mask_ref[...]                       # zero the junk positions
        stats_ref[:, 0:1] = jnp.sum(yv, axis=1, keepdims=True)
        stats_ref[:, 1:2] = jnp.sum(yv * yv, axis=1, keepdims=True)

    return kernel


# ---------------------------------------------------------------------------
# Pass 2 kernel: y * scale + shift, then ReLU (lane-dense elementwise)
# ---------------------------------------------------------------------------
def _bn_relu_kernel(scale_ref, shift_ref, y_ref, o_ref):
    o_ref[...] = jnp.maximum(y_ref[...] * scale_ref[...] + shift_ref[...], 0.0)


# ---------------------------------------------------------------------------
# Wrapper
# ---------------------------------------------------------------------------
def conv_block_forward(x, params, *, k_size, stride=1, p=1, num_groups=1,
                       compute_dtype=jnp.bfloat16):
    """conv_block forward: NCDHW input -> NCDHW float32 output."""
    # TODO(synk): grouped Conv3d (num_groups > 1) and stride > 1 are not
    # implemented; the module defaults (stride=1, num_groups=1) are supported.
    assert num_groups == 1
    assert stride == 1

    w, gamma, beta = params["w"], params["gamma"], params["beta"]
    # params["b"] (Conv3d bias) is intentionally unused: training-mode BatchNorm
    # subtracts the batch mean, which cancels a constant per-channel bias exactly.

    cout, cin, k, _, _ = w.shape
    assert k == k_size
    n, cin_x, d, h, wdim = x.shape
    assert cin_x == cin

    do = d + 2 * p - k + 1
    ho = h + 2 * p - k + 1
    wo = wdim + 2 * p - k + 1
    hp = h + 2 * p
    wp = wdim + 2 * p
    L = hp * wp                      # flat length of one padded depth slab
    nout = do * L                    # flat conv-output width (junk rows/cols kept)
    F = (do + 1) * L                 # flat input width (+1 slab absorbs tap shifts)
    cstk = _round_up(k * cin, 8)     # sublane-aligned (depth-tap, cin) row count

    # ---- host-side layout plumbing (cheap XLA ops, single pass over x) ----
    # Row (kd*cin + ci) of the stacked input holds depth slabs kd..kd+do of
    # channel ci, flattened to hp*wp lanes per depth.  The k-fold depth reuse is
    # paid once in layout instead of k repeated HBM reads per output depth.
    xpad = jnp.pad(x, ((0, 0), (0, 0), (p, p + 1), (p, p), (p, p)))
    slabs = [xpad[:, :, kd:kd + do + 1].reshape(n, cin, F) for kd in range(k)]
    xs = jnp.concatenate(slabs, axis=1)                         # (n, k*cin, F)
    xs = jnp.pad(xs, ((0, 0), (0, cstk - k * cin), (0, 0)))     # sublane-align rows
    xs = xs.astype(compute_dtype)

    # Weights: (Cout, Cin, kd, kh, kw) -> (Cout, kh, kw, kd, Cin) -> padded flat.
    wt = jnp.transpose(w, (0, 3, 4, 2, 1)).reshape(cout, k * k, k * cin)
    wt = jnp.pad(wt, ((0, 0), (0, 0), (0, cstk - k * cin)))     # zero pad channels
    wt = wt.reshape(cout, k * k * cstk).astype(compute_dtype)

    # Validity mask of flat output positions (junk rows/cols excluded from BN).
    j = jnp.arange(nout, dtype=jnp.int32)
    r = (j % L) // wp
    c = j % wp
    mask = ((r < ho) & (c < wo)).astype(jnp.float32).reshape(1, nout)

    flops = 2 * n * do * ho * wo * cout * cin * (k ** 3)
    bytes_accessed = int(xs.size * xs.dtype.itemsize
                         + wt.size * wt.dtype.itemsize
                         + mask.size * 4
                         + n * cout * (nout + 2) * 4)

    # ---------------- pass 1: conv (one GEMM per batch) + BN statistics -------
    kernel = _make_conv_stats_kernel(k, cstk, nout, wp)
    y, stats = pl.pallas_call(
        kernel,
        grid=(n,),
        in_specs=[pl.BlockSpec((cout, k * k * cstk), lambda b: (0, 0)),
                  pl.BlockSpec((1, nout), lambda b: (0, 0)),
                  pl.BlockSpec((None, cstk, F), lambda b: (b, 0, 0))],
        out_specs=[pl.BlockSpec((None, cout, nout), lambda b: (b, 0, 0)),
                   pl.BlockSpec((None, cout, 2), lambda b: (b, 0, 0))],
        out_shape=[jax.ShapeDtypeStruct((n, cout, nout), jnp.float32),
                   jax.ShapeDtypeStruct((n, cout, 2), jnp.float32)],
        scratch_shapes=[pltpu.VMEM((k * k * cstk, nout), compute_dtype)],
        compiler_params=pltpu.CompilerParams(
            dimension_semantics=("parallel",),
            vmem_limit_bytes=32 * 1024 * 1024),
        cost_estimate=pl.CostEstimate(flops=flops, transcendentals=0,
                                      bytes_accessed=bytes_accessed),
    )(wt, mask, xs)

    # ---------------- global batch statistics (tiny, plain JAX) ---------------
    count = jnp.float32(n * do * ho * wo)
    mean = jnp.sum(stats[..., 0], axis=0) / count                 # (Cout,)
    var = jnp.maximum(jnp.sum(stats[..., 1], axis=0) / count - mean * mean, 0.0)
    scale = gamma * lax.rsqrt(var + BN_EPS)
    shift = beta - mean * scale

    # ---------------- pass 2: normalize + ReLU ---------------------------------
    out = pl.pallas_call(
        _bn_relu_kernel,
        grid=(n,),
        in_specs=[pl.BlockSpec((cout, 1), lambda b: (0, 0)),
                  pl.BlockSpec((cout, 1), lambda b: (0, 0)),
                  pl.BlockSpec((None, cout, nout), lambda b: (b, 0, 0))],
        out_specs=pl.BlockSpec((None, cout, nout), lambda b: (b, 0, 0)),
        out_shape=jax.ShapeDtypeStruct((n, cout, nout), jnp.float32),
        compiler_params=pltpu.CompilerParams(
            dimension_semantics=("parallel",),
            vmem_limit_bytes=32 * 1024 * 1024),
    )(scale.reshape(cout, 1).astype(jnp.float32),
      shift.reshape(cout, 1).astype(jnp.float32),
      y)

    # Drop junk rows/cols; result is already NCDHW-ordered (no transpose needed).
    out = out.reshape(n, cout, do, hp, wp)[:, :, :, :ho, :wo]
    return out


# ---------------------------------------------------------------------------
# Pure-JAX reference (includes the conv bias -> proves the BN cancellation)
# ---------------------------------------------------------------------------
def conv_block_reference(x, params, *, k_size, stride=1, p=1):
    w, b, gamma, beta = params["w"], params["b"], params["gamma"], params["beta"]
    y = lax.conv_general_dilated(
        x, w, window_strides=(stride,) * 3, padding=[(p, p)] * 3,
        dimension_numbers=("NCDHW", "OIDHW", "NCDHW"))
    y = y + b.reshape(1, -1, 1, 1, 1)
    mean = jnp.mean(y, axis=(0, 2, 3, 4), keepdims=True)
    var = jnp.mean((y - mean) ** 2, axis=(0, 2, 3, 4), keepdims=True)
    y = (y - mean) * lax.rsqrt(var + BN_EPS)
    y = y * gamma.reshape(1, -1, 1, 1, 1) + beta.reshape(1, -1, 1, 1, 1)
    return jnp.maximum(y, 0.0)


if __name__ == "__main__":
    # conv_block(ch_in=4, ch_out=8, k_size=3, stride=1, p=1, num_groups=1)
    N, Cin, Cout, D, H, W, K = 2, 4, 8, 16, 16, 16, 3

    key = jax.random.PRNGKey(0)
    kx, kw_, kb, kg, kbt = jax.random.split(key, 5)
    x = jax.random.normal(kx, (N, Cin, D, H, W), jnp.float32)

    fan_in = Cin * K ** 3
    params = dict(
        w=jax.random.normal(kw_, (Cout, Cin, K, K, K), jnp.float32)
          / jnp.sqrt(float(fan_in)),
        b=0.1 * jax.random.normal(kb, (Cout,), jnp.float32),
        gamma=1.0 + 0.1 * jax.random.normal(kg, (Cout,), jnp.float32),
        beta=0.1 * jax.random.normal(kbt, (Cout,), jnp.float32),
    )

    ref = conv_block_reference(x, params, k_size=K, stride=1, p=1)

    # f32 path (v5e-safe default compute), tight tolerance
    out_f32 = jax.block_until_ready(
        conv_block_forward(x, params, k_size=K, stride=1, p=1,
                           compute_dtype=jnp.float32))
    assert out_f32.shape == (N, Cout, D, H, W), out_f32.shape
    err32 = float(jnp.max(jnp.abs(out_f32 - ref)))
    assert err32 < 2e-3, f"f32 path max abs error too large: {err32}"

    # bf16 MXU-operand path (v6e/v7x recommendation), f32 accumulation
    out_bf16 = jax.block_until_ready(
        conv_block_forward(x, params, k_size=K, stride=1, p=1,
                           compute_dtype=jnp.bfloat16))
    err16 = float(jnp.max(jnp.abs(out_bf16 - ref)))
    assert err16 < 5e-2, f"bf16 path max abs error too large: {err16}"

    print("KERNEL_OK")
</pallas_src>

<mosaic_0001>
module attributes {stable_mosaic.version = 11 : i64} {
  func.func @kernel(%arg0: i32, %arg1: memref<8x144xf32, #tpu.memory_space<vmem>>, %arg2: memref<1x5184xf32, #tpu.memory_space<vmem>>, %arg3: memref<1x16x5508xf32, #tpu.memory_space<vmem>>, %arg4: memref<1x8x5184xf32, #tpu.memory_space<vmem>>, %arg5: memref<1x8x2xf32, #tpu.memory_space<vmem>>, %arg6: memref<144x5184xf32, #tpu.memory_space<vmem>>) attributes {dimension_semantics = [#tpu.dimension_semantics<parallel>], iteration_bounds = array<i64: 2>, scalar_prefetch = 0 : i64, scratch_operands = 1 : i64, tpu.core_type = #tpu.core_type<tc>, window_params = [{pipeline_mode = #tpu.pipeline_mode<synchronous>, transform_indices = @transform_0, window_bounds = array<i64: 8, 144>}, {pipeline_mode = #tpu.pipeline_mode<synchronous>, transform_indices = @transform_1, window_bounds = array<i64: 1, 5184>}, {transform_indices = @transform_2, window_bounds = array<i64: 1, 16, 5508>}, {transform_indices = @transform_3, window_bounds = array<i64: 1, 8, 5184>}, {transform_indices = @transform_4, window_bounds = array<i64: 1, 8, 2>}]} {
    %c0 = arith.constant 0 : index
    %c0_0 = arith.constant 0 : index
    %c0_1 = arith.constant 0 : index
    %0 = vector.load %arg3[%c0, %c0_0, %c0_1] : memref<1x16x5508xf32, #tpu.memory_space<vmem>>, vector<1x16x5184xf32>
    %1 = vector.shape_cast %0 : vector<1x16x5184xf32> to vector<16x5184xf32>
    %c0_2 = arith.constant 0 : index
    %c0_3 = arith.constant 0 : index
    %2 = vector.load %arg6[%c0_2, %c0_3] : memref<144x5184xf32, #tpu.memory_space<vmem>>, vector<16x5184xf32>
    tpu.vector_store %arg6[%c0_2, %c0_3], %1 {strides = array<i32>} : memref<144x5184xf32, #tpu.memory_space<vmem>>, vector<16x5184xf32>,
    %c0_4 = arith.constant 0 : index
    %c0_5 = arith.constant 0 : index
    %c1 = arith.constant 1 : index
    %3 = vector.load %arg3[%c0_4, %c0_5, %c1] : memref<1x16x5508xf32, #tpu.memory_space<vmem>>, vector<1x16x5184xf32>
    %4 = vector.shape_cast %3 : vector<1x16x5184xf32> to vector<16x5184xf32>
    %c16 = arith.constant 16 : index
    %c0_6 = arith.constant 0 : index
    %5 = vector.load %arg6[%c16, %c0_6] : memref<144x5184xf32, #tpu.memory_space<vmem>>, vector<16x5184xf32>
    tpu.vector_store %arg6[%c16, %c0_6], %4 {strides = array<i32>} : memref<144x5184xf32, #tpu.memory_space<vmem>>, vector<16x5184xf32>,
    %c0_7 = arith.constant 0 : index
    %c0_8 = arith.constant 0 : index
    %c2 = arith.constant 2 : index
    %6 = vector.load %arg3[%c0_7, %c0_8, %c2] : memref<1x16x5508xf32, #tpu.memory_space<vmem>>, vector<1x16x5184xf32>
    %7 = vector.shape_cast %6 : vector<1x16x5184xf32> to vector<16x5184xf32>
    %c32 = arith.constant 32 : index
    %c0_9 = arith.constant 0 : index
    %8 = vector.load %arg6[%c32, %c0_9] : memref<144x5184xf32, #tpu.memory_space<vmem>>, vector<16x5184xf32>
    tpu.vector_store %arg6[%c32, %c0_9], %7 {strides = array<i32>} : memref<144x5184xf32, #tpu.memory_space<vmem>>, vector<16x5184xf32>,
    %c0_10 = arith.constant 0 : index
    %c0_11 = arith.constant 0 : index
    %c18 = arith.constant 18 : index
    %9 = vector.load %arg3[%c0_10, %c0_11, %c18] : memref<1x16x5508xf32, #tpu.memory_space<vmem>>, vector<1x16x5184xf32>
    %10 = vector.shape_cast %9 : vector<1x16x5184xf32> to vector<16x5184xf32>
    %c48 = arith.constant 48 : index
    %c0_12 = arith.constant 0 : index
    %11 = vector.load %arg6[%c48, %c0_12] : memref<144x5184xf32, #tpu.memory_space<vmem>>, vector<16x5184xf32>
    tpu.vector_store %arg6[%c48, %c0_12], %10 {strides = array<i32>} : memref<144x5184xf32, #tpu.memory_space<vmem>>, vector<16x5184xf32>,
    %c0_13 = arith.constant 0 : index
    %c0_14 = arith.constant 0 : index
    %c19 = arith.constant 19 : index
    %12 = vector.load %arg3[%c0_13, %c0_14, %c19] : memref<1x16x5508xf32, #tpu.memory_space<vmem>>, vector<1x16x5184xf32>
    %13 = vector.shape_cast %12 : vector<1x16x5184xf32> to vector<16x5184xf32>
    %c64 = arith.constant 64 : index
    %c0_15 = arith.constant 0 : index
    %14 = vector.load %arg6[%c64, %c0_15] : memref<144x5184xf32, #tpu.memory_space<vmem>>, vector<16x5184xf32>
    tpu.vector_store %arg6[%c64, %c0_15], %13 {strides = array<i32>} : memref<144x5184xf32, #tpu.memory_space<vmem>>, vector<16x5184xf32>,
    %c0_16 = arith.constant 0 : index
    %c0_17 = arith.constant 0 : index
    %c20 = arith.constant 20 : index
    %15 = vector.load %arg3[%c0_16, %c0_17, %c20] : memref<1x16x5508xf32, #tpu.memory_space<vmem>>, vector<1x16x5184xf32>
    %16 = vector.shape_cast %15 : vector<1x16x5184xf32> to vector<16x5184xf32>
    %c80 = arith.constant 80 : index
    %c0_18 = arith.constant 0 : index
    %17 = vector.load %arg6[%c80, %c0_18] : memref<144x5184xf32, #tpu.memory_space<vmem>>, vector<16x5184xf32>
    tpu.vector_store %arg6[%c80, %c0_18], %16 {strides = array<i32>} : memref<144x5184xf32, #tpu.memory_space<vmem>>, vector<16x5184xf32>,
    %c0_19 = arith.constant 0 : index
    %c0_20 = arith.constant 0 : index
    %c36 = arith.constant 36 : index
    %18 = vector.load %arg3[%c0_19, %c0_20, %c36] : memref<1x16x5508xf32, #tpu.memory_space<vmem>>, vector<1x16x5184xf32>
    %19 = vector.shape_cast %18 : vector<1x16x5184xf32> to vector<16x5184xf32>
    %c96 = arith.constant 96 : index
    %c0_21 = arith.constant 0 : index
    %20 = vector.load %arg6[%c96, %c0_21] : memref<144x5184xf32, #tpu.memory_space<vmem>>, vector<16x5184xf32>
    tpu.vector_store %arg6[%c96, %c0_21], %19 {strides = array<i32>} : memref<144x5184xf32, #tpu.memory_space<vmem>>, vector<16x5184xf32>,
    %c0_22 = arith.constant 0 : index
    %c0_23 = arith.constant 0 : index
    %c37 = arith.constant 37 : index
    %21 = vector.load %arg3[%c0_22, %c0_23, %c37] : memref<1x16x5508xf32, #tpu.memory_space<vmem>>, vector<1x16x5184xf32>
    %22 = vector.shape_cast %21 : vector<1x16x5184xf32> to vector<16x5184xf32>
    %c112 = arith.constant 112 : index
    %c0_24 = arith.constant 0 : index
    %23 = vector.load %arg6[%c112, %c0_24] : memref<144x5184xf32, #tpu.memory_space<vmem>>, vector<16x5184xf32>
    tpu.vector_store %arg6[%c112, %c0_24], %22 {strides = array<i32>} : memref<144x5184xf32, #tpu.memory_space<vmem>>, vector<16x5184xf32>,
    %c0_25 = arith.constant 0 : index
    %c0_26 = arith.constant 0 : index
    %c38 = arith.constant 38 : index
    %24 = vector.load %arg3[%c0_25, %c0_26, %c38] : memref<1x16x5508xf32, #tpu.memory_space<vmem>>, vector<1x16x5184xf32>
    %25 = vector.shape_cast %24 : vector<1x16x5184xf32> to vector<16x5184xf32>
    %c128 = arith.constant 128 : index
    %c0_27 = arith.constant 0 : index
    %26 = vector.load %arg6[%c128, %c0_27] : memref<144x5184xf32, #tpu.memory_space<vmem>>, vector<16x5184xf32>
    tpu.vector_store %arg6[%c128, %c0_27], %25 {strides = array<i32>} : memref<144x5184xf32, #tpu.memory_space<vmem>>, vector<16x5184xf32>,
    %c0_28 = arith.constant 0 : index
    %c0_29 = arith.constant 0 : index
    %27 = vector.load %arg1[%c0_28, %c0_29] : memref<8x144xf32, #tpu.memory_space<vmem>>, vector<8x144xf32>
    %c0_30 = arith.constant 0 : index
    %c0_31 = arith.constant 0 : index
    %28 = vector.load %arg6[%c0_30, %c0_31] : memref<144x5184xf32, #tpu.memory_space<vmem>>, vector<144x5184xf32>
    %cst = arith.constant dense<0.000000e+00> : vector<8x5184xf32>
    %29 = tpu.matmul %27, %28, %cst {dimension_numbers = #tpu.dot_dimension_numbers<[1], [0], [0], [1], [0, 0, 1, 1], [], []>} : vector<8x144xf32>, vector<144x5184xf32>, vector<8x5184xf32> -> vector<8x5184xf32>
    %c0_32 = arith.constant 0 : index
    %c0_33 = arith.constant 0 : index
    %c0_34 = arith.constant 0 : index
    %30 = vector.load %arg4[%c0_32, %c0_33, %c0_34] : memref<1x8x5184xf32, #tpu.memory_space<vmem>>, vector<1x8x5184xf32>
    %31 = vector.shape_cast %30 : vector<1x8x5184xf32> to vector<8x5184xf32>
    %32 = vector.shape_cast %29 : vector<8x5184xf32> to vector<1x8x5184xf32>
    tpu.vector_store %arg4[%c0_32, %c0_33, %c0_34], %32 {strides = array<i32>} : memref<1x8x5184xf32, #tpu.memory_space<vmem>>, vector<1x8x5184xf32>,
    %c0_35 = arith.constant 0 : index
    %c0_36 = arith.constant 0 : index
    %33 = vector.load %arg2[%c0_35, %c0_36] : memref<1x5184xf32, #tpu.memory_space<vmem>>, vector<1x5184xf32>
    %34 = vector.broadcast %33 : vector<1x5184xf32> to vector<8x5184xf32>
    %35 = arith.mulf %29, %34 : vector<8x5184xf32>
    %cst_37 = arith.constant dense<0.000000e+00> : vector<8xf32>
    %36 = vector.multi_reduction <add>, %35, %cst_37 [1] : vector<8x5184xf32> to vector<8xf32>
    %37 = vector.shape_cast %36 : vector<8xf32> to vector<8x1xf32>
    %c0_38 = arith.constant 0 : index
    %c0_39 = arith.constant 0 : index
    %c0_40 = arith.constant 0 : index
    %38 = vector.load %arg5[%c0_38, %c0_39, %c0_40] : memref<1x8x2xf32, #tpu.memory_space<vmem>>, vector<1x8x1xf32>
    %39 = vector.shape_cast %38 : vector<1x8x1xf32> to vector<8x1xf32>
    %40 = vector.shape_cast %37 : vector<8x1xf32> to vector<1x8x1xf32>
    tpu.vector_store %arg5[%c0_38, %c0_39, %c0_40], %40 {strides = array<i32>} : memref<1x8x2xf32, #tpu.memory_space<vmem>>, vector<1x8x1xf32>,
    %41 = arith.mulf %35, %35 : vector<8x5184xf32>
    %cst_41 = arith.constant dense<0.000000e+00> : vector<8xf32>
    %42 = vector.multi_reduction <add>, %41, %cst_41 [1] : vector<8x5184xf32> to vector<8xf32>
    %43 = vector.shape_cast %42 : vector<8xf32> to vector<8x1xf32>
    %c0_42 = arith.constant 0 : index
    %c0_43 = arith.constant 0 : index
    %c1_44 = arith.constant 1 : index
    %44 = vector.load %arg5[%c0_42, %c0_43, %c1_44] : memref<1x8x2xf32, #tpu.memory_space<vmem>>, vector<1x8x1xf32>
    %45 = vector.shape_cast %44 : vector<1x8x1xf32> to vector<8x1xf32>
    %46 = vector.shape_cast %43 : vector<8x1xf32> to vector<1x8x1xf32>
    tpu.vector_store %arg5[%c0_42, %c0_43, %c1_44], %46 {strides = array<i32>} : memref<1x8x2xf32, #tpu.memory_space<vmem>>, vector<1x8x1xf32>,
    return
  }
  func.func @transform_0(%arg0: i32) -> (i32, i32) {
    %c0_i32 = arith.constant 0 : i32
    %c0_i32_0 = arith.constant 0 : i32
    %c0_i32_1 = arith.constant 0 : i32
    return %c0_i32, %c0_i32_0 : i32, i32
  }
  func.func @transform_1(%arg0: i32) -> (i32, i32) {
    %c0_i32 = arith.constant 0 : i32
    %c0_i32_0 = arith.constant 0 : i32
    %c0_i32_1 = arith.constant 0 : i32
    return %c0_i32, %c0_i32_0 : i32, i32
  }
  func.func @transform_2(%arg0: i32) -> (i32, i32, i32) {
    %c0_i32 = arith.constant 0 : i32
    %c0_i32_0 = arith.constant 0 : i32
    %c0_i32_1 = arith.constant 0 : i32
    return %arg0, %c0_i32, %c0_i32_0 : i32, i32, i32
  }
  func.func @transform_3(%arg0: i32) -> (i32, i32, i32) {
    %c0_i32 = arith.constant 0 : i32
    %c0_i32_0 = arith.constant 0 : i32
    %c0_i32_1 = arith.constant 0 : i32
    return %arg0, %c0_i32, %c0_i32_0 : i32, i32, i32
  }
  func.func @transform_4(%arg0: i32) -> (i32, i32, i32) {
    %c0_i32 = arith.constant 0 : i32
    %c0_i32_0 = arith.constant 0 : i32
    %c0_i32_1 = arith.constant 0 : i32
    return %arg0, %c0_i32, %c0_i32_0 : i32, i32, i32
  }
}

</mosaic_0001>

<llo_original>
// kernel: tpu_custom_call.1
$region0: #{tpu_custom_call.1}
  #allocation0 [shape = 'u32[]', space=smem, size = 0x4, offset = 0x4, fixed_abs, tag = 'smem constant byte address 0x4 - core index']
  #allocation1 [shape = 'u32[144,128]{1,0:T(1,128)}', space=vmem, size = 0x12000, scoped, tag = 'internal scratch']
  #allocation2 [shape = 'f32[144,5184]{1,0:T(8,128)}', space=vmem, size = 0x2e2000, scoped, tag = 'scratch operand']
  %s0 = inlined_call_operand.hbm [shape: f32[8,144], index: 0, kind: input, shape index: {}]
  %s1 = inlined_call_operand.hbm [shape: f32[1,5184], index: 1, kind: input, shape index: {}]
  %s2 = inlined_call_operand.hbm [shape: f32[2,16,5508], index: 2, kind: input, shape index: {}]
  %s3 = inlined_call_operand.hbm [shape: f32[2,8,5184], index: 3, kind: output, shape index: {0}]
  %s4 = inlined_call_operand.vmem [shape: f32[2,8,2], index: 4, kind: output, shape index: {1}]
  %5 = xla_tuple %s3, %s4
  %s6 = sld [smem:[#allocation0]]
  $region65: #{tpu_custom_call.1} parent=0
    _
  %s8 = ssub.s32 1, %s6
  %s9 = scalar_select 0, %s8, %s6
  $region1: #{tpu_custom_call.1} parent=0
    #allocation3 [shape = 'u8[8192]{0}', space=vmem, size = 0x2000, scoped, tag = 'input window, operand 0, single buffered']
    #allocation4 [shape = 's32[2]{0}', space=sflag, size = 0x8, scoped, tag = 'scoped memory for tpu_custom_call.1']
    #allocation5 [shape = 's32[2]{0}', space=sflag, size = 0x8, scoped, tag = 'scoped memory for tpu_custom_call.1']
    #allocation6 [shape = 'u8[20992]{0}', space=vmem, size = 0x5400, scoped, tag = 'input window, operand 1, single buffered']
    #allocation7 [shape = 's32[1]{0}', space=sflag, size = 0x4, scoped, tag = 'scoped memory for tpu_custom_call.1']
    #allocation8 [shape = 'u8[720896]{0}', space=vmem, size = 0xb0000, scoped, tag = 'input window, operand 2']
    #allocation9 [shape = 'u8[335872]{0}', space=vmem, size = 0x52000, scoped, tag = 'output window, operand 0']
    %10 = vsyncpa [#allocation4], 0
    %11 = vsyncpa [#allocation7], 0
    %12 = vsyncpa [#allocation5], 0
    %s13 = scalar_lea.sflag [#allocation5], 1
    %14 = vsyncpa %s13, 0
    loop: start=0, step=1, limit=4
    $region2: #{tpu_custom_call.1} parent=1 // loop_pre_header
      _
    $region3: #{tpu_custom_call.1} parent=1 // loop_header
      %s16 = sphi 0, %s20
      %p17 = scmp.ge.s32.totalorder %s16, 4
      %s24 = sphi 0, %s24
      %s26 = sphi 0, %s24
      %s27 = sphi 0, %s26
      %s41 = sphi 0, %s27
      %s45 = sphi 0, %s45
      %s47 = sphi 0, %s45
      %s48 = sphi 0, %s47
      %s62 = sphi 0, %s48
      %s68 = sphi 0, %s70
      %s71 = sphi 0, %s68
      %s72 = sphi 0, %s71
      %s88 = sphi 0, %s72
      %s94 = sphi 0, %s96
      %s97 = sphi 0, %s94
      %s98 = sphi 0, %s97
      %s114 = sphi 0, %s98
      %s120 = sphi 0, %s122
      %s123 = sphi 0, %s120
      %s124 = sphi 0, %s123
      %s140 = sphi 0, %s124
    $region4: #{tpu_custom_call.1} parent=1 // loop_header_branch
      %19 = sbr.rel (%p17) target = $region8
    $region5: #{tpu_custom_call.1} parent=1 // loop_body
      %s21 = ssub.s32 %s16, 1
      %s22 = ssub.s32 %s16, 2
      %s23 = sadd.s32 %s16, 1
      %s25 = sadd.s32 %s24, 1
      %p28 = scmp.eq.s32.totalorder %s16, 1
      %p29 = scmp.ne.s32.totalorder %s24, %s26
      %p30 = scmp.eq.s32.totalorder %s16, 0
      %p31 = por %p29, %p30
      %p32 = scmp.ne.s32.totalorder %s24, %s26
      %p33 = scmp.eq.s32.totalorder %s21, 1
      %p34 = por %p32, %p33
      %p35 = scmp.ne.s32.totalorder %s26, %s27
      %p36 = scmp.eq.s32.totalorder %s21, 0
      %p37 = por %p35, %p36
      %p38 = scmp.ne.s32.totalorder %s26, %s27
      %p39 = scmp.eq.s32.totalorder %s22, 1
      %p40 = por %p38, %p39
      %p42 = scmp.ne.s32.totalorder %s27, %s41
      %p43 = scmp.eq.s32.totalorder %s22, 0
      %p44 = por %p42, %p43
      %s46 = sadd.s32 %s45, 1
      %p49 = scmp.eq.s32.totalorder %s16, 1
      %p50 = scmp.ne.s32.totalorder %s45, %s47
      %p51 = scmp.eq.s32.totalorder %s16, 0
      %p52 = por %p50, %p51
      %p53 = scmp.ne.s32.totalorder %s45, %s47
      %p54 = scmp.eq.s32.totalorder %s21, 1
      %p55 = por %p53, %p54
      %p56 = scmp.ne.s32.totalorder %s47, %s48
      %p57 = scmp.eq.s32.totalorder %s21, 0
      %p58 = por %p56, %p57
      %p59 = scmp.ne.s32.totalorder %s47, %s48
      %p60 = scmp.eq.s32.totalorder %s22, 1
      %p61 = por %p59, %p60
      %p63 = scmp.ne.s32.totalorder %s48, %s62
      %p64 = scmp.eq.s32.totalorder %s22, 0
      %p65 = por %p63, %p64
      %s66 = ssub.s32 %s16, %s23
      %p67 = scmp.eq.s32.totalorder %s66, 0
      %s69 = sadd.s32 %s68, 1
      %s70 = scalar_select %p67, %s68, %s69
      %p73 = pneg %p67
      %p74 = scmp.eq.s32.totalorder %s16, 1
      %p75 = por %p73, %p74
      %p76 = scmp.ne.s32.totalorder %s68, %s71
      %p77 = scmp.eq.s32.totalorder %s16, 0
      %p78 = por %p76, %p77
      %p79 = scmp.ne.s32.totalorder %s68, %s71
      %p80 = scmp.eq.s32.totalorder %s21, 1
      %p81 = por %p79, %p80
      %p82 = scmp.ne.s32.totalorder %s71, %s72
      %p83 = scmp.eq.s32.totalorder %s21, 0
      %p84 = por %p82, %p83
      %p85 = scmp.ne.s32.totalorder %s71, %s72
      %p86 = scmp.eq.s32.totalorder %s22, 1
      %p87 = por %p85, %p86
      %p89 = scmp.ne.s32.totalorder %s72, %s88
      %p90 = scmp.eq.s32.totalorder %s22, 0
      %p91 = por %p89, %p90
      %s92 = ssub.s32 %s16, %s23
      %p93 = scmp.eq.s32.totalorder %s92, 0
      %s95 = sadd.s32 %s94, 1
      %s96 = scalar_select %p93, %s94, %s95
      %p99 = pneg %p93
      %p100 = scmp.eq.s32.totalorder %s16, 1
      %p101 = por %p99, %p100
      %p102 = scmp.ne.s32.totalorder %s94, %s97
      %p103 = scmp.eq.s32.totalorder %s16, 0
      %p104 = por %p102, %p103
      %p105 = scmp.ne.s32.totalorder %s94, %s97
      %p106 = scmp.eq.s32.totalorder %s21, 1
      %p107 = por %p105, %p106
      %p108 = scmp.ne.s32.totalorder %s97, %s98
      %p109 = scmp.eq.s32.totalorder %s21, 0
      %p110 = por %p108, %p109
      %p111 = scmp.ne.s32.totalorder %s97, %s98
      %p112 = scmp.eq.s32.totalorder %s22, 1
      %p113 = por %p111, %p112
      %p115 = scmp.ne.s32.totalorder %s98, %s114
      %p116 = scmp.eq.s32.totalorder %s22, 0
      %p117 = por %p115, %p116
      %s118 = ssub.s32 %s16, %s23
      %p119 = scmp.eq.s32.totalorder %s118, 0
      %s121 = sadd.s32 %s120, 1
      %s122 = scalar_select %p119, %s120, %s121
      %p125 = pneg %p119
      %p126 = scmp.eq.s32.totalorder %s16, 1
      %p127 = por %p125, %p126
      %p128 = scmp.ne.s32.totalorder %s120, %s123
      %p129 = scmp.eq.s32.totalorder %s16, 0
      %p130 = por %p128, %p129
      %p131 = scmp.ne.s32.totalorder %s120, %s123
      %p132 = scmp.eq.s32.totalorder %s21, 1
      %p133 = por %p131, %p132
      %p134 = scmp.ne.s32.totalorder %s123, %s124
      %p135 = scmp.eq.s32.totalorder %s21, 0
      %p136 = por %p134, %p135
      %p137 = scmp.ne.s32.totalorder %s123, %s124
      %p138 = scmp.eq.s32.totalorder %s22, 1
      %p139 = por %p137, %p138
      %p141 = scmp.ne.s32.totalorder %s124, %s140
      %p142 = scmp.eq.s32.totalorder %s22, 0
      %p143 = por %p141, %p142
      %p144 = scmp.le.s32.totalorder 1, %s16
      %p145 = scmp.lt.s32.totalorder %s16, 3
      %p146 = pnand %p144, %p145
      %p147 = pneg %p146
      // Predicated region
      $region9: #{tpu_custom_call.1} parent=5 // pred_check
        _
      $region10: #{tpu_custom_call.1} parent=5 // pred_check_branch
        %149 = sbr.rel (%p146) target = $region12
      $region11: #{tpu_custom_call.1} parent=5 // pred_region
        %s150 = ssub.s32 %s16, 1
        // Predicated region
        $region13: #{tpu_custom_call.1} parent=11 // pred_check
          %p151 = pneg %p37
        $region14: #{tpu_custom_call.1} parent=11 // pred_check_branch
          %153 = sbr.rel (%p151) target = $region16
        $region15: #{tpu_custom_call.1} parent=11 // pred_region
          %s155 = ssub.s32 256, 256
          %156 = vsyncadd [#allocation4], %s155
          %s158 = sshll.u32 [#allocation3], 4
          %s159 = int_to_ptr.vmem [resolvable:$true] %s158
          %161 = dma.hbm_to_vmem [thread:$0]  %s0, 256, %s159, [#allocation4]
        $region16: #{tpu_custom_call.1} parent=11 // pred_fallthru
          _
        // Predicated region
        $region17: #{tpu_custom_call.1} parent=11 // pred_check
          %p162 = pneg %p58
        $region18: #{tpu_custom_call.1} parent=11 // pred_check_branch
          %164 = sbr.rel (%p162) target = $region20
        $region19: #{tpu_custom_call.1} parent=11 // pred_region
          %s166 = ssub.s32 656, 656
          %167 = vsyncadd [#allocation7], %s166
          %s169 = sshll.u32 [#allocation6], 4
          %s170 = int_to_ptr.vmem [resolvable:$true] %s169
          %172 = dma.hbm_to_vmem [thread:$0]  %s1, 656, %s170, [#allocation7]
        $region20: #{tpu_custom_call.1} parent=11 // pred_fallthru
          _
      $region12: #{tpu_custom_call.1} parent=5 // pred_fallthru
        _
      %p173 = scmp.lt.s32.totalorder %s16, 2
      // Predicated region
      $region21: #{tpu_custom_call.1} parent=5 // pred_check
        %p174 = pneg %p173
      $region22: #{tpu_custom_call.1} parent=5 // pred_check_branch
        %176 = sbr.rel (%p174) target = $region24
      $region23: #{tpu_custom_call.1} parent=5 // pred_region
        // Predicated region
        $region25: #{tpu_custom_call.1} parent=23 // pred_check
          %p177 = pneg %p78
        $region26: #{tpu_custom_call.1} parent=23 // pred_check_branch
          %179 = sbr.rel (%p177) target = $region28
        $region27: #{tpu_custom_call.1} parent=23 // pred_region
          %s180 = sand.u32 %s16, 1
          %s181 = scalar_lea.sflag [#allocation4], %s180
          %s182 = sand.u32 %s68, 1
          %s183 = smul.addr %s182, 704
          %s184 = scalar_lea.vmem [#allocation8], %s183
          %s186 = ssub.s32 11264, 11264
          %187 = vsyncadd %s181, %s186
          %s188 = smul.addr %s16, 88
          %s189 = smul.addr %s188, 128
          %s190 = scalar_lea.hbm %s2, %s189
          %s191 = sshll.u32 %s184, 4
          %s192 = int_to_ptr.vmem [resolvable:$true] %s191
          %197 = dma.hbm_to_vmem [thread:$0]  %s190, 11264, %s192, %s181, 5632, 5632, 352
        $region28: #{tpu_custom_call.1} parent=23 // pred_fallthru
          _
      $region24: #{tpu_custom_call.1} parent=5 // pred_fallthru
        _
      %p198 = scmp.le.s32.totalorder 1, %s16
      %p199 = scmp.lt.s32.totalorder %s16, 3
      %p200 = pnand %p198, %p199
      %p201 = pneg %p200
      // Predicated region
      $region29: #{tpu_custom_call.1} parent=5 // pred_check
        _
      $region30: #{tpu_custom_call.1} parent=5 // pred_check_branch
        %203 = sbr.rel (%p200) target = $region32
      $region31: #{tpu_custom_call.1} parent=5 // pred_region
        %s204 = ssub.s32 %s16, 1
        // Predicated region
        $region33: #{tpu_custom_call.1} parent=31 // pred_check
          %p205 = pneg %p37
        $region34: #{tpu_custom_call.1} parent=31 // pred_check_branch
          %207 = sbr.rel (%p205) target = $region36
        $region35: #{tpu_custom_call.1} parent=31 // pred_region
          %208 = dma.done [#allocation4], 256
        $region36: #{tpu_custom_call.1} parent=31 // pred_fallthru
          _
        // Predicated region
        $region37: #{tpu_custom_call.1} parent=31 // pred_check
          %p209 = pneg %p58
        $region38: #{tpu_custom_call.1} parent=31 // pred_check_branch
          %211 = sbr.rel (%p209) target = $region40
        $region39: #{tpu_custom_call.1} parent=31 // pred_region
          %212 = dma.done [#allocation7], 656
        $region40: #{tpu_custom_call.1} parent=31 // pred_fallthru
          _
        %s213 = sand.u32 %s21, 1
        %s214 = scalar_lea.sflag [#allocation4], %s213
        %s215 = sand.u32 %s71, 1
        %s216 = smul.addr %s215, 704
        %s217 = scalar_lea.vmem [#allocation8], %s216
        // Predicated region
        $region41: #{tpu_custom_call.1} parent=31 // pred_check
          %p218 = pneg %p84
        $region42: #{tpu_custom_call.1} parent=31 // pred_check_branch
          %220 = sbr.rel (%p218) target = $region44
        $region43: #{tpu_custom_call.1} parent=31 // pred_region
          %221 = dma.done %s214, 11264
        $region44: #{tpu_custom_call.1} parent=31 // pred_fallthru
          _
        %p222 = pneg %p37
        %p223 = pneg %p34
        %p224 = pneg %p58
        %p225 = pneg %p55
        %s226 = sand.u32 %s21, 1
        %s227 = scalar_lea.sflag [#allocation4], %s226
        %s228 = sand.u32 %s71, 1
        %s229 = smul.addr %s228, 704
        %s230 = scalar_lea.vmem [#allocation8], %s229
        %p231 = pneg %p84
        %p232 = pneg %p81
        %p233 = pneg %p110
        %p234 = pneg %p107
        %s235 = sand.u32 %s97, 1
        %s236 = scalar_lea.sflag [#allocation5], %s235
        %s237 = sand.u32 %s97, 1
        %s238 = smul.addr %s237, 328
        %s239 = scalar_lea.vmem [#allocation9], %s238
        %p240 = pneg %p136
        %p241 = pneg %p133
        %p242 = scmp.lt.s32.totalorder %s21, 1
        %s243 = scalar_select %p242, %s21, 1
        %s244 = smul.addr %s243, 8
        %s245 = scalar_lea.vmem %s4, %s244
        %p246 = scmp.lt.s32.totalorder %s21, 1
        %s247 = scalar_select %p246, %s21, 1
        %s248 = smul.addr %s247, 8
        %s249 = scalar_lea.vmem %s4, %s248
        %v250 = vld [vmem:[%s217] sm:$0xff]
        %v251 = vld [vmem:[%s217 + $0x8] sm:$0xff]
        %v252 = vld [vmem:[%s217 + $0x10] sm:$0xff]
        %v253 = vld [vmem:[%s217 + $0x18] sm:$0xff]
        %v254 = vld [vmem:[%s217 + $0x20] sm:$0xff]
        %v255 = vld [vmem:[%s217 + $0x28] sm:$0xff]
        %v256 = vld [vmem:[%s217 + $0x30] sm:$0xff]
        %v257 = vld [vmem:[%s217 + $0x38] sm:$0xff]
        %v258 = vld [vmem:[%s217 + $0x40] sm:$0xff]
        %v259 = vld [vmem:[%s217 + $0x48] sm:$0xff]
        %v260 = vld [vmem:[%s217 + $0x50] sm:$0xff]
        %v261 = vld [vmem:[%s217 + $0x58] sm:$0xff]
        %v262 = vld [vmem:[%s217 + $0x60] sm:$0xff]
        %v263 = vld [vmem:[%s217 + $0x68] sm:$0xff]
        %v264 = vld [vmem:[%s217 + $0x70] sm:$0xff]
        %v265 = vld [vmem:[%s217 + $0x78] sm:$0xff]
        %v266 = vld [vmem:[%s217 + $0x80] sm:$0xff]
        %v267 = vld [vmem:[%s217 + $0x88] sm:$0xff]
        %v268 = vld [vmem:[%s217 + $0x90] sm:$0xff]
        %v269 = vld [vmem:[%s217 + $0x98] sm:$0xff]
        %v270 = vld [vmem:[%s217 + $0xa0] sm:$0xff]
        %v271 = vld [vmem:[%s217 + $0xa8] sm:$0xff]
        %v272 = vld [vmem:[%s217 + $0xb0] sm:$0xff]
        %v273 = vld [vmem:[%s217 + $0xb8] sm:$0xff]
        %v274 = vld [vmem:[%s217 + $0xc0] sm:$0xff]
        %v275 = vld [vmem:[%s217 + $0xc8] sm:$0xff]
        %v276 = vld [vmem:[%s217 + $0xd0] sm:$0xff]
        %v277 = vld [vmem:[%s217 + $0xd8] sm:$0xff]
        %v278 = vld [vmem:[%s217 + $0xe0] sm:$0xff]
        %v279 = vld [vmem:[%s217 + $0xe8] sm:$0xff]
        %v280 = vld [vmem:[%s217 + $0xf0] sm:$0xff]
        %v281 = vld [vmem:[%s217 + $0xf8] sm:$0xff]
        %v282 = vld [vmem:[%s217 + $0x100] sm:$0xff]
        %v283 = vld [vmem:[%s217 + $0x108] sm:$0xff]
        %v284 = vld [vmem:[%s217 + $0x110] sm:$0xff]
        %v285 = vld [vmem:[%s217 + $0x118] sm:$0xff]
        %v286 = vld [vmem:[%s217 + $0x120] sm:$0xff]
        %v287 = vld [vmem:[%s217 + $0x128] sm:$0xff]
        %v288 = vld [vmem:[%s217 + $0x130] sm:$0xff]
        %v289 = vld [vmem:[%s217 + $0x138] sm:$0xff]
        %v290 = vld [vmem:[%s217 + $0x140] sm:$0xff]
        %v291 = vld [vmem:[%s217 + $0x160] sm:$0xff]
        %v292 = vld [vmem:[%s217 + $0x168] sm:$0xff]
        %v293 = vld [vmem:[%s217 + $0x170] sm:$0xff]
        %v294 = vld [vmem:[%s217 + $0x178] sm:$0xff]
        %v295 = vld [vmem:[%s217 + $0x180] sm:$0xff]
        %v296 = vld [vmem:[%s217 + $0x188] sm:$0xff]
        %v297 = vld [vmem:[%s217 + $0x190] sm:$0xff]
        %v298 = vld [vmem:[%s217 + $0x198] sm:$0xff]
        %v299 = vld [vmem:[%s217 + $0x1a0] sm:$0xff]
        %v300 = vld [vmem:[%s217 + $0x1a8] sm:$0xff]
        %v301 = vld [vmem:[%s217 + $0x1b0] sm:$0xff]
        %v302 = vld [vmem:[%s217 + $0x1b8] sm:$0xff]
        %v303 = vld [vmem:[%s217 + $0x1c0] sm:$0xff]
        %v304 = vld [vmem:[%s217 + $0x1c8] sm:$0xff]
        %v305 = vld [vmem:[%s217 + $0x1d0] sm:$0xff]
        %v306 = vld [vmem:[%s217 + $0x1d8] sm:$0xff]
        %v307 = vld [vmem:[%s217 + $0x1e0] sm:$0xff]
        %v308 = vld [vmem:[%s217 + $0x1e8] sm:$0xff]
        %v309 = vld [vmem:[%s217 + $0x1f0] sm:$0xff]
        %v310 = vld [vmem:[%s217 + $0x1f8] sm:$0xff]
        %v311 = vld [vmem:[%s217 + $0x200] sm:$0xff]
        %v312 = vld [vmem:[%s217 + $0x208] sm:$0xff]
        %v313 = vld [vmem:[%s217 + $0x210] sm:$0xff]
        %v314 = vld [vmem:[%s217 + $0x218] sm:$0xff]
        %v315 = vld [vmem:[%s217 + $0x220] sm:$0xff]
        %v316 = vld [vmem:[%s217 + $0x228] sm:$0xff]
        %v317 = vld [vmem:[%s217 + $0x230] sm:$0xff]
        %v318 = vld [vmem:[%s217 + $0x238] sm:$0xff]
        %v319 = vld [vmem:[%s217 + $0x240] sm:$0xff]
        %v320 = vld [vmem:[%s217 + $0x248] sm:$0xff]
        %v321 = vld [vmem:[%s217 + $0x250] sm:$0xff]
        %v322 = vld [vmem:[%s217 + $0x258] sm:$0xff]
        %v323 = vld [vmem:[%s217 + $0x260] sm:$0xff]
        %v324 = vld [vmem:[%s217 + $0x268] sm:$0xff]
        %v325 = vld [vmem:[%s217 + $0x270] sm:$0xff]
        %v326 = vld [vmem:[%s217 + $0x278] sm:$0xff]
        %v327 = vld [vmem:[%s217 + $0x280] sm:$0xff]
        %v328 = vld [vmem:[%s217 + $0x288] sm:$0xff]
        %v329 = vld [vmem:[%s217 + $0x290] sm:$0xff]
        %v330 = vld [vmem:[%s217 + $0x298] sm:$0xff]
        %v331 = vld [vmem:[%s217 + $0x2a0] sm:$0xff]
        %332 = vst [vmem:[#allocation2] sm:$0xff] %v250
        %333 = vst [vmem:[#allocation2 + $0x8] sm:$0xff] %v251
        %334 = vst [vmem:[#allocation2 + $0x10] sm:$0xff] %v252
        %335 = vst [vmem:[#allocation2 + $0x18] sm:$0xff] %v253
        %336 = vst [vmem:[#allocation2 + $0x20] sm:$0xff] %v254
        %337 = vst [vmem:[#allocation2 + $0x28] sm:$0xff] %v255
        %338 = vst [vmem:[#allocation2 + $0x30] sm:$0xff] %v256
        %339 = vst [vmem:[#allocation2 + $0x38] sm:$0xff] %v257
        %340 = vst [vmem:[#allocation2 + $0x40] sm:$0xff] %v258
        %341 = vst [vmem:[#allocation2 + $0x48] sm:$0xff] %v259
        %342 = vst [vmem:[#allocation2 + $0x50] sm:$0xff] %v260
        %343 = vst [vmem:[#allocation2 + $0x58] sm:$0xff] %v261
        %344 = vst [vmem:[#allocation2 + $0x60] sm:$0xff] %v262
        %345 = vst [vmem:[#allocation2 + $0x68] sm:$0xff] %v263
        %346 = vst [vmem:[#allocation2 + $0x70] sm:$0xff] %v264
        %347 = vst [vmem:[#allocation2 + $0x78] sm:$0xff] %v265
        %348 = vst [vmem:[#allocation2 + $0x80] sm:$0xff] %v266
        %349 = vst [vmem:[#allocation2 + $0x88] sm:$0xff] %v267
        %350 = vst [vmem:[#allocation2 + $0x90] sm:$0xff] %v268
        %351 = vst [vmem:[#allocation2 + $0x98] sm:$0xff] %v269
        %352 = vst [vmem:[#allocation2 + $0xa0] sm:$0xff] %v270
        %353 = vst [vmem:[#allocation2 + $0xa8] sm:$0xff] %v271
        %354 = vst [vmem:[#allocation2 + $0xb0] sm:$0xff] %v272
        %355 = vst [vmem:[#allocation2 + $0xb8] sm:$0xff] %v273
        %356 = vst [vmem:[#allocation2 + $0xc0] sm:$0xff] %v274
        %357 = vst [vmem:[#allocation2 + $0xc8] sm:$0xff] %v275
        %358 = vst [vmem:[#allocation2 + $0xd0] sm:$0xff] %v276
        %359 = vst [vmem:[#allocation2 + $0xd8] sm:$0xff] %v277
        %360 = vst [vmem:[#allocation2 + $0xe0] sm:$0xff] %v278
        %361 = vst [vmem:[#allocation2 + $0xe8] sm:$0xff] %v279
        %362 = vst [vmem:[#allocation2 + $0xf0] sm:$0xff] %v280
        %363 = vst [vmem:[#allocation2 + $0xf8] sm:$0xff] %v281
        %364 = vst [vmem:[#allocation2 + $0x100] sm:$0xff] %v282
        %365 = vst [vmem:[#allocation2 + $0x108] sm:$0xff] %v283
        %366 = vst [vmem:[#allocation2 + $0x110] sm:$0xff] %v284
        %367 = vst [vmem:[#allocation2 + $0x118] sm:$0xff] %v285
        %368 = vst [vmem:[#allocation2 + $0x120] sm:$0xff] %v286
        %369 = vst [vmem:[#allocation2 + $0x128] sm:$0xff] %v287
        %370 = vst [vmem:[#allocation2 + $0x130] sm:$0xff] %v288
        %371 = vst [vmem:[#allocation2 + $0x138] sm:$0xff] %v289
        %vm372 = vcmask 523264
        %373 = vst.msk [vmem:[#allocation2 + $0x140] sm:$0xff] %vm372, %v290
        %374 = vst [vmem:[#allocation2 + $0x148] sm:$0xff] %v291
        %375 = vst [vmem:[#allocation2 + $0x150] sm:$0xff] %v292
        %376 = vst [vmem:[#allocation2 + $0x158] sm:$0xff] %v293
        %377 = vst [vmem:[#allocation2 + $0x160] sm:$0xff] %v294
        %378 = vst [vmem:[#allocation2 + $0x168] sm:$0xff] %v295
        %379 = vst [vmem:[#allocation2 + $0x170] sm:$0xff] %v296
        %380 = vst [vmem:[#allocation2 + $0x178] sm:$0xff] %v297
        %381 = vst [vmem:[#allocation2 + $0x180] sm:$0xff] %v298
        %382 = vst [vmem:[#allocation2 + $0x188] sm:$0xff] %v299
        %383 = vst [vmem:[#allocation2 + $0x190] sm:$0xff] %v300
        %384 = vst [vmem:[#allocation2 + $0x198] sm:$0xff] %v301
        %385 = vst [vmem:[#allocation2 + $0x1a0] sm:$0xff] %v302
        %386 = vst [vmem:[#allocation2 + $0x1a8] sm:$0xff] %v303
        %387 = vst [vmem:[#allocation2 + $0x1b0] sm:$0xff] %v304
        %388 = vst [vmem:[#allocation2 + $0x1b8] sm:$0xff] %v305
        %389 = vst [vmem:[#allocation2 + $0x1c0] sm:$0xff] %v306
        %390 = vst [vmem:[#allocation2 + $0x1c8] sm:$0xff] %v307
        %391 = vst [vmem:[#allocation2 + $0x1d0] sm:$0xff] %v308
        %392 = vst [vmem:[#allocation2 + $0x1d8] sm:$0xff] %v309
        %393 = vst [vmem:[#allocation2 + $0x1e0] sm:$0xff] %v310
        %394 = vst [vmem:[#allocation2 + $0x1e8] sm:$0xff] %v311
        %395 = vst [vmem:[#allocation2 + $0x1f0] sm:$0xff] %v312
        %396 = vst [vmem:[#allocation2 + $0x1f8] sm:$0xff] %v313
        %397 = vst [vmem:[#allocation2 + $0x200] sm:$0xff] %v314
        %398 = vst [vmem:[#allocation2 + $0x208] sm:$0xff] %v315
        %399 = vst [vmem:[#allocation2 + $0x210] sm:$0xff] %v316
        %400 = vst [vmem:[#allocation2 + $0x218] sm:$0xff] %v317
        %401 = vst [vmem:[#allocation2 + $0x220] sm:$0xff] %v318
        %402 = vst [vmem:[#allocation2 + $0x228] sm:$0xff] %v319
        %403 = vst [vmem:[#allocation2 + $0x230] sm:$0xff] %v320
        %404 = vst [vmem:[#allocation2 + $0x238] sm:$0xff] %v321
        %405 = vst [vmem:[#allocation2 + $0x240] sm:$0xff] %v322
        %406 = vst [vmem:[#allocation2 + $0x248] sm:$0xff] %v323
        %407 = vst [vmem:[#allocation2 + $0x250] sm:$0xff] %v324
        %408 = vst [vmem:[#allocation2 + $0x258] sm:$0xff] %v325
        %409 = vst [vmem:[#allocation2 + $0x260] sm:$0xff] %v326
        %410 = vst [vmem:[#allocation2 + $0x268] sm:$0xff] %v327
        %411 = vst [vmem:[#allocation2 + $0x270] sm:$0xff] %v328
        %412 = vst [vmem:[#allocation2 + $0x278] sm:$0xff] %v329
        %413 = vst [vmem:[#allocation2 + $0x280] sm:$0xff] %v330
        %414 = vst.msk [vmem:[#allocation2 + $0x288] sm:$0xff] %vm372, %v331
        %v415 = vld [vmem:[%s217] sm:$0xff]
        %v416 = vld [vmem:[%s217 + $0x8] sm:$0xff]
        %v417 = vld [vmem:[%s217 + $0x10] sm:$0xff]
        %v418 = vld [vmem:[%s217 + $0x18] sm:$0xff]
        %v419 = vld [vmem:[%s217 + $0x20] sm:$0xff]
        %v420 = vld [vmem:[%s217 + $0x28] sm:$0xff]
        %v421 = vld [vmem:[%s217 + $0x30] sm:$0xff]
        %v422 = vld [vmem:[%s217 + $0x38] sm:$0xff]
        %v423 = vld [vmem:[%s217 + $0x40] sm:$0xff]
        %v424 = vld [vmem:[%s217 + $0x48] sm:$0xff]
        %v425 = vld [vmem:[%s217 + $0x50] sm:$0xff]
        %v426 = vld [vmem:[%s217 + $0x58] sm:$0xff]
        %v427 = vld [vmem:[%s217 + $0x60] sm:$0xff]
        %v428 = vld [vmem:[%s217 + $0x68] sm:$0xff]
        %v429 = vld [vmem:[%s217 + $0x70] sm:$0xff]
        %v430 = vld [vmem:[%s217 + $0x78] sm:$0xff]
        %v431 = vld [vmem:[%s217 + $0x80] sm:$0xff]
        %v432 = vld [vmem:[%s217 + $0x88] sm:$0xff]
        %v433 = vld [vmem:[%s217 + $0x90] sm:$0xff]
        %v434 = vld [vmem:[%s217 + $0x98] sm:$0xff]
        %v435 = vld [vmem:[%s217 + $0xa0] sm:$0xff]
        %v436 = vld [vmem:[%s217 + $0xa8] sm:$0xff]
        %v437 = vld [vmem:[%s217 + $0xb0] sm:$0xff]
        %v438 = vld [vmem:[%s217 + $0xb8] sm:$0xff]
        %v439 = vld [vmem:[%s217 + $0xc0] sm:$0xff]
        %v440 = vld [vmem:[%s217 + $0xc8] sm:$0xff]
        %v441 = vld [vmem:[%s217 + $0xd0] sm:$0xff]
        %v442 = vld [vmem:[%s217 + $0xd8] sm:$0xff]
        %v443 = vld [vmem:[%s217 + $0xe0] sm:$0xff]
        %v444 = vld [vmem:[%s217 + $0xe8] sm:$0xff]
        %v445 = vld [vmem:[%s217 + $0xf0] sm:$0xff]
        %v446 = vld [vmem:[%s217 + $0xf8] sm:$0xff]
        %v447 = vld [vmem:[%s217 + $0x100] sm:$0xff]
        %v448 = vld [vmem:[%s217 + $0x108] sm:$0xff]
        %v449 = vld [vmem:[%s217 + $0x110] sm:$0xff]
        %v450 = vld [vmem:[%s217 + $0x118] sm:$0xff]
        %v451 = vld [vmem:[%s217 + $0x120] sm:$0xff]
        %v452 = vld [vmem:[%s217 + $0x128] sm:$0xff]
        %v453 = vld [vmem:[%s217 + $0x130] sm:$0xff]
        %v454 = vld [vmem:[%s217 + $0x138] sm:$0xff]
        %v455 = vld [vmem:[%s217 + $0x140] sm:$0xff]
        %v456 = vld [vmem:[%s217 + $0x160] sm:$0xff]
        %v457 = vld [vmem:[%s217 + $0x168] sm:$0xff]
        %v458 = vld [vmem:[%s217 + $0x170] sm:$0xff]
        %v459 = vld [vmem:[%s217 + $0x178] sm:$0xff]
        %v460 = vld [vmem:[%s217 + $0x180] sm:$0xff]
        %v461 = vld [vmem:[%s217 + $0x188] sm:$0xff]
        %v462 = vld [vmem:[%s217 + $0x190] sm:$0xff]
        %v463 = vld [vmem:[%s217 + $0x198] sm:$0xff]
        %v464 = vld [vmem:[%s217 + $0x1a0] sm:$0xff]
        %v465 = vld [vmem:[%s217 + $0x1a8] sm:$0xff]
        %v466 = vld [vmem:[%s217 + $0x1b0] sm:$0xff]
        %v467 = vld [vmem:[%s217 + $0x1b8] sm:$0xff]
        %v468 = vld [vmem:[%s217 + $0x1c0] sm:$0xff]
        %v469 = vld [vmem:[%s217 + $0x1c8] sm:$0xff]
        %v470 = vld [vmem:[%s217 + $0x1d0] sm:$0xff]
        %v471 = vld [vmem:[%s217 + $0x1d8] sm:$0xff]
        %v472 = vld [vmem:[%s217 + $0x1e0] sm:$0xff]
        %v473 = vld [vmem:[%s217 + $0x1e8] sm:$0xff]
        %v474 = vld [vmem:[%s217 + $0x1f0] sm:$0xff]
        %v475 = vld [vmem:[%s217 + $0x1f8] sm:$0xff]
        %v476 = vld [vmem:[%s217 + $0x200] sm:$0xff]
        %v477 = vld [vmem:[%s217 + $0x208] sm:$0xff]
        %v478 = vld [vmem:[%s217 + $0x210] sm:$0xff]
        %v479 = vld [vmem:[%s217 + $0x218] sm:$0xff]
        %v480 = vld [vmem:[%s217 + $0x220] sm:$0xff]
        %v481 = vld [vmem:[%s217 + $0x228] sm:$0xff]
        %v482 = vld [vmem:[%s217 + $0x230] sm:$0xff]
        %v483 = vld [vmem:[%s217 + $0x238] sm:$0xff]
        %v484 = vld [vmem:[%s217 + $0x240] sm:$0xff]
        %v485 = vld [vmem:[%s217 + $0x248] sm:$0xff]
        %v486 = vld [vmem:[%s217 + $0x250] sm:$0xff]
        %v487 = vld [vmem:[%s217 + $0x258] sm:$0xff]
        %v488 = vld [vmem:[%s217 + $0x260] sm:$0xff]
        %v489 = vld [vmem:[%s217 + $0x268] sm:$0xff]
        %v490 = vld [vmem:[%s217 + $0x270] sm:$0xff]
        %v491 = vld [vmem:[%s217 + $0x278] sm:$0xff]
        %v492 = vld [vmem:[%s217 + $0x280] sm:$0xff]
        %v493 = vld [vmem:[%s217 + $0x288] sm:$0xff]
        %v494 = vld [vmem:[%s217 + $0x290] sm:$0xff]
        %v495 = vld [vmem:[%s217 + $0x298] sm:$0xff]
        %v496 = vld [vmem:[%s217 + $0x2a0] sm:$0xff]
        %579 = vrot.lane.b32.xlu0 %v415, 127
        %v580 = vpop.permute.xlu0 %579
        %581 = vrot.lane.b32.xlu0 %v416, 127
        %v582 = vpop.permute.xlu0 %581
        %583 = vrot.lane.b32.xlu0 %v417, 127
        %v584 = vpop.permute.xlu0 %583
        %585 = vrot.lane.b32.xlu0 %v418, 127
        %v586 = vpop.permute.xlu0 %585
        %587 = vrot.lane.b32.xlu0 %v419, 127
        %v588 = vpop.permute.xlu0 %587
        %589 = vrot.lane.b32.xlu0 %v420, 127
        %v590 = vpop.permute.xlu0 %589
        %591 = vrot.lane.b32.xlu0 %v421, 127
        %v592 = vpop.permute.xlu0 %591
        %593 = vrot.lane.b32.xlu0 %v422, 127
        %v594 = vpop.permute.xlu0 %593
        %595 = vrot.lane.b32.xlu0 %v423, 127
        %v596 = vpop.permute.xlu0 %595
        %597 = vrot.lane.b32.xlu0 %v424, 127
        %v598 = vpop.permute.xlu0 %597
        %599 = vrot.lane.b32.xlu0 %v425, 127
        %v600 = vpop.permute.xlu0 %599
        %601 = vrot.lane.b32.xlu0 %v426, 127
        %v602 = vpop.permute.xlu0 %601
        %603 = vrot.lane.b32.xlu0 %v427, 127
        %v604 = vpop.permute.xlu0 %603
        %605 = vrot.lane.b32.xlu0 %v428, 127
        %v606 = vpop.permute.xlu0 %605
        %607 = vrot.lane.b32.xlu0 %v429, 127
        %v608 = vpop.permute.xlu0 %607
        %609 = vrot.lane.b32.xlu0 %v430, 127
        %v610 = vpop.permute.xlu0 %609
        %611 = vrot.lane.b32.xlu0 %v431, 127
        %v612 = vpop.permute.xlu0 %611
        %613 = vrot.lane.b32.xlu0 %v432, 127
        %v614 = vpop.permute.xlu0 %613
        %615 = vrot.lane.b32.xlu0 %v433, 127
        %v616 = vpop.permute.xlu0 %615
        %617 = vrot.lane.b32.xlu0 %v434, 127
        %v618 = vpop.permute.xlu0 %617
        %619 = vrot.lane.b32.xlu0 %v435, 127
        %v620 = vpop.permute.xlu0 %619
        %621 = vrot.lane.b32.xlu0 %v436, 127
        %v622 = vpop.permute.xlu0 %621
        %623 = vrot.lane.b32.xlu0 %v437, 127
        %v624 = vpop.permute.xlu0 %623
        %625 = vrot.lane.b32.xlu0 %v438, 127
        %v626 = vpop.permute.xlu0 %625
        %627 = vrot.lane.b32.xlu0 %v439, 127
        %v628 = vpop.permute.xlu0 %627
        %629 = vrot.lane.b32.xlu0 %v440, 127
        %v630 = vpop.permute.xlu0 %629
        %631 = vrot.lane.b32.xlu0 %v441, 127
        %v632 = vpop.permute.xlu0 %631
        %633 = vrot.lane.b32.xlu0 %v442, 127
        %v634 = vpop.permute.xlu0 %633
        %635 = vrot.lane.b32.xlu0 %v443, 127
        %v636 = vpop.permute.xlu0 %635
        %637 = vrot.lane.b32.xlu0 %v444, 127
        %v638 = vpop.permute.xlu0 %637
        %639 = vrot.lane.b32.xlu0 %v445, 127
        %v640 = vpop.permute.xlu0 %639
        %641 = vrot.lane.b32.xlu0 %v446, 127
        %v642 = vpop.permute.xlu0 %641
        %643 = vrot.lane.b32.xlu0 %v447, 127
        %v644 = vpop.permute.xlu0 %643
        %645 = vrot.lane.b32.xlu0 %v448, 127
        %v646 = vpop.permute.xlu0 %645
        %647 = vrot.lane.b32.xlu0 %v449, 127
        %v648 = vpop.permute.xlu0 %647
        %649 = vrot.lane.b32.xlu0 %v450, 127
        %v650 = vpop.permute.xlu0 %649
        %651 = vrot.lane.b32.xlu0 %v451, 127
        %v652 = vpop.permute.xlu0 %651
        %653 = vrot.lane.b32.xlu0 %v452, 127
        %v654 = vpop.permute.xlu0 %653
        %655 = vrot.lane.b32.xlu0 %v453, 127
        %v656 = vpop.permute.xlu0 %655
        %657 = vrot.lane.b32.xlu0 %v454, 127
        %v658 = vpop.permute.xlu0 %657
        %659 = vrot.lane.b32.xlu0 %v455, 127
        %v660 = vpop.permute.xlu0 %659
        %661 = vrot.lane.b32.xlu0 %v456, 127
        %v662 = vpop.permute.xlu0 %661
        %663 = vrot.lane.b32.xlu0 %v457, 127
        %v664 = vpop.permute.xlu0 %663
        %665 = vrot.lane.b32.xlu0 %v458, 127
        %v666 = vpop.permute.xlu0 %665
        %667 = vrot.lane.b32.xlu0 %v459, 127
        %v668 = vpop.permute.xlu0 %667
        %669 = vrot.lane.b32.xlu0 %v460, 127
        %v670 = vpop.permute.xlu0 %669
        %671 = vrot.lane.b32.xlu0 %v461, 127
        %v672 = vpop.permute.xlu0 %671
        %673 = vrot.lane.b32.xlu0 %v462, 127
        %v674 = vpop.permute.xlu0 %673
        %675 = vrot.lane.b32.xlu0 %v463, 127
        %v676 = vpop.permute.xlu0 %675
        %677 = vrot.lane.b32.xlu0 %v464, 127
        %v678 = vpop.permute.xlu0 %677
        %679 = vrot.lane.b32.xlu0 %v465, 127
        %v680 = vpop.permute.xlu0 %679
        %681 = vrot.lane.b32.xlu0 %v466, 127
        %v682 = vpop.permute.xlu0 %681
        %683 = vrot.lane.b32.xlu0 %v467, 127
        %v684 = vpop.permute.xlu0 %683
        %685 = vrot.lane.b32.xlu0 %v468, 127
        %v686 = vpop.permute.xlu0 %685
        %687 = vrot.lane.b32.xlu0 %v469, 127
        %v688 = vpop.permute.xlu0 %687
        %689 = vrot.lane.b32.xlu0 %v470, 127
        %v690 = vpop.permute.xlu0 %689
        %691 = vrot.lane.b32.xlu0 %v471, 127
        %v692 = vpop.permute.xlu0 %691
        %693 = vrot.lane.b32.xlu0 %v472, 127
        %v694 = vpop.permute.xlu0 %693
        %695 = vrot.lane.b32.xlu0 %v473, 127
        %v696 = vpop.permute.xlu0 %695
        %697 = vrot.lane.b32.xlu0 %v474, 127
        %v698 = vpop.permute.xlu0 %697
        %699 = vrot.lane.b32.xlu0 %v475, 127
        %v700 = vpop.permute.xlu0 %699
        %701 = vrot.lane.b32.xlu0 %v476, 127
        %v702 = vpop.permute.xlu0 %701
        %703 = vrot.lane.b32.xlu0 %v477, 127
        %v704 = vpop.permute.xlu0 %703
        %705 = vrot.lane.b32.xlu0 %v478, 127
        %v706 = vpop.permute.xlu0 %705
        %707 = vrot.lane.b32.xlu0 %v479, 127
        %v708 = vpop.permute.xlu0 %707
        %709 = vrot.lane.b32.xlu0 %v480, 127
        %v710 = vpop.permute.xlu0 %709
        %711 = vrot.lane.b32.xlu0 %v481, 127
        %v712 = vpop.permute.xlu0 %711
        %713 = vrot.lane.b32.xlu0 %v482, 127
        %v714 = vpop.permute.xlu0 %713
        %715 = vrot.lane.b32.xlu0 %v483, 127
        %v716 = vpop.permute.xlu0 %715
        %717 = vrot.lane.b32.xlu0 %v484, 127
        %v718 = vpop.permute.xlu0 %717
        %719 = vrot.lane.b32.xlu0 %v485, 127
        %v720 = vpop.permute.xlu0 %719
        %721 = vrot.lane.b32.xlu0 %v486, 127
        %v722 = vpop.permute.xlu0 %721
        %723 = vrot.lane.b32.xlu0 %v487, 127
        %v724 = vpop.permute.xlu0 %723
        %725 = vrot.lane.b32.xlu0 %v488, 127
        %v726 = vpop.permute.xlu0 %725
        %727 = vrot.lane.b32.xlu0 %v489, 127
        %v728 = vpop.permute.xlu0 %727
        %729 = vrot.lane.b32.xlu0 %v490, 127
        %v730 = vpop.permute.xlu0 %729
        %731 = vrot.lane.b32.xlu0 %v491, 127
        %v732 = vpop.permute.xlu0 %731
        %733 = vrot.lane.b32.xlu0 %v492, 127
        %v734 = vpop.permute.xlu0 %733
        %735 = vrot.lane.b32.xlu0 %v493, 127
        %v736 = vpop.permute.xlu0 %735
        %737 = vrot.lane.b32.xlu0 %v494, 127
        %v738 = vpop.permute.xlu0 %737
        %739 = vrot.lane.b32.xlu0 %v495, 127
        %v740 = vpop.permute.xlu0 %739
        %741 = vrot.lane.b32.xlu0 %v496, 127
        %v742 = vpop.permute.xlu0 %741
        %vm743 = vcmask 1039360
        %v744 = vsel %vm743, %v580, %v582
        %v745 = vsel %vm743, %v582, %v584
        %v746 = vsel %vm743, %v584, %v586
        %v747 = vsel %vm743, %v586, %v588
        %v748 = vsel %vm743, %v588, %v590
        %v749 = vsel %vm743, %v590, %v592
        %v750 = vsel %vm743, %v592, %v594
        %v751 = vsel %vm743, %v594, %v596
        %v752 = vsel %vm743, %v596, %v598
        %v753 = vsel %vm743, %v598, %v600
        %v754 = vsel %vm743, %v600, %v602
        %v755 = vsel %vm743, %v602, %v604
        %v756 = vsel %vm743, %v604, %v606
        %v757 = vsel %vm743, %v606, %v608
        %v758 = vsel %vm743, %v608, %v610
        %v759 = vsel %vm743, %v610, %v612
        %v760 = vsel %vm743, %v612, %v614
        %v761 = vsel %vm743, %v614, %v616
        %v762 = vsel %vm743, %v616, %v618
        %v763 = vsel %vm743, %v618, %v620
        %v764 = vsel %vm743, %v620, %v622
        %v765 = vsel %vm743, %v622, %v624
        %v766 = vsel %vm743, %v624, %v626
        %v767 = vsel %vm743, %v626, %v628
        %v768 = vsel %vm743, %v628, %v630
        %v769 = vsel %vm743, %v630, %v632
        %v770 = vsel %vm743, %v632, %v634
        %v771 = vsel %vm743, %v634, %v636
        %v772 = vsel %vm743, %v636, %v638
        %v773 = vsel %vm743, %v638, %v640
        %v774 = vsel %vm743, %v640, %v642
        %v775 = vsel %vm743, %v642, %v644
        %v776 = vsel %vm743, %v644, %v646
        %v777 = vsel %vm743, %v646, %v648
        %v778 = vsel %vm743, %v648, %v650
        %v779 = vsel %vm743, %v650, %v652
        %v780 = vsel %vm743, %v652, %v654
        %v781 = vsel %vm743, %v654, %v656
        %v782 = vsel %vm743, %v656, %v658
        %v783 = vsel %vm743, %v658, %v660
        %v784 = vsel %vm743, %v662, %v664
        %v785 = vsel %vm743, %v664, %v666
        %v786 = vsel %vm743, %v666, %v668
        %v787 = vsel %vm743, %v668, %v670
        %v788 = vsel %vm743, %v670, %v672
        %v789 = vsel %vm743, %v672, %v674
        %v790 = vsel %vm743, %v674, %v676
        %v791 = vsel %vm743, %v676, %v678
        %v792 = vsel %vm743, %v678, %v680
        %v793 = vsel %vm743, %v680, %v682
        %v794 = vsel %vm743, %v682, %v684
        %v795 = vsel %vm743, %v684, %v686
        %v796 = vsel %vm743, %v686, %v688
        %v797 = vsel %vm743, %v688, %v690
        %v798 = vsel %vm743, %v690, %v692
        %v799 = vsel %vm743, %v692, %v694
        %v800 = vsel %vm743, %v694, %v696
        %v801 = vsel %vm743, %v696, %v698
        %v802 = vsel %vm743, %v698, %v700
        %v803 = vsel %vm743, %v700, %v702
        %v804 = vsel %vm743, %v702, %v704
        %v805 = vsel %vm743, %v704, %v706
        %v806 = vsel %vm743, %v706, %v708
        %v807 = vsel %vm743, %v708, %v710
        %v808 = vsel %vm743, %v710, %v712
        %v809 = vsel %vm743, %v712, %v714
        %v810 = vsel %vm743, %v714, %v716
        %v811 = vsel %vm743, %v716, %v718
        %v812 = vsel %vm743, %v718, %v720
        %v813 = vsel %vm743, %v720, %v722
        %v814 = vsel %vm743, %v722, %v724
        %v815 = vsel %vm743, %v724, %v726
        %v816 = vsel %vm743, %v726, %v728
        %v817 = vsel %vm743, %v728, %v730
        %v818 = vsel %vm743, %v730, %v732
        %v819 = vsel %vm743, %v732, %v734
        %v820 = vsel %vm743, %v734, %v736
        %v821 = vsel %vm743, %v736, %v738
        %v822 = vsel %vm743, %v738, %v740
        %v823 = vsel %vm743, %v740, %v742
        %906 = vst [vmem:[#allocation2 + $0x290] sm:$0xff] %v744
        %907 = vst [vmem:[#allocation2 + $0x298] sm:$0xff] %v745
        %908 = vst [vmem:[#allocation2 + $0x2a0] sm:$0xff] %v746
        %909 = vst [vmem:[#allocation2 + $0x2a8] sm:$0xff] %v747
        %910 = vst [vmem:[#allocation2 + $0x2b0] sm:$0xff] %v748
        %911 = vst [vmem:[#allocation2 + $0x2b8] sm:$0xff] %v749
        %912 = vst [vmem:[#allocation2 + $0x2c0] sm:$0xff] %v750
        %913 = vst [vmem:[#allocation2 + $0x2c8] sm:$0xff] %v751
        %914 = vst [vmem:[#allocation2 + $0x2d0] sm:$0xff] %v752
        %915 = vst [vmem:[#allocation2 + $0x2d8] sm:$0xff] %v753
        %916 = vst [vmem:[#allocation2 + $0x2e0] sm:$0xff] %v754
        %917 = vst [vmem:[#allocation2 + $0x2e8] sm:$0xff] %v755
        %918 = vst [vmem:[#allocation2 + $0x2f0] sm:$0xff] %v756
        %919 = vst [vmem:[#allocation2 + $0x2f8] sm:$0xff] %v757
        %920 = vst [vmem:[#allocation2 + $0x300] sm:$0xff] %v758
        %921 = vst [vmem:[#allocation2 + $0x308] sm:$0xff] %v759
        %922 = vst [vmem:[#allocation2 + $0x310] sm:$0xff] %v760
        %923 = vst [vmem:[#allocation2 + $0x318] sm:$0xff] %v761
        %924 = vst [vmem:[#allocation2 + $0x320] sm:$0xff] %v762
        %925 = vst [vmem:[#allocation2 + $0x328] sm:$0xff] %v763
        %926 = vst [vmem:[#allocation2 + $0x330] sm:$0xff] %v764
        %927 = vst [vmem:[#allocation2 + $0x338] sm:$0xff] %v765
        %928 = vst [vmem:[#allocation2 + $0x340] sm:$0xff] %v766
        %929 = vst [vmem:[#allocation2 + $0x348] sm:$0xff] %v767
        %930 = vst [vmem:[#allocation2 + $0x350] sm:$0xff] %v768
        %931 = vst [vmem:[#allocation2 + $0x358] sm:$0xff] %v769
        %932 = vst [vmem:[#allocation2 + $0x360] sm:$0xff] %v770
        %933 = vst [vmem:[#allocation2 + $0x368] sm:$0xff] %v771
        %934 = vst [vmem:[#allocation2 + $0x370] sm:$0xff] %v772
        %935 = vst [vmem:[#allocation2 + $0x378] sm:$0xff] %v773
        %936 = vst [vmem:[#allocation2 + $0x380] sm:$0xff] %v774
        %937 = vst [vmem:[#allocation2 + $0x388] sm:$0xff] %v775
        %938 = vst [vmem:[#allocation2 + $0x390] sm:$0xff] %v776
        %939 = vst [vmem:[#allocation2 + $0x398] sm:$0xff] %v777
        %940 = vst [vmem:[#allocation2 + $0x3a0] sm:$0xff] %v778
        %941 = vst [vmem:[#allocation2 + $0x3a8] sm:$0xff] %v779
        %942 = vst [vmem:[#allocation2 + $0x3b0] sm:$0xff] %v780
        %943 = vst [vmem:[#allocation2 + $0x3b8] sm:$0xff] %v781
        %944 = vst [vmem:[#allocation2 + $0x3c0] sm:$0xff] %v782
        %945 = vst [vmem:[#allocation2 + $0x3c8] sm:$0xff] %v783
        %946 = vst.msk [vmem:[#allocation2 + $0x3d0] sm:$0xff] %vm372, %v660
        %947 = vst [vmem:[#allocation2 + $0x3d8] sm:$0xff] %v784
        %948 = vst [vmem:[#allocation2 + $0x3e0] sm:$0xff] %v785
        %949 = vst [vmem:[#allocation2 + $0x3e8] sm:$0xff] %v786
        %950 = vst [vmem:[#allocation2 + $0x3f0] sm:$0xff] %v787
        %951 = vst [vmem:[#allocation2 + $0x3f8] sm:$0xff] %v788
        %952 = vst [vmem:[#allocation2 + $0x400] sm:$0xff] %v789
        %953 = vst [vmem:[#allocation2 + $0x408] sm:$0xff] %v790
        %954 = vst [vmem:[#allocation2 + $0x410] sm:$0xff] %v791
        %955 = vst [vmem:[#allocation2 + $0x418] sm:$0xff] %v792
        %956 = vst [vmem:[#allocation2 + $0x420] sm:$0xff] %v793
        %957 = vst [vmem:[#allocation2 + $0x428] sm:$0xff] %v794
        %958 = vst [vmem:[#allocation2 + $0x430] sm:$0xff] %v795
        %959 = vst [vmem:[#allocation2 + $0x438] sm:$0xff] %v796
        %960 = vst [vmem:[#allocation2 + $0x440] sm:$0xff] %v797
        %961 = vst [vmem:[#allocation2 + $0x448] sm:$0xff] %v798
        %962 = vst [vmem:[#allocation2 + $0x450] sm:$0xff] %v799
        %963 = vst [vmem:[#allocation2 + $0x458] sm:$0xff] %v800
        %964 = vst [vmem:[#allocation2 + $0x460] sm:$0xff] %v801
        %965 = vst [vmem:[#allocation2 + $0x468] sm:$0xff] %v802
        %966 = vst [vmem:[#allocation2 + $0x470] sm:$0xff] %v803
        %967 = vst [vmem:[#allocation2 + $0x478] sm:$0xff] %v804
        %968 = vst [vmem:[#allocation2 + $0x480] sm:$0xff] %v805
        %969 = vst [vmem:[#allocation2 + $0x488] sm:$0xff] %v806
        %970 = vst [vmem:[#allocation2 + $0x490] sm:$0xff] %v807
        %971 = vst [vmem:[#allocation2 + $0x498] sm:$0xff] %v808
        %972 = vst [vmem:[#allocation2 + $0x4a0] sm:$0xff] %v809
        %973 = vst [vmem:[#allocation2 + $0x4a8] sm:$0xff] %v810
        %974 = vst [vmem:[#allocation2 + $0x4b0] sm:$0xff] %v811
        %975 = vst [vmem:[#allocation2 + $0x4b8] sm:$0xff] %v812
        %976 = vst [vmem:[#allocation2 + $0x4c0] sm:$0xff] %v813
        %977 = vst [vmem:[#allocation2 + $0x4c8] sm:$0xff] %v814
        %978 = vst [vmem:[#allocation2 + $0x4d0] sm:$0xff] %v815
        %979 = vst [vmem:[#allocation2 + $0x4d8] sm:$0xff] %v816
        %980 = vst [vmem:[#allocation2 + $0x4e0] sm:$0xff] %v817
        %981 = vst [vmem:[#allocation2 + $0x4e8] sm:$0xff] %v818
        %982 = vst [vmem:[#allocation2 + $0x4f0] sm:$0xff] %v819
        %983 = vst [vmem:[#allocation2 + $0x4f8] sm:$0xff] %v820
        %984 = vst [vmem:[#allocation2 + $0x500] sm:$0xff] %v821
        %985 = vst [vmem:[#allocation2 + $0x508] sm:$0xff] %v822
        %986 = vst [vmem:[#allocation2 + $0x510] sm:$0xff] %v823
        %987 = vst.msk [vmem:[#allocation2 + $0x518] sm:$0xff] %vm372, %v742
        %v988 = vld [vmem:[%s217] sm:$0xff]
        %v989 = vld [vmem:[%s217 + $0x8] sm:$0xff]
        %v990 = vld [vmem:[%s217 + $0x10] sm:$0xff]
        %v991 = vld [vmem:[%s217 + $0x18] sm:$0xff]
        %v992 = vld [vmem:[%s217 + $0x20] sm:$0xff]
        %v993 = vld [vmem:[%s217 + $0x28] sm:$0xff]
        %v994 = vld [vmem:[%s217 + $0x30] sm:$0xff]
        %v995 = vld [vmem:[%s217 + $0x38] sm:$0xff]
        %v996 = vld [vmem:[%s217 + $0x40] sm:$0xff]
        %v997 = vld [vmem:[%s217 + $0x48] sm:$0xff]
        %v998 = vld [vmem:[%s217 + $0x50] sm:$0xff]
        %v999 = vld [vmem:[%s217 + $0x58] sm:$0xff]
        %v1000 = vld [vmem:[%s217 + $0x60] sm:$0xff]
        %v1001 = vld [vmem:[%s217 + $0x68] sm:$0xff]
        %v1002 = vld [vmem:[%s217 + $0x70] sm:$0xff]
        %v1003 = vld [vmem:[%s217 + $0x78] sm:$0xff]
        %v1004 = vld [vmem:[%s217 + $0x80] sm:$0xff]
        %v1005 = vld [vmem:[%s217 + $0x88] sm:$0xff]
        %v1006 = vld [vmem:[%s217 + $0x90] sm:$0xff]
        %v1007 = vld [vmem:[%s217 + $0x98] sm:$0xff]
        %v1008 = vld [vmem:[%s217 + $0xa0] sm:$0xff]
        %v1009 = vld [vmem:[%s217 + $0xa8] sm:$0xff]
        %v1010 = vld [vmem:[%s217 + $0xb0] sm:$0xff]
        %v1011 = vld [vmem:[%s217 + $0xb8] sm:$0xff]
        %v1012 = vld [vmem:[%s217 + $0xc0] sm:$0xff]
        %v1013 = vld [vmem:[%s217 + $0xc8] sm:$0xff]
        %v1014 = vld [vmem:[%s217 + $0xd0] sm:$0xff]
        %v1015 = vld [vmem:[%s217 + $0xd8] sm:$0xff]
        %v1016 = vld [vmem:[%s217 + $0xe0] sm:$0xff]
        %v1017 = vld [vmem:[%s217 + $0xe8] sm:$0xff]
        %v1018 = vld [vmem:[%s217 + $0xf0] sm:$0xff]
        %v1019 = vld [vmem:[%s217 + $0xf8] sm:$0xff]
        %v1020 = vld [vmem:[%s217 + $0x100] sm:$0xff]
        %v1021 = vld [vmem:[%s217 + $0x108] sm:$0xff]
        %v1022 = vld [vmem:[%s217 + $0x110] sm:$0xff]
        %v1023 = vld [vmem:[%s217 + $0x118] sm:$0xff]
        %v1024 = vld [vmem:[%s217 + $0x120] sm:$0xff]
        %v1025 = vld [vmem:[%s217 + $0x128] sm:$0xff]
        %v1026 = vld [vmem:[%s217 + $0x130] sm:$0xff]
        %v1027 = vld [vmem:[%s217 + $0x138] sm:$0xff]
        %v1028 = vld [vmem:[%s217 + $0x140] sm:$0xff]
        %v1029 = vld [vmem:[%s217 + $0x160] sm:$0xff]
        %v1030 = vld [vmem:[%s217 + $0x168] sm:$0xff]
        %v1031 = vld [vmem:[%s217 + $0x170] sm:$0xff]
        %v1032 = vld [vmem:[%s217 + $0x178] sm:$0xff]
        %v1033 = vld [vmem:[%s217 + $0x180] sm:$0xff]
        %v1034 = vld [vmem:[%s217 + $0x188] sm:$0xff]
        %v1035 = vld [vmem:[%s217 + $0x190] sm:$0xff]
        %v1036 = vld [vmem:[%s217 + $0x198] sm:$0xff]
        %v1037 = vld [vmem:[%s217 + $0x1a0] sm:$0xff]
        %v1038 = vld [vmem:[%s217 + $0x1a8] sm:$0xff]
        %v1039 = vld [vmem:[%s217 + $0x1b0] sm:$0xff]
        %v1040 = vld [vmem:[%s217 + $0x1b8] sm:$0xff]
        %v1041 = vld [vmem:[%s217 + $0x1c0] sm:$0xff]
        %v1042 = vld [vmem:[%s217 + $0x1c8] sm:$0xff]
        %v1043 = vld [vmem:[%s217 + $0x1d0] sm:$0xff]
        %v1044 = vld [vmem:[%s217 + $0x1d8] sm:$0xff]
        %v1045 = vld [vmem:[%s217 + $0x1e0] sm:$0xff]
        %v1046 = vld [vmem:[%s217 + $0x1e8] sm:$0xff]
        %v1047 = vld [vmem:[%s217 + $0x1f0] sm:$0xff]
        %v1048 = vld [vmem:[%s217 + $0x1f8] sm:$0xff]
        %v1049 = vld [vmem:[%s217 + $0x200] sm:$0xff]
        %v1050 = vld [vmem:[%s217 + $0x208] sm:$0xff]
        %v1051 = vld [vmem:[%s217 + $0x210] sm:$0xff]
        %v1052 = vld [vmem:[%s217 + $0x218] sm:$0xff]
        %v1053 = vld [vmem:[%s217 + $0x220] sm:$0xff]
        %v1054 = vld [vmem:[%s217 + $0x228] sm:$0xff]
        %v1055 = vld [vmem:[%s217 + $0x230] sm:$0xff]
        %v1056 = vld [vmem:[%s217 + $0x238] sm:$0xff]
        %v1057 = vld [vmem:[%s217 + $0x240] sm:$0xff]
        %v1058 = vld [vmem:[%s217 + $0x248] sm:$0xff]
        %v1059 = vld [vmem:[%s217 + $0x250] sm:$0xff]
        %v1060 = vld [vmem:[%s217 + $0x258] sm:$0xff]
        %v1061 = vld [vmem:[%s217 + $0x260] sm:$0xff]
        %v1062 = vld [vmem:[%s217 + $0x268] sm:$0xff]
        %v1063 = vld [vmem:[%s217 + $0x270] sm:$0xff]
        %v1064 = vld [vmem:[%s217 + $0x278] sm:$0xff]
        %v1065 = vld [vmem:[%s217 + $0x280] sm:$0xff]
        %v1066 = vld [vmem:[%s217 + $0x288] sm:$0xff]
        %v1067 = vld [vmem:[%s217 + $0x290] sm:$0xff]
        %v1068 = vld [vmem:[%s217 + $0x298] sm:$0xff]
        %v1069 = vld [vmem:[%s217 + $0x2a0] sm:$0xff]
        %1152 = vrot.lane.b32.xlu0 %v988, 126
        %v1153 = vpop.permute.xlu0 %1152
        %1154 = vrot.lane.b32.xlu0 %v989, 126
        %v1155 = vpop.permute.xlu0 %1154
        %1156 = vrot.lane.b32.xlu0 %v990, 126
        %v1157 = vpop.permute.xlu0 %1156
        %1158 = vrot.lane.b32.xlu0 %v991, 126
        %v1159 = vpop.permute.xlu0 %1158
        %1160 = vrot.lane.b32.xlu0 %v992, 126
        %v1161 = vpop.permute.xlu0 %1160
        %1162 = vrot.lane.b32.xlu0 %v993, 126
        %v1163 = vpop.permute.xlu0 %1162
        %1164 = vrot.lane.b32.xlu0 %v994, 126
        %v1165 = vpop.permute.xlu0 %1164
        %1166 = vrot.lane.b32.xlu0 %v995, 126
        %v1167 = vpop.permute.xlu0 %1166
        %1168 = vrot.lane.b32.xlu0 %v996, 126
        %v1169 = vpop.permute.xlu0 %1168
        %1170 = vrot.lane.b32.xlu0 %v997, 126
        %v1171 = vpop.permute.xlu0 %1170
        %1172 = vrot.lane.b32.xlu0 %v998, 126
        %v1173 = vpop.permute.xlu0 %1172
        %1174 = vrot.lane.b32.xlu0 %v999, 126
        %v1175 = vpop.permute.xlu0 %1174
        %1176 = vrot.lane.b32.xlu0 %v1000, 126
        %v1177 = vpop.permute.xlu0 %1176
        %1178 = vrot.lane.b32.xlu0 %v1001, 126
        %v1179 = vpop.permute.xlu0 %1178
        %1180 = vrot.lane.b32.xlu0 %v1002, 126
        %v1181 = vpop.permute.xlu0 %1180
        %1182 = vrot.lane.b32.xlu0 %v1003, 126
        %v1183 = vpop.permute.xlu0 %1182
        %1184 = vrot.lane.b32.xlu0 %v1004, 126
        %v1185 = vpop.permute.xlu0 %1184
        %1186 = vrot.lane.b32.xlu0 %v1005, 126
        %v1187 = vpop.permute.xlu0 %1186
        %1188 = vrot.lane.b32.xlu0 %v1006, 126
        %v1189 = vpop.permute.xlu0 %1188
        %1190 = vrot.lane.b32.xlu0 %v1007, 126
        %v1191 = vpop.permute.xlu0 %1190
        %1192 = vrot.lane.b32.xlu0 %v1008, 126
        %v1193 = vpop.permute.xlu0 %1192
        %1194 = vrot.lane.b32.xlu0 %v1009, 126
        %v1195 = vpop.permute.xlu0 %1194
        %1196 = vrot.lane.b32.xlu0 %v1010, 126
        %v1197 = vpop.permute.xlu0 %1196
        %1198 = vrot.lane.b32.xlu0 %v1011, 126
        %v1199 = vpop.permute.xlu0 %1198
        %1200 = vrot.lane.b32.xlu0 %v1012, 126
        %v1201 = vpop.permute.xlu0 %1200
        %1202 = vrot.lane.b32.xlu0 %v1013, 126
        %v1203 = vpop.permute.xlu0 %1202
        %1204 = vrot.lane.b32.xlu0 %v1014, 126
        %v1205 = vpop.permute.xlu0 %1204
        %1206 = vrot.lane.b32.xlu0 %v1015, 126
        %v1207 = vpop.permute.xlu0 %1206
        %1208 = vrot.lane.b32.xlu0 %v1016, 126
        %v1209 = vpop.permute.xlu0 %1208
        %1210 = vrot.lane.b32.xlu0 %v1017, 126
        %v1211 = vpop.permute.xlu0 %1210
        %1212 = vrot.lane.b32.xlu0 %v1018, 126
        %v1213 = vpop.permute.xlu0 %1212
        %1214 = vrot.lane.b32.xlu0 %v1019, 126
        %v1215 = vpop.permute.xlu0 %1214
        %1216 = vrot.lane.b32.xlu0 %v1020, 126
        %v1217 = vpop.permute.xlu0 %1216
        %1218 = vrot.lane.b32.xlu0 %v1021, 126
        %v1219 = vpop.permute.xlu0 %1218
        %1220 = vrot.lane.b32.xlu0 %v1022, 126
        %v1221 = vpop.permute.xlu0 %1220
        %1222 = vrot.lane.b32.xlu0 %v1023, 126
        %v1223 = vpop.permute.xlu0 %1222
        %1224 = vrot.lane.b32.xlu0 %v1024, 126
        %v1225 = vpop.permute.xlu0 %1224
        %1226 = vrot.lane.b32.xlu0 %v1025, 126
        %v1227 = vpop.permute.xlu0 %1226
        %1228 = vrot.lane.b32.xlu0 %v1026, 126
        %v1229 = vpop.permute.xlu0 %1228
        %1230 = vrot.lane.b32.xlu0 %v1027, 126
        %v1231 = vpop.permute.xlu0 %1230
        %1232 = vrot.lane.b32.xlu0 %v1028, 126
        %v1233 = vpop.permute.xlu0 %1232
        %1234 = vrot.lane.b32.xlu0 %v1029, 126
        %v1235 = vpop.permute.xlu0 %1234
        %1236 = vrot.lane.b32.xlu0 %v1030, 126
        %v1237 = vpop.permute.xlu0 %1236
        %1238 = vrot.lane.b32.xlu0 %v1031, 126
        %v1239 = vpop.permute.xlu0 %1238
        %1240 = vrot.lane.b32.xlu0 %v1032, 126
        %v1241 = vpop.permute.xlu0 %1240
        %1242 = vrot.lane.b32.xlu0 %v1033, 126
        %v1243 = vpop.permute.xlu0 %1242
        %1244 = vrot.lane.b32.xlu0 %v1034, 126
        %v1245 = vpop.permute.xlu0 %1244
        %1246 = vrot.lane.b32.xlu0 %v1035, 126
        %v1247 = vpop.permute.xlu0 %1246
        %1248 = vrot.lane.b32.xlu0 %v1036, 126
        %v1249 = vpop.permute.xlu0 %1248
        %1250 = vrot.lane.b32.xlu0 %v1037, 126
        %v1251 = vpop.permute.xlu0 %1250
        %1252 = vrot.lane.b32.xlu0 %v1038, 126
        %v1253 = vpop.permute.xlu0 %1252
        %1254 = vrot.lane.b32.xlu0 %v1039, 126
        %v1255 = vpop.permute.xlu0 %1254
        %1256 = vrot.lane.b32.xlu0 %v1040, 126
        %v1257 = vpop.permute.xlu0 %1256
        %1258 = vrot.lane.b32.xlu0 %v1041, 126
        %v1259 = vpop.permute.xlu0 %1258
        %1260 = vrot.lane.b32.xlu0 %v1042, 126
        %v1261 = vpop.permute.xlu0 %1260
        %1262 = vrot.lane.b32.xlu0 %v1043, 126
        %v1263 = vpop.permute.xlu0 %1262
        %1264 = vrot.lane.b32.xlu0 %v1044, 126
        %v1265 = vpop.permute.xlu0 %1264
        %1266 = vrot.lane.b32.xlu0 %v1045, 126
        %v1267 = vpop.permute.xlu0 %1266
        %1268 = vrot.lane.b32.xlu0 %v1046, 126
        %v1269 = vpop.permute.xlu0 %1268
        %1270 = vrot.lane.b32.xlu0 %v1047, 126
        %v1271 = vpop.permute.xlu0 %1270
        %1272 = vrot.lane.b32.xlu0 %v1048, 126
        %v1273 = vpop.permute.xlu0 %1272
        %1274 = vrot.lane.b32.xlu0 %v1049, 126
        %v1275 = vpop.permute.xlu0 %1274
        %1276 = vrot.lane.b32.xlu0 %v1050, 126
        %v1277 = vpop.permute.xlu0 %1276
        %1278 = vrot.lane.b32.xlu0 %v1051, 126
        %v1279 = vpop.permute.xlu0 %1278
        %1280 = vrot.lane.b32.xlu0 %v1052, 126
        %v1281 = vpop.permute.xlu0 %1280
        %1282 = vrot.lane.b32.xlu0 %v1053, 126
        %v1283 = vpop.permute.xlu0 %1282
        %1284 = vrot.lane.b32.xlu0 %v1054, 126
        %v1285 = vpop.permute.xlu0 %1284
        %1286 = vrot.lane.b32.xlu0 %v1055, 126
        %v1287 = vpop.permute.xlu0 %1286
        %1288 = vrot.lane.b32.xlu0 %v1056, 126
        %v1289 = vpop.permute.xlu0 %1288
        %1290 = vrot.lane.b32.xlu0 %v1057, 126
        %v1291 = vpop.permute.xlu0 %1290
        %1292 = vrot.lane.b32.xlu0 %v1058, 126
        %v1293 = vpop.permute.xlu0 %1292
        %1294 = vrot.lane.b32.xlu0 %v1059, 126
        %v1295 = vpop.permute.xlu0 %1294
        %1296 = vrot.lane.b32.xlu0 %v1060, 126
        %v1297 = vpop.permute.xlu0 %1296
        %1298 = vrot.lane.b32.xlu0 %v1061, 126
        %v1299 = vpop.permute.xlu0 %1298
        %1300 = vrot.lane.b32.xlu0 %v1062, 126
        %v1301 = vpop.permute.xlu0 %1300
        %1302 = vrot.lane.b32.xlu0 %v1063, 126
        %v1303 = vpop.permute.xlu0 %1302
        %1304 = vrot.lane.b32.xlu0 %v1064, 126
        %v1305 = vpop.permute.xlu0 %1304
        %1306 = vrot.lane.b32.xlu0 %v1065, 126
        %v1307 = vpop.permute.xlu0 %1306
        %1308 = vrot.lane.b32.xlu0 %v1066, 126
        %v1309 = vpop.permute.xlu0 %1308
        %1310 = vrot.lane.b32.xlu0 %v1067, 126
        %v1311 = vpop.permute.xlu0 %1310
        %1312 = vrot.lane.b32.xlu0 %v1068, 126
        %v1313 = vpop.permute.xlu0 %1312
        %1314 = vrot.lane.b32.xlu0 %v1069, 126
        %v1315 = vpop.permute.xlu0 %1314
        %vm1316 = vcmask 1031168
        %v1317 = vsel %vm1316, %v1153, %v1155
        %v1318 = vsel %vm1316, %v1155, %v1157
        %v1319 = vsel %vm1316, %v1157, %v1159
        %v1320 = vsel %vm1316, %v1159, %v1161
        %v1321 = vsel %vm1316, %v1161, %v1163
        %v1322 = vsel %vm1316, %v1163, %v1165
        %v1323 = vsel %vm1316, %v1165, %v1167
        %v1324 = vsel %vm1316, %v1167, %v1169
        %v1325 = vsel %vm1316, %v1169, %v1171
        %v1326 = vsel %vm1316, %v1171, %v1173
        %v1327 = vsel %vm1316, %v1173, %v1175
        %v1328 = vsel %vm1316, %v1175, %v1177
        %v1329 = vsel %vm1316, %v1177, %v1179
        %v1330 = vsel %vm1316, %v1179, %v1181
        %v1331 = vsel %vm1316, %v1181, %v1183
        %v1332 = vsel %vm1316, %v1183, %v1185
        %v1333 = vsel %vm1316, %v1185, %v1187
        %v1334 = vsel %vm1316, %v1187, %v1189
        %v1335 = vsel %vm1316, %v1189, %v1191
        %v1336 = vsel %vm1316, %v1191, %v1193
        %v1337 = vsel %vm1316, %v1193, %v1195
        %v1338 = vsel %vm1316, %v1195, %v1197
        %v1339 = vsel %vm1316, %v1197, %v1199
        %v1340 = vsel %vm1316, %v1199, %v1201
        %v1341 = vsel %vm1316, %v1201, %v1203
        %v1342 = vsel %vm1316, %v1203, %v1205
        %v1343 = vsel %vm1316, %v1205, %v1207
        %v1344 = vsel %vm1316, %v1207, %v1209
        %v1345 = vsel %vm1316, %v1209, %v1211
        %v1346 = vsel %vm1316, %v1211, %v1213
        %v1347 = vsel %vm1316, %v1213, %v1215
        %v1348 = vsel %vm1316, %v1215, %v1217
        %v1349 = vsel %vm1316, %v1217, %v1219
        %v1350 = vsel %vm1316, %v1219, %v1221
        %v1351 = vsel %vm1316, %v1221, %v1223
        %v1352 = vsel %vm1316, %v1223, %v1225
        %v1353 = vsel %vm1316, %v1225, %v1227
        %v1354 = vsel %vm1316, %v1227, %v1229
        %v1355 = vsel %vm1316, %v1229, %v1231
        %v1356 = vsel %vm1316, %v1231, %v1233
        %v1357 = vsel %vm1316, %v1235, %v1237
        %v1358 = vsel %vm1316, %v1237, %v1239
        %v1359 = vsel %vm1316, %v1239, %v1241
        %v1360 = vsel %vm1316, %v1241, %v1243
        %v1361 = vsel %vm1316, %v1243, %v1245
        %v1362 = vsel %vm1316, %v1245, %v1247
        %v1363 = vsel %vm1316, %v1247, %v1249
        %v1364 = vsel %vm1316, %v1249, %v1251
        %v1365 = vsel %vm1316, %v1251, %v1253
        %v1366 = vsel %vm1316, %v1253, %v1255
        %v1367 = vsel %vm1316, %v1255, %v1257
        %v1368 = vsel %vm1316, %v1257, %v1259
        %v1369 = vsel %vm1316, %v1259, %v1261
        %v1370 = vsel %vm1316, %v1261, %v1263
        %v1371 = vsel %vm1316, %v1263, %v1265
        %v1372 = vsel %vm1316, %v1265, %v1267
        %v1373 = vsel %vm1316, %v1267, %v1269
        %v1374 = vsel %vm1316, %v1269, %v1271
        %v1375 = vsel %vm1316, %v1271, %v1273
        %v1376 = vsel %vm1316, %v1273, %v1275
        %v1377 = vsel %vm1316, %v1275, %v1277
        %v1378 = vsel %vm1316, %v1277, %v1279
        %v1379 = vsel %vm1316, %v1279, %v1281
        %v1380 = vsel %vm1316, %v1281, %v1283
        %v1381 = vsel %vm1316, %v1283, %v1285
        %v1382 = vsel %vm1316, %v1285, %v1287
        %v1383 = vsel %vm1316, %v1287, %v1289
        %v1384 = vsel %vm1316, %v1289, %v1291
        %v1385 = vsel %vm1316, %v1291, %v1293
        %v1386 = vsel %vm1316, %v1293, %v1295
        %v1387 = vsel %vm1316, %v1295, %v1297
        %v1388 = vsel %vm1316, %v1297, %v1299
        %v1389 = vsel %vm1316, %v1299, %v1301
        %v1390 = vsel %vm1316, %v1301, %v1303
        %v1391 = vsel %vm1316, %v1303, %v1305
        %v1392 = vsel %vm1316, %v1305, %v1307
        %v1393 = vsel %vm1316, %v1307, %v1309
        %v1394 = vsel %vm1316, %v1309, %v1311
        %v1395 = vsel %vm1316, %v1311, %v1313
        %v1396 = vsel %vm1316, %v1313, %v1315
        %1479 = vst [vmem:[#allocation2 + $0x520] sm:$0xff] %v1317
        %1480 = vst [vmem:[#allocation2 + $0x528] sm:$0xff] %v1318
        %1481 = vst [vmem:[#allocation2 + $0x530] sm:$0xff] %v1319
        %1482 = vst [vmem:[#allocation2 + $0x538] sm:$0xff] %v1320
        %1483 = vst [vmem:[#allocation2 + $0x540] sm:$0xff] %v1321
        %1484 = vst [vmem:[#allocation2 + $0x548] sm:$0xff] %v1322
        %1485 = vst [vmem:[#allocation2 + $0x550] sm:$0xff] %v1323
        %1486 = vst [vmem:[#allocation2 + $0x558] sm:$0xff] %v1324
        %1487 = vst [vmem:[#allocation2 + $0x560] sm:$0xff] %v1325
        %1488 = vst [vmem:[#allocation2 + $0x568] sm:$0xff] %v1326
        %1489 = vst [vmem:[#allocation2 + $0x570] sm:$0xff] %v1327
        %1490 = vst [vmem:[#allocation2 + $0x578] sm:$0xff] %v1328
        %1491 = vst [vmem:[#allocation2 + $0x580] sm:$0xff] %v1329
        %1492 = vst [vmem:[#allocation2 + $0x588] sm:$0xff] %v1330
        %1493 = vst [vmem:[#allocation2 + $0x590] sm:$0xff] %v1331
        %1494 = vst [vmem:[#allocation2 + $0x598] sm:$0xff] %v1332
        %1495 = vst [vmem:[#allocation2 + $0x5a0] sm:$0xff] %v1333
        %1496 = vst [vmem:[#allocation2 + $0x5a8] sm:$0xff] %v1334
        %1497 = vst [vmem:[#allocation2 + $0x5b0] sm:$0xff] %v1335
        %1498 = vst [vmem:[#allocation2 + $0x5b8] sm:$0xff] %v1336
        %1499 = vst [vmem:[#allocation2 + $0x5c0] sm:$0xff] %v1337
        %1500 = vst [vmem:[#allocation2 + $0x5c8] sm:$0xff] %v1338
        %1501 = vst [vmem:[#allocation2 + $0x5d0] sm:$0xff] %v1339
        %1502 = vst [vmem:[#allocation2 + $0x5d8] sm:$0xff] %v1340
        %1503 = vst [vmem:[#allocation2 + $0x5e0] sm:$0xff] %v1341
        %1504 = vst [vmem:[#allocation2 + $0x5e8] sm:$0xff] %v1342
        %1505 = vst [vmem:[#allocation2 + $0x5f0] sm:$0xff] %v1343
        %1506 = vst [vmem:[#allocation2 + $0x5f8] sm:$0xff] %v1344
        %1507 = vst [vmem:[#allocation2 + $0x600] sm:$0xff] %v1345
        %1508 = vst [vmem:[#allocation2 + $0x608] sm:$0xff] %v1346
        %1509 = vst [vmem:[#allocation2 + $0x610] sm:$0xff] %v1347
        %1510 = vst [vmem:[#allocation2 + $0x618] sm:$0xff] %v1348
        %1511 = vst [vmem:[#allocation2 + $0x620] sm:$0xff] %v1349
        %1512 = vst [vmem:[#allocation2 + $0x628] sm:$0xff] %v1350
        %1513 = vst [vmem:[#allocation2 + $0x630] sm:$0xff] %v1351
        %1514 = vst [vmem:[#allocation2 + $0x638] sm:$0xff] %v1352
        %1515 = vst [vmem:[#allocation2 + $0x640] sm:$0xff] %v1353
        %1516 = vst [vmem:[#allocation2 + $0x648] sm:$0xff] %v1354
        %1517 = vst [vmem:[#allocation2 + $0x650] sm:$0xff] %v1355
        %1518 = vst [vmem:[#allocation2 + $0x658] sm:$0xff] %v1356
        %1519 = vst.msk [vmem:[#allocation2 + $0x660] sm:$0xff] %vm372, %v1233
        %1520 = vst [vmem:[#allocation2 + $0x668] sm:$0xff] %v1357
        %1521 = vst [vmem:[#allocation2 + $0x670] sm:$0xff] %v1358
        %1522 = vst [vmem:[#allocation2 + $0x678] sm:$0xff] %v1359
        %1523 = vst [vmem:[#allocation2 + $0x680] sm:$0xff] %v1360
        %1524 = vst [vmem:[#allocation2 + $0x688] sm:$0xff] %v1361
        %1525 = vst [vmem:[#allocation2 + $0x690] sm:$0xff] %v1362
        %1526 = vst [vmem:[#allocation2 + $0x698] sm:$0xff] %v1363
        %1527 = vst [vmem:[#allocation2 + $0x6a0] sm:$0xff] %v1364
        %1528 = vst [vmem:[#allocation2 + $0x6a8] sm:$0xff] %v1365
        %1529 = vst [vmem:[#allocation2 + $0x6b0] sm:$0xff] %v1366
        %1530 = vst [vmem:[#allocation2 + $0x6b8] sm:$0xff] %v1367
        %1531 = vst [vmem:[#allocation2 + $0x6c0] sm:$0xff] %v1368
        %1532 = vst [vmem:[#allocation2 + $0x6c8] sm:$0xff] %v1369
        %1533 = vst [vmem:[#allocation2 + $0x6d0] sm:$0xff] %v1370
        %1534 = vst [vmem:[#allocation2 + $0x6d8] sm:$0xff] %v1371
        %1535 = vst [vmem:[#allocation2 + $0x6e0] sm:$0xff] %v1372
        %1536 = vst [vmem:[#allocation2 + $0x6e8] sm:$0xff] %v1373
        %1537 = vst [vmem:[#allocation2 + $0x6f0] sm:$0xff] %v1374
        %1538 = vst [vmem:[#allocation2 + $0x6f8] sm:$0xff] %v1375
        %1539 = vst [vmem:[#allocation2 + $0x700] sm:$0xff] %v1376
        %1540 = vst [vmem:[#allocation2 + $0x708] sm:$0xff] %v1377
        %1541 = vst [vmem:[#allocation2 + $0x710] sm:$0xff] %v1378
        %1542 = vst [vmem:[#allocation2 + $0x718] sm:$0xff] %v1379
        %1543 = vst [vmem:[#allocation2 + $0x720] sm:$0xff] %v1380
        %1544 = vst [vmem:[#allocation2 + $0x728] sm:$0xff] %v1381
        %1545 = vst [vmem:[#allocation2 + $0x730] sm:$0xff] %v1382
        %1546 = vst [vmem:[#allocation2 + $0x738] sm:$0xff] %v1383
        %1547 = vst [vmem:[#allocation2 + $0x740] sm:$0xff] %v1384
        %1548 = vst [vmem:[#allocation2 + $0x748] sm:$0xff] %v1385
        %1549 = vst [vmem:[#allocation2 + $0x750] sm:$0xff] %v1386
        %1550 = vst [vmem:[#allocation2 + $0x758] sm:$0xff] %v1387
        %1551 = vst [vmem:[#allocation2 + $0x760] sm:$0xff] %v1388
        %1552 = vst [vmem:[#allocation2 + $0x768] sm:$0xff] %v1389
        %1553 = vst [vmem:[#allocation2 + $0x770] sm:$0xff] %v1390
        %1554 = vst [vmem:[#allocation2 + $0x778] sm:$0xff] %v1391
        %1555 = vst [vmem:[#allocation2 + $0x780] sm:$0xff] %v1392
        %1556 = vst [vmem:[#allocation2 + $0x788] sm:$0xff] %v1393
        %1557 = vst [vmem:[#allocation2 + $0x790] sm:$0xff] %v1394
        %1558 = vst [vmem:[#allocation2 + $0x798] sm:$0xff] %v1395
        %1559 = vst [vmem:[#allocation2 + $0x7a0] sm:$0xff] %v1396
        %1560 = vst.msk [vmem:[#allocation2 + $0x7a8] sm:$0xff] %vm372, %v1315
        %v1561 = vld [vmem:[%s217] sm:$0xff]
        %v1562 = vld [vmem:[%s217 + $0x8] sm:$0xff]
        %v1563 = vld [vmem:[%s217 + $0x10] sm:$0xff]
        %v1564 = vld [vmem:[%s217 + $0x18] sm:$0xff]
        %v1565 = vld [vmem:[%s217 + $0x20] sm:$0xff]
        %v1566 = vld [vmem:[%s217 + $0x28] sm:$0xff]
        %v1567 = vld [vmem:[%s217 + $0x30] sm:$0xff]
        %v1568 = vld [vmem:[%s217 + $0x38] sm:$0xff]
        %v1569 = vld [vmem:[%s217 + $0x40] sm:$0xff]
        %v1570 = vld [vmem:[%s217 + $0x48] sm:$0xff]
        %v1571 = vld [vmem:[%s217 + $0x50] sm:$0xff]
        %v1572 = vld [vmem:[%s217 + $0x58] sm:$0xff]
        %v1573 = vld [vmem:[%s217 + $0x60] sm:$0xff]
        %v1574 = vld [vmem:[%s217 + $0x68] sm:$0xff]
        %v1575 = vld [vmem:[%s217 + $0x70] sm:$0xff]
        %v1576 = vld [vmem:[%s217 + $0x78] sm:$0xff]
        %v1577 = vld [vmem:[%s217 + $0x80] sm:$0xff]
        %v1578 = vld [vmem:[%s217 + $0x88] sm:$0xff]
        %v1579 = vld [vmem:[%s217 + $0x90] sm:$0xff]
        %v1580 = vld [vmem:[%s217 + $0x98] sm:$0xff]
        %v1581 = vld [vmem:[%s217 + $0xa0] sm:$0xff]
        %v1582 = vld [vmem:[%s217 + $0xa8] sm:$0xff]
        %v1583 = vld [vmem:[%s217 + $0xb0] sm:$0xff]
        %v1584 = vld [vmem:[%s217 + $0xb8] sm:$0xff]
        %v1585 = vld [vmem:[%s217 + $0xc0] sm:$0xff]
        %v1586 = vld [vmem:[%s217 + $0xc8] sm:$0xff]
        %v1587 = vld [vmem:[%s217 + $0xd0] sm:$0xff]
        %v1588 = vld [vmem:[%s217 + $0xd8] sm:$0xff]
        %v1589 = vld [vmem:[%s217 + $0xe0] sm:$0xff]
        %v1590 = vld [vmem:[%s217 + $0xe8] sm:$0xff]
        %v1591 = vld [vmem:[%s217 + $0xf0] sm:$0xff]
        %v1592 = vld [vmem:[%s217 + $0xf8] sm:$0xff]
        %v1593 = vld [vmem:[%s217 + $0x100] sm:$0xff]
        %v1594 = vld [vmem:[%s217 + $0x108] sm:$0xff]
        %v1595 = vld [vmem:[%s217 + $0x110] sm:$0xff]
        %v1596 = vld [vmem:[%s217 + $0x118] sm:$0xff]
        %v1597 = vld [vmem:[%s217 + $0x120] sm:$0xff]
        %v1598 = vld [vmem:[%s217 + $0x128] sm:$0xff]
        %v1599 = vld [vmem:[%s217 + $0x130] sm:$0xff]
        %v1600 = vld [vmem:[%s217 + $0x138] sm:$0xff]
        %v1601 = vld [vmem:[%s217 + $0x140] sm:$0xff]
        %v1602 = vld [vmem:[%s217 + $0x160] sm:$0xff]
        %v1603 = vld [vmem:[%s217 + $0x168] sm:$0xff]
        %v1604 = vld [vmem:[%s217 + $0x170] sm:$0xff]
        %v1605 = vld [vmem:[%s217 + $0x178] sm:$0xff]
        %v1606 = vld [vmem:[%s217 + $0x180] sm:$0xff]
        %v1607 = vld [vmem:[%s217 + $0x188] sm:$0xff]
        %v1608 = vld [vmem:[%s217 + $0x190] sm:$0xff]
        %v1609 = vld [vmem:[%s217 + $0x198] sm:$0xff]
        %v1610 = vld [vmem:[%s217 + $0x1a0] sm:$0xff]
        %v1611 = vld [vmem:[%s217 + $0x1a8] sm:$0xff]
        %v1612 = vld [vmem:[%s217 + $0x1b0] sm:$0xff]
        %v1613 = vld [vmem:[%s217 + $0x1b8] sm:$0xff]
        %v1614 = vld [vmem:[%s217 + $0x1c0] sm:$0xff]
        %v1615 = vld [vmem:[%s217 + $0x1c8] sm:$0xff]
        %v1616 = vld [vmem:[%s217 + $0x1d0] sm:$0xff]
        %v1617 = vld [vmem:[%s217 + $0x1d8] sm:$0xff]
        %v1618 = vld [vmem:[%s217 + $0x1e0] sm:$0xff]
        %v1619 = vld [vmem:[%s217 + $0x1e8] sm:$0xff]
        %v1620 = vld [vmem:[%s217 + $0x1f0] sm:$0xff]
        %v1621 = vld [vmem:[%s217 + $0x1f8] sm:$0xff]
        %v1622 = vld [vmem:[%s217 + $0x200] sm:$0xff]
        %v1623 = vld [vmem:[%s217 + $0x208] sm:$0xff]
        %v1624 = vld [vmem:[%s217 + $0x210] sm:$0xff]
        %v1625 = vld [vmem:[%s217 + $0x218] sm:$0xff]
        %v1626 = vld [vmem:[%s217 + $0x220] sm:$0xff]
        %v1627 = vld [vmem:[%s217 + $0x228] sm:$0xff]
        %v1628 = vld [vmem:[%s217 + $0x230] sm:$0xff]
        %v1629 = vld [vmem:[%s217 + $0x238] sm:$0xff]
        %v1630 = vld [vmem:[%s217 + $0x240] sm:$0xff]
        %v1631 = vld [vmem:[%s217 + $0x248] sm:$0xff]
        %v1632 = vld [vmem:[%s217 + $0x250] sm:$0xff]
        %v1633 = vld [vmem:[%s217 + $0x258] sm:$0xff]
        %v1634 = vld [vmem:[%s217 + $0x260] sm:$0xff]
        %v1635 = vld [vmem:[%s217 + $0x268] sm:$0xff]
        %v1636 = vld [vmem:[%s217 + $0x270] sm:$0xff]
        %v1637 = vld [vmem:[%s217 + $0x278] sm:$0xff]
        %v1638 = vld [vmem:[%s217 + $0x280] sm:$0xff]
        %v1639 = vld [vmem:[%s217 + $0x288] sm:$0xff]
        %v1640 = vld [vmem:[%s217 + $0x290] sm:$0xff]
        %v1641 = vld [vmem:[%s217 + $0x298] sm:$0xff]
        %v1642 = vld [vmem:[%s217 + $0x2a0] sm:$0xff]
        %1725 = vrot.lane.b32.xlu0 %v1561, 110
        %v1726 = vpop.permute.xlu0 %1725
        %1727 = vrot.lane.b32.xlu0 %v1562, 110
        %v1728 = vpop.permute.xlu0 %1727
        %1729 = vrot.lane.b32.xlu0 %v1563, 110
        %v1730 = vpop.permute.xlu0 %1729
        %1731 = vrot.lane.b32.xlu0 %v1564, 110
        %v1732 = vpop.permute.xlu0 %1731
        %1733 = vrot.lane.b32.xlu0 %v1565, 110
        %v1734 = vpop.permute.xlu0 %1733
        %1735 = vrot.lane.b32.xlu0 %v1566, 110
        %v1736 = vpop.permute.xlu0 %1735
        %1737 = vrot.lane.b32.xlu0 %v1567, 110
        %v1738 = vpop.permute.xlu0 %1737
        %1739 = vrot.lane.b32.xlu0 %v1568, 110
        %v1740 = vpop.permute.xlu0 %1739
        %1741 = vrot.lane.b32.xlu0 %v1569, 110
        %v1742 = vpop.permute.xlu0 %1741
        %1743 = vrot.lane.b32.xlu0 %v1570, 110
        %v1744 = vpop.permute.xlu0 %1743
        %1745 = vrot.lane.b32.xlu0 %v1571, 110
        %v1746 = vpop.permute.xlu0 %1745
        %1747 = vrot.lane.b32.xlu0 %v1572, 110
        %v1748 = vpop.permute.xlu0 %1747
        %1749 = vrot.lane.b32.xlu0 %v1573, 110
        %v1750 = vpop.permute.xlu0 %1749
        %1751 = vrot.lane.b32.xlu0 %v1574, 110
        %v1752 = vpop.permute.xlu0 %1751
        %1753 = vrot.lane.b32.xlu0 %v1575, 110
        %v1754 = vpop.permute.xlu0 %1753
        %1755 = vrot.lane.b32.xlu0 %v1576, 110
        %v1756 = vpop.permute.xlu0 %1755
        %1757 = vrot.lane.b32.xlu0 %v1577, 110
        %v1758 = vpop.permute.xlu0 %1757
        %1759 = vrot.lane.b32.xlu0 %v1578, 110
        %v1760 = vpop.permute.xlu0 %1759
        %1761 = vrot.lane.b32.xlu0 %v1579, 110
        %v1762 = vpop.permute.xlu0 %1761
        %1763 = vrot.lane.b32.xlu0 %v1580, 110
        %v1764 = vpop.permute.xlu0 %1763
        %1765 = vrot.lane.b32.xlu0 %v1581, 110
        %v1766 = vpop.permute.xlu0 %1765
        %1767 = vrot.lane.b32.xlu0 %v1582, 110
        %v1768 = vpop.permute.xlu0 %1767
        %1769 = vrot.lane.b32.xlu0 %v1583, 110
        %v1770 = vpop.permute.xlu0 %1769
        %1771 = vrot.lane.b32.xlu0 %v1584, 110
        %v1772 = vpop.permute.xlu0 %1771
        %1773 = vrot.lane.b32.xlu0 %v1585, 110
        %v1774 = vpop.permute.xlu0 %1773
        %1775 = vrot.lane.b32.xlu0 %v1586, 110
        %v1776 = vpop.permute.xlu0 %1775
        %1777 = vrot.lane.b32.xlu0 %v1587, 110
        %v1778 = vpop.permute.xlu0 %1777
        %1779 = vrot.lane.b32.xlu0 %v1588, 110
        %v1780 = vpop.permute.xlu0 %1779
        %1781 = vrot.lane.b32.xlu0 %v1589, 110
        %v1782 = vpop.permute.xlu0 %1781
        %1783 = vrot.lane.b32.xlu0 %v1590, 110
        %v1784 = vpop.permute.xlu0 %1783
        %1785 = vrot.lane.b32.xlu0 %v1591, 110
        %v1786 = vpop.permute.xlu0 %1785
        %1787 = vrot.lane.b32.xlu0 %v1592, 110
        %v1788 = vpop.permute.xlu0 %1787
        %1789 = vrot.lane.b32.xlu0 %v1593, 110
        %v1790 = vpop.permute.xlu0 %1789
        %1791 = vrot.lane.b32.xlu0 %v1594, 110
        %v1792 = vpop.permute.xlu0 %1791
        %1793 = vrot.lane.b32.xlu0 %v1595, 110
        %v1794 = vpop.permute.xlu0 %1793
        %1795 = vrot.lane.b32.xlu0 %v1596, 110
        %v1796 = vpop.permute.xlu0 %1795
        %1797 = vrot.lane.b32.xlu0 %v1597, 110
        %v1798 = vpop.permute.xlu0 %1797
        %1799 = vrot.lane.b32.xlu0 %v1598, 110
        %v1800 = vpop.permute.xlu0 %1799
        %1801 = vrot.lane.b32.xlu0 %v1599, 110
        %v1802 = vpop.permute.xlu0 %1801
        %1803 = vrot.lane.b32.xlu0 %v1600, 110
        %v1804 = vpop.permute.xlu0 %1803
        %1805 = vrot.lane.b32.xlu0 %v1601, 110
        %v1806 = vpop.permute.xlu0 %1805
        %1807 = vrot.lane.b32.xlu0 %v1602, 110
        %v1808 = vpop.permute.xlu0 %1807
        %1809 = vrot.lane.b32.xlu0 %v1603, 110
        %v1810 = vpop.permute.xlu0 %1809
        %1811 = vrot.lane.b32.xlu0 %v1604, 110
        %v1812 = vpop.permute.xlu0 %1811
        %1813 = vrot.lane.b32.xlu0 %v1605, 110
        %v1814 = vpop.permute.xlu0 %1813
        %1815 = vrot.lane.b32.xlu0 %v1606, 110
        %v1816 = vpop.permute.xlu0 %1815
        %1817 = vrot.lane.b32.xlu0 %v1607, 110
        %v1818 = vpop.permute.xlu0 %1817
        %1819 = vrot.lane.b32.xlu0 %v1608, 110
        %v1820 = vpop.permute.xlu0 %1819
        %1821 = vrot.lane.b32.xlu0 %v1609, 110
        %v1822 = vpop.permute.xlu0 %1821
        %1823 = vrot.lane.b32.xlu0 %v1610, 110
        %v1824 = vpop.permute.xlu0 %1823
        %1825 = vrot.lane.b32.xlu0 %v1611, 110
        %v1826 = vpop.permute.xlu0 %1825
        %1827 = vrot.lane.b32.xlu0 %v1612, 110
        %v1828 = vpop.permute.xlu0 %1827
        %1829 = vrot.lane.b32.xlu0 %v1613, 110
        %v1830 = vpop.permute.xlu0 %1829
        %1831 = vrot.lane.b32.xlu0 %v1614, 110
        %v1832 = vpop.permute.xlu0 %1831
        %1833 = vrot.lane.b32.xlu0 %v1615, 110
        %v1834 = vpop.permute.xlu0 %1833
        %1835 = vrot.lane.b32.xlu0 %v1616, 110
        %v1836 = vpop.permute.xlu0 %1835
        %1837 = vrot.lane.b32.xlu0 %v1617, 110
        %v1838 = vpop.permute.xlu0 %1837
        %1839 = vrot.lane.b32.xlu0 %v1618, 110
        %v1840 = vpop.permute.xlu0 %1839
        %1841 = vrot.lane.b32.xlu0 %v1619, 110
        %v1842 = vpop.permute.xlu0 %1841
        %1843 = vrot.lane.b32.xlu0 %v1620, 110
        %v1844 = vpop.permute.xlu0 %1843
        %1845 = vrot.lane.b32.xlu0 %v1621, 110
        %v1846 = vpop.permute.xlu0 %1845
        %1847 = vrot.lane.b32.xlu0 %v1622, 110
        %v1848 = vpop.permute.xlu0 %1847
        %1849 = vrot.lane.b32.xlu0 %v1623, 110
        %v1850 = vpop.permute.xlu0 %1849
        %1851 = vrot.lane.b32.xlu0 %v1624, 110
        %v1852 = vpop.permute.xlu0 %1851
        %1853 = vrot.lane.b32.xlu0 %v1625, 110
        %v1854 = vpop.permute.xlu0 %1853
        %1855 = vrot.lane.b32.xlu0 %v1626, 110
        %v1856 = vpop.permute.xlu0 %1855
        %1857 = vrot.lane.b32.xlu0 %v1627, 110
        %v1858 = vpop.permute.xlu0 %1857
        %1859 = vrot.lane.b32.xlu0 %v1628, 110
        %v1860 = vpop.permute.xlu0 %1859
        %1861 = vrot.lane.b32.xlu0 %v1629, 110
        %v1862 = vpop.permute.xlu0 %1861
        %1863 = vrot.lane.b32.xlu0 %v1630, 110
        %v1864 = vpop.permute.xlu0 %1863
        %1865 = vrot.lane.b32.xlu0 %v1631, 110
        %v1866 = vpop.permute.xlu0 %1865
        %1867 = vrot.lane.b32.xlu0 %v1632, 110
        %v1868 = vpop.permute.xlu0 %1867
        %1869 = vrot.lane.b32.xlu0 %v1633, 110
        %v1870 = vpop.permute.xlu0 %1869
        %1871 = vrot.lane.b32.xlu0 %v1634, 110
        %v1872 = vpop.permute.xlu0 %1871
        %1873 = vrot.lane.b32.xlu0 %v1635, 110
        %v1874 = vpop.permute.xlu0 %1873
        %1875 = vrot.lane.b32.xlu0 %v1636, 110
        %v1876 = vpop.permute.xlu0 %1875
        %1877 = vrot.lane.b32.xlu0 %v1637, 110
        %v1878 = vpop.permute.xlu0 %1877
        %1879 = vrot.lane.b32.xlu0 %v1638, 110
        %v1880 = vpop.permute.xlu0 %1879
        %1881 = vrot.lane.b32.xlu0 %v1639, 110
        %v1882 = vpop.permute.xlu0 %1881
        %1883 = vrot.lane.b32.xlu0 %v1640, 110
        %v1884 = vpop.permute.xlu0 %1883
        %1885 = vrot.lane.b32.xlu0 %v1641, 110
        %v1886 = vpop.permute.xlu0 %1885
        %1887 = vrot.lane.b32.xlu0 %v1642, 110
        %v1888 = vpop.permute.xlu0 %1887
        %vm1889 = vcmask 900096
        %v1890 = vsel %vm1889, %v1726, %v1728
        %v1891 = vsel %vm1889, %v1728, %v1730
        %v1892 = vsel %vm1889, %v1730, %v1732
        %v1893 = vsel %vm1889, %v1732, %v1734
        %v1894 = vsel %vm1889, %v1734, %v1736
        %v1895 = vsel %vm1889, %v1736, %v1738
        %v1896 = vsel %vm1889, %v1738, %v1740
        %v1897 = vsel %vm1889, %v1740, %v1742
        %v1898 = vsel %vm1889, %v1742, %v1744
        %v1899 = vsel %vm1889, %v1744, %v1746
        %v1900 = vsel %vm1889, %v1746, %v1748
        %v1901 = vsel %vm1889, %v1748, %v1750
        %v1902 = vsel %vm1889, %v1750, %v1752
        %v1903 = vsel %vm1889, %v1752, %v1754
        %v1904 = vsel %vm1889, %v1754, %v1756
        %v1905 = vsel %vm1889, %v1756, %v1758
        %v1906 = vsel %vm1889, %v1758, %v1760
        %v1907 = vsel %vm1889, %v1760, %v1762
        %v1908 = vsel %vm1889, %v1762, %v1764
        %v1909 = vsel %vm1889, %v1764, %v1766
        %v1910 = vsel %vm1889, %v1766, %v1768
        %v1911 = vsel %vm1889, %v1768, %v1770
        %v1912 = vsel %vm1889, %v1770, %v1772
        %v1913 = vsel %vm1889, %v1772, %v1774
        %v1914 = vsel %vm1889, %v1774, %v1776
        %v1915 = vsel %vm1889, %v1776, %v1778
        %v1916 = vsel %vm1889, %v1778, %v1780
        %v1917 = vsel %vm1889, %v1780, %v1782
        %v1918 = vsel %vm1889, %v1782, %v1784
        %v1919 = vsel %vm1889, %v1784, %v1786
        %v1920 = vsel %vm1889, %v1786, %v1788
        %v1921 = vsel %vm1889, %v1788, %v1790
        %v1922 = vsel %vm1889, %v1790, %v1792
        %v1923 = vsel %vm1889, %v1792, %v1794
        %v1924 = vsel %vm1889, %v1794, %v1796
        %v1925 = vsel %vm1889, %v1796, %v1798
        %v1926 = vsel %vm1889, %v1798, %v1800
        %v1927 = vsel %vm1889, %v1800, %v1802
        %v1928 = vsel %vm1889, %v1802, %v1804
        %v1929 = vsel %vm1889, %v1804, %v1806
        %v1930 = vsel %vm1889, %v1808, %v1810
        %v1931 = vsel %vm1889, %v1810, %v1812
        %v1932 = vsel %vm1889, %v1812, %v1814
        %v1933 = vsel %vm1889, %v1814, %v1816
        %v1934 = vsel %vm1889, %v1816, %v1818
        %v1935 = vsel %vm1889, %v1818, %v1820
        %v1936 = vsel %vm1889, %v1820, %v1822
        %v1937 = vsel %vm1889, %v1822, %v1824
        %v1938 = vsel %vm1889, %v1824, %v1826
        %v1939 = vsel %vm1889, %v1826, %v1828
        %v1940 = vsel %vm1889, %v1828, %v1830
        %v1941 = vsel %vm1889, %v1830, %v1832
        %v1942 = vsel %vm1889, %v1832, %v1834
        %v1943 = vsel %vm1889, %v1834, %v1836
        %v1944 = vsel %vm1889, %v1836, %v1838
        %v1945 = vsel %vm1889, %v1838, %v1840
        %v1946 = vsel %vm1889, %v1840, %v1842
        %v1947 = vsel %vm1889, %v1842, %v1844
        %v1948 = vsel %vm1889, %v1844, %v1846
        %v1949 = vsel %vm1889, %v1846, %v1848
        %v1950 = vsel %vm1889, %v1848, %v1850
        %v1951 = vsel %vm1889, %v1850, %v1852
        %v1952 = vsel %vm1889, %v1852, %v1854
        %v1953 = vsel %vm1889, %v1854, %v1856
        %v1954 = vsel %vm1889, %v1856, %v1858
        %v1955 = vsel %vm1889, %v1858, %v1860
        %v1956 = vsel %vm1889, %v1860, %v1862
        %v1957 = vsel %vm1889, %v1862, %v1864
        %v1958 = vsel %vm1889, %v1864, %v1866
        %v1959 = vsel %vm1889, %v1866, %v1868
        %v1960 = vsel %vm1889, %v1868, %v1870
        %v1961 = vsel %vm1889, %v1870, %v1872
        %v1962 = vsel %vm1889, %v1872, %v1874
        %v1963 = vsel %vm1889, %v1874, %v1876
        %v1964 = vsel %vm1889, %v1876, %v1878
        %v1965 = vsel %vm1889, %v1878, %v1880
        %v1966 = vsel %vm1889, %v1880, %v1882
        %v1967 = vsel %vm1889, %v1882, %v1884
        %v1968 = vsel %vm1889, %v1884, %v1886
        %v1969 = vsel %vm1889, %v1886, %v1888
        %2052 = vst [vmem:[#allocation2 + $0x7b0] sm:$0xff] %v1890
        %2053 = vst [vmem:[#allocation2 + $0x7b8] sm:$0xff] %v1891
        %2054 = vst [vmem:[#allocation2 + $0x7c0] sm:$0xff] %v1892
        %2055 = vst [vmem:[#allocation2 + $0x7c8] sm:$0xff] %v1893
        %2056 = vst [vmem:[#allocation2 + $0x7d0] sm:$0xff] %v1894
        %2057 = vst [vmem:[#allocation2 + $0x7d8] sm:$0xff] %v1895
        %2058 = vst [vmem:[#allocation2 + $0x7e0] sm:$0xff] %v1896
        %2059 = vst [vmem:[#allocation2 + $0x7e8] sm:$0xff] %v1897
        %2060 = vst [vmem:[#allocation2 + $0x7f0] sm:$0xff] %v1898
        %2061 = vst [vmem:[#allocation2 + $0x7f8] sm:$0xff] %v1899
        %2062 = vst [vmem:[#allocation2 + $0x800] sm:$0xff] %v1900
        %2063 = vst [vmem:[#allocation2 + $0x808] sm:$0xff] %v1901
        %2064 = vst [vmem:[#allocation2 + $0x810] sm:$0xff] %v1902
        %2065 = vst [vmem:[#allocation2 + $0x818] sm:$0xff] %v1903
        %2066 = vst [vmem:[#allocation2 + $0x820] sm:$0xff] %v1904
        %2067 = vst [vmem:[#allocation2 + $0x828] sm:$0xff] %v1905
        %2068 = vst [vmem:[#allocation2 + $0x830] sm:$0xff] %v1906
        %2069 = vst [vmem:[#allocation2 + $0x838] sm:$0xff] %v1907
        %2070 = vst [vmem:[#allocation2 + $0x840] sm:$0xff] %v1908
        %2071 = vst [vmem:[#allocation2 + $0x848] sm:$0xff] %v1909
        %2072 = vst [vmem:[#allocation2 + $0x850] sm:$0xff] %v1910
        %2073 = vst [vmem:[#allocation2 + $0x858] sm:$0xff] %v1911
        %2074 = vst [vmem:[#allocation2 + $0x860] sm:$0xff] %v1912
        %2075 = vst [vmem:[#allocation2 + $0x868] sm:$0xff] %v1913
        %2076 = vst [vmem:[#allocation2 + $0x870] sm:$0xff] %v1914
        %2077 = vst [vmem:[#allocation2 + $0x878] sm:$0xff] %v1915
        %2078 = vst [vmem:[#allocation2 + $0x880] sm:$0xff] %v1916
        %2079 = vst [vmem:[#allocation2 + $0x888] sm:$0xff] %v1917
        %2080 = vst [vmem:[#allocation2 + $0x890] sm:$0xff] %v1918
        %2081 = vst [vmem:[#allocation2 + $0x898] sm:$0xff] %v1919
        %2082 = vst [vmem:[#allocation2 + $0x8a0] sm:$0xff] %v1920
        %2083 = vst [vmem:[#allocation2 + $0x8a8] sm:$0xff] %v1921
        %2084 = vst [vmem:[#allocation2 + $0x8b0] sm:$0xff] %v1922
        %2085 = vst [vmem:[#allocation2 + $0x8b8] sm:$0xff] %v1923
        %2086 = vst [vmem:[#allocation2 + $0x8c0] sm:$0xff] %v1924
        %2087 = vst [vmem:[#allocation2 + $0x8c8] sm:$0xff] %v1925
        %2088 = vst [vmem:[#allocation2 + $0x8d0] sm:$0xff] %v1926
        %2089 = vst [vmem:[#allocation2 + $0x8d8] sm:$0xff] %v1927
        %2090 = vst [vmem:[#allocation2 + $0x8e0] sm:$0xff] %v1928
        %2091 = vst [vmem:[#allocation2 + $0x8e8] sm:$0xff] %v1929
        %2092 = vst.msk [vmem:[#allocation2 + $0x8f0] sm:$0xff] %vm372, %v1806
        %2093 = vst [vmem:[#allocation2 + $0x8f8] sm:$0xff] %v1930
        %2094 = vst [vmem:[#allocation2 + $0x900] sm:$0xff] %v1931
        %2095 = vst [vmem:[#allocation2 + $0x908] sm:$0xff] %v1932
        %2096 = vst [vmem:[#allocation2 + $0x910] sm:$0xff] %v1933
        %2097 = vst [vmem:[#allocation2 + $0x918] sm:$0xff] %v1934
        %2098 = vst [vmem:[#allocation2 + $0x920] sm:$0xff] %v1935
        %2099 = vst [vmem:[#allocation2 + $0x928] sm:$0xff] %v1936
        %2100 = vst [vmem:[#allocation2 + $0x930] sm:$0xff] %v1937
        %2101 = vst [vmem:[#allocation2 + $0x938] sm:$0xff] %v1938
        %2102 = vst [vmem:[#allocation2 + $0x940] sm:$0xff] %v1939
        %2103 = vst [vmem:[#allocation2 + $0x948] sm:$0xff] %v1940
        %2104 = vst [vmem:[#allocation2 + $0x950] sm:$0xff] %v1941
        %2105 = vst [vmem:[#allocation2 + $0x958] sm:$0xff] %v1942
        %2106 = vst [vmem:[#allocation2 + $0x960] sm:$0xff] %v1943
        %2107 = vst [vmem:[#allocation2 + $0x968] sm:$0xff] %v1944
        %2108 = vst [vmem:[#allocation2 + $0x970] sm:$0xff] %v1945
        %2109 = vst [vmem:[#allocation2 + $0x978] sm:$0xff] %v1946
        %2110 = vst [vmem:[#allocation2 + $0x980] sm:$0xff] %v1947
        %2111 = vst [vmem:[#allocation2 + $0x988] sm:$0xff] %v1948
        %2112 = vst [vmem:[#allocation2 + $0x990] sm:$0xff] %v1949
        %2113 = vst [vmem:[#allocation2 + $0x998] sm:$0xff] %v1950
        %2114 = vst [vmem:[#allocation2 + $0x9a0] sm:$0xff] %v1951
        %2115 = vst [vmem:[#allocation2 + $0x9a8] sm:$0xff] %v1952
        %2116 = vst [vmem:[#allocation2 + $0x9b0] sm:$0xff] %v1953
        %2117 = vst [vmem:[#allocation2 + $0x9b8] sm:$0xff] %v1954
        %2118 = vst [vmem:[#allocation2 + $0x9c0] sm:$0xff] %v1955
        %2119 = vst [vmem:[#allocation2 + $0x9c8] sm:$0xff] %v1956
        %2120 = vst [vmem:[#allocation2 + $0x9d0] sm:$0xff] %v1957
        %2121 = vst [vmem:[#allocation2 + $0x9d8] sm:$0xff] %v1958
        %2122 = vst [vmem:[#allocation2 + $0x9e0] sm:$0xff] %v1959
        %2123 = vst [vmem:[#allocation2 + $0x9e8] sm:$0xff] %v1960
        %2124 = vst [vmem:[#allocation2 + $0x9f0] sm:$0xff] %v1961
        %2125 = vst [vmem:[#allocation2 + $0x9f8] sm:$0xff] %v1962
        %2126 = vst [vmem:[#allocation2 + $0xa00] sm:$0xff] %v1963
        %2127 = vst [vmem:[#allocation2 + $0xa08] sm:$0xff] %v1964
        %2128 = vst [vmem:[#allocation2 + $0xa10] sm:$0xff] %v1965
        %2129 = vst [vmem:[#allocation2 + $0xa18] sm:$0xff] %v1966
        %2130 = vst [vmem:[#allocation2 + $0xa20] sm:$0xff] %v1967
        %2131 = vst [vmem:[#allocation2 + $0xa28] sm:$0xff] %v1968
        %2132 = vst [vmem:[#allocation2 + $0xa30] sm:$0xff] %v1969
        %2133 = vst.msk [vmem:[#allocation2 + $0xa38] sm:$0xff] %vm372, %v1888
        %v2134 = vld [vmem:[%s217] sm:$0xff]
        %v2135 = vld [vmem:[%s217 + $0x8] sm:$0xff]
        %v2136 = vld [vmem:[%s217 + $0x10] sm:$0xff]
        %v2137 = vld [vmem:[%s217 + $0x18] sm:$0xff]
        %v2138 = vld [vmem:[%s217 + $0x20] sm:$0xff]
        %v2139 = vld [vmem:[%s217 + $0x28] sm:$0xff]
        %v2140 = vld [vmem:[%s217 + $0x30] sm:$0xff]
        %v2141 = vld [vmem:[%s217 + $0x38] sm:$0xff]
        %v2142 = vld [vmem:[%s217 + $0x40] sm:$0xff]
        %v2143 = vld [vmem:[%s217 + $0x48] sm:$0xff]
        %v2144 = vld [vmem:[%s217 + $0x50] sm:$0xff]
        %v2145 = vld [vmem:[%s217 + $0x58] sm:$0xff]
        %v2146 = vld [vmem:[%s217 + $0x60] sm:$0xff]
        %v2147 = vld [vmem:[%s217 + $0x68] sm:$0xff]
        %v2148 = vld [vmem:[%s217 + $0x70] sm:$0xff]
        %v2149 = vld [vmem:[%s217 + $0x78] sm:$0xff]
        %v2150 = vld [vmem:[%s217 + $0x80] sm:$0xff]
        %v2151 = vld [vmem:[%s217 + $0x88] sm:$0xff]
        %v2152 = vld [vmem:[%s217 + $0x90] sm:$0xff]
        %v2153 = vld [vmem:[%s217 + $0x98] sm:$0xff]
        %v2154 = vld [vmem:[%s217 + $0xa0] sm:$0xff]
        %v2155 = vld [vmem:[%s217 + $0xa8] sm:$0xff]
        %v2156 = vld [vmem:[%s217 + $0xb0] sm:$0xff]
        %v2157 = vld [vmem:[%s217 + $0xb8] sm:$0xff]
        %v2158 = vld [vmem:[%s217 + $0xc0] sm:$0xff]
        %v2159 = vld [vmem:[%s217 + $0xc8] sm:$0xff]
        %v2160 = vld [vmem:[%s217 + $0xd0] sm:$0xff]
        %v2161 = vld [vmem:[%s217 + $0xd8] sm:$0xff]
        %v2162 = vld [vmem:[%s217 + $0xe0] sm:$0xff]
        %v2163 = vld [vmem:[%s217 + $0xe8] sm:$0xff]
        %v2164 = vld [vmem:[%s217 + $0xf0] sm:$0xff]
        %v2165 = vld [vmem:[%s217 + $0xf8] sm:$0xff]
        %v2166 = vld [vmem:[%s217 + $0x100] sm:$0xff]
        %v2167 = vld [vmem:[%s217 + $0x108] sm:$0xff]
        %v2168 = vld [vmem:[%s217 + $0x110] sm:$0xff]
        %v2169 = vld [vmem:[%s217 + $0x118] sm:$0xff]
        %v2170 = vld [vmem:[%s217 + $0x120] sm:$0xff]
        %v2171 = vld [vmem:[%s217 + $0x128] sm:$0xff]
        %v2172 = vld [vmem:[%s217 + $0x130] sm:$0xff]
        %v2173 = vld [vmem:[%s217 + $0x138] sm:$0xff]
        %v2174 = vld [vmem:[%s217 + $0x140] sm:$0xff]
        %v2175 = vld [vmem:[%s217 + $0x160] sm:$0xff]
        %v2176 = vld [vmem:[%s217 + $0x168] sm:$0xff]
        %v2177 = vld [vmem:[%s217 + $0x170] sm:$0xff]
        %v2178 = vld [vmem:[%s217 + $0x178] sm:$0xff]
        %v2179 = vld [vmem:[%s217 + $0x180] sm:$0xff]
        %v2180 = vld [vmem:[%s217 + $0x188] sm:$0xff]
        %v2181 = vld [vmem:[%s217 + $0x190] sm:$0xff]
        %v2182 = vld [vmem:[%s217 + $0x198] sm:$0xff]
        %v2183 = vld [vmem:[%s217 + $0x1a0] sm:$0xff]
        %v2184 = vld [vmem:[%s217 + $0x1a8] sm:$0xff]
        %v2185 = vld [vmem:[%s217 + $0x1b0] sm:$0xff]
        %v2186 = vld [vmem:[%s217 + $0x1b8] sm:$0xff]
        %v2187 = vld [vmem:[%s217 + $0x1c0] sm:$0xff]
        %v2188 = vld [vmem:[%s217 + $0x1c8] sm:$0xff]
        %v2189 = vld [vmem:[%s217 + $0x1d0] sm:$0xff]
        %v2190 = vld [vmem:[%s217 + $0x1d8] sm:$0xff]
        %v2191 = vld [vmem:[%s217 + $0x1e0] sm:$0xff]
        %v2192 = vld [vmem:[%s217 + $0x1e8] sm:$0xff]
        %v2193 = vld [vmem:[%s217 + $0x1f0] sm:$0xff]
        %v2194 = vld [vmem:[%s217 + $0x1f8] sm:$0xff]
        %v2195 = vld [vmem:[%s217 + $0x200] sm:$0xff]
        %v2196 = vld [vmem:[%s217 + $0x208] sm:$0xff]
        %v2197 = vld [vmem:[%s217 + $0x210] sm:$0xff]
        %v2198 = vld [vmem:[%s217 + $0x218] sm:$0xff]
        %v2199 = vld [vmem:[%s217 + $0x220] sm:$0xff]
        %v2200 = vld [vmem:[%s217 + $0x228] sm:$0xff]
        %v2201 = vld [vmem:[%s217 + $0x230] sm:$0xff]
        %v2202 = vld [vmem:[%s217 + $0x238] sm:$0xff]
        %v2203 = vld [vmem:[%s217 + $0x240] sm:$0xff]
        %v2204 = vld [vmem:[%s217 + $0x248] sm:$0xff]
        %v2205 = vld [vmem:[%s217 + $0x250] sm:$0xff]
        %v2206 = vld [vmem:[%s217 + $0x258] sm:$0xff]
        %v2207 = vld [vmem:[%s217 + $0x260] sm:$0xff]
        %v2208 = vld [vmem:[%s217 + $0x268] sm:$0xff]
        %v2209 = vld [vmem:[%s217 + $0x270] sm:$0xff]
        %v2210 = vld [vmem:[%s217 + $0x278] sm:$0xff]
        %v2211 = vld [vmem:[%s217 + $0x280] sm:$0xff]
        %v2212 = vld [vmem:[%s217 + $0x288] sm:$0xff]
        %v2213 = vld [vmem:[%s217 + $0x290] sm:$0xff]
        %v2214 = vld [vmem:[%s217 + $0x298] sm:$0xff]
        %v2215 = vld [vmem:[%s217 + $0x2a0] sm:$0xff]
        %2298 = vrot.lane.b32.xlu0 %v2134, 109
        %v2299 = vpop.permute.xlu0 %2298
        %2300 = vrot.lane.b32.xlu0 %v2135, 109
        %v2301 = vpop.permute.xlu0 %2300
        %2302 = vrot.lane.b32.xlu0 %v2136, 109
        %v2303 = vpop.permute.xlu0 %2302
        %2304 = vrot.lane.b32.xlu0 %v2137, 109
        %v2305 = vpop.permute.xlu0 %2304
        %2306 = vrot.lane.b32.xlu0 %v2138, 109
        %v2307 = vpop.permute.xlu0 %2306
        %2308 = vrot.lane.b32.xlu0 %v2139, 109
        %v2309 = vpop.permute.xlu0 %2308
        %2310 = vrot.lane.b32.xlu0 %v2140, 109
        %v2311 = vpop.permute.xlu0 %2310
        %2312 = vrot.lane.b32.xlu0 %v2141, 109
        %v2313 = vpop.permute.xlu0 %2312
        %2314 = vrot.lane.b32.xlu0 %v2142, 109
        %v2315 = vpop.permute.xlu0 %2314
        %2316 = vrot.lane.b32.xlu0 %v2143, 109
        %v2317 = vpop.permute.xlu0 %2316
        %2318 = vrot.lane.b32.xlu0 %v2144, 109
        %v2319 = vpop.permute.xlu0 %2318
        %2320 = vrot.lane.b32.xlu0 %v2145, 109
        %v2321 = vpop.permute.xlu0 %2320
        %2322 = vrot.lane.b32.xlu0 %v2146, 109
        %v2323 = vpop.permute.xlu0 %2322
        %2324 = vrot.lane.b32.xlu0 %v2147, 109
        %v2325 = vpop.permute.xlu0 %2324
        %2326 = vrot.lane.b32.xlu0 %v2148, 109
        %v2327 = vpop.permute.xlu0 %2326
        %2328 = vrot.lane.b32.xlu0 %v2149, 109
        %v2329 = vpop.permute.xlu0 %2328
        %2330 = vrot.lane.b32.xlu0 %v2150, 109
        %v2331 = vpop.permute.xlu0 %2330
        %2332 = vrot.lane.b32.xlu0 %v2151, 109
        %v2333 = vpop.permute.xlu0 %2332
        %2334 = vrot.lane.b32.xlu0 %v2152, 109
        %v2335 = vpop.permute.xlu0 %2334
        %2336 = vrot.lane.b32.xlu0 %v2153, 109
        %v2337 = vpop.permute.xlu0 %2336
        %2338 = vrot.lane.b32.xlu0 %v2154, 109
        %v2339 = vpop.permute.xlu0 %2338
        %2340 = vrot.lane.b32.xlu0 %v2155, 109
        %v2341 = vpop.permute.xlu0 %2340
        %2342 = vrot.lane.b32.xlu0 %v2156, 109
        %v2343 = vpop.permute.xlu0 %2342
        %2344 = vrot.lane.b32.xlu0 %v2157, 109
        %v2345 = vpop.permute.xlu0 %2344
        %2346 = vrot.lane.b32.xlu0 %v2158, 109
        %v2347 = vpop.permute.xlu0 %2346
        %2348 = vrot.lane.b32.xlu0 %v2159, 109
        %v2349 = vpop.permute.xlu0 %2348
        %2350 = vrot.lane.b32.xlu0 %v2160, 109
        %v2351 = vpop.permute.xlu0 %2350
        %2352 = vrot.lane.b32.xlu0 %v2161, 109
        %v2353 = vpop.permute.xlu0 %2352
        %2354 = vrot.lane.b32.xlu0 %v2162, 109
        %v2355 = vpop.permute.xlu0 %2354
        %2356 = vrot.lane.b32.xlu0 %v2163, 109
        %v2357 = vpop.permute.xlu0 %2356
        %2358 = vrot.lane.b32.xlu0 %v2164, 109
        %v2359 = vpop.permute.xlu0 %2358
        %2360 = vrot.lane.b32.xlu0 %v2165, 109
        %v2361 = vpop.permute.xlu0 %2360
        %2362 = vrot.lane.b32.xlu0 %v2166, 109
        %v2363 = vpop.permute.xlu0 %2362
        %2364 = vrot.lane.b32.xlu0 %v2167, 109
        %v2365 = vpop.permute.xlu0 %2364
        %2366 = vrot.lane.b32.xlu0 %v2168, 109
        %v2367 = vpop.permute.xlu0 %2366
        %2368 = vrot.lane.b32.xlu0 %v2169, 109
        %v2369 = vpop.permute.xlu0 %2368
        %2370 = vrot.lane.b32.xlu0 %v2170, 109
        %v2371 = vpop.permute.xlu0 %2370
        %2372 = vrot.lane.b32.xlu0 %v2171, 109
        %v2373 = vpop.permute.xlu0 %2372
        %2374 = vrot.lane.b32.xlu0 %v2172, 109
        %v2375 = vpop.permute.xlu0 %2374
        %2376 = vrot.lane.b32.xlu0 %v2173, 109
        %v2377 = vpop.permute.xlu0 %2376
        %2378 = vrot.lane.b32.xlu0 %v2174, 109
        %v2379 = vpop.permute.xlu0 %2378
        %2380 = vrot.lane.b32.xlu0 %v2175, 109
        %v2381 = vpop.permute.xlu0 %2380
        %2382 = vrot.lane.b32.xlu0 %v2176, 109
        %v2383 = vpop.permute.xlu0 %2382
        %2384 = vrot.lane.b32.xlu0 %v2177, 109
        %v2385 = vpop.permute.xlu0 %2384
        %2386 = vrot.lane.b32.xlu0 %v2178, 109
        %v2387 = vpop.permute.xlu0 %2386
        %2388 = vrot.lane.b32.xlu0 %v2179, 109
        %v2389 = vpop.permute.xlu0 %2388
        %2390 = vrot.lane.b32.xlu0 %v2180, 109
        %v2391 = vpop.permute.xlu0 %2390
        %2392 = vrot.lane.b32.xlu0 %v2181, 109
        %v2393 = vpop.permute.xlu0 %2392
        %2394 = vrot.lane.b32.xlu0 %v2182, 109
        %v2395 = vpop.permute.xlu0 %2394
        %2396 = vrot.lane.b32.xlu0 %v2183, 109
        %v2397 = vpop.permute.xlu0 %2396
        %2398 = vrot.lane.b32.xlu0 %v2184, 109
        %v2399 = vpop.permute.xlu0 %2398
        %2400 = vrot.lane.b32.xlu0 %v2185, 109
        %v2401 = vpop.permute.xlu0 %2400
        %2402 = vrot.lane.b32.xlu0 %v2186, 109
        %v2403 = vpop.permute.xlu0 %2402
        %2404 = vrot.lane.b32.xlu0 %v2187, 109
        %v2405 = vpop.permute.xlu0 %2404
        %2406 = vrot.lane.b32.xlu0 %v2188, 109
        %v2407 = vpop.permute.xlu0 %2406
        %2408 = vrot.lane.b32.xlu0 %v2189, 109
        %v2409 = vpop.permute.xlu0 %2408
        %2410 = vrot.lane.b32.xlu0 %v2190, 109
        %v2411 = vpop.permute.xlu0 %2410
        %2412 = vrot.lane.b32.xlu0 %v2191, 109
        %v2413 = vpop.permute.xlu0 %2412
        %2414 = vrot.lane.b32.xlu0 %v2192, 109
        %v2415 = vpop.permute.xlu0 %2414
        %2416 = vrot.lane.b32.xlu0 %v2193, 109
        %v2417 = vpop.permute.xlu0 %2416
        %2418 = vrot.lane.b32.xlu0 %v2194, 109
        %v2419 = vpop.permute.xlu0 %2418
        %2420 = vrot.lane.b32.xlu0 %v2195, 109
        %v2421 = vpop.permute.xlu0 %2420
        %2422 = vrot.lane.b32.xlu0 %v2196, 109
        %v2423 = vpop.permute.xlu0 %2422
        %2424 = vrot.lane.b32.xlu0 %v2197, 109
        %v2425 = vpop.permute.xlu0 %2424
        %2426 = vrot.lane.b32.xlu0 %v2198, 109
        %v2427 = vpop.permute.xlu0 %2426
        %2428 = vrot.lane.b32.xlu0 %v2199, 109
        %v2429 = vpop.permute.xlu0 %2428
        %2430 = vrot.lane.b32.xlu0 %v2200, 109
        %v2431 = vpop.permute.xlu0 %2430
        %2432 = vrot.lane.b32.xlu0 %v2201, 109
        %v2433 = vpop.permute.xlu0 %2432
        %2434 = vrot.lane.b32.xlu0 %v2202, 109
        %v2435 = vpop.permute.xlu0 %2434
        %2436 = vrot.lane.b32.xlu0 %v2203, 109
        %v2437 = vpop.permute.xlu0 %2436
        %2438 = vrot.lane.b32.xlu0 %v2204, 109
        %v2439 = vpop.permute.xlu0 %2438
        %2440 = vrot.lane.b32.xlu0 %v2205, 109
        %v2441 = vpop.permute.xlu0 %2440
        %2442 = vrot.lane.b32.xlu0 %v2206, 109
        %v2443 = vpop.permute.xlu0 %2442
        %2444 = vrot.lane.b32.xlu0 %v2207, 109
        %v2445 = vpop.permute.xlu0 %2444
        %2446 = vrot.lane.b32.xlu0 %v2208, 109
        %v2447 = vpop.permute.xlu0 %2446
        %2448 = vrot.lane.b32.xlu0 %v2209, 109
        %v2449 = vpop.permute.xlu0 %2448
        %2450 = vrot.lane.b32.xlu0 %v2210, 109
        %v2451 = vpop.permute.xlu0 %2450
        %2452 = vrot.lane.b32.xlu0 %v2211, 109
        %v2453 = vpop.permute.xlu0 %2452
        %2454 = vrot.lane.b32.xlu0 %v2212, 109
        %v2455 = vpop.permute.xlu0 %2454
        %2456 = vrot.lane.b32.xlu0 %v2213, 109
        %v2457 = vpop.permute.xlu0 %2456
        %2458 = vrot.lane.b32.xlu0 %v2214, 109
        %v2459 = vpop.permute.xlu0 %2458
        %2460 = vrot.lane.b32.xlu0 %v2215, 109
        %v2461 = vpop.permute.xlu0 %2460
        %vm2462 = vcmask 891904
        %v2463 = vsel %vm2462, %v2299, %v2301
        %v2464 = vsel %vm2462, %v2301, %v2303
        %v2465 = vsel %vm2462, %v2303, %v2305
        %v2466 = vsel %vm2462, %v2305, %v2307
        %v2467 = vsel %vm2462, %v2307, %v2309
        %v2468 = vsel %vm2462, %v2309, %v2311
        %v2469 = vsel %vm2462, %v2311, %v2313
        %v2470 = vsel %vm2462, %v2313, %v2315
        %v2471 = vsel %vm2462, %v2315, %v2317
        %v2472 = vsel %vm2462, %v2317, %v2319
        %v2473 = vsel %vm2462, %v2319, %v2321
        %v2474 = vsel %vm2462, %v2321, %v2323
        %v2475 = vsel %vm2462, %v2323, %v2325
        %v2476 = vsel %vm2462, %v2325, %v2327
        %v2477 = vsel %vm2462, %v2327, %v2329
        %v2478 = vsel %vm2462, %v2329, %v2331
        %v2479 = vsel %vm2462, %v2331, %v2333
        %v2480 = vsel %vm2462, %v2333, %v2335
        %v2481 = vsel %vm2462, %v2335, %v2337
        %v2482 = vsel %vm2462, %v2337, %v2339
        %v2483 = vsel %vm2462, %v2339, %v2341
        %v2484 = vsel %vm2462, %v2341, %v2343
        %v2485 = vsel %vm2462, %v2343, %v2345
        %v2486 = vsel %vm2462, %v2345, %v2347
        %v2487 = vsel %vm2462, %v2347, %v2349
        %v2488 = vsel %vm2462, %v2349, %v2351
        %v2489 = vsel %vm2462, %v2351, %v2353
        %v2490 = vsel %vm2462, %v2353, %v2355
        %v2491 = vsel %vm2462, %v2355, %v2357
        %v2492 = vsel %vm2462, %v2357, %v2359
        %v2493 = vsel %vm2462, %v2359, %v2361
        %v2494 = vsel %vm2462, %v2361, %v2363
        %v2495 = vsel %vm2462, %v2363, %v2365
        %v2496 = vsel %vm2462, %v2365, %v2367
        %v2497 = vsel %vm2462, %v2367, %v2369
        %v2498 = vsel %vm2462, %v2369, %v2371
        %v2499 = vsel %vm2462, %v2371, %v2373
        %v2500 = vsel %vm2462, %v2373, %v2375
        %v2501 = vsel %vm2462, %v2375, %v2377
        %v2502 = vsel %vm2462, %v2377, %v2379
        %v2503 = vsel %vm2462, %v2381, %v2383
        %v2504 = vsel %vm2462, %v2383, %v2385
        %v2505 = vsel %vm2462, %v2385, %v2387
        %v2506 = vsel %vm2462, %v2387, %v2389
        %v2507 = vsel %vm2462, %v2389, %v2391
        %v2508 = vsel %vm2462, %v2391, %v2393
        %v2509 = vsel %vm2462, %v2393, %v2395
        %v2510 = vsel %vm2462, %v2395, %v2397
        %v2511 = vsel %vm2462, %v2397, %v2399
        %v2512 = vsel %vm2462, %v2399, %v2401
        %v2513 = vsel %vm2462, %v2401, %v2403
        %v2514 = vsel %vm2462, %v2403, %v2405
        %v2515 = vsel %vm2462, %v2405, %v2407
        %v2516 = vsel %vm2462, %v2407, %v2409
        %v2517 = vsel %vm2462, %v2409, %v2411
        %v2518 = vsel %vm2462, %v2411, %v2413
        %v2519 = vsel %vm2462, %v2413, %v2415
        %v2520 = vsel %vm2462, %v2415, %v2417
        %v2521 = vsel %vm2462, %v2417, %v2419
        %v2522 = vsel %vm2462, %v2419, %v2421
        %v2523 = vsel %vm2462, %v2421, %v2423
        %v2524 = vsel %vm2462, %v2423, %v2425
        %v2525 = vsel %vm2462, %v2425, %v2427
        %v2526 = vsel %vm2462, %v2427, %v2429
        %v2527 = vsel %vm2462, %v2429, %v2431
        %v2528 = vsel %vm2462, %v2431, %v2433
        %v2529 = vsel %vm2462, %v2433, %v2435
        %v2530 = vsel %vm2462, %v2435, %v2437
        %v2531 = vsel %vm2462, %v2437, %v2439
        %v2532 = vsel %vm2462, %v2439, %v2441
        %v2533 = vsel %vm2462, %v2441, %v2443
        %v2534 = vsel %vm2462, %v2443, %v2445
        %v2535 = vsel %vm2462, %v2445, %v2447
        %v2536 = vsel %vm2462, %v2447, %v2449
        %v2537 = vsel %vm2462, %v2449, %v2451
        %v2538 = vsel %vm2462, %v2451, %v2453
        %v2539 = vsel %vm2462, %v2453, %v2455
        %v2540 = vsel %vm2462, %v2455, %v2457
        %v2541 = vsel %vm2462, %v2457, %v2459
        %v2542 = vsel %vm2462, %v2459, %v2461
        %2625 = vst [vmem:[#allocation2 + $0xa40] sm:$0xff] %v2463
        %2626 = vst [vmem:[#allocation2 + $0xa48] sm:$0xff] %v2464
        %2627 = vst [vmem:[#allocation2 + $0xa50] sm:$0xff] %v2465
        %2628 = vst [vmem:[#allocation2 + $0xa58] sm:$0xff] %v2466
        %2629 = vst [vmem:[#allocation2 + $0xa60] sm:$0xff] %v2467
        %2630 = vst [vmem:[#allocation2 + $0xa68] sm:$0xff] %v2468
        %2631 = vst [vmem:[#allocation2 + $0xa70] sm:$0xff] %v2469
        %2632 = vst [vmem:[#allocation2 + $0xa78] sm:$0xff] %v2470
        %2633 = vst [vmem:[#allocation2 + $0xa80] sm:$0xff] %v2471
        %2634 = vst [vmem:[#allocation2 + $0xa88] sm:$0xff] %v2472
        %2635 = vst [vmem:[#allocation2 + $0xa90] sm:$0xff] %v2473
        %2636 = vst [vmem:[#allocation2 + $0xa98] sm:$0xff] %v2474
        %2637 = vst [vmem:[#allocation2 + $0xaa0] sm:$0xff] %v2475
        %2638 = vst [vmem:[#allocation2 + $0xaa8] sm:$0xff] %v2476
        %2639 = vst [vmem:[#allocation2 + $0xab0] sm:$0xff] %v2477
        %2640 = vst [vmem:[#allocation2 + $0xab8] sm:$0xff] %v2478
        %2641 = vst [vmem:[#allocation2 + $0xac0] sm:$0xff] %v2479
        %2642 = vst [vmem:[#allocation2 + $0xac8] sm:$0xff] %v2480
        %2643 = vst [vmem:[#allocation2 + $0xad0] sm:$0xff] %v2481
        %2644 = vst [vmem:[#allocation2 + $0xad8] sm:$0xff] %v2482
        %2645 = vst [vmem:[#allocation2 + $0xae0] sm:$0xff] %v2483
        %2646 = vst [vmem:[#allocation2 + $0xae8] sm:$0xff] %v2484
        %2647 = vst [vmem:[#allocation2 + $0xaf0] sm:$0xff] %v2485
        %2648 = vst [vmem:[#allocation2 + $0xaf8] sm:$0xff] %v2486
        %2649 = vst [vmem:[#allocation2 + $0xb00] sm:$0xff] %v2487
        %2650 = vst [vmem:[#allocation2 + $0xb08] sm:$0xff] %v2488
        %2651 = vst [vmem:[#allocation2 + $0xb10] sm:$0xff] %v2489
        %2652 = vst [vmem:[#allocation2 + $0xb18] sm:$0xff] %v2490
        %2653 = vst [vmem:[#allocation2 + $0xb20] sm:$0xff] %v2491
        %2654 = vst [vmem:[#allocation2 + $0xb28] sm:$0xff] %v2492
        %2655 = vst [vmem:[#allocation2 + $0xb30] sm:$0xff] %v2493
        %2656 = vst [vmem:[#allocation2 + $0xb38] sm:$0xff] %v2494
        %2657 = vst [vmem:[#allocation2 + $0xb40] sm:$0xff] %v2495
        %2658 = vst [vmem:[#allocation2 + $0xb48] sm:$0xff] %v2496
        %2659 = vst [vmem:[#allocation2 + $0xb50] sm:$0xff] %v2497
        %2660 = vst [vmem:[#allocation2 + $0xb58] sm:$0xff] %v2498
        %2661 = vst [vmem:[#allocation2 + $0xb60] sm:$0xff] %v2499
        %2662 = vst [vmem:[#allocation2 + $0xb68] sm:$0xff] %v2500
        %2663 = vst [vmem:[#allocation2 + $0xb70] sm:$0xff] %v2501
        %2664 = vst [vmem:[#allocation2 + $0xb78] sm:$0xff] %v2502
        %2665 = vst.msk [vmem:[#allocation2 + $0xb80] sm:$0xff] %vm372, %v2379
        %2666 = vst [vmem:[#allocation2 + $0xb88] sm:$0xff] %v2503
        %2667 = vst [vmem:[#allocation2 + $0xb90] sm:$0xff] %v2504
        %2668 = vst [vmem:[#allocation2 + $0xb98] sm:$0xff] %v2505
        %2669 = vst [vmem:[#allocation2 + $0xba0] sm:$0xff] %v2506
        %2670 = vst [vmem:[#allocation2 + $0xba8] sm:$0xff] %v2507
        %2671 = vst [vmem:[#allocation2 + $0xbb0] sm:$0xff] %v2508
        %2672 = vst [vmem:[#allocation2 + $0xbb8] sm:$0xff] %v2509
        %2673 = vst [vmem:[#allocation2 + $0xbc0] sm:$0xff] %v2510
        %2674 = vst [vmem:[#allocation2 + $0xbc8] sm:$0xff] %v2511
        %2675 = vst [vmem:[#allocation2 + $0xbd0] sm:$0xff] %v2512
        %2676 = vst [vmem:[#allocation2 + $0xbd8] sm:$0xff] %v2513
        %2677 = vst [vmem:[#allocation2 + $0xbe0] sm:$0xff] %v2514
        %2678 = vst [vmem:[#allocation2 + $0xbe8] sm:$0xff] %v2515
        %2679 = vst [vmem:[#allocation2 + $0xbf0] sm:$0xff] %v2516
        %2680 = vst [vmem:[#allocation2 + $0xbf8] sm:$0xff] %v2517
        %2681 = vst [vmem:[#allocation2 + $0xc00] sm:$0xff] %v2518
        %2682 = vst [vmem:[#allocation2 + $0xc08] sm:$0xff] %v2519
        %2683 = vst [vmem:[#allocation2 + $0xc10] sm:$0xff] %v2520
        %2684 = vst [vmem:[#allocation2 + $0xc18] sm:$0xff] %v2521
        %2685 = vst [vmem:[#allocation2 + $0xc20] sm:$0xff] %v2522
        %2686 = vst [vmem:[#allocation2 + $0xc28] sm:$0xff] %v2523
        %2687 = vst [vmem:[#allocation2 + $0xc30] sm:$0xff] %v2524
        %2688 = vst [vmem:[#allocation2 + $0xc38] sm:$0xff] %v2525
        %2689 = vst [vmem:[#allocation2 + $0xc40] sm:$0xff] %v2526
        %2690 = vst [vmem:[#allocation2 + $0xc48] sm:$0xff] %v2527
        %2691 = vst [vmem:[#allocation2 + $0xc50] sm:$0xff] %v2528
        %2692 = vst [vmem:[#allocation2 + $0xc58] sm:$0xff] %v2529
        %2693 = vst [vmem:[#allocation2 + $0xc60] sm:$0xff] %v2530
        %2694 = vst [vmem:[#allocation2 + $0xc68] sm:$0xff] %v2531
        %2695 = vst [vmem:[#allocation2 + $0xc70] sm:$0xff] %v2532
        %2696 = vst [vmem:[#allocation2 + $0xc78] sm:$0xff] %v2533
        %2697 = vst [vmem:[#allocation2 + $0xc80] sm:$0xff] %v2534
        %2698 = vst [vmem:[#allocation2 + $0xc88] sm:$0xff] %v2535
        %2699 = vst [vmem:[#allocation2 + $0xc90] sm:$0xff] %v2536
        %2700 = vst [vmem:[#allocation2 + $0xc98] sm:$0xff] %v2537
        %2701 = vst [vmem:[#allocation2 + $0xca0] sm:$0xff] %v2538
        %2702 = vst [vmem:[#allocation2 + $0xca8] sm:$0xff] %v2539
        %2703 = vst [vmem:[#allocation2 + $0xcb0] sm:$0xff] %v2540
        %2704 = vst [vmem:[#allocation2 + $0xcb8] sm:$0xff] %v2541
        %2705 = vst [vmem:[#allocation2 + $0xcc0] sm:$0xff] %v2542
        %2706 = vst.msk [vmem:[#allocation2 + $0xcc8] sm:$0xff] %vm372, %v2461
        %v2707 = vld [vmem:[%s217] sm:$0xff]
        %v2708 = vld [vmem:[%s217 + $0x8] sm:$0xff]
        %v2709 = vld [vmem:[%s217 + $0x10] sm:$0xff]
        %v2710 = vld [vmem:[%s217 + $0x18] sm:$0xff]
        %v2711 = vld [vmem:[%s217 + $0x20] sm:$0xff]
        %v2712 = vld [vmem:[%s217 + $0x28] sm:$0xff]
        %v2713 = vld [vmem:[%s217 + $0x30] sm:$0xff]
        %v2714 = vld [vmem:[%s217 + $0x38] sm:$0xff]
        %v2715 = vld [vmem:[%s217 + $0x40] sm:$0xff]
        %v2716 = vld [vmem:[%s217 + $0x48] sm:$0xff]
        %v2717 = vld [vmem:[%s217 + $0x50] sm:$0xff]
        %v2718 = vld [vmem:[%s217 + $0x58] sm:$0xff]
        %v2719 = vld [vmem:[%s217 + $0x60] sm:$0xff]
        %v2720 = vld [vmem:[%s217 + $0x68] sm:$0xff]
        %v2721 = vld [vmem:[%s217 + $0x70] sm:$0xff]
        %v2722 = vld [vmem:[%s217 + $0x78] sm:$0xff]
        %v2723 = vld [vmem:[%s217 + $0x80] sm:$0xff]
        %v2724 = vld [vmem:[%s217 + $0x88] sm:$0xff]
        %v2725 = vld [vmem:[%s217 + $0x90] sm:$0xff]
        %v2726 = vld [vmem:[%s217 + $0x98] sm:$0xff]
        %v2727 = vld [vmem:[%s217 + $0xa0] sm:$0xff]
        %v2728 = vld [vmem:[%s217 + $0xa8] sm:$0xff]
        %v2729 = vld [vmem:[%s217 + $0xb0] sm:$0xff]
        %v2730 = vld [vmem:[%s217 + $0xb8] sm:$0xff]
        %v2731 = vld [vmem:[%s217 + $0xc0] sm:$0xff]
        %v2732 = vld [vmem:[%s217 + $0xc8] sm:$0xff]
        %v2733 = vld [vmem:[%s217 + $0xd0] sm:$0xff]
        %v2734 = vld [vmem:[%s217 + $0xd8] sm:$0xff]
        %v2735 = vld [vmem:[%s217 + $0xe0] sm:$0xff]
        %v2736 = vld [vmem:[%s217 + $0xe8] sm:$0xff]
        %v2737 = vld [vmem:[%s217 + $0xf0] sm:$0xff]
        %v2738 = vld [vmem:[%s217 + $0xf8] sm:$0xff]
        %v2739 = vld [vmem:[%s217 + $0x100] sm:$0xff]
        %v2740 = vld [vmem:[%s217 + $0x108] sm:$0xff]
        %v2741 = vld [vmem:[%s217 + $0x110] sm:$0xff]
        %v2742 = vld [vmem:[%s217 + $0x118] sm:$0xff]
        %v2743 = vld [vmem:[%s217 + $0x120] sm:$0xff]
        %v2744 = vld [vmem:[%s217 + $0x128] sm:$0xff]
        %v2745 = vld [vmem:[%s217 + $0x130] sm:$0xff]
        %v2746 = vld [vmem:[%s217 + $0x138] sm:$0xff]
        %v2747 = vld [vmem:[%s217 + $0x140] sm:$0xff]
        %v2748 = vld [vmem:[%s217 + $0x160] sm:$0xff]
        %v2749 = vld [vmem:[%s217 + $0x168] sm:$0xff]
        %v2750 = vld [vmem:[%s217 + $0x170] sm:$0xff]
        %v2751 = vld [vmem:[%s217 + $0x178] sm:$0xff]
        %v2752 = vld [vmem:[%s217 + $0x180] sm:$0xff]
        %v2753 = vld [vmem:[%s217 + $0x188] sm:$0xff]
        %v2754 = vld [vmem:[%s217 + $0x190] sm:$0xff]
        %v2755 = vld [vmem:[%s217 + $0x198] sm:$0xff]
        %v2756 = vld [vmem:[%s217 + $0x1a0] sm:$0xff]
        %v2757 = vld [vmem:[%s217 + $0x1a8] sm:$0xff]
        %v2758 = vld [vmem:[%s217 + $0x1b0] sm:$0xff]
        %v2759 = vld [vmem:[%s217 + $0x1b8] sm:$0xff]
        %v2760 = vld [vmem:[%s217 + $0x1c0] sm:$0xff]
        %v2761 = vld [vmem:[%s217 + $0x1c8] sm:$0xff]
        %v2762 = vld [vmem:[%s217 + $0x1d0] sm:$0xff]
        %v2763 = vld [vmem:[%s217 + $0x1d8] sm:$0xff]
        %v2764 = vld [vmem:[%s217 + $0x1e0] sm:$0xff]
        %v2765 = vld [vmem:[%s217 + $0x1e8] sm:$0xff]
        %v2766 = vld [vmem:[%s217 + $0x1f0] sm:$0xff]
        %v2767 = vld [vmem:[%s217 + $0x1f8] sm:$0xff]
        %v2768 = vld [vmem:[%s217 + $0x200] sm:$0xff]
        %v2769 = vld [vmem:[%s217 + $0x208] sm:$0xff]
        %v2770 = vld [vmem:[%s217 + $0x210] sm:$0xff]
        %v2771 = vld [vmem:[%s217 + $0x218] sm:$0xff]
        %v2772 = vld [vmem:[%s217 + $0x220] sm:$0xff]
        %v2773 = vld [vmem:[%s217 + $0x228] sm:$0xff]
        %v2774 = vld [vmem:[%s217 + $0x230] sm:$0xff]
        %v2775 = vld [vmem:[%s217 + $0x238] sm:$0xff]
        %v2776 = vld [vmem:[%s217 + $0x240] sm:$0xff]
        %v2777 = vld [vmem:[%s217 + $0x248] sm:$0xff]
        %v2778 = vld [vmem:[%s217 + $0x250] sm:$0xff]
        %v2779 = vld [vmem:[%s217 + $0x258] sm:$0xff]
        %v2780 = vld [vmem:[%s217 + $0x260] sm:$0xff]
        %v2781 = vld [vmem:[%s217 + $0x268] sm:$0xff]
        %v2782 = vld [vmem:[%s217 + $0x270] sm:$0xff]
        %v2783 = vld [vmem:[%s217 + $0x278] sm:$0xff]
        %v2784 = vld [vmem:[%s217 + $0x280] sm:$0xff]
        %v2785 = vld [vmem:[%s217 + $0x288] sm:$0xff]
        %v2786 = vld [vmem:[%s217 + $0x290] sm:$0xff]
        %v2787 = vld [vmem:[%s217 + $0x298] sm:$0xff]
        %v2788 = vld [vmem:[%s217 + $0x2a0] sm:$0xff]
        %2871 = vrot.lane.b32.xlu0 %v2707, 108
        %v2872 = vpop.permute.xlu0 %2871
        %2873 = vrot.lane.b32.xlu0 %v2708, 108
        %v2874 = vpop.permute.xlu0 %2873
        %2875 = vrot.lane.b32.xlu0 %v2709, 108
        %v2876 = vpop.permute.xlu0 %2875
        %2877 = vrot.lane.b32.xlu0 %v2710, 108
        %v2878 = vpop.permute.xlu0 %2877
        %2879 = vrot.lane.b32.xlu0 %v2711, 108
        %v2880 = vpop.permute.xlu0 %2879
        %2881 = vrot.lane.b32.xlu0 %v2712, 108
        %v2882 = vpop.permute.xlu0 %2881
        %2883 = vrot.lane.b32.xlu0 %v2713, 108
        %v2884 = vpop.permute.xlu0 %2883
        %2885 = vrot.lane.b32.xlu0 %v2714, 108
        %v2886 = vpop.permute.xlu0 %2885
        %2887 = vrot.lane.b32.xlu0 %v2715, 108
        %v2888 = vpop.permute.xlu0 %2887
        %2889 = vrot.lane.b32.xlu0 %v2716, 108
        %v2890 = vpop.permute.xlu0 %2889
        %2891 = vrot.lane.b32.xlu0 %v2717, 108
        %v2892 = vpop.permute.xlu0 %2891
        %2893 = vrot.lane.b32.xlu0 %v2718, 108
        %v2894 = vpop.permute.xlu0 %2893
        %2895 = vrot.lane.b32.xlu0 %v2719, 108
        %v2896 = vpop.permute.xlu0 %2895
        %2897 = vrot.lane.b32.xlu0 %v2720, 108
        %v2898 = vpop.permute.xlu0 %2897
        %2899 = vrot.lane.b32.xlu0 %v2721, 108
        %v2900 = vpop.permute.xlu0 %2899
        %2901 = vrot.lane.b32.xlu0 %v2722, 108
        %v2902 = vpop.permute.xlu0 %2901
        %2903 = vrot.lane.b32.xlu0 %v2723, 108
        %v2904 = vpop.permute.xlu0 %2903
        %2905 = vrot.lane.b32.xlu0 %v2724, 108
        %v2906 = vpop.permute.xlu0 %2905
        %2907 = vrot.lane.b32.xlu0 %v2725, 108
        %v2908 = vpop.permute.xlu0 %2907
        %2909 = vrot.lane.b32.xlu0 %v2726, 108
        %v2910 = vpop.permute.xlu0 %2909
        %2911 = vrot.lane.b32.xlu0 %v2727, 108
        %v2912 = vpop.permute.xlu0 %2911
        %2913 = vrot.lane.b32.xlu0 %v2728, 108
        %v2914 = vpop.permute.xlu0 %2913
        %2915 = vrot.lane.b32.xlu0 %v2729, 108
        %v2916 = vpop.permute.xlu0 %2915
        %2917 = vrot.lane.b32.xlu0 %v2730, 108
        %v2918 = vpop.permute.xlu0 %2917
        %2919 = vrot.lane.b32.xlu0 %v2731, 108
        %v2920 = vpop.permute.xlu0 %2919
        %2921 = vrot.lane.b32.xlu0 %v2732, 108
        %v2922 = vpop.permute.xlu0 %2921
        %2923 = vrot.lane.b32.xlu0 %v2733, 108
        %v2924 = vpop.permute.xlu0 %2923
        %2925 = vrot.lane.b32.xlu0 %v2734, 108
        %v2926 = vpop.permute.xlu0 %2925
        %2927 = vrot.lane.b32.xlu0 %v2735, 108
        %v2928 = vpop.permute.xlu0 %2927
        %2929 = vrot.lane.b32.xlu0 %v2736, 108
        %v2930 = vpop.permute.xlu0 %2929
        %2931 = vrot.lane.b32.xlu0 %v2737, 108
        %v2932 = vpop.permute.xlu0 %2931
        %2933 = vrot.lane.b32.xlu0 %v2738, 108
        %v2934 = vpop.permute.xlu0 %2933
        %2935 = vrot.lane.b32.xlu0 %v2739, 108
        %v2936 = vpop.permute.xlu0 %2935
        %2937 = vrot.lane.b32.xlu0 %v2740, 108
        %v2938 = vpop.permute.xlu0 %2937
        %2939 = vrot.lane.b32.xlu0 %v2741, 108
        %v2940 = vpop.permute.xlu0 %2939
        %2941 = vrot.lane.b32.xlu0 %v2742, 108
        %v2942 = vpop.permute.xlu0 %2941
        %2943 = vrot.lane.b32.xlu0 %v2743, 108
        %v2944 = vpop.permute.xlu0 %2943
        %2945 = vrot.lane.b32.xlu0 %v2744, 108
        %v2946 = vpop.permute.xlu0 %2945
        %2947 = vrot.lane.b32.xlu0 %v2745, 108
        %v2948 = vpop.permute.xlu0 %2947
        %2949 = vrot.lane.b32.xlu0 %v2746, 108
        %v2950 = vpop.permute.xlu0 %2949
        %2951 = vrot.lane.b32.xlu0 %v2747, 108
        %v2952 = vpop.permute.xlu0 %2951
        %2953 = vrot.lane.b32.xlu0 %v2748, 108
        %v2954 = vpop.permute.xlu0 %2953
        %2955 = vrot.lane.b32.xlu0 %v2749, 108
        %v2956 = vpop.permute.xlu0 %2955
        %2957 = vrot.lane.b32.xlu0 %v2750, 108
        %v2958 = vpop.permute.xlu0 %2957
        %2959 = vrot.lane.b32.xlu0 %v2751, 108
        %v2960 = vpop.permute.xlu0 %2959
        %2961 = vrot.lane.b32.xlu0 %v2752, 108
        %v2962 = vpop.permute.xlu0 %2961
        %2963 = vrot.lane.b32.xlu0 %v2753, 108
        %v2964 = vpop.permute.xlu0 %2963
        %2965 = vrot.lane.b32.xlu0 %v2754, 108
        %v2966 = vpop.permute.xlu0 %2965
        %2967 = vrot.lane.b32.xlu0 %v2755, 108
        %v2968 = vpop.permute.xlu0 %2967
        %2969 = vrot.lane.b32.xlu0 %v2756, 108
        %v2970 = vpop.permute.xlu0 %2969
        %2971 = vrot.lane.b32.xlu0 %v2757, 108
        %v2972 = vpop.permute.xlu0 %2971
        %2973 = vrot.lane.b32.xlu0 %v2758, 108
        %v2974 = vpop.permute.xlu0 %2973
        %2975 = vrot.lane.b32.xlu0 %v2759, 108
        %v2976 = vpop.permute.xlu0 %2975
        %2977 = vrot.lane.b32.xlu0 %v2760, 108
        %v2978 = vpop.permute.xlu0 %2977
        %2979 = vrot.lane.b32.xlu0 %v2761, 108
        %v2980 = vpop.permute.xlu0 %2979
        %2981 = vrot.lane.b32.xlu0 %v2762, 108
        %v2982 = vpop.permute.xlu0 %2981
        %2983 = vrot.lane.b32.xlu0 %v2763, 108
        %v2984 = vpop.permute.xlu0 %2983
        %2985 = vrot.lane.b32.xlu0 %v2764, 108
        %v2986 = vpop.permute.xlu0 %2985
        %2987 = vrot.lane.b32.xlu0 %v2765, 108
        %v2988 = vpop.permute.xlu0 %2987
        %2989 = vrot.lane.b32.xlu0 %v2766, 108
        %v2990 = vpop.permute.xlu0 %2989
        %2991 = vrot.lane.b32.xlu0 %v2767, 108
        %v2992 = vpop.permute.xlu0 %2991
        %2993 = vrot.lane.b32.xlu0 %v2768, 108
        %v2994 = vpop.permute.xlu0 %2993
        %2995 = vrot.lane.b32.xlu0 %v2769, 108
        %v2996 = vpop.permute.xlu0 %2995
        %2997 = vrot.lane.b32.xlu0 %v2770, 108
        %v2998 = vpop.permute.xlu0 %2997
        %2999 = vrot.lane.b32.xlu0 %v2771, 108
        %v3000 = vpop.permute.xlu0 %2999
        %3001 = vrot.lane.b32.xlu0 %v2772, 108
        %v3002 = vpop.permute.xlu0 %3001
        %3003 = vrot.lane.b32.xlu0 %v2773, 108
        %v3004 = vpop.permute.xlu0 %3003
        %3005 = vrot.lane.b32.xlu0 %v2774, 108
        %v3006 = vpop.permute.xlu0 %3005
        %3007 = vrot.lane.b32.xlu0 %v2775, 108
        %v3008 = vpop.permute.xlu0 %3007
        %3009 = vrot.lane.b32.xlu0 %v2776, 108
        %v3010 = vpop.permute.xlu0 %3009
        %3011 = vrot.lane.b32.xlu0 %v2777, 108
        %v3012 = vpop.permute.xlu0 %3011
        %3013 = vrot.lane.b32.xlu0 %v2778, 108
        %v3014 = vpop.permute.xlu0 %3013
        %3015 = vrot.lane.b32.xlu0 %v2779, 108
        %v3016 = vpop.permute.xlu0 %3015
        %3017 = vrot.lane.b32.xlu0 %v2780, 108
        %v3018 = vpop.permute.xlu0 %3017
        %3019 = vrot.lane.b32.xlu0 %v2781, 108
        %v3020 = vpop.permute.xlu0 %3019
        %3021 = vrot.lane.b32.xlu0 %v2782, 108
        %v3022 = vpop.permute.xlu0 %3021
        %3023 = vrot.lane.b32.xlu0 %v2783, 108
        %v3024 = vpop.permute.xlu0 %3023
        %3025 = vrot.lane.b32.xlu0 %v2784, 108
        %v3026 = vpop.permute.xlu0 %3025
        %3027 = vrot.lane.b32.xlu0 %v2785, 108
        %v3028 = vpop.permute.xlu0 %3027
        %3029 = vrot.lane.b32.xlu0 %v2786, 108
        %v3030 = vpop.permute.xlu0 %3029
        %3031 = vrot.lane.b32.xlu0 %v2787, 108
        %v3032 = vpop.permute.xlu0 %3031
        %3033 = vrot.lane.b32.xlu0 %v2788, 108
        %v3034 = vpop.permute.xlu0 %3033
        %vm3035 = vcmask 883712
        %v3036 = vsel %vm3035, %v2872, %v2874
        %v3037 = vsel %vm3035, %v2874, %v2876
        %v3038 = vsel %vm3035, %v2876, %v2878
        %v3039 = vsel %vm3035, %v2878, %v2880
        %v3040 = vsel %vm3035, %v2880, %v2882
        %v3041 = vsel %vm3035, %v2882, %v2884
        %v3042 = vsel %vm3035, %v2884, %v2886
        %v3043 = vsel %vm3035, %v2886, %v2888
        %v3044 = vsel %vm3035, %v2888, %v2890
        %v3045 = vsel %vm3035, %v2890, %v2892
        %v3046 = vsel %vm3035, %v2892, %v2894
        %v3047 = vsel %vm3035, %v2894, %v2896
        %v3048 = vsel %vm3035, %v2896, %v2898
        %v3049 = vsel %vm3035, %v2898, %v2900
        %v3050 = vsel %vm3035, %v2900, %v2902
        %v3051 = vsel %vm3035, %v2902, %v2904
        %v3052 = vsel %vm3035, %v2904, %v2906
        %v3053 = vsel %vm3035, %v2906, %v2908
        %v3054 = vsel %vm3035, %v2908, %v2910
        %v3055 = vsel %vm3035, %v2910, %v2912
        %v3056 = vsel %vm3035, %v2912, %v2914
        %v3057 = vsel %vm3035, %v2914, %v2916
        %v3058 = vsel %vm3035, %v2916, %v2918
        %v3059 = vsel %vm3035, %v2918, %v2920
        %v3060 = vsel %vm3035, %v2920, %v2922
        %v3061 = vsel %vm3035, %v2922, %v2924
        %v3062 = vsel %vm3035, %v2924, %v2926
        %v3063 = vsel %vm3035, %v2926, %v2928
        %v3064 = vsel %vm3035, %v2928, %v2930
        %v3065 = vsel %vm3035, %v2930, %v2932
        %v3066 = vsel %vm3035, %v2932, %v2934
        %v3067 = vsel %vm3035, %v2934, %v2936
        %v3068 = vsel %vm3035, %v2936, %v2938
        %v3069 = vsel %vm3035, %v2938, %v2940
        %v3070 = vsel %vm3035, %v2940, %v2942
        %v3071 = vsel %vm3035, %v2942, %v2944
        %v3072 = vsel %vm3035, %v2944, %v2946
        %v3073 = vsel %vm3035, %v2946, %v2948
        %v3074 = vsel %vm3035, %v2948, %v2950
        %v3075 = vsel %vm3035, %v2950, %v2952
        %v3076 = vsel %vm3035, %v2954, %v2956
        %v3077 = vsel %vm3035, %v2956, %v2958
        %v3078 = vsel %vm3035, %v2958, %v2960
        %v3079 = vsel %vm3035, %v2960, %v2962
        %v3080 = vsel %vm3035, %v2962, %v2964
        %v3081 = vsel %vm3035, %v2964, %v2966
        %v3082 = vsel %vm3035, %v2966, %v2968
        %v3083 = vsel %vm3035, %v2968, %v2970
        %v3084 = vsel %vm3035, %v2970, %v2972
        %v3085 = vsel %vm3035, %v2972, %v2974
        %v3086 = vsel %vm3035, %v2974, %v2976
        %v3087 = vsel %vm3035, %v2976, %v2978
        %v3088 = vsel %vm3035, %v2978, %v2980
        %v3089 = vsel %vm3035, %v2980, %v2982
        %v3090 = vsel %vm3035, %v2982, %v2984
        %v3091 = vsel %vm3035, %v2984, %v2986
        %v3092 = vsel %vm3035, %v2986, %v2988
        %v3093 = vsel %vm3035, %v2988, %v2990
        %v3094 = vsel %vm3035, %v2990, %v2992
        %v3095 = vsel %vm3035, %v2992, %v2994
        %v3096 = vsel %vm3035, %v2994, %v2996
        %v3097 = vsel %vm3035, %v2996, %v2998
        %v3098 = vsel %vm3035, %v2998, %v3000
        %v3099 = vsel %vm3035, %v3000, %v3002
        %v3100 = vsel %vm3035, %v3002, %v3004
        %v3101 = vsel %vm3035, %v3004, %v3006
        %v3102 = vsel %vm3035, %v3006, %v3008
        %v3103 = vsel %vm3035, %v3008, %v3010
        %v3104 = vsel %vm3035, %v3010, %v3012
        %v3105 = vsel %vm3035, %v3012, %v3014
        %v3106 = vsel %vm3035, %v3014, %v3016
        %v3107 = vsel %vm3035, %v3016, %v3018
        %v3108 = vsel %vm3035, %v3018, %v3020
        %v3109 = vsel %vm3035, %v3020, %v3022
        %v3110 = vsel %vm3035, %v3022, %v3024
        %v3111 = vsel %vm3035, %v3024, %v3026
        %v3112 = vsel %vm3035, %v3026, %v3028
        %v3113 = vsel %vm3035, %v3028, %v3030
        %v3114 = vsel %vm3035, %v3030, %v3032
        %v3115 = vsel %vm3035, %v3032, %v3034
        %3198 = vst [vmem:[#allocation2 + $0xcd0] sm:$0xff] %v3036
        %3199 = vst [vmem:[#allocation2 + $0xcd8] sm:$0xff] %v3037
        %3200 = vst [vmem:[#allocation2 + $0xce0] sm:$0xff] %v3038
        %3201 = vst [vmem:[#allocation2 + $0xce8] sm:$0xff] %v3039
        %3202 = vst [vmem:[#allocation2 + $0xcf0] sm:$0xff] %v3040
        %3203 = vst [vmem:[#allocation2 + $0xcf8] sm:$0xff] %v3041
        %3204 = vst [vmem:[#allocation2 + $0xd00] sm:$0xff] %v3042
        %3205 = vst [vmem:[#allocation2 + $0xd08] sm:$0xff] %v3043
        %3206 = vst [vmem:[#allocation2 + $0xd10] sm:$0xff] %v3044
        %3207 = vst [vmem:[#allocation2 + $0xd18] sm:$0xff] %v3045
        %3208 = vst [vmem:[#allocation2 + $0xd20] sm:$0xff] %v3046
        %3209 = vst [vmem:[#allocation2 + $0xd28] sm:$0xff] %v3047
        %3210 = vst [vmem:[#allocation2 + $0xd30] sm:$0xff] %v3048
        %3211 = vst [vmem:[#allocation2 + $0xd38] sm:$0xff] %v3049
        %3212 = vst [vmem:[#allocation2 + $0xd40] sm:$0xff] %v3050
        %3213 = vst [vmem:[#allocation2 + $0xd48] sm:$0xff] %v3051
        %3214 = vst [vmem:[#allocation2 + $0xd50] sm:$0xff] %v3052
        %3215 = vst [vmem:[#allocation2 + $0xd58] sm:$0xff] %v3053
        %3216 = vst [vmem:[#allocation2 + $0xd60] sm:$0xff] %v3054
        %3217 = vst [vmem:[#allocation2 + $0xd68] sm:$0xff] %v3055
        %3218 = vst [vmem:[#allocation2 + $0xd70] sm:$0xff] %v3056
        %3219 = vst [vmem:[#allocation2 + $0xd78] sm:$0xff] %v3057
        %3220 = vst [vmem:[#allocation2 + $0xd80] sm:$0xff] %v3058
        %3221 = vst [vmem:[#allocation2 + $0xd88] sm:$0xff] %v3059
        %3222 = vst [vmem:[#allocation2 + $0xd90] sm:$0xff] %v3060
        %3223 = vst [vmem:[#allocation2 + $0xd98] sm:$0xff] %v3061
        %3224 = vst [vmem:[#allocation2 + $0xda0] sm:$0xff] %v3062
        %3225 = vst [vmem:[#allocation2 + $0xda8] sm:$0xff] %v3063
        %3226 = vst [vmem:[#allocation2 + $0xdb0] sm:$0xff] %v3064
        %3227 = vst [vmem:[#allocation2 + $0xdb8] sm:$0xff] %v3065
        %3228 = vst [vmem:[#allocation2 + $0xdc0] sm:$0xff] %v3066
        %3229 = vst [vmem:[#allocation2 + $0xdc8] sm:$0xff] %v3067
        %3230 = vst [vmem:[#allocation2 + $0xdd0] sm:$0xff] %v3068
        %3231 = vst [vmem:[#allocation2 + $0xdd8] sm:$0xff] %v3069
        %3232 = vst [vmem:[#allocation2 + $0xde0] sm:$0xff] %v3070
        %3233 = vst [vmem:[#allocation2 + $0xde8] sm:$0xff] %v3071
        %3234 = vst [vmem:[#allocation2 + $0xdf0] sm:$0xff] %v3072
        %3235 = vst [vmem:[#allocation2 + $0xdf8] sm:$0xff] %v3073
        %3236 = vst [vmem:[#allocation2 + $0xe00] sm:$0xff] %v3074
        %3237 = vst [vmem:[#allocation2 + $0xe08] sm:$0xff] %v3075
        %3238 = vst.msk [vmem:[#allocation2 + $0xe10] sm:$0xff] %vm372, %v2952
        %3239 = vst [vmem:[#allocation2 + $0xe18] sm:$0xff] %v3076
        %3240 = vst [vmem:[#allocation2 + $0xe20] sm:$0xff] %v3077
        %3241 = vst [vmem:[#allocation2 + $0xe28] sm:$0xff] %v3078
        %3242 = vst [vmem:[#allocation2 + $0xe30] sm:$0xff] %v3079
        %3243 = vst [vmem:[#allocation2 + $0xe38] sm:$0xff] %v3080
        %3244 = vst [vmem:[#allocation2 + $0xe40] sm:$0xff] %v3081
        %3245 = vst [vmem:[#allocation2 + $0xe48] sm:$0xff] %v3082
        %3246 = vst [vmem:[#allocation2 + $0xe50] sm:$0xff] %v3083
        %3247 = vst [vmem:[#allocation2 + $0xe58] sm:$0xff] %v3084
        %3248 = vst [vmem:[#allocation2 + $0xe60] sm:$0xff] %v3085
        %3249 = vst [vmem:[#allocation2 + $0xe68] sm:$0xff] %v3086
        %3250 = vst [vmem:[#allocation2 + $0xe70] sm:$0xff] %v3087
        %3251 = vst [vmem:[#allocation2 + $0xe78] sm:$0xff] %v3088
        %3252 = vst [vmem:[#allocation2 + $0xe80] sm:$0xff] %v3089
        %3253 = vst [vmem:[#allocation2 + $0xe88] sm:$0xff] %v3090
        %3254 = vst [vmem:[#allocation2 + $0xe90] sm:$0xff] %v3091
        %3255 = vst [vmem:[#allocation2 + $0xe98] sm:$0xff] %v3092
        %3256 = vst [vmem:[#allocation2 + $0xea0] sm:$0xff] %v3093
        %3257 = vst [vmem:[#allocation2 + $0xea8] sm:$0xff] %v3094
        %3258 = vst [vmem:[#allocation2 + $0xeb0] sm:$0xff] %v3095
        %3259 = vst [vmem:[#allocation2 + $0xeb8] sm:$0xff] %v3096
        %3260 = vst [vmem:[#allocation2 + $0xec0] sm:$0xff] %v3097
        %3261 = vst [vmem:[#allocation2 + $0xec8] sm:$0xff] %v3098
        %3262 = vst [vmem:[#allocation2 + $0xed0] sm:$0xff] %v3099
        %3263 = vst [vmem:[#allocation2 + $0xed8] sm:$0xff] %v3100
        %3264 = vst [vmem:[#allocation2 + $0xee0] sm:$0xff] %v3101
        %3265 = vst [vmem:[#allocation2 + $0xee8] sm:$0xff] %v3102
        %3266 = vst [vmem:[#allocation2 + $0xef0] sm:$0xff] %v3103
        %3267 = vst [vmem:[#allocation2 + $0xef8] sm:$0xff] %v3104
        %3268 = vst [vmem:[#allocation2 + $0xf00] sm:$0xff] %v3105
        %3269 = vst [vmem:[#allocation2 + $0xf08] sm:$0xff] %v3106
        %3270 = vst [vmem:[#allocation2 + $0xf10] sm:$0xff] %v3107
        %3271 = vst [vmem:[#allocation2 + $0xf18] sm:$0xff] %v3108
        %3272 = vst [vmem:[#allocation2 + $0xf20] sm:$0xff] %v3109
        %3273 = vst [vmem:[#allocation2 + $0xf28] sm:$0xff] %v3110
        %3274 = vst [vmem:[#allocation2 + $0xf30] sm:$0xff] %v3111
        %3275 = vst [vmem:[#allocation2 + $0xf38] sm:$0xff] %v3112
        %3276 = vst [vmem:[#allocation2 + $0xf40] sm:$0xff] %v3113
        %3277 = vst [vmem:[#allocation2 + $0xf48] sm:$0xff] %v3114
        %3278 = vst [vmem:[#allocation2 + $0xf50] sm:$0xff] %v3115
        %3279 = vst.msk [vmem:[#allocation2 + $0xf58] sm:$0xff] %vm372, %v3034
        %v3280 = vld [vmem:[%s217] sm:$0xff]
        %v3281 = vld [vmem:[%s217 + $0x8] sm:$0xff]
        %v3282 = vld [vmem:[%s217 + $0x10] sm:$0xff]
        %v3283 = vld [vmem:[%s217 + $0x18] sm:$0xff]
        %v3284 = vld [vmem:[%s217 + $0x20] sm:$0xff]
        %v3285 = vld [vmem:[%s217 + $0x28] sm:$0xff]
        %v3286 = vld [vmem:[%s217 + $0x30] sm:$0xff]
        %v3287 = vld [vmem:[%s217 + $0x38] sm:$0xff]
        %v3288 = vld [vmem:[%s217 + $0x40] sm:$0xff]
        %v3289 = vld [vmem:[%s217 + $0x48] sm:$0xff]
        %v3290 = vld [vmem:[%s217 + $0x50] sm:$0xff]
        %v3291 = vld [vmem:[%s217 + $0x58] sm:$0xff]
        %v3292 = vld [vmem:[%s217 + $0x60] sm:$0xff]
        %v3293 = vld [vmem:[%s217 + $0x68] sm:$0xff]
        %v3294 = vld [vmem:[%s217 + $0x70] sm:$0xff]
        %v3295 = vld [vmem:[%s217 + $0x78] sm:$0xff]
        %v3296 = vld [vmem:[%s217 + $0x80] sm:$0xff]
        %v3297 = vld [vmem:[%s217 + $0x88] sm:$0xff]
        %v3298 = vld [vmem:[%s217 + $0x90] sm:$0xff]
        %v3299 = vld [vmem:[%s217 + $0x98] sm:$0xff]
        %v3300 = vld [vmem:[%s217 + $0xa0] sm:$0xff]
        %v3301 = vld [vmem:[%s217 + $0xa8] sm:$0xff]
        %v3302 = vld [vmem:[%s217 + $0xb0] sm:$0xff]
        %v3303 = vld [vmem:[%s217 + $0xb8] sm:$0xff]
        %v3304 = vld [vmem:[%s217 + $0xc0] sm:$0xff]
        %v3305 = vld [vmem:[%s217 + $0xc8] sm:$0xff]
        %v3306 = vld [vmem:[%s217 + $0xd0] sm:$0xff]
        %v3307 = vld [vmem:[%s217 + $0xd8] sm:$0xff]
        %v3308 = vld [vmem:[%s217 + $0xe0] sm:$0xff]
        %v3309 = vld [vmem:[%s217 + $0xe8] sm:$0xff]
        %v3310 = vld [vmem:[%s217 + $0xf0] sm:$0xff]
        %v3311 = vld [vmem:[%s217 + $0xf8] sm:$0xff]
        %v3312 = vld [vmem:[%s217 + $0x100] sm:$0xff]
        %v3313 = vld [vmem:[%s217 + $0x108] sm:$0xff]
        %v3314 = vld [vmem:[%s217 + $0x110] sm:$0xff]
        %v3315 = vld [vmem:[%s217 + $0x118] sm:$0xff]
        %v3316 = vld [vmem:[%s217 + $0x120] sm:$0xff]
        %v3317 = vld [vmem:[%s217 + $0x128] sm:$0xff]
        %v3318 = vld [vmem:[%s217 + $0x130] sm:$0xff]
        %v3319 = vld [vmem:[%s217 + $0x138] sm:$0xff]
        %v3320 = vld [vmem:[%s217 + $0x140] sm:$0xff]
        %v3321 = vld [vmem:[%s217 + $0x160] sm:$0xff]
        %v3322 = vld [vmem:[%s217 + $0x168] sm:$0xff]
        %v3323 = vld [vmem:[%s217 + $0x170] sm:$0xff]
        %v3324 = vld [vmem:[%s217 + $0x178] sm:$0xff]
        %v3325 = vld [vmem:[%s217 + $0x180] sm:$0xff]
        %v3326 = vld [vmem:[%s217 + $0x188] sm:$0xff]
        %v3327 = vld [vmem:[%s217 + $0x190] sm:$0xff]
        %v3328 = vld [vmem:[%s217 + $0x198] sm:$0xff]
        %v3329 = vld [vmem:[%s217 + $0x1a0] sm:$0xff]
        %v3330 = vld [vmem:[%s217 + $0x1a8] sm:$0xff]
        %v3331 = vld [vmem:[%s217 + $0x1b0] sm:$0xff]
        %v3332 = vld [vmem:[%s217 + $0x1b8] sm:$0xff]
        %v3333 = vld [vmem:[%s217 + $0x1c0] sm:$0xff]
        %v3334 = vld [vmem:[%s217 + $0x1c8] sm:$0xff]
        %v3335 = vld [vmem:[%s217 + $0x1d0] sm:$0xff]
        %v3336 = vld [vmem:[%s217 + $0x1d8] sm:$0xff]
        %v3337 = vld [vmem:[%s217 + $0x1e0] sm:$0xff]
        %v3338 = vld [vmem:[%s217 + $0x1e8] sm:$0xff]
        %v3339 = vld [vmem:[%s217 + $0x1f0] sm:$0xff]
        %v3340 = vld [vmem:[%s217 + $0x1f8] sm:$0xff]
        %v3341 = vld [vmem:[%s217 + $0x200] sm:$0xff]
        %v3342 = vld [vmem:[%s217 + $0x208] sm:$0xff]
        %v3343 = vld [vmem:[%s217 + $0x210] sm:$0xff]
        %v3344 = vld [vmem:[%s217 + $0x218] sm:$0xff]
        %v3345 = vld [vmem:[%s217 + $0x220] sm:$0xff]
        %v3346 = vld [vmem:[%s217 + $0x228] sm:$0xff]
        %v3347 = vld [vmem:[%s217 + $0x230] sm:$0xff]
        %v3348 = vld [vmem:[%s217 + $0x238] sm:$0xff]
        %v3349 = vld [vmem:[%s217 + $0x240] sm:$0xff]
        %v3350 = vld [vmem:[%s217 + $0x248] sm:$0xff]
        %v3351 = vld [vmem:[%s217 + $0x250] sm:$0xff]
        %v3352 = vld [vmem:[%s217 + $0x258] sm:$0xff]
        %v3353 = vld [vmem:[%s217 + $0x260] sm:$0xff]
        %v3354 = vld [vmem:[%s217 + $0x268] sm:$0xff]
        %v3355 = vld [vmem:[%s217 + $0x270] sm:$0xff]
        %v3356 = vld [vmem:[%s217 + $0x278] sm:$0xff]
        %v3357 = vld [vmem:[%s217 + $0x280] sm:$0xff]
        %v3358 = vld [vmem:[%s217 + $0x288] sm:$0xff]
        %v3359 = vld [vmem:[%s217 + $0x290] sm:$0xff]
        %v3360 = vld [vmem:[%s217 + $0x298] sm:$0xff]
        %v3361 = vld [vmem:[%s217 + $0x2a0] sm:$0xff]
        %3444 = vrot.lane.b32.xlu0 %v3280, 92
        %v3445 = vpop.permute.xlu0 %3444
        %3446 = vrot.lane.b32.xlu0 %v3281, 92
        %v3447 = vpop.permute.xlu0 %3446
        %3448 = vrot.lane.b32.xlu0 %v3282, 92
        %v3449 = vpop.permute.xlu0 %3448
        %3450 = vrot.lane.b32.xlu0 %v3283, 92
        %v3451 = vpop.permute.xlu0 %3450
        %3452 = vrot.lane.b32.xlu0 %v3284, 92
        %v3453 = vpop.permute.xlu0 %3452
        %3454 = vrot.lane.b32.xlu0 %v3285, 92
        %v3455 = vpop.permute.xlu0 %3454
        %3456 = vrot.lane.b32.xlu0 %v3286, 92
        %v3457 = vpop.permute.xlu0 %3456
        %3458 = vrot.lane.b32.xlu0 %v3287, 92
        %v3459 = vpop.permute.xlu0 %3458
        %3460 = vrot.lane.b32.xlu0 %v3288, 92
        %v3461 = vpop.permute.xlu0 %3460
        %3462 = vrot.lane.b32.xlu0 %v3289, 92
        %v3463 = vpop.permute.xlu0 %3462
        %3464 = vrot.lane.b32.xlu0 %v3290, 92
        %v3465 = vpop.permute.xlu0 %3464
        %3466 = vrot.lane.b32.xlu0 %v3291, 92
        %v3467 = vpop.permute.xlu0 %3466
        %3468 = vrot.lane.b32.xlu0 %v3292, 92
        %v3469 = vpop.permute.xlu0 %3468
        %3470 = vrot.lane.b32.xlu0 %v3293, 92
        %v3471 = vpop.permute.xlu0 %3470
        %3472 = vrot.lane.b32.xlu0 %v3294, 92
        %v3473 = vpop.permute.xlu0 %3472
        %3474 = vrot.lane.b32.xlu0 %v3295, 92
        %v3475 = vpop.permute.xlu0 %3474
        %3476 = vrot.lane.b32.xlu0 %v3296, 92
        %v3477 = vpop.permute.xlu0 %3476
        %3478 = vrot.lane.b32.xlu0 %v3297, 92
        %v3479 = vpop.permute.xlu0 %3478
        %3480 = vrot.lane.b32.xlu0 %v3298, 92
        %v3481 = vpop.permute.xlu0 %3480
        %3482 = vrot.lane.b32.xlu0 %v3299, 92
        %v3483 = vpop.permute.xlu0 %3482
        %3484 = vrot.lane.b32.xlu0 %v3300, 92
        %v3485 = vpop.permute.xlu0 %3484
        %3486 = vrot.lane.b32.xlu0 %v3301, 92
        %v3487 = vpop.permute.xlu0 %3486
        %3488 = vrot.lane.b32.xlu0 %v3302, 92
        %v3489 = vpop.permute.xlu0 %3488
        %3490 = vrot.lane.b32.xlu0 %v3303, 92
        %v3491 = vpop.permute.xlu0 %3490
        %3492 = vrot.lane.b32.xlu0 %v3304, 92
        %v3493 = vpop.permute.xlu0 %3492
        %3494 = vrot.lane.b32.xlu0 %v3305, 92
        %v3495 = vpop.permute.xlu0 %3494
        %3496 = vrot.lane.b32.xlu0 %v3306, 92
        %v3497 = vpop.permute.xlu0 %3496
        %3498 = vrot.lane.b32.xlu0 %v3307, 92
        %v3499 = vpop.permute.xlu0 %3498
        %3500 = vrot.lane.b32.xlu0 %v3308, 92
        %v3501 = vpop.permute.xlu0 %3500
        %3502 = vrot.lane.b32.xlu0 %v3309, 92
        %v3503 = vpop.permute.xlu0 %3502
        %3504 = vrot.lane.b32.xlu0 %v3310, 92
        %v3505 = vpop.permute.xlu0 %3504
        %3506 = vrot.lane.b32.xlu0 %v3311, 92
        %v3507 = vpop.permute.xlu0 %3506
        %3508 = vrot.lane.b32.xlu0 %v3312, 92
        %v3509 = vpop.permute.xlu0 %3508
        %3510 = vrot.lane.b32.xlu0 %v3313, 92
        %v3511 = vpop.permute.xlu0 %3510
        %3512 = vrot.lane.b32.xlu0 %v3314, 92
        %v3513 = vpop.permute.xlu0 %3512
        %3514 = vrot.lane.b32.xlu0 %v3315, 92
        %v3515 = vpop.permute.xlu0 %3514
        %3516 = vrot.lane.b32.xlu0 %v3316, 92
        %v3517 = vpop.permute.xlu0 %3516
        %3518 = vrot.lane.b32.xlu0 %v3317, 92
        %v3519 = vpop.permute.xlu0 %3518
        %3520 = vrot.lane.b32.xlu0 %v3318, 92
        %v3521 = vpop.permute.xlu0 %3520
        %3522 = vrot.lane.b32.xlu0 %v3319, 92
        %v3523 = vpop.permute.xlu0 %3522
        %3524 = vrot.lane.b32.xlu0 %v3320, 92
        %v3525 = vpop.permute.xlu0 %3524
        %3526 = vrot.lane.b32.xlu0 %v3321, 92
        %v3527 = vpop.permute.xlu0 %3526
        %3528 = vrot.lane.b32.xlu0 %v3322, 92
        %v3529 = vpop.permute.xlu0 %3528
        %3530 = vrot.lane.b32.xlu0 %v3323, 92
        %v3531 = vpop.permute.xlu0 %3530
        %3532 = vrot.lane.b32.xlu0 %v3324, 92
        %v3533 = vpop.permute.xlu0 %3532
        %3534 = vrot.lane.b32.xlu0 %v3325, 92
        %v3535 = vpop.permute.xlu0 %3534
        %3536 = vrot.lane.b32.xlu0 %v3326, 92
        %v3537 = vpop.permute.xlu0 %3536
        %3538 = vrot.lane.b32.xlu0 %v3327, 92
        %v3539 = vpop.permute.xlu0 %3538
        %3540 = vrot.lane.b32.xlu0 %v3328, 92
        %v3541 = vpop.permute.xlu0 %3540
        %3542 = vrot.lane.b32.xlu0 %v3329, 92
        %v3543 = vpop.permute.xlu0 %3542
        %3544 = vrot.lane.b32.xlu0 %v3330, 92
        %v3545 = vpop.permute.xlu0 %3544
        %3546 = vrot.lane.b32.xlu0 %v3331, 92
        %v3547 = vpop.permute.xlu0 %3546
        %3548 = vrot.lane.b32.xlu0 %v3332, 92
        %v3549 = vpop.permute.xlu0 %3548
        %3550 = vrot.lane.b32.xlu0 %v3333, 92
        %v3551 = vpop.permute.xlu0 %3550
        %3552 = vrot.lane.b32.xlu0 %v3334, 92
        %v3553 = vpop.permute.xlu0 %3552
        %3554 = vrot.lane.b32.xlu0 %v3335, 92
        %v3555 = vpop.permute.xlu0 %3554
        %3556 = vrot.lane.b32.xlu0 %v3336, 92
        %v3557 = vpop.permute.xlu0 %3556
        %3558 = vrot.lane.b32.xlu0 %v3337, 92
        %v3559 = vpop.permute.xlu0 %3558
        %3560 = vrot.lane.b32.xlu0 %v3338, 92
        %v3561 = vpop.permute.xlu0 %3560
        %3562 = vrot.lane.b32.xlu0 %v3339, 92
        %v3563 = vpop.permute.xlu0 %3562
        %3564 = vrot.lane.b32.xlu0 %v3340, 92
        %v3565 = vpop.permute.xlu0 %3564
        %3566 = vrot.lane.b32.xlu0 %v3341, 92
        %v3567 = vpop.permute.xlu0 %3566
        %3568 = vrot.lane.b32.xlu0 %v3342, 92
        %v3569 = vpop.permute.xlu0 %3568
        %3570 = vrot.lane.b32.xlu0 %v3343, 92
        %v3571 = vpop.permute.xlu0 %3570
        %3572 = vrot.lane.b32.xlu0 %v3344, 92
        %v3573 = vpop.permute.xlu0 %3572
        %3574 = vrot.lane.b32.xlu0 %v3345, 92
        %v3575 = vpop.permute.xlu0 %3574
        %3576 = vrot.lane.b32.xlu0 %v3346, 92
        %v3577 = vpop.permute.xlu0 %3576
        %3578 = vrot.lane.b32.xlu0 %v3347, 92
        %v3579 = vpop.permute.xlu0 %3578
        %3580 = vrot.lane.b32.xlu0 %v3348, 92
        %v3581 = vpop.permute.xlu0 %3580
        %3582 = vrot.lane.b32.xlu0 %v3349, 92
        %v3583 = vpop.permute.xlu0 %3582
        %3584 = vrot.lane.b32.xlu0 %v3350, 92
        %v3585 = vpop.permute.xlu0 %3584
        %3586 = vrot.lane.b32.xlu0 %v3351, 92
        %v3587 = vpop.permute.xlu0 %3586
        %3588 = vrot.lane.b32.xlu0 %v3352, 92
        %v3589 = vpop.permute.xlu0 %3588
        %3590 = vrot.lane.b32.xlu0 %v3353, 92
        %v3591 = vpop.permute.xlu0 %3590
        %3592 = vrot.lane.b32.xlu0 %v3354, 92
        %v3593 = vpop.permute.xlu0 %3592
        %3594 = vrot.lane.b32.xlu0 %v3355, 92
        %v3595 = vpop.permute.xlu0 %3594
        %3596 = vrot.lane.b32.xlu0 %v3356, 92
        %v3597 = vpop.permute.xlu0 %3596
        %3598 = vrot.lane.b32.xlu0 %v3357, 92
        %v3599 = vpop.permute.xlu0 %3598
        %3600 = vrot.lane.b32.xlu0 %v3358, 92
        %v3601 = vpop.permute.xlu0 %3600
        %3602 = vrot.lane.b32.xlu0 %v3359, 92
        %v3603 = vpop.permute.xlu0 %3602
        %3604 = vrot.lane.b32.xlu0 %v3360, 92
        %v3605 = vpop.permute.xlu0 %3604
        %3606 = vrot.lane.b32.xlu0 %v3361, 92
        %v3607 = vpop.permute.xlu0 %3606
        %vm3608 = vcmask 752640
        %v3609 = vsel %vm3608, %v3445, %v3447
        %v3610 = vsel %vm3608, %v3447, %v3449
        %v3611 = vsel %vm3608, %v3449, %v3451
        %v3612 = vsel %vm3608, %v3451, %v3453
        %v3613 = vsel %vm3608, %v3453, %v3455
        %v3614 = vsel %vm3608, %v3455, %v3457
        %v3615 = vsel %vm3608, %v3457, %v3459
        %v3616 = vsel %vm3608, %v3459, %v3461
        %v3617 = vsel %vm3608, %v3461, %v3463
        %v3618 = vsel %vm3608, %v3463, %v3465
        %v3619 = vsel %vm3608, %v3465, %v3467
        %v3620 = vsel %vm3608, %v3467, %v3469
        %v3621 = vsel %vm3608, %v3469, %v3471
        %v3622 = vsel %vm3608, %v3471, %v3473
        %v3623 = vsel %vm3608, %v3473, %v3475
        %v3624 = vsel %vm3608, %v3475, %v3477
        %v3625 = vsel %vm3608, %v3477, %v3479
        %v3626 = vsel %vm3608, %v3479, %v3481
        %v3627 = vsel %vm3608, %v3481, %v3483
        %v3628 = vsel %vm3608, %v3483, %v3485
        %v3629 = vsel %vm3608, %v3485, %v3487
        %v3630 = vsel %vm3608, %v3487, %v3489
        %v3631 = vsel %vm3608, %v3489, %v3491
        %v3632 = vsel %vm3608, %v3491, %v3493
        %v3633 = vsel %vm3608, %v3493, %v3495
        %v3634 = vsel %vm3608, %v3495, %v3497
        %v3635 = vsel %vm3608, %v3497, %v3499
        %v3636 = vsel %vm3608, %v3499, %v3501
        %v3637 = vsel %vm3608, %v3501, %v3503
        %v3638 = vsel %vm3608, %v3503, %v3505
        %v3639 = vsel %vm3608, %v3505, %v3507
        %v3640 = vsel %vm3608, %v3507, %v3509
        %v3641 = vsel %vm3608, %v3509, %v3511
        %v3642 = vsel %vm3608, %v3511, %v3513
        %v3643 = vsel %vm3608, %v3513, %v3515
        %v3644 = vsel %vm3608, %v3515, %v3517
        %v3645 = vsel %vm3608, %v3517, %v3519
        %v3646 = vsel %vm3608, %v3519, %v3521
        %v3647 = vsel %vm3608, %v3521, %v3523
        %v3648 = vsel %vm3608, %v3523, %v3525
        %v3649 = vsel %vm3608, %v3527, %v3529
        %v3650 = vsel %vm3608, %v3529, %v3531
        %v3651 = vsel %vm3608, %v3531, %v3533
        %v3652 = vsel %vm3608, %v3533, %v3535
        %v3653 = vsel %vm3608, %v3535, %v3537
        %v3654 = vsel %vm3608, %v3537, %v3539
        %v3655 = vsel %vm3608, %v3539, %v3541
        %v3656 = vsel %vm3608, %v3541, %v3543
        %v3657 = vsel %vm3608, %v3543, %v3545
        %v3658 = vsel %vm3608, %v3545, %v3547
        %v3659 = vsel %vm3608, %v3547, %v3549
        %v3660 = vsel %vm3608, %v3549, %v3551
        %v3661 = vsel %vm3608, %v3551, %v3553
        %v3662 = vsel %vm3608, %v3553, %v3555
        %v3663 = vsel %vm3608, %v3555, %v3557
        %v3664 = vsel %vm3608, %v3557, %v3559
        %v3665 = vsel %vm3608, %v3559, %v3561
        %v3666 = vsel %vm3608, %v3561, %v3563
        %v3667 = vsel %vm3608, %v3563, %v3565
        %v3668 = vsel %vm3608, %v3565, %v3567
        %v3669 = vsel %vm3608, %v3567, %v3569
        %v3670 = vsel %vm3608, %v3569, %v3571
        %v3671 = vsel %vm3608, %v3571, %v3573
        %v3672 = vsel %vm3608, %v3573, %v3575
        %v3673 = vsel %vm3608, %v3575, %v3577
        %v3674 = vsel %vm3608, %v3577, %v3579
        %v3675 = vsel %vm3608, %v3579, %v3581
        %v3676 = vsel %vm3608, %v3581, %v3583
        %v3677 = vsel %vm3608, %v3583, %v3585
        %v3678 = vsel %vm3608, %v3585, %v3587
        %v3679 = vsel %vm3608, %v3587, %v3589
        %v3680 = vsel %vm3608, %v3589, %v3591
        %v3681 = vsel %vm3608, %v3591, %v3593
        %v3682 = vsel %vm3608, %v3593, %v3595
        %v3683 = vsel %vm3608, %v3595, %v3597
        %v3684 = vsel %vm3608, %v3597, %v3599
        %v3685 = vsel %vm3608, %v3599, %v3601
        %v3686 = vsel %vm3608, %v3601, %v3603
        %v3687 = vsel %vm3608, %v3603, %v3605
        %v3688 = vsel %vm3608, %v3605, %v3607
        %3771 = vst [vmem:[#allocation2 + $0xf60] sm:$0xff] %v3609
        %3772 = vst [vmem:[#allocation2 + $0xf68] sm:$0xff] %v3610
        %3773 = vst [vmem:[#allocation2 + $0xf70] sm:$0xff] %v3611
        %3774 = vst [vmem:[#allocation2 + $0xf78] sm:$0xff] %v3612
        %3775 = vst [vmem:[#allocation2 + $0xf80] sm:$0xff] %v3613
        %3776 = vst [vmem:[#allocation2 + $0xf88] sm:$0xff] %v3614
        %3777 = vst [vmem:[#allocation2 + $0xf90] sm:$0xff] %v3615
        %3778 = vst [vmem:[#allocation2 + $0xf98] sm:$0xff] %v3616
        %3779 = vst [vmem:[#allocation2 + $0xfa0] sm:$0xff] %v3617
        %3780 = vst [vmem:[#allocation2 + $0xfa8] sm:$0xff] %v3618
        %3781 = vst [vmem:[#allocation2 + $0xfb0] sm:$0xff] %v3619
        %3782 = vst [vmem:[#allocation2 + $0xfb8] sm:$0xff] %v3620
        %3783 = vst [vmem:[#allocation2 + $0xfc0] sm:$0xff] %v3621
        %3784 = vst [vmem:[#allocation2 + $0xfc8] sm:$0xff] %v3622
        %3785 = vst [vmem:[#allocation2 + $0xfd0] sm:$0xff] %v3623
        %3786 = vst [vmem:[#allocation2 + $0xfd8] sm:$0xff] %v3624
        %3787 = vst [vmem:[#allocation2 + $0xfe0] sm:$0xff] %v3625
        %3788 = vst [vmem:[#allocation2 + $0xfe8] sm:$0xff] %v3626
        %3789 = vst [vmem:[#allocation2 + $0xff0] sm:$0xff] %v3627
        %3790 = vst [vmem:[#allocation2 + $0xff8] sm:$0xff] %v3628
        %3791 = vst [vmem:[#allocation2 + $0x1000] sm:$0xff] %v3629
        %3792 = vst [vmem:[#allocation2 + $0x1008] sm:$0xff] %v3630
        %3793 = vst [vmem:[#allocation2 + $0x1010] sm:$0xff] %v3631
        %3794 = vst [vmem:[#allocation2 + $0x1018] sm:$0xff] %v3632
        %3795 = vst [vmem:[#allocation2 + $0x1020] sm:$0xff] %v3633
        %3796 = vst [vmem:[#allocation2 + $0x1028] sm:$0xff] %v3634
        %3797 = vst [vmem:[#allocation2 + $0x1030] sm:$0xff] %v3635
        %3798 = vst [vmem:[#allocation2 + $0x1038] sm:$0xff] %v3636
        %3799 = vst [vmem:[#allocation2 + $0x1040] sm:$0xff] %v3637
        %3800 = vst [vmem:[#allocation2 + $0x1048] sm:$0xff] %v3638
        %3801 = vst [vmem:[#allocation2 + $0x1050] sm:$0xff] %v3639
        %3802 = vst [vmem:[#allocation2 + $0x1058] sm:$0xff] %v3640
        %3803 = vst [vmem:[#allocation2 + $0x1060] sm:$0xff] %v3641
        %3804 = vst [vmem:[#allocation2 + $0x1068] sm:$0xff] %v3642
        %3805 = vst [vmem:[#allocation2 + $0x1070] sm:$0xff] %v3643
        %3806 = vst [vmem:[#allocation2 + $0x1078] sm:$0xff] %v3644
        %3807 = vst [vmem:[#allocation2 + $0x1080] sm:$0xff] %v3645
        %3808 = vst [vmem:[#allocation2 + $0x1088] sm:$0xff] %v3646
        %3809 = vst [vmem:[#allocation2 + $0x1090] sm:$0xff] %v3647
        %3810 = vst [vmem:[#allocation2 + $0x1098] sm:$0xff] %v3648
        %3811 = vst.msk [vmem:[#allocation2 + $0x10a0] sm:$0xff] %vm372, %v3525
        %3812 = vst [vmem:[#allocation2 + $0x10a8] sm:$0xff] %v3649
        %3813 = vst [vmem:[#allocation2 + $0x10b0] sm:$0xff] %v3650
        %3814 = vst [vmem:[#allocation2 + $0x10b8] sm:$0xff] %v3651
        %3815 = vst [vmem:[#allocation2 + $0x10c0] sm:$0xff] %v3652
        %3816 = vst [vmem:[#allocation2 + $0x10c8] sm:$0xff] %v3653
        %3817 = vst [vmem:[#allocation2 + $0x10d0] sm:$0xff] %v3654
        %3818 = vst [vmem:[#allocation2 + $0x10d8] sm:$0xff] %v3655
        %3819 = vst [vmem:[#allocation2 + $0x10e0] sm:$0xff] %v3656
        %3820 = vst [vmem:[#allocation2 + $0x10e8] sm:$0xff] %v3657
        %3821 = vst [vmem:[#allocation2 + $0x10f0] sm:$0xff] %v3658
        %3822 = vst [vmem:[#allocation2 + $0x10f8] sm:$0xff] %v3659
        %3823 = vst [vmem:[#allocation2 + $0x1100] sm:$0xff] %v3660
        %3824 = vst [vmem:[#allocation2 + $0x1108] sm:$0xff] %v3661
        %3825 = vst [vmem:[#allocation2 + $0x1110] sm:$0xff] %v3662
        %3826 = vst [vmem:[#allocation2 + $0x1118] sm:$0xff] %v3663
        %3827 = vst [vmem:[#allocation2 + $0x1120] sm:$0xff] %v3664
        %3828 = vst [vmem:[#allocation2 + $0x1128] sm:$0xff] %v3665
        %3829 = vst [vmem:[#allocation2 + $0x1130] sm:$0xff] %v3666
        %3830 = vst [vmem:[#allocation2 + $0x1138] sm:$0xff] %v3667
        %3831 = vst [vmem:[#allocation2 + $0x1140] sm:$0xff] %v3668
        %3832 = vst [vmem:[#allocation2 + $0x1148] sm:$0xff] %v3669
        %3833 = vst [vmem:[#allocation2 + $0x1150] sm:$0xff] %v3670
        %3834 = vst [vmem:[#allocation2 + $0x1158] sm:$0xff] %v3671
        %3835 = vst [vmem:[#allocation2 + $0x1160] sm:$0xff] %v3672
        %3836 = vst [vmem:[#allocation2 + $0x1168] sm:$0xff] %v3673
        %3837 = vst [vmem:[#allocation2 + $0x1170] sm:$0xff] %v3674
        %3838 = vst [vmem:[#allocation2 + $0x1178] sm:$0xff] %v3675
        %3839 = vst [vmem:[#allocation2 + $0x1180] sm:$0xff] %v3676
        %3840 = vst [vmem:[#allocation2 + $0x1188] sm:$0xff] %v3677
        %3841 = vst [vmem:[#allocation2 + $0x1190] sm:$0xff] %v3678
        %3842 = vst [vmem:[#allocation2 + $0x1198] sm:$0xff] %v3679
        %3843 = vst [vmem:[#allocation2 + $0x11a0] sm:$0xff] %v3680
        %3844 = vst [vmem:[#allocation2 + $0x11a8] sm:$0xff] %v3681
        %3845 = vst [vmem:[#allocation2 + $0x11b0] sm:$0xff] %v3682
        %3846 = vst [vmem:[#allocation2 + $0x11b8] sm:$0xff] %v3683
        %3847 = vst [vmem:[#allocation2 + $0x11c0] sm:$0xff] %v3684
        %3848 = vst [vmem:[#allocation2 + $0x11c8] sm:$0xff] %v3685
        %3849 = vst [vmem:[#allocation2 + $0x11d0] sm:$0xff] %v3686
        %3850 = vst [vmem:[#allocation2 + $0x11d8] sm:$0xff] %v3687
        %3851 = vst [vmem:[#allocation2 + $0x11e0] sm:$0xff] %v3688
        %3852 = vst.msk [vmem:[#allocation2 + $0x11e8] sm:$0xff] %vm372, %v3607
        %v3853 = vld [vmem:[%s217] sm:$0xff]
        %v3854 = vld [vmem:[%s217 + $0x8] sm:$0xff]
        %v3855 = vld [vmem:[%s217 + $0x10] sm:$0xff]
        %v3856 = vld [vmem:[%s217 + $0x18] sm:$0xff]
        %v3857 = vld [vmem:[%s217 + $0x20] sm:$0xff]
        %v3858 = vld [vmem:[%s217 + $0x28] sm:$0xff]
        %v3859 = vld [vmem:[%s217 + $0x30] sm:$0xff]
        %v3860 = vld [vmem:[%s217 + $0x38] sm:$0xff]
        %v3861 = vld [vmem:[%s217 + $0x40] sm:$0xff]
        %v3862 = vld [vmem:[%s217 + $0x48] sm:$0xff]
        %v3863 = vld [vmem:[%s217 + $0x50] sm:$0xff]
        %v3864 = vld [vmem:[%s217 + $0x58] sm:$0xff]
        %v3865 = vld [vmem:[%s217 + $0x60] sm:$0xff]
        %v3866 = vld [vmem:[%s217 + $0x68] sm:$0xff]
        %v3867 = vld [vmem:[%s217 + $0x70] sm:$0xff]
        %v3868 = vld [vmem:[%s217 + $0x78] sm:$0xff]
        %v3869 = vld [vmem:[%s217 + $0x80] sm:$0xff]
        %v3870 = vld [vmem:[%s217 + $0x88] sm:$0xff]
        %v3871 = vld [vmem:[%s217 + $0x90] sm:$0xff]
        %v3872 = vld [vmem:[%s217 + $0x98] sm:$0xff]
        %v3873 = vld [vmem:[%s217 + $0xa0] sm:$0xff]
        %v3874 = vld [vmem:[%s217 + $0xa8] sm:$0xff]
        %v3875 = vld [vmem:[%s217 + $0xb0] sm:$0xff]
        %v3876 = vld [vmem:[%s217 + $0xb8] sm:$0xff]
        %v3877 = vld [vmem:[%s217 + $0xc0] sm:$0xff]
        %v3878 = vld [vmem:[%s217 + $0xc8] sm:$0xff]
        %v3879 = vld [vmem:[%s217 + $0xd0] sm:$0xff]
        %v3880 = vld [vmem:[%s217 + $0xd8] sm:$0xff]
        %v3881 = vld [vmem:[%s217 + $0xe0] sm:$0xff]
        %v3882 = vld [vmem:[%s217 + $0xe8] sm:$0xff]
        %v3883 = vld [vmem:[%s217 + $0xf0] sm:$0xff]
        %v3884 = vld [vmem:[%s217 + $0xf8] sm:$0xff]
        %v3885 = vld [vmem:[%s217 + $0x100] sm:$0xff]
        %v3886 = vld [vmem:[%s217 + $0x108] sm:$0xff]
        %v3887 = vld [vmem:[%s217 + $0x110] sm:$0xff]
        %v3888 = vld [vmem:[%s217 + $0x118] sm:$0xff]
        %v3889 = vld [vmem:[%s217 + $0x120] sm:$0xff]
        %v3890 = vld [vmem:[%s217 + $0x128] sm:$0xff]
        %v3891 = vld [vmem:[%s217 + $0x130] sm:$0xff]
        %v3892 = vld [vmem:[%s217 + $0x138] sm:$0xff]
        %v3893 = vld [vmem:[%s217 + $0x140] sm:$0xff]
        %v3894 = vld [vmem:[%s217 + $0x160] sm:$0xff]
        %v3895 = vld [vmem:[%s217 + $0x168] sm:$0xff]
        %v3896 = vld [vmem:[%s217 + $0x170] sm:$0xff]
        %v3897 = vld [vmem:[%s217 + $0x178] sm:$0xff]
        %v3898 = vld [vmem:[%s217 + $0x180] sm:$0xff]
        %v3899 = vld [vmem:[%s217 + $0x188] sm:$0xff]
        %v3900 = vld [vmem:[%s217 + $0x190] sm:$0xff]
        %v3901 = vld [vmem:[%s217 + $0x198] sm:$0xff]
        %v3902 = vld [vmem:[%s217 + $0x1a0] sm:$0xff]
        %v3903 = vld [vmem:[%s217 + $0x1a8] sm:$0xff]
        %v3904 = vld [vmem:[%s217 + $0x1b0] sm:$0xff]
        %v3905 = vld [vmem:[%s217 + $0x1b8] sm:$0xff]
        %v3906 = vld [vmem:[%s217 + $0x1c0] sm:$0xff]
        %v3907 = vld [vmem:[%s217 + $0x1c8] sm:$0xff]
        %v3908 = vld [vmem:[%s217 + $0x1d0] sm:$0xff]
        %v3909 = vld [vmem:[%s217 + $0x1d8] sm:$0xff]
        %v3910 = vld [vmem:[%s217 + $0x1e0] sm:$0xff]
        %v3911 = vld [vmem:[%s217 + $0x1e8] sm:$0xff]
        %v3912 = vld [vmem:[%s217 + $0x1f0] sm:$0xff]
        %v3913 = vld [vmem:[%s217 + $0x1f8] sm:$0xff]
        %v3914 = vld [vmem:[%s217 + $0x200] sm:$0xff]
        %v3915 = vld [vmem:[%s217 + $0x208] sm:$0xff]
        %v3916 = vld [vmem:[%s217 + $0x210] sm:$0xff]
        %v3917 = vld [vmem:[%s217 + $0x218] sm:$0xff]
        %v3918 = vld [vmem:[%s217 + $0x220] sm:$0xff]
        %v3919 = vld [vmem:[%s217 + $0x228] sm:$0xff]
        %v3920 = vld [vmem:[%s217 + $0x230] sm:$0xff]
        %v3921 = vld [vmem:[%s217 + $0x238] sm:$0xff]
        %v3922 = vld [vmem:[%s217 + $0x240] sm:$0xff]
        %v3923 = vld [vmem:[%s217 + $0x248] sm:$0xff]
        %v3924 = vld [vmem:[%s217 + $0x250] sm:$0xff]
        %v3925 = vld [vmem:[%s217 + $0x258] sm:$0xff]
        %v3926 = vld [vmem:[%s217 + $0x260] sm:$0xff]
        %v3927 = vld [vmem:[%s217 + $0x268] sm:$0xff]
        %v3928 = vld [vmem:[%s217 + $0x270] sm:$0xff]
        %v3929 = vld [vmem:[%s217 + $0x278] sm:$0xff]
        %v3930 = vld [vmem:[%s217 + $0x280] sm:$0xff]
        %v3931 = vld [vmem:[%s217 + $0x288] sm:$0xff]
        %v3932 = vld [vmem:[%s217 + $0x290] sm:$0xff]
        %v3933 = vld [vmem:[%s217 + $0x298] sm:$0xff]
        %v3934 = vld [vmem:[%s217 + $0x2a0] sm:$0xff]
        %4017 = vrot.lane.b32.xlu0 %v3853, 91
        %v4018 = vpop.permute.xlu0 %4017
        %4019 = vrot.lane.b32.xlu0 %v3854, 91
        %v4020 = vpop.permute.xlu0 %4019
        %4021 = vrot.lane.b32.xlu0 %v3855, 91
        %v4022 = vpop.permute.xlu0 %4021
        %4023 = vrot.lane.b32.xlu0 %v3856, 91
        %v4024 = vpop.permute.xlu0 %4023
        %4025 = vrot.lane.b32.xlu0 %v3857, 91
        %v4026 = vpop.permute.xlu0 %4025
        %4027 = vrot.lane.b32.xlu0 %v3858, 91
        %v4028 = vpop.permute.xlu0 %4027
        %4029 = vrot.lane.b32.xlu0 %v3859, 91
        %v4030 = vpop.permute.xlu0 %4029
        %4031 = vrot.lane.b32.xlu0 %v3860, 91
        %v4032 = vpop.permute.xlu0 %4031
        %4033 = vrot.lane.b32.xlu0 %v3861, 91
        %v4034 = vpop.permute.xlu0 %4033
        %4035 = vrot.lane.b32.xlu0 %v3862, 91
        %v4036 = vpop.permute.xlu0 %4035
        %4037 = vrot.lane.b32.xlu0 %v3863, 91
        %v4038 = vpop.permute.xlu0 %4037
        %4039 = vrot.lane.b32.xlu0 %v3864, 91
        %v4040 = vpop.permute.xlu0 %4039
        %4041 = vrot.lane.b32.xlu0 %v3865, 91
        %v4042 = vpop.permute.xlu0 %4041
        %4043 = vrot.lane.b32.xlu0 %v3866, 91
        %v4044 = vpop.permute.xlu0 %4043
        %4045 = vrot.lane.b32.xlu0 %v3867, 91
        %v4046 = vpop.permute.xlu0 %4045
        %4047 = vrot.lane.b32.xlu0 %v3868, 91
        %v4048 = vpop.permute.xlu0 %4047
        %4049 = vrot.lane.b32.xlu0 %v3869, 91
        %v4050 = vpop.permute.xlu0 %4049
        %4051 = vrot.lane.b32.xlu0 %v3870, 91
        %v4052 = vpop.permute.xlu0 %4051
        %4053 = vrot.lane.b32.xlu0 %v3871, 91
        %v4054 = vpop.permute.xlu0 %4053
        %4055 = vrot.lane.b32.xlu0 %v3872, 91
        %v4056 = vpop.permute.xlu0 %4055
        %4057 = vrot.lane.b32.xlu0 %v3873, 91
        %v4058 = vpop.permute.xlu0 %4057
        %4059 = vrot.lane.b32.xlu0 %v3874, 91
        %v4060 = vpop.permute.xlu0 %4059
        %4061 = vrot.lane.b32.xlu0 %v3875, 91
        %v4062 = vpop.permute.xlu0 %4061
        %4063 = vrot.lane.b32.xlu0 %v3876, 91
        %v4064 = vpop.permute.xlu0 %4063
        %4065 = vrot.lane.b32.xlu0 %v3877, 91
        %v4066 = vpop.permute.xlu0 %4065
        %4067 = vrot.lane.b32.xlu0 %v3878, 91
        %v4068 = vpop.permute.xlu0 %4067
        %4069 = vrot.lane.b32.xlu0 %v3879, 91
        %v4070 = vpop.permute.xlu0 %4069
        %4071 = vrot.lane.b32.xlu0 %v3880, 91
        %v4072 = vpop.permute.xlu0 %4071
        %4073 = vrot.lane.b32.xlu0 %v3881, 91
        %v4074 = vpop.permute.xlu0 %4073
        %4075 = vrot.lane.b32.xlu0 %v3882, 91
        %v4076 = vpop.permute.xlu0 %4075
        %4077 = vrot.lane.b32.xlu0 %v3883, 91
        %v4078 = vpop.permute.xlu0 %4077
        %4079 = vrot.lane.b32.xlu0 %v3884, 91
        %v4080 = vpop.permute.xlu0 %4079
        %4081 = vrot.lane.b32.xlu0 %v3885, 91
        %v4082 = vpop.permute.xlu0 %4081
        %4083 = vrot.lane.b32.xlu0 %v3886, 91
        %v4084 = vpop.permute.xlu0 %4083
        %4085 = vrot.lane.b32.xlu0 %v3887, 91
        %v4086 = vpop.permute.xlu0 %4085
        %4087 = vrot.lane.b32.xlu0 %v3888, 91
        %v4088 = vpop.permute.xlu0 %4087
        %4089 = vrot.lane.b32.xlu0 %v3889, 91
        %v4090 = vpop.permute.xlu0 %4089
        %4091 = vrot.lane.b32.xlu0 %v3890, 91
        %v4092 = vpop.permute.xlu0 %4091
        %4093 = vrot.lane.b32.xlu0 %v3891, 91
        %v4094 = vpop.permute.xlu0 %4093
        %4095 = vrot.lane.b32.xlu0 %v3892, 91
        %v4096 = vpop.permute.xlu0 %4095
        %4097 = vrot.lane.b32.xlu0 %v3893, 91
        %v4098 = vpop.permute.xlu0 %4097
        %4099 = vrot.lane.b32.xlu0 %v3894, 91
        %v4100 = vpop.permute.xlu0 %4099
        %4101 = vrot.lane.b32.xlu0 %v3895, 91
        %v4102 = vpop.permute.xlu0 %4101
        %4103 = vrot.lane.b32.xlu0 %v3896, 91
        %v4104 = vpop.permute.xlu0 %4103
        %4105 = vrot.lane.b32.xlu0 %v3897, 91
        %v4106 = vpop.permute.xlu0 %4105
        %4107 = vrot.lane.b32.xlu0 %v3898, 91
        %v4108 = vpop.permute.xlu0 %4107
        %4109 = vrot.lane.b32.xlu0 %v3899, 91
        %v4110 = vpop.permute.xlu0 %4109
        %4111 = vrot.lane.b32.xlu0 %v3900, 91
        %v4112 = vpop.permute.xlu0 %4111
        %4113 = vrot.lane.b32.xlu0 %v3901, 91
        %v4114 = vpop.permute.xlu0 %4113
        %4115 = vrot.lane.b32.xlu0 %v3902, 91
        %v4116 = vpop.permute.xlu0 %4115
        %4117 = vrot.lane.b32.xlu0 %v3903, 91
        %v4118 = vpop.permute.xlu0 %4117
        %4119 = vrot.lane.b32.xlu0 %v3904, 91
        %v4120 = vpop.permute.xlu0 %4119
        %4121 = vrot.lane.b32.xlu0 %v3905, 91
        %v4122 = vpop.permute.xlu0 %4121
        %4123 = vrot.lane.b32.xlu0 %v3906, 91
        %v4124 = vpop.permute.xlu0 %4123
        %4125 = vrot.lane.b32.xlu0 %v3907, 91
        %v4126 = vpop.permute.xlu0 %4125
        %4127 = vrot.lane.b32.xlu0 %v3908, 91
        %v4128 = vpop.permute.xlu0 %4127
        %4129 = vrot.lane.b32.xlu0 %v3909, 91
        %v4130 = vpop.permute.xlu0 %4129
        %4131 = vrot.lane.b32.xlu0 %v3910, 91
        %v4132 = vpop.permute.xlu0 %4131
        %4133 = vrot.lane.b32.xlu0 %v3911, 91
        %v4134 = vpop.permute.xlu0 %4133
        %4135 = vrot.lane.b32.xlu0 %v3912, 91
        %v4136 = vpop.permute.xlu0 %4135
        %4137 = vrot.lane.b32.xlu0 %v3913, 91
        %v4138 = vpop.permute.xlu0 %4137
        %4139 = vrot.lane.b32.xlu0 %v3914, 91
        %v4140 = vpop.permute.xlu0 %4139
        %4141 = vrot.lane.b32.xlu0 %v3915, 91
        %v4142 = vpop.permute.xlu0 %4141
        %4143 = vrot.lane.b32.xlu0 %v3916, 91
        %v4144 = vpop.permute.xlu0 %4143
        %4145 = vrot.lane.b32.xlu0 %v3917, 91
        %v4146 = vpop.permute.xlu0 %4145
        %4147 = vrot.lane.b32.xlu0 %v3918, 91
        %v4148 = vpop.permute.xlu0 %4147
        %4149 = vrot.lane.b32.xlu0 %v3919, 91
        %v4150 = vpop.permute.xlu0 %4149
        %4151 = vrot.lane.b32.xlu0 %v3920, 91
        %v4152 = vpop.permute.xlu0 %4151
        %4153 = vrot.lane.b32.xlu0 %v3921, 91
        %v4154 = vpop.permute.xlu0 %4153
        %4155 = vrot.lane.b32.xlu0 %v3922, 91
        %v4156 = vpop.permute.xlu0 %4155
        %4157 = vrot.lane.b32.xlu0 %v3923, 91
        %v4158 = vpop.permute.xlu0 %4157
        %4159 = vrot.lane.b32.xlu0 %v3924, 91
        %v4160 = vpop.permute.xlu0 %4159
        %4161 = vrot.lane.b32.xlu0 %v3925, 91
        %v4162 = vpop.permute.xlu0 %4161
        %4163 = vrot.lane.b32.xlu0 %v3926, 91
        %v4164 = vpop.permute.xlu0 %4163
        %4165 = vrot.lane.b32.xlu0 %v3927, 91
        %v4166 = vpop.permute.xlu0 %4165
        %4167 = vrot.lane.b32.xlu0 %v3928, 91
        %v4168 = vpop.permute.xlu0 %4167
        %4169 = vrot.lane.b32.xlu0 %v3929, 91
        %v4170 = vpop.permute.xlu0 %4169
        %4171 = vrot.lane.b32.xlu0 %v3930, 91
        %v4172 = vpop.permute.xlu0 %4171
        %4173 = vrot.lane.b32.xlu0 %v3931, 91
        %v4174 = vpop.permute.xlu0 %4173
        %4175 = vrot.lane.b32.xlu0 %v3932, 91
        %v4176 = vpop.permute.xlu0 %4175
        %4177 = vrot.lane.b32.xlu0 %v3933, 91
        %v4178 = vpop.permute.xlu0 %4177
        %4179 = vrot.lane.b32.xlu0 %v3934, 91
        %v4180 = vpop.permute.xlu0 %4179
        %vm4181 = vcmask 744448
        %v4182 = vsel %vm4181, %v4018, %v4020
        %v4183 = vsel %vm4181, %v4020, %v4022
        %v4184 = vsel %vm4181, %v4022, %v4024
        %v4185 = vsel %vm4181, %v4024, %v4026
        %v4186 = vsel %vm4181, %v4026, %v4028
        %v4187 = vsel %vm4181, %v4028, %v4030
        %v4188 = vsel %vm4181, %v4030, %v4032
        %v4189 = vsel %vm4181, %v4032, %v4034
        %v4190 = vsel %vm4181, %v4034, %v4036
        %v4191 = vsel %vm4181, %v4036, %v4038
        %v4192 = vsel %vm4181, %v4038, %v4040
        %v4193 = vsel %vm4181, %v4040, %v4042
        %v4194 = vsel %vm4181, %v4042, %v4044
        %v4195 = vsel %vm4181, %v4044, %v4046
        %v4196 = vsel %vm4181, %v4046, %v4048
        %v4197 = vsel %vm4181, %v4048, %v4050
        %v4198 = vsel %vm4181, %v4050, %v4052
        %v4199 = vsel %vm4181, %v4052, %v4054
        %v4200 = vsel %vm4181, %v4054, %v4056
        %v4201 = vsel %vm4181, %v4056, %v4058
        %v4202 = vsel %vm4181, %v4058, %v4060
        %v4203 = vsel %vm4181, %v4060, %v4062
        %v4204 = vsel %vm4181, %v4062, %v4064
        %v4205 = vsel %vm4181, %v4064, %v4066
        %v4206 = vsel %vm4181, %v4066, %v4068
        %v4207 = vsel %vm4181, %v4068, %v4070
        %v4208 = vsel %vm4181, %v4070, %v4072
        %v4209 = vsel %vm4181, %v4072, %v4074
        %v4210 = vsel %vm4181, %v4074, %v4076
        %v4211 = vsel %vm4181, %v4076, %v4078
        %v4212 = vsel %vm4181, %v4078, %v4080
        %v4213 = vsel %vm4181, %v4080, %v4082
        %v4214 = vsel %vm4181, %v4082, %v4084
        %v4215 = vsel %vm4181, %v4084, %v4086
        %v4216 = vsel %vm4181, %v4086, %v4088
        %v4217 = vsel %vm4181, %v4088, %v4090
        %v4218 = vsel %vm4181, %v4090, %v4092
        %v4219 = vsel %vm4181, %v4092, %v4094
        %v4220 = vsel %vm4181, %v4094, %v4096
        %v4221 = vsel %vm4181, %v4096, %v4098
        %v4222 = vsel %vm4181, %v4100, %v4102
        %v4223 = vsel %vm4181, %v4102, %v4104
        %v4224 = vsel %vm4181, %v4104, %v4106
        %v4225 = vsel %vm4181, %v4106, %v4108
        %v4226 = vsel %vm4181, %v4108, %v4110
        %v4227 = vsel %vm4181, %v4110, %v4112
        %v4228 = vsel %vm4181, %v4112, %v4114
        %v4229 = vsel %vm4181, %v4114, %v4116
        %v4230 = vsel %vm4181, %v4116, %v4118
        %v4231 = vsel %vm4181, %v4118, %v4120
        %v4232 = vsel %vm4181, %v4120, %v4122
        %v4233 = vsel %vm4181, %v4122, %v4124
        %v4234 = vsel %vm4181, %v4124, %v4126
        %v4235 = vsel %vm4181, %v4126, %v4128
        %v4236 = vsel %vm4181, %v4128, %v4130
        %v4237 = vsel %vm4181, %v4130, %v4132
        %v4238 = vsel %vm4181, %v4132, %v4134
        %v4239 = vsel %vm4181, %v4134, %v4136
        %v4240 = vsel %vm4181, %v4136, %v4138
        %v4241 = vsel %vm4181, %v4138, %v4140
        %v4242 = vsel %vm4181, %v4140, %v4142
        %v4243 = vsel %vm4181, %v4142, %v4144
        %v4244 = vsel %vm4181, %v4144, %v4146
        %v4245 = vsel %vm4181, %v4146, %v4148
        %v4246 = vsel %vm4181, %v4148, %v4150
        %v4247 = vsel %vm4181, %v4150, %v4152
        %v4248 = vsel %vm4181, %v4152, %v4154
        %v4249 = vsel %vm4181, %v4154, %v4156
        %v4250 = vsel %vm4181, %v4156, %v4158
        %v4251 = vsel %vm4181, %v4158, %v4160
        %v4252 = vsel %vm4181, %v4160, %v4162
        %v4253 = vsel %vm4181, %v4162, %v4164
        %v4254 = vsel %vm4181, %v4164, %v4166
        %v4255 = vsel %vm4181, %v4166, %v4168
        %v4256 = vsel %vm4181, %v4168, %v4170
        %v4257 = vsel %vm4181, %v4170, %v4172
        %v4258 = vsel %vm4181, %v4172, %v4174
        %v4259 = vsel %vm4181, %v4174, %v4176
        %v4260 = vsel %vm4181, %v4176, %v4178
        %v4261 = vsel %vm4181, %v4178, %v4180
        %4344 = vst [vmem:[#allocation2 + $0x11f0] sm:$0xff] %v4182
        %4345 = vst [vmem:[#allocation2 + $0x11f8] sm:$0xff] %v4183
        %4346 = vst [vmem:[#allocation2 + $0x1200] sm:$0xff] %v4184
        %4347 = vst [vmem:[#allocation2 + $0x1208] sm:$0xff] %v4185
        %4348 = vst [vmem:[#allocation2 + $0x1210] sm:$0xff] %v4186
        %4349 = vst [vmem:[#allocation2 + $0x1218] sm:$0xff] %v4187
        %4350 = vst [vmem:[#allocation2 + $0x1220] sm:$0xff] %v4188
        %4351 = vst [vmem:[#allocation2 + $0x1228] sm:$0xff] %v4189
        %4352 = vst [vmem:[#allocation2 + $0x1230] sm:$0xff] %v4190
        %4353 = vst [vmem:[#allocation2 + $0x1238] sm:$0xff] %v4191
        %4354 = vst [vmem:[#allocation2 + $0x1240] sm:$0xff] %v4192
        %4355 = vst [vmem:[#allocation2 + $0x1248] sm:$0xff] %v4193
        %4356 = vst [vmem:[#allocation2 + $0x1250] sm:$0xff] %v4194
        %4357 = vst [vmem:[#allocation2 + $0x1258] sm:$0xff] %v4195
        %4358 = vst [vmem:[#allocation2 + $0x1260] sm:$0xff] %v4196
        %4359 = vst [vmem:[#allocation2 + $0x1268] sm:$0xff] %v4197
        %4360 = vst [vmem:[#allocation2 + $0x1270] sm:$0xff] %v4198
        %4361 = vst [vmem:[#allocation2 + $0x1278] sm:$0xff] %v4199
        %4362 = vst [vmem:[#allocation2 + $0x1280] sm:$0xff] %v4200
        %4363 = vst [vmem:[#allocation2 + $0x1288] sm:$0xff] %v4201
        %4364 = vst [vmem:[#allocation2 + $0x1290] sm:$0xff] %v4202
        %4365 = vst [vmem:[#allocation2 + $0x1298] sm:$0xff] %v4203
        %4366 = vst [vmem:[#allocation2 + $0x12a0] sm:$0xff] %v4204
        %4367 = vst [vmem:[#allocation2 + $0x12a8] sm:$0xff] %v4205
        %4368 = vst [vmem:[#allocation2 + $0x12b0] sm:$0xff] %v4206
        %4369 = vst [vmem:[#allocation2 + $0x12b8] sm:$0xff] %v4207
        %4370 = vst [vmem:[#allocation2 + $0x12c0] sm:$0xff] %v4208
        %4371 = vst [vmem:[#allocation2 + $0x12c8] sm:$0xff] %v4209
        %4372 = vst [vmem:[#allocation2 + $0x12d0] sm:$0xff] %v4210
        %4373 = vst [vmem:[#allocation2 + $0x12d8] sm:$0xff] %v4211
        %4374 = vst [vmem:[#allocation2 + $0x12e0] sm:$0xff] %v4212
        %4375 = vst [vmem:[#allocation2 + $0x12e8] sm:$0xff] %v4213
        %4376 = vst [vmem:[#allocation2 + $0x12f0] sm:$0xff] %v4214
        %4377 = vst [vmem:[#allocation2 + $0x12f8] sm:$0xff] %v4215
        %4378 = vst [vmem:[#allocation2 + $0x1300] sm:$0xff] %v4216
        %4379 = vst [vmem:[#allocation2 + $0x1308] sm:$0xff] %v4217
        %4380 = vst [vmem:[#allocation2 + $0x1310] sm:$0xff] %v4218
        %4381 = vst [vmem:[#allocation2 + $0x1318] sm:$0xff] %v4219
        %4382 = vst [vmem:[#allocation2 + $0x1320] sm:$0xff] %v4220
        %4383 = vst [vmem:[#allocation2 + $0x1328] sm:$0xff] %v4221
        %4384 = vst.msk [vmem:[#allocation2 + $0x1330] sm:$0xff] %vm372, %v4098
        %4385 = vst [vmem:[#allocation2 + $0x1338] sm:$0xff] %v4222
        %4386 = vst [vmem:[#allocation2 + $0x1340] sm:$0xff] %v4223
        %4387 = vst [vmem:[#allocation2 + $0x1348] sm:$0xff] %v4224
        %4388 = vst [vmem:[#allocation2 + $0x1350] sm:$0xff] %v4225
        %4389 = vst [vmem:[#allocation2 + $0x1358] sm:$0xff] %v4226
        %4390 = vst [vmem:[#allocation2 + $0x1360] sm:$0xff] %v4227
        %4391 = vst [vmem:[#allocation2 + $0x1368] sm:$0xff] %v4228
        %4392 = vst [vmem:[#allocation2 + $0x1370] sm:$0xff] %v4229
        %4393 = vst [vmem:[#allocation2 + $0x1378] sm:$0xff] %v4230
        %4394 = vst [vmem:[#allocation2 + $0x1380] sm:$0xff] %v4231
        %4395 = vst [vmem:[#allocation2 + $0x1388] sm:$0xff] %v4232
        %4396 = vst [vmem:[#allocation2 + $0x1390] sm:$0xff] %v4233
        %4397 = vst [vmem:[#allocation2 + $0x1398] sm:$0xff] %v4234
        %4398 = vst [vmem:[#allocation2 + $0x13a0] sm:$0xff] %v4235
        %4399 = vst [vmem:[#allocation2 + $0x13a8] sm:$0xff] %v4236
        %4400 = vst [vmem:[#allocation2 + $0x13b0] sm:$0xff] %v4237
        %4401 = vst [vmem:[#allocation2 + $0x13b8] sm:$0xff] %v4238
        %4402 = vst [vmem:[#allocation2 + $0x13c0] sm:$0xff] %v4239
        %4403 = vst [vmem:[#allocation2 + $0x13c8] sm:$0xff] %v4240
        %4404 = vst [vmem:[#allocation2 + $0x13d0] sm:$0xff] %v4241
        %4405 = vst [vmem:[#allocation2 + $0x13d8] sm:$0xff] %v4242
        %4406 = vst [vmem:[#allocation2 + $0x13e0] sm:$0xff] %v4243
        %4407 = vst [vmem:[#allocation2 + $0x13e8] sm:$0xff] %v4244
        %4408 = vst [vmem:[#allocation2 + $0x13f0] sm:$0xff] %v4245
        %4409 = vst [vmem:[#allocation2 + $0x13f8] sm:$0xff] %v4246
        %4410 = vst [vmem:[#allocation2 + $0x1400] sm:$0xff] %v4247
        %4411 = vst [vmem:[#allocation2 + $0x1408] sm:$0xff] %v4248
        %4412 = vst [vmem:[#allocation2 + $0x1410] sm:$0xff] %v4249
        %4413 = vst [vmem:[#allocation2 + $0x1418] sm:$0xff] %v4250
        %4414 = vst [vmem:[#allocation2 + $0x1420] sm:$0xff] %v4251
        %4415 = vst [vmem:[#allocation2 + $0x1428] sm:$0xff] %v4252
        %4416 = vst [vmem:[#allocation2 + $0x1430] sm:$0xff] %v4253
        %4417 = vst [vmem:[#allocation2 + $0x1438] sm:$0xff] %v4254
        %4418 = vst [vmem:[#allocation2 + $0x1440] sm:$0xff] %v4255
        %4419 = vst [vmem:[#allocation2 + $0x1448] sm:$0xff] %v4256
        %4420 = vst [vmem:[#allocation2 + $0x1450] sm:$0xff] %v4257
        %4421 = vst [vmem:[#allocation2 + $0x1458] sm:$0xff] %v4258
        %4422 = vst [vmem:[#allocation2 + $0x1460] sm:$0xff] %v4259
        %4423 = vst [vmem:[#allocation2 + $0x1468] sm:$0xff] %v4260
        %4424 = vst [vmem:[#allocation2 + $0x1470] sm:$0xff] %v4261
        %4425 = vst.msk [vmem:[#allocation2 + $0x1478] sm:$0xff] %vm372, %v4180
        %v4426 = vld [vmem:[%s217] sm:$0xff]
        %v4427 = vld [vmem:[%s217 + $0x8] sm:$0xff]
        %v4428 = vld [vmem:[%s217 + $0x10] sm:$0xff]
        %v4429 = vld [vmem:[%s217 + $0x18] sm:$0xff]
        %v4430 = vld [vmem:[%s217 + $0x20] sm:$0xff]
        %v4431 = vld [vmem:[%s217 + $0x28] sm:$0xff]
        %v4432 = vld [vmem:[%s217 + $0x30] sm:$0xff]
        %v4433 = vld [vmem:[%s217 + $0x38] sm:$0xff]
        %v4434 = vld [vmem:[%s217 + $0x40] sm:$0xff]
        %v4435 = vld [vmem:[%s217 + $0x48] sm:$0xff]
        %v4436 = vld [vmem:[%s217 + $0x50] sm:$0xff]
        %v4437 = vld [vmem:[%s217 + $0x58] sm:$0xff]
        %v4438 = vld [vmem:[%s217 + $0x60] sm:$0xff]
        %v4439 = vld [vmem:[%s217 + $0x68] sm:$0xff]
        %v4440 = vld [vmem:[%s217 + $0x70] sm:$0xff]
        %v4441 = vld [vmem:[%s217 + $0x78] sm:$0xff]
        %v4442 = vld [vmem:[%s217 + $0x80] sm:$0xff]
        %v4443 = vld [vmem:[%s217 + $0x88] sm:$0xff]
        %v4444 = vld [vmem:[%s217 + $0x90] sm:$0xff]
        %v4445 = vld [vmem:[%s217 + $0x98] sm:$0xff]
        %v4446 = vld [vmem:[%s217 + $0xa0] sm:$0xff]
        %v4447 = vld [vmem:[%s217 + $0xa8] sm:$0xff]
        %v4448 = vld [vmem:[%s217 + $0xb0] sm:$0xff]
        %v4449 = vld [vmem:[%s217 + $0xb8] sm:$0xff]
        %v4450 = vld [vmem:[%s217 + $0xc0] sm:$0xff]
        %v4451 = vld [vmem:[%s217 + $0xc8] sm:$0xff]
        %v4452 = vld [vmem:[%s217 + $0xd0] sm:$0xff]
        %v4453 = vld [vmem:[%s217 + $0xd8] sm:$0xff]
        %v4454 = vld [vmem:[%s217 + $0xe0] sm:$0xff]
        %v4455 = vld [vmem:[%s217 + $0xe8] sm:$0xff]
        %v4456 = vld [vmem:[%s217 + $0xf0] sm:$0xff]
        %v4457 = vld [vmem:[%s217 + $0xf8] sm:$0xff]
        %v4458 = vld [vmem:[%s217 + $0x100] sm:$0xff]
        %v4459 = vld [vmem:[%s217 + $0x108] sm:$0xff]
        %v4460 = vld [vmem:[%s217 + $0x110] sm:$0xff]
        %v4461 = vld [vmem:[%s217 + $0x118] sm:$0xff]
        %v4462 = vld [vmem:[%s217 + $0x120] sm:$0xff]
        %v4463 = vld [vmem:[%s217 + $0x128] sm:$0xff]
        %v4464 = vld [vmem:[%s217 + $0x130] sm:$0xff]
        %v4465 = vld [vmem:[%s217 + $0x138] sm:$0xff]
        %v4466 = vld [vmem:[%s217 + $0x140] sm:$0xff]
        %v4467 = vld [vmem:[%s217 + $0x160] sm:$0xff]
        %v4468 = vld [vmem:[%s217 + $0x168] sm:$0xff]
        %v4469 = vld [vmem:[%s217 + $0x170] sm:$0xff]
        %v4470 = vld [vmem:[%s217 + $0x178] sm:$0xff]
        %v4471 = vld [vmem:[%s217 + $0x180] sm:$0xff]
        %v4472 = vld [vmem:[%s217 + $0x188] sm:$0xff]
        %v4473 = vld [vmem:[%s217 + $0x190] sm:$0xff]
        %v4474 = vld [vmem:[%s217 + $0x198] sm:$0xff]
        %v4475 = vld [vmem:[%s217 + $0x1a0] sm:$0xff]
        %v4476 = vld [vmem:[%s217 + $0x1a8] sm:$0xff]
        %v4477 = vld [vmem:[%s217 + $0x1b0] sm:$0xff]
        %v4478 = vld [vmem:[%s217 + $0x1b8] sm:$0xff]
        %v4479 = vld [vmem:[%s217 + $0x1c0] sm:$0xff]
        %v4480 = vld [vmem:[%s217 + $0x1c8] sm:$0xff]
        %v4481 = vld [vmem:[%s217 + $0x1d0] sm:$0xff]
        %v4482 = vld [vmem:[%s217 + $0x1d8] sm:$0xff]
        %v4483 = vld [vmem:[%s217 + $0x1e0] sm:$0xff]
        %v4484 = vld [vmem:[%s217 + $0x1e8] sm:$0xff]
        %v4485 = vld [vmem:[%s217 + $0x1f0] sm:$0xff]
        %v4486 = vld [vmem:[%s217 + $0x1f8] sm:$0xff]
        %v4487 = vld [vmem:[%s217 + $0x200] sm:$0xff]
        %v4488 = vld [vmem:[%s217 + $0x208] sm:$0xff]
        %v4489 = vld [vmem:[%s217 + $0x210] sm:$0xff]
        %v4490 = vld [vmem:[%s217 + $0x218] sm:$0xff]
        %v4491 = vld [vmem:[%s217 + $0x220] sm:$0xff]
        %v4492 = vld [vmem:[%s217 + $0x228] sm:$0xff]
        %v4493 = vld [vmem:[%s217 + $0x230] sm:$0xff]
        %v4494 = vld [vmem:[%s217 + $0x238] sm:$0xff]
        %v4495 = vld [vmem:[%s217 + $0x240] sm:$0xff]
        %v4496 = vld [vmem:[%s217 + $0x248] sm:$0xff]
        %v4497 = vld [vmem:[%s217 + $0x250] sm:$0xff]
        %v4498 = vld [vmem:[%s217 + $0x258] sm:$0xff]
        %v4499 = vld [vmem:[%s217 + $0x260] sm:$0xff]
        %v4500 = vld [vmem:[%s217 + $0x268] sm:$0xff]
        %v4501 = vld [vmem:[%s217 + $0x270] sm:$0xff]
        %v4502 = vld [vmem:[%s217 + $0x278] sm:$0xff]
        %v4503 = vld [vmem:[%s217 + $0x280] sm:$0xff]
        %v4504 = vld [vmem:[%s217 + $0x288] sm:$0xff]
        %v4505 = vld [vmem:[%s217 + $0x290] sm:$0xff]
        %v4506 = vld [vmem:[%s217 + $0x298] sm:$0xff]
        %v4507 = vld [vmem:[%s217 + $0x2a0] sm:$0xff]
        %4590 = vrot.lane.b32.xlu0 %v4426, 90
        %v4591 = vpop.permute.xlu0 %4590
        %4592 = vrot.lane.b32.xlu0 %v4427, 90
        %v4593 = vpop.permute.xlu0 %4592
        %4594 = vrot.lane.b32.xlu0 %v4428, 90
        %v4595 = vpop.permute.xlu0 %4594
        %4596 = vrot.lane.b32.xlu0 %v4429, 90
        %v4597 = vpop.permute.xlu0 %4596
        %4598 = vrot.lane.b32.xlu0 %v4430, 90
        %v4599 = vpop.permute.xlu0 %4598
        %4600 = vrot.lane.b32.xlu0 %v4431, 90
        %v4601 = vpop.permute.xlu0 %4600
        %4602 = vrot.lane.b32.xlu0 %v4432, 90
        %v4603 = vpop.permute.xlu0 %4602
        %4604 = vrot.lane.b32.xlu0 %v4433, 90
        %v4605 = vpop.permute.xlu0 %4604
        %4606 = vrot.lane.b32.xlu0 %v4434, 90
        %v4607 = vpop.permute.xlu0 %4606
        %4608 = vrot.lane.b32.xlu0 %v4435, 90
        %v4609 = vpop.permute.xlu0 %4608
        %4610 = vrot.lane.b32.xlu0 %v4436, 90
        %v4611 = vpop.permute.xlu0 %4610
        %4612 = vrot.lane.b32.xlu0 %v4437, 90
        %v4613 = vpop.permute.xlu0 %4612
        %4614 = vrot.lane.b32.xlu0 %v4438, 90
        %v4615 = vpop.permute.xlu0 %4614
        %4616 = vrot.lane.b32.xlu0 %v4439, 90
        %v4617 = vpop.permute.xlu0 %4616
        %4618 = vrot.lane.b32.xlu0 %v4440, 90
        %v4619 = vpop.permute.xlu0 %4618
        %4620 = vrot.lane.b32.xlu0 %v4441, 90
        %v4621 = vpop.permute.xlu0 %4620
        %4622 = vrot.lane.b32.xlu0 %v4442, 90
        %v4623 = vpop.permute.xlu0 %4622
        %4624 = vrot.lane.b32.xlu0 %v4443, 90
        %v4625 = vpop.permute.xlu0 %4624
        %4626 = vrot.lane.b32.xlu0 %v4444, 90
        %v4627 = vpop.permute.xlu0 %4626
        %4628 = vrot.lane.b32.xlu0 %v4445, 90
        %v4629 = vpop.permute.xlu0 %4628
        %4630 = vrot.lane.b32.xlu0 %v4446, 90
        %v4631 = vpop.permute.xlu0 %4630
        %4632 = vrot.lane.b32.xlu0 %v4447, 90
        %v4633 = vpop.permute.xlu0 %4632
        %4634 = vrot.lane.b32.xlu0 %v4448, 90
        %v4635 = vpop.permute.xlu0 %4634
        %4636 = vrot.lane.b32.xlu0 %v4449, 90
        %v4637 = vpop.permute.xlu0 %4636
        %4638 = vrot.lane.b32.xlu0 %v4450, 90
        %v4639 = vpop.permute.xlu0 %4638
        %4640 = vrot.lane.b32.xlu0 %v4451, 90
        %v4641 = vpop.permute.xlu0 %4640
        %4642 = vrot.lane.b32.xlu0 %v4452, 90
        %v4643 = vpop.permute.xlu0 %4642
        %4644 = vrot.lane.b32.xlu0 %v4453, 90
        %v4645 = vpop.permute.xlu0 %4644
        %4646 = vrot.lane.b32.xlu0 %v4454, 90
        %v4647 = vpop.permute.xlu0 %4646
        %4648 = vrot.lane.b32.xlu0 %v4455, 90
        %v4649 = vpop.permute.xlu0 %4648
        %4650 = vrot.lane.b32.xlu0 %v4456, 90
        %v4651 = vpop.permute.xlu0 %4650
        %4652 = vrot.lane.b32.xlu0 %v4457, 90
        %v4653 = vpop.permute.xlu0 %4652
        %4654 = vrot.lane.b32.xlu0 %v4458, 90
        %v4655 = vpop.permute.xlu0 %4654
        %4656 = vrot.lane.b32.xlu0 %v4459, 90
        %v4657 = vpop.permute.xlu0 %4656
        %4658 = vrot.lane.b32.xlu0 %v4460, 90
        %v4659 = vpop.permute.xlu0 %4658
        %4660 = vrot.lane.b32.xlu0 %v4461, 90
        %v4661 = vpop.permute.xlu0 %4660
        %4662 = vrot.lane.b32.xlu0 %v4462, 90
        %v4663 = vpop.permute.xlu0 %4662
        %4664 = vrot.lane.b32.xlu0 %v4463, 90
        %v4665 = vpop.permute.xlu0 %4664
        %4666 = vrot.lane.b32.xlu0 %v4464, 90
        %v4667 = vpop.permute.xlu0 %4666
        %4668 = vrot.lane.b32.xlu0 %v4465, 90
        %v4669 = vpop.permute.xlu0 %4668
        %4670 = vrot.lane.b32.xlu0 %v4466, 90
        %v4671 = vpop.permute.xlu0 %4670
        %4672 = vrot.lane.b32.xlu0 %v4467, 90
        %v4673 = vpop.permute.xlu0 %4672
        %4674 = vrot.lane.b32.xlu0 %v4468, 90
        %v4675 = vpop.permute.xlu0 %4674
        %4676 = vrot.lane.b32.xlu0 %v4469, 90
        %v4677 = vpop.permute.xlu0 %4676
        %4678 = vrot.lane.b32.xlu0 %v4470, 90
        %v4679 = vpop.permute.xlu0 %4678
        %4680 = vrot.lane.b32.xlu0 %v4471, 90
        %v4681 = vpop.permute.xlu0 %4680
        %4682 = vrot.lane.b32.xlu0 %v4472, 90
        %v4683 = vpop.permute.xlu0 %4682
        %4684 = vrot.lane.b32.xlu0 %v4473, 90
        %v4685 = vpop.permute.xlu0 %4684
        %4686 = vrot.lane.b32.xlu0 %v4474, 90
        %v4687 = vpop.permute.xlu0 %4686
        %4688 = vrot.lane.b32.xlu0 %v4475, 90
        %v4689 = vpop.permute.xlu0 %4688
        %4690 = vrot.lane.b32.xlu0 %v4476, 90
        %v4691 = vpop.permute.xlu0 %4690
        %4692 = vrot.lane.b32.xlu0 %v4477, 90
        %v4693 = vpop.permute.xlu0 %4692
        %4694 = vrot.lane.b32.xlu0 %v4478, 90
        %v4695 = vpop.permute.xlu0 %4694
        %4696 = vrot.lane.b32.xlu0 %v4479, 90
        %v4697 = vpop.permute.xlu0 %4696
        %4698 = vrot.lane.b32.xlu0 %v4480, 90
        %v4699 = vpop.permute.xlu0 %4698
        %4700 = vrot.lane.b32.xlu0 %v4481, 90
        %v4701 = vpop.permute.xlu0 %4700
        %4702 = vrot.lane.b32.xlu0 %v4482, 90
        %v4703 = vpop.permute.xlu0 %4702
        %4704 = vrot.lane.b32.xlu0 %v4483, 90
        %v4705 = vpop.permute.xlu0 %4704
        %4706 = vrot.lane.b32.xlu0 %v4484, 90
        %v4707 = vpop.permute.xlu0 %4706
        %4708 = vrot.lane.b32.xlu0 %v4485, 90
        %v4709 = vpop.permute.xlu0 %4708
        %4710 = vrot.lane.b32.xlu0 %v4486, 90
        %v4711 = vpop.permute.xlu0 %4710
        %4712 = vrot.lane.b32.xlu0 %v4487, 90
        %v4713 = vpop.permute.xlu0 %4712
        %4714 = vrot.lane.b32.xlu0 %v4488, 90
        %v4715 = vpop.permute.xlu0 %4714
        %4716 = vrot.lane.b32.xlu0 %v4489, 90
        %v4717 = vpop.permute.xlu0 %4716
        %4718 = vrot.lane.b32.xlu0 %v4490, 90
        %v4719 = vpop.permute.xlu0 %4718
        %4720 = vrot.lane.b32.xlu0 %v4491, 90
        %v4721 = vpop.permute.xlu0 %4720
        %4722 = vrot.lane.b32.xlu0 %v4492, 90
        %v4723 = vpop.permute.xlu0 %4722
        %4724 = vrot.lane.b32.xlu0 %v4493, 90
        %v4725 = vpop.permute.xlu0 %4724
        %4726 = vrot.lane.b32.xlu0 %v4494, 90
        %v4727 = vpop.permute.xlu0 %4726
        %4728 = vrot.lane.b32.xlu0 %v4495, 90
        %v4729 = vpop.permute.xlu0 %4728
        %4730 = vrot.lane.b32.xlu0 %v4496, 90
        %v4731 = vpop.permute.xlu0 %4730
        %4732 = vrot.lane.b32.xlu0 %v4497, 90
        %v4733 = vpop.permute.xlu0 %4732
        %4734 = vrot.lane.b32.xlu0 %v4498, 90
        %v4735 = vpop.permute.xlu0 %4734
        %4736 = vrot.lane.b32.xlu0 %v4499, 90
        %v4737 = vpop.permute.xlu0 %4736
        %4738 = vrot.lane.b32.xlu0 %v4500, 90
        %v4739 = vpop.permute.xlu0 %4738
        %4740 = vrot.lane.b32.xlu0 %v4501, 90
        %v4741 = vpop.permute.xlu0 %4740
        %4742 = vrot.lane.b32.xlu0 %v4502, 90
        %v4743 = vpop.permute.xlu0 %4742
        %4744 = vrot.lane.b32.xlu0 %v4503, 90
        %v4745 = vpop.permute.xlu0 %4744
        %4746 = vrot.lane.b32.xlu0 %v4504, 90
        %v4747 = vpop.permute.xlu0 %4746
        %4748 = vrot.lane.b32.xlu0 %v4505, 90
        %v4749 = vpop.permute.xlu0 %4748
        %4750 = vrot.lane.b32.xlu0 %v4506, 90
        %v4751 = vpop.permute.xlu0 %4750
        %4752 = vrot.lane.b32.xlu0 %v4507, 90
        %v4753 = vpop.permute.xlu0 %4752
        %vm4754 = vcmask 736256
        %v4755 = vsel %vm4754, %v4591, %v4593
        %v4756 = vsel %vm4754, %v4593, %v4595
        %v4757 = vsel %vm4754, %v4595, %v4597
        %v4758 = vsel %vm4754, %v4597, %v4599
        %v4759 = vsel %vm4754, %v4599, %v4601
        %v4760 = vsel %vm4754, %v4601, %v4603
        %v4761 = vsel %vm4754, %v4603, %v4605
        %v4762 = vsel %vm4754, %v4605, %v4607
        %v4763 = vsel %vm4754, %v4607, %v4609
        %v4764 = vsel %vm4754, %v4609, %v4611
        %v4765 = vsel %vm4754, %v4611, %v4613
        %v4766 = vsel %vm4754, %v4613, %v4615
        %v4767 = vsel %vm4754, %v4615, %v4617
        %v4768 = vsel %vm4754, %v4617, %v4619
        %v4769 = vsel %vm4754, %v4619, %v4621
        %v4770 = vsel %vm4754, %v4621, %v4623
        %v4771 = vsel %vm4754, %v4623, %v4625
        %v4772 = vsel %vm4754, %v4625, %v4627
        %v4773 = vsel %vm4754, %v4627, %v4629
        %v4774 = vsel %vm4754, %v4629, %v4631
        %v4775 = vsel %vm4754, %v4631, %v4633
        %v4776 = vsel %vm4754, %v4633, %v4635
        %v4777 = vsel %vm4754, %v4635, %v4637
        %v4778 = vsel %vm4754, %v4637, %v4639
        %v4779 = vsel %vm4754, %v4639, %v4641
        %v4780 = vsel %vm4754, %v4641, %v4643
        %v4781 = vsel %vm4754, %v4643, %v4645
        %v4782 = vsel %vm4754, %v4645, %v4647
        %v4783 = vsel %vm4754, %v4647, %v4649
        %v4784 = vsel %vm4754, %v4649, %v4651
        %v4785 = vsel %vm4754, %v4651, %v4653
        %v4786 = vsel %vm4754, %v4653, %v4655
        %v4787 = vsel %vm4754, %v4655, %v4657
        %v4788 = vsel %vm4754, %v4657, %v4659
        %v4789 = vsel %vm4754, %v4659, %v4661
        %v4790 = vsel %vm4754, %v4661, %v4663
        %v4791 = vsel %vm4754, %v4663, %v4665
        %v4792 = vsel %vm4754, %v4665, %v4667
        %v4793 = vsel %vm4754, %v4667, %v4669
        %v4794 = vsel %vm4754, %v4669, %v4671
        %v4795 = vsel %vm4754, %v4673, %v4675
        %v4796 = vsel %vm4754, %v4675, %v4677
        %v4797 = vsel %vm4754, %v4677, %v4679
        %v4798 = vsel %vm4754, %v4679, %v4681
        %v4799 = vsel %vm4754, %v4681, %v4683
        %v4800 = vsel %vm4754, %v4683, %v4685
        %v4801 = vsel %vm4754, %v4685, %v4687
        %v4802 = vsel %vm4754, %v4687, %v4689
        %v4803 = vsel %vm4754, %v4689, %v4691
        %v4804 = vsel %vm4754, %v4691, %v4693
        %v4805 = vsel %vm4754, %v4693, %v4695
        %v4806 = vsel %vm4754, %v4695, %v4697
        %v4807 = vsel %vm4754, %v4697, %v4699
        %v4808 = vsel %vm4754, %v4699, %v4701
        %v4809 = vsel %vm4754, %v4701, %v4703
        %v4810 = vsel %vm4754, %v4703, %v4705
        %v4811 = vsel %vm4754, %v4705, %v4707
        %v4812 = vsel %vm4754, %v4707, %v4709
        %v4813 = vsel %vm4754, %v4709, %v4711
        %v4814 = vsel %vm4754, %v4711, %v4713
        %v4815 = vsel %vm4754, %v4713, %v4715
        %v4816 = vsel %vm4754, %v4715, %v4717
        %v4817 = vsel %vm4754, %v4717, %v4719
        %v4818 = vsel %vm4754, %v4719, %v4721
        %v4819 = vsel %vm4754, %v4721, %v4723
        %v4820 = vsel %vm4754, %v4723, %v4725
        %v4821 = vsel %vm4754, %v4725, %v4727
        %v4822 = vsel %vm4754, %v4727, %v4729
        %v4823 = vsel %vm4754, %v4729, %v4731
        %v4824 = vsel %vm4754, %v4731, %v4733
        %v4825 = vsel %vm4754, %v4733, %v4735
        %v4826 = vsel %vm4754, %v4735, %v4737
        %v4827 = vsel %vm4754, %v4737, %v4739
        %v4828 = vsel %vm4754, %v4739, %v4741
        %v4829 = vsel %vm4754, %v4741, %v4743
        %v4830 = vsel %vm4754, %v4743, %v4745
        %v4831 = vsel %vm4754, %v4745, %v4747
        %v4832 = vsel %vm4754, %v4747, %v4749
        %v4833 = vsel %vm4754, %v4749, %v4751
        %v4834 = vsel %vm4754, %v4751, %v4753
        %4917 = vst [vmem:[#allocation2 + $0x1480] sm:$0xff] %v4755
        %4918 = vst [vmem:[#allocation2 + $0x1488] sm:$0xff] %v4756
        %4919 = vst [vmem:[#allocation2 + $0x1490] sm:$0xff] %v4757
        %4920 = vst [vmem:[#allocation2 + $0x1498] sm:$0xff] %v4758
        %4921 = vst [vmem:[#allocation2 + $0x14a0] sm:$0xff] %v4759
        %4922 = vst [vmem:[#allocation2 + $0x14a8] sm:$0xff] %v4760
        %4923 = vst [vmem:[#allocation2 + $0x14b0] sm:$0xff] %v4761
        %4924 = vst [vmem:[#allocation2 + $0x14b8] sm:$0xff] %v4762
        %4925 = vst [vmem:[#allocation2 + $0x14c0] sm:$0xff] %v4763
        %4926 = vst [vmem:[#allocation2 + $0x14c8] sm:$0xff] %v4764
        %4927 = vst [vmem:[#allocation2 + $0x14d0] sm:$0xff] %v4765
        %4928 = vst [vmem:[#allocation2 + $0x14d8] sm:$0xff] %v4766
        %4929 = vst [vmem:[#allocation2 + $0x14e0] sm:$0xff] %v4767
        %4930 = vst [vmem:[#allocation2 + $0x14e8] sm:$0xff] %v4768
        %4931 = vst [vmem:[#allocation2 + $0x14f0] sm:$0xff] %v4769
        %4932 = vst [vmem:[#allocation2 + $0x14f8] sm:$0xff] %v4770
        %4933 = vst [vmem:[#allocation2 + $0x1500] sm:$0xff] %v4771
        %4934 = vst [vmem:[#allocation2 + $0x1508] sm:$0xff] %v4772
        %4935 = vst [vmem:[#allocation2 + $0x1510] sm:$0xff] %v4773
        %4936 = vst [vmem:[#allocation2 + $0x1518] sm:$0xff] %v4774
        %4937 = vst [vmem:[#allocation2 + $0x1520] sm:$0xff] %v4775
        %4938 = vst [vmem:[#allocation2 + $0x1528] sm:$0xff] %v4776
        %4939 = vst [vmem:[#allocation2 + $0x1530] sm:$0xff] %v4777
        %4940 = vst [vmem:[#allocation2 + $0x1538] sm:$0xff] %v4778
        %4941 = vst [vmem:[#allocation2 + $0x1540] sm:$0xff] %v4779
        %4942 = vst [vmem:[#allocation2 + $0x1548] sm:$0xff] %v4780
        %4943 = vst [vmem:[#allocation2 + $0x1550] sm:$0xff] %v4781
        %4944 = vst [vmem:[#allocation2 + $0x1558] sm:$0xff] %v4782
        %4945 = vst [vmem:[#allocation2 + $0x1560] sm:$0xff] %v4783
        %4946 = vst [vmem:[#allocation2 + $0x1568] sm:$0xff] %v4784
        %4947 = vst [vmem:[#allocation2 + $0x1570] sm:$0xff] %v4785
        %4948 = vst [vmem:[#allocation2 + $0x1578] sm:$0xff] %v4786
        %4949 = vst [vmem:[#allocation2 + $0x1580] sm:$0xff] %v4787
        %4950 = vst [vmem:[#allocation2 + $0x1588] sm:$0xff] %v4788
        %4951 = vst [vmem:[#allocation2 + $0x1590] sm:$0xff] %v4789
        %4952 = vst [vmem:[#allocation2 + $0x1598] sm:$0xff] %v4790
        %4953 = vst [vmem:[#allocation2 + $0x15a0] sm:$0xff] %v4791
        %4954 = vst [vmem:[#allocation2 + $0x15a8] sm:$0xff] %v4792
        %4955 = vst [vmem:[#allocation2 + $0x15b0] sm:$0xff] %v4793
        %4956 = vst [vmem:[#allocation2 + $0x15b8] sm:$0xff] %v4794
        %4957 = vst.msk [vmem:[#allocation2 + $0x15c0] sm:$0xff] %vm372, %v4671
        %4958 = vst [vmem:[#allocation2 + $0x15c8] sm:$0xff] %v4795
        %4959 = vst [vmem:[#allocation2 + $0x15d0] sm:$0xff] %v4796
        %4960 = vst [vmem:[#allocation2 + $0x15d8] sm:$0xff] %v4797
        %4961 = vst [vmem:[#allocation2 + $0x15e0] sm:$0xff] %v4798
        %4962 = vst [vmem:[#allocation2 + $0x15e8] sm:$0xff] %v4799
        %4963 = vst [vmem:[#allocation2 + $0x15f0] sm:$0xff] %v4800
        %4964 = vst [vmem:[#allocation2 + $0x15f8] sm:$0xff] %v4801
        %4965 = vst [vmem:[#allocation2 + $0x1600] sm:$0xff] %v4802
        %4966 = vst [vmem:[#allocation2 + $0x1608] sm:$0xff] %v4803
        %4967 = vst [vmem:[#allocation2 + $0x1610] sm:$0xff] %v4804
        %4968 = vst [vmem:[#allocation2 + $0x1618] sm:$0xff] %v4805
        %4969 = vst [vmem:[#allocation2 + $0x1620] sm:$0xff] %v4806
        %4970 = vst [vmem:[#allocation2 + $0x1628] sm:$0xff] %v4807
        %4971 = vst [vmem:[#allocation2 + $0x1630] sm:$0xff] %v4808
        %4972 = vst [vmem:[#allocation2 + $0x1638] sm:$0xff] %v4809
        %4973 = vst [vmem:[#allocation2 + $0x1640] sm:$0xff] %v4810
        %4974 = vst [vmem:[#allocation2 + $0x1648] sm:$0xff] %v4811
        %4975 = vst [vmem:[#allocation2 + $0x1650] sm:$0xff] %v4812
        %4976 = vst [vmem:[#allocation2 + $0x1658] sm:$0xff] %v4813
        %4977 = vst [vmem:[#allocation2 + $0x1660] sm:$0xff] %v4814
        %4978 = vst [vmem:[#allocation2 + $0x1668] sm:$0xff] %v4815
        %4979 = vst [vmem:[#allocation2 + $0x1670] sm:$0xff] %v4816
        %4980 = vst [vmem:[#allocation2 + $0x1678] sm:$0xff] %v4817
        %4981 = vst [vmem:[#allocation2 + $0x1680] sm:$0xff] %v4818
        %4982 = vst [vmem:[#allocation2 + $0x1688] sm:$0xff] %v4819
        %4983 = vst [vmem:[#allocation2 + $0x1690] sm:$0xff] %v4820
        %4984 = vst [vmem:[#allocation2 + $0x1698] sm:$0xff] %v4821
        %4985 = vst [vmem:[#allocation2 + $0x16a0] sm:$0xff] %v4822
        %4986 = vst [vmem:[#allocation2 + $0x16a8] sm:$0xff] %v4823
        %4987 = vst [vmem:[#allocation2 + $0x16b0] sm:$0xff] %v4824
        %4988 = vst [vmem:[#allocation2 + $0x16b8] sm:$0xff] %v4825
        %4989 = vst [vmem:[#allocation2 + $0x16c0] sm:$0xff] %v4826
        %4990 = vst [vmem:[#allocation2 + $0x16c8] sm:$0xff] %v4827
        %4991 = vst [vmem:[#allocation2 + $0x16d0] sm:$0xff] %v4828
        %4992 = vst [vmem:[#allocation2 + $0x16d8] sm:$0xff] %v4829
        %4993 = vst [vmem:[#allocation2 + $0x16e0] sm:$0xff] %v4830
        %4994 = vst [vmem:[#allocation2 + $0x16e8] sm:$0xff] %v4831
        %4995 = vst [vmem:[#allocation2 + $0x16f0] sm:$0xff] %v4832
        %4996 = vst [vmem:[#allocation2 + $0x16f8] sm:$0xff] %v4833
        %4997 = vst [vmem:[#allocation2 + $0x1700] sm:$0xff] %v4834
        %4998 = vst.msk [vmem:[#allocation2 + $0x1708] sm:$0xff] %vm372, %v4753
        %v4999 = vld [vmem:[#allocation3] sm:$0xff]
        %v5000 = vld [vmem:[#allocation3 + $0x8] sm:$0xff]
        %v5001 = vld [vmem:[#allocation2] sm:$0xff]
        %v5002 = vld [vmem:[#allocation2 + $0x8] sm:$0xff]
        %v5003 = vld [vmem:[#allocation2 + $0x10] sm:$0xff]
        %v5004 = vld [vmem:[#allocation2 + $0x18] sm:$0xff]
        %v5005 = vld [vmem:[#allocation2 + $0x20] sm:$0xff]
        %v5006 = vld [vmem:[#allocation2 + $0x28] sm:$0xff]
        %v5007 = vld [vmem:[#allocation2 + $0x30] sm:$0xff]
        %v5008 = vld [vmem:[#allocation2 + $0x38] sm:$0xff]
        %v5009 = vld [vmem:[#allocation2 + $0x40] sm:$0xff]
        %v5010 = vld [vmem:[#allocation2 + $0x48] sm:$0xff]
        %v5011 = vld [vmem:[#allocation2 + $0x50] sm:$0xff]
        %v5012 = vld [vmem:[#allocation2 + $0x58] sm:$0xff]
        %v5013 = vld [vmem:[#allocation2 + $0x60] sm:$0xff]
        %v5014 = vld [vmem:[#allocation2 + $0x68] sm:$0xff]
        %v5015 = vld [vmem:[#allocation2 + $0x70] sm:$0xff]
        %v5016 = vld [vmem:[#allocation2 + $0x78] sm:$0xff]
        %v5017 = vld [vmem:[#allocation2 + $0x80] sm:$0xff]
        %v5018 = vld [vmem:[#allocation2 + $0x88] sm:$0xff]
        %v5019 = vld [vmem:[#allocation2 + $0x90] sm:$0xff]
        %v5020 = vld [vmem:[#allocation2 + $0x98] sm:$0xff]
        %v5021 = vld [vmem:[#allocation2 + $0xa0] sm:$0xff]
        %v5022 = vld [vmem:[#allocation2 + $0xa8] sm:$0xff]
        %v5023 = vld [vmem:[#allocation2 + $0xb0] sm:$0xff]
        %v5024 = vld [vmem:[#allocation2 + $0xb8] sm:$0xff]
        %v5025 = vld [vmem:[#allocation2 + $0xc0] sm:$0xff]
        %v5026 = vld [vmem:[#allocation2 + $0xc8] sm:$0xff]
        %v5027 = vld [vmem:[#allocation2 + $0xd0] sm:$0xff]
        %v5028 = vld [vmem:[#allocation2 + $0xd8] sm:$0xff]
        %v5029 = vld [vmem:[#allocation2 + $0xe0] sm:$0xff]
        %v5030 = vld [vmem:[#allocation2 + $0xe8] sm:$0xff]
        %v5031 = vld [vmem:[#allocation2 + $0xf0] sm:$0xff]
        %v5032 = vld [vmem:[#allocation2 + $0xf8] sm:$0xff]
        %v5033 = vld [vmem:[#allocation2 + $0x100] sm:$0xff]
        %v5034 = vld [vmem:[#allocation2 + $0x108] sm:$0xff]
        %v5035 = vld [vmem:[#allocation2 + $0x110] sm:$0xff]
        %v5036 = vld [vmem:[#allocation2 + $0x118] sm:$0xff]
        %v5037 = vld [vmem:[#allocation2 + $0x120] sm:$0xff]
        %v5038 = vld [vmem:[#allocation2 + $0x128] sm:$0xff]
        %v5039 = vld [vmem:[#allocation2 + $0x130] sm:$0xff]
        %v5040 = vld [vmem:[#allocation2 + $0x138] sm:$0xff]
        %v5041 = vld [vmem:[#allocation2 + $0x140] sm:$0xff]
        %v5042 = vld [vmem:[#allocation2 + $0x148] sm:$0xff]
        %v5043 = vld [vmem:[#allocation2 + $0x150] sm:$0xff]
        %v5044 = vld [vmem:[#allocation2 + $0x158] sm:$0xff]
        %v5045 = vld [vmem:[#allocation2 + $0x160] sm:$0xff]
        %v5046 = vld [vmem:[#allocation2 + $0x168] sm:$0xff]
        %v5047 = vld [vmem:[#allocation2 + $0x170] sm:$0xff]
        %v5048 = vld [vmem:[#allocation2 + $0x178] sm:$0xff]
        %v5049 = vld [vmem:[#allocation2 + $0x180] sm:$0xff]
        %v5050 = vld [vmem:[#allocation2 + $0x188] sm:$0xff]
        %v5051 = vld [vmem:[#allocation2 + $0x190] sm:$0xff]
        %v5052 = vld [vmem:[#allocation2 + $0x198] sm:$0xff]
        %v5053 = vld [vmem:[#allocation2 + $0x1a0] sm:$0xff]
        %v5054 = vld [vmem:[#allocation2 + $0x1a8] sm:$0xff]
        %v5055 = vld [vmem:[#allocation2 + $0x1b0] sm:$0xff]
        %v5056 = vld [vmem:[#allocation2 + $0x1b8] sm:$0xff]
        %v5057 = vld [vmem:[#allocation2 + $0x1c0] sm:$0xff]
        %v5058 = vld [vmem:[#allocation2 + $0x1c8] sm:$0xff]
        %v5059 = vld [vmem:[#allocation2 + $0x1d0] sm:$0xff]
        %v5060 = vld [vmem:[#allocation2 + $0x1d8] sm:$0xff]
        %v5061 = vld [vmem:[#allocation2 + $0x1e0] sm:$0xff]
        %v5062 = vld [vmem:[#allocation2 + $0x1e8] sm:$0xff]
        %v5063 = vld [vmem:[#allocation2 + $0x1f0] sm:$0xff]
        %v5064 = vld [vmem:[#allocation2 + $0x1f8] sm:$0xff]
        %v5065 = vld [vmem:[#allocation2 + $0x200] sm:$0xff]
        %v5066 = vld [vmem:[#allocation2 + $0x208] sm:$0xff]
        %v5067 = vld [vmem:[#allocation2 + $0x210] sm:$0xff]
        %v5068 = vld [vmem:[#allocation2 + $0x218] sm:$0xff]
        %v5069 = vld [vmem:[#allocation2 + $0x220] sm:$0xff]
        %v5070 = vld [vmem:[#allocation2 + $0x228] sm:$0xff]
        %v5071 = vld [vmem:[#allocation2 + $0x230] sm:$0xff]
        %v5072 = vld [vmem:[#allocation2 + $0x238] sm:$0xff]
        %v5073 = vld [vmem:[#allocation2 + $0x240] sm:$0xff]
        %v5074 = vld [vmem:[#allocation2 + $0x248] sm:$0xff]
        %v5075 = vld [vmem:[#allocation2 + $0x250] sm:$0xff]
        %v5076 = vld [vmem:[#allocation2 + $0x258] sm:$0xff]
        %v5077 = vld [vmem:[#allocation2 + $0x260] sm:$0xff]
        %v5078 = vld [vmem:[#allocation2 + $0x268] sm:$0xff]
        %v5079 = vld [vmem:[#allocation2 + $0x270] sm:$0xff]
        %v5080 = vld [vmem:[#allocation2 + $0x278] sm:$0xff]
        %v5081 = vld [vmem:[#allocation2 + $0x280] sm:$0xff]
        %v5082 = vld [vmem:[#allocation2 + $0x288] sm:$0xff]
        %v5083 = vld [vmem:[#allocation2 + $0x290] sm:$0xff]
        %v5084 = vld [vmem:[#allocation2 + $0x298] sm:$0xff]
        %v5085 = vld [vmem:[#allocation2 + $0x2a0] sm:$0xff]
        %v5086 = vld [vmem:[#allocation2 + $0x2a8] sm:$0xff]
        %v5087 = vld [vmem:[#allocation2 + $0x2b0] sm:$0xff]
        %v5088 = vld [vmem:[#allocation2 + $0x2b8] sm:$0xff]
        %v5089 = vld [vmem:[#allocation2 + $0x2c0] sm:$0xff]
        %v5090 = vld [vmem:[#allocation2 + $0x2c8] sm:$0xff]
        %v5091 = vld [vmem:[#allocation2 + $0x2d0] sm:$0xff]
        %v5092 = vld [vmem:[#allocation2 + $0x2d8] sm:$0xff]
        %v5093 = vld [vmem:[#allocation2 + $0x2e0] sm:$0xff]
        %v5094 = vld [vmem:[#allocation2 + $0x2e8] sm:$0xff]
        %v5095 = vld [vmem:[#allocation2 + $0x2f0] sm:$0xff]
        %v5096 = vld [vmem:[#allocation2 + $0x2f8] sm:$0xff]
        %v5097 = vld [vmem:[#allocation2 + $0x300] sm:$0xff]
        %v5098 = vld [vmem:[#allocation2 + $0x308] sm:$0xff]
        %v5099 = vld [vmem:[#allocation2 + $0x310] sm:$0xff]
        %v5100 = vld [vmem:[#allocation2 + $0x318] sm:$0xff]
        %v5101 = vld [vmem:[#allocation2 + $0x320] sm:$0xff]
        %v5102 = vld [vmem:[#allocation2 + $0x328] sm:$0xff]
        %v5103 = vld [vmem:[#allocation2 + $0x330] sm:$0xff]
        %v5104 = vld [vmem:[#allocation2 + $0x338] sm:$0xff]
        %v5105 = vld [vmem:[#allocation2 + $0x340] sm:$0xff]
        %v5106 = vld [vmem:[#allocation2 + $0x348] sm:$0xff]
        %v5107 = vld [vmem:[#allocation2 + $0x350] sm:$0xff]
        %v5108 = vld [vmem:[#allocation2 + $0x358] sm:$0xff]
        %v5109 = vld [vmem:[#allocation2 + $0x360] sm:$0xff]
        %v5110 = vld [vmem:[#allocation2 + $0x368] sm:$0xff]
        %v5111 = vld [vmem:[#allocation2 + $0x370] sm:$0xff]
        %v5112 = vld [vmem:[#allocation2 + $0x378] sm:$0xff]
        %v5113 = vld [vmem:[#allocation2 + $0x380] sm:$0xff]
        %v5114 = vld [vmem:[#allocation2 + $0x388] sm:$0xff]
        %v5115 = vld [vmem:[#allocation2 + $0x390] sm:$0xff]
        %v5116 = vld [vmem:[#allocation2 + $0x398] sm:$0xff]
        %v5117 = vld [vmem:[#allocation2 + $0x3a0] sm:$0xff]
        %v5118 = vld [vmem:[#allocation2 + $0x3a8] sm:$0xff]
        %v5119 = vld [vmem:[#allocation2 + $0x3b0] sm:$0xff]
        %v5120 = vld [vmem:[#allocation2 + $0x3b8] sm:$0xff]
        %v5121 = vld [vmem:[#allocation2 + $0x3c0] sm:$0xff]
        %v5122 = vld [vmem:[#allocation2 + $0x3c8] sm:$0xff]
        %v5123 = vld [vmem:[#allocation2 + $0x3d0] sm:$0xff]
        %v5124 = vld [vmem:[#allocation2 + $0x3d8] sm:$0xff]
        %v5125 = vld [vmem:[#allocation2 + $0x3e0] sm:$0xff]
        %v5126 = vld [vmem:[#allocation2 + $0x3e8] sm:$0xff]
        %v5127 = vld [vmem:[#allocation2 + $0x3f0] sm:$0xff]
        %v5128 = vld [vmem:[#allocation2 + $0x3f8] sm:$0xff]
        %v5129 = vld [vmem:[#allocation2 + $0x400] sm:$0xff]
        %v5130 = vld [vmem:[#allocation2 + $0x408] sm:$0xff]
        %v5131 = vld [vmem:[#allocation2 + $0x410] sm:$0xff]
        %v5132 = vld [vmem:[#allocation2 + $0x418] sm:$0xff]
        %v5133 = vld [vmem:[#allocation2 + $0x420] sm:$0xff]
        %v5134 = vld [vmem:[#allocation2 + $0x428] sm:$0xff]
        %v5135 = vld [vmem:[#allocation2 + $0x430] sm:$0xff]
        %v5136 = vld [vmem:[#allocation2 + $0x438] sm:$0xff]
        %v5137 = vld [vmem:[#allocation2 + $0x440] sm:$0xff]
        %v5138 = vld [vmem:[#allocation2 + $0x448] sm:$0xff]
        %v5139 = vld [vmem:[#allocation2 + $0x450] sm:$0xff]
        %v5140 = vld [vmem:[#allocation2 + $0x458] sm:$0xff]
        %v5141 = vld [vmem:[#allocation2 + $0x460] sm:$0xff]
        %v5142 = vld [vmem:[#allocation2 + $0x468] sm:$0xff]
        %v5143 = vld [vmem:[#allocation2 + $0x470] sm:$0xff]
        %v5144 = vld [vmem:[#allocation2 + $0x478] sm:$0xff]
        %v5145 = vld [vmem:[#allocation2 + $0x480] sm:$0xff]
        %v5146 = vld [vmem:[#allocation2 + $0x488] sm:$0xff]
        %v5147 = vld [vmem:[#allocation2 + $0x490] sm:$0xff]
        %v5148 = vld [vmem:[#allocation2 + $0x498] sm:$0xff]
        %v5149 = vld [vmem:[#allocation2 + $0x4a0] sm:$0xff]
        %v5150 = vld [vmem:[#allocation2 + $0x4a8] sm:$0xff]
        %v5151 = vld [vmem:[#allocation2 + $0x4b0] sm:$0xff]
        %v5152 = vld [vmem:[#allocation2 + $0x4b8] sm:$0xff]
        %v5153 = vld [vmem:[#allocation2 + $0x4c0] sm:$0xff]
        %v5154 = vld [vmem:[#allocation2 + $0x4c8] sm:$0xff]
        %v5155 = vld [vmem:[#allocation2 + $0x4d0] sm:$0xff]
        %v5156 = vld [vmem:[#allocation2 + $0x4d8] sm:$0xff]
        %v5157 = vld [vmem:[#allocation2 + $0x4e0] sm:$0xff]
        %v5158 = vld [vmem:[#allocation2 + $0x4e8] sm:$0xff]
        %v5159 = vld [vmem:[#allocation2 + $0x4f0] sm:$0xff]
        %v5160 = vld [vmem:[#allocation2 + $0x4f8] sm:$0xff]
        %v5161 = vld [vmem:[#allocation2 + $0x500] sm:$0xff]
        %v5162 = vld [vmem:[#allocation2 + $0x508] sm:$0xff]
        %v5163 = vld [vmem:[#allocation2 + $0x510] sm:$0xff]
        %v5164 = vld [vmem:[#allocation2 + $0x518] sm:$0xff]
        %v5165 = vld [vmem:[#allocation2 + $0x520] sm:$0xff]
        %v5166 = vld [vmem:[#allocation2 + $0x528] sm:$0xff]
        %v5167 = vld [vmem:[#allocation2 + $0x530] sm:$0xff]
        %v5168 = vld [vmem:[#allocation2 + $0x538] sm:$0xff]
        %v5169 = vld [vmem:[#allocation2 + $0x540] sm:$0xff]
        %v5170 = vld [vmem:[#allocation2 + $0x548] sm:$0xff]
        %v5171 = vld [vmem:[#allocation2 + $0x550] sm:$0xff]
        %v5172 = vld [vmem:[#allocation2 + $0x558] sm:$0xff]
        %v5173 = vld [vmem:[#allocation2 + $0x560] sm:$0xff]
        %v5174 = vld [vmem:[#allocation2 + $0x568] sm:$0xff]
        %v5175 = vld [vmem:[#allocation2 + $0x570] sm:$0xff]
        %v5176 = vld [vmem:[#allocation2 + $0x578] sm:$0xff]
        %v5177 = vld [vmem:[#allocation2 + $0x580] sm:$0xff]
        %v5178 = vld [vmem:[#allocation2 + $0x588] sm:$0xff]
        %v5179 = vld [vmem:[#allocation2 + $0x590] sm:$0xff]
        %v5180 = vld [vmem:[#allocation2 + $0x598] sm:$0xff]
        %v5181 = vld [vmem:[#allocation2 + $0x5a0] sm:$0xff]
        %v5182 = vld [vmem:[#allocation2 + $0x5a8] sm:$0xff]
        %v5183 = vld [vmem:[#allocation2 + $0x5b0] sm:$0xff]
        %v5184 = vld [vmem:[#allocation2 + $0x5b8] sm:$0xff]
        %v5185 = vld [vmem:[#allocation2 + $0x5c0] sm:$0xff]
        %v5186 = vld [vmem:[#allocation2 + $0x5c8] sm:$0xff]
        %v5187 = vld [vmem:[#allocation2 + $0x5d0] sm:$0xff]
        %v5188 = vld [vmem:[#allocation2 + $0x5d8] sm:$0xff]
        %v5189 = vld [vmem:[#allocation2 + $0x5e0] sm:$0xff]
        %v5190 = vld [vmem:[#allocation2 + $0x5e8] sm:$0xff]
        %v5191 = vld [vmem:[#allocation2 + $0x5f0] sm:$0xff]
        %v5192 = vld [vmem:[#allocation2 + $0x5f8] sm:$0xff]
        %v5193 = vld [vmem:[#allocation2 + $0x600] sm:$0xff]
        %v5194 = vld [vmem:[#allocation2 + $0x608] sm:$0xff]
        %v5195 = vld [vmem:[#allocation2 + $0x610] sm:$0xff]
        %v5196 = vld [vmem:[#allocation2 + $0x618] sm:$0xff]
        %v5197 = vld [vmem:[#allocation2 + $0x620] sm:$0xff]
        %v5198 = vld [vmem:[#allocation2 + $0x628] sm:$0xff]
        %v5199 = vld [vmem:[#allocation2 + $0x630] sm:$0xff]
        %v5200 = vld [vmem:[#allocation2 + $0x638] sm:$0xff]
        %v5201 = vld [vmem:[#allocation2 + $0x640] sm:$0xff]
        %v5202 = vld [vmem:[#allocation2 + $0x648] sm:$0xff]
        %v5203 = vld [vmem:[#allocation2 + $0x650] sm:$0xff]
        %v5204 = vld [vmem:[#allocation2 + $0x658] sm:$0xff]
        %v5205 = vld [vmem:[#allocation2 + $0x660] sm:$0xff]
        %v5206 = vld [vmem:[#allocation2 + $0x668] sm:$0xff]
        %v5207 = vld [vmem:[#allocation2 + $0x670] sm:$0xff]
        %v5208 = vld [vmem:[#allocation2 + $0x678] sm:$0xff]
        %v5209 = vld [vmem:[#allocation2 + $0x680] sm:$0xff]
        %v5210 = vld [vmem:[#allocation2 + $0x688] sm:$0xff]
        %v5211 = vld [vmem:[#allocation2 + $0x690] sm:$0xff]
        %v5212 = vld [vmem:[#allocation2 + $0x698] sm:$0xff]
        %v5213 = vld [vmem:[#allocation2 + $0x6a0] sm:$0xff]
        %v5214 = vld [vmem:[#allocation2 + $0x6a8] sm:$0xff]
        %v5215 = vld [vmem:[#allocation2 + $0x6b0] sm:$0xff]
        %v5216 = vld [vmem:[#allocation2 + $0x6b8] sm:$0xff]
        %v5217 = vld [vmem:[#allocation2 + $0x6c0] sm:$0xff]
        %v5218 = vld [vmem:[#allocation2 + $0x6c8] sm:$0xff]
        %v5219 = vld [vmem:[#allocation2 + $0x6d0] sm:$0xff]
        %v5220 = vld [vmem:[#allocation2 + $0x6d8] sm:$0xff]
        %v5221 = vld [vmem:[#allocation2 + $0x6e0] sm:$0xff]
        %v5222 = vld [vmem:[#allocation2 + $0x6e8] sm:$0xff]
        %v5223 = vld [vmem:[#allocation2 + $0x6f0] sm:$0xff]
        %v5224 = vld [vmem:[#allocation2 + $0x6f8] sm:$0xff]
        %v5225 = vld [vmem:[#allocation2 + $0x700] sm:$0xff]
        %v5226 = vld [vmem:[#allocation2 + $0x708] sm:$0xff]
        %v5227 = vld [vmem:[#allocation2 + $0x710] sm:$0xff]
        %v5228 = vld [vmem:[#allocation2 + $0x718] sm:$0xff]
        %v5229 = vld [vmem:[#allocation2 + $0x720] sm:$0xff]
        %v5230 = vld [vmem:[#allocation2 + $0x728] sm:$0xff]
        %v5231 = vld [vmem:[#allocation2 + $0x730] sm:$0xff]
        %v5232 = vld [vmem:[#allocation2 + $0x738] sm:$0xff]
        %v5233 = vld [vmem:[#allocation2 + $0x740] sm:$0xff]
        %v5234 = vld [vmem:[#allocation2 + $0x748] sm:$0xff]
        %v5235 = vld [vmem:[#allocation2 + $0x750] sm:$0xff]
        %v5236 = vld [vmem:[#allocation2 + $0x758] sm:$0xff]
        %v5237 = vld [vmem:[#allocation2 + $0x760] sm:$0xff]
        %v5238 = vld [vmem:[#allocation2 + $0x768] sm:$0xff]
        %v5239 = vld [vmem:[#allocation2 + $0x770] sm:$0xff]
        %v5240 = vld [vmem:[#allocation2 + $0x778] sm:$0xff]
        %v5241 = vld [vmem:[#allocation2 + $0x780] sm:$0xff]
        %v5242 = vld [vmem:[#allocation2 + $0x788] sm:$0xff]
        %v5243 = vld [vmem:[#allocation2 + $0x790] sm:$0xff]
        %v5244 = vld [vmem:[#allocation2 + $0x798] sm:$0xff]
        %v5245 = vld [vmem:[#allocation2 + $0x7a0] sm:$0xff]
        %v5246 = vld [vmem:[#allocation2 + $0x7a8] sm:$0xff]
        %v5247 = vld [vmem:[#allocation2 + $0x7b0] sm:$0xff]
        %v5248 = vld [vmem:[#allocation2 + $0x7b8] sm:$0xff]
        %v5249 = vld [vmem:[#allocation2 + $0x7c0] sm:$0xff]
        %v5250 = vld [vmem:[#allocation2 + $0x7c8] sm:$0xff]
        %v5251 = vld [vmem:[#allocation2 + $0x7d0] sm:$0xff]
        %v5252 = vld [vmem:[#allocation2 + $0x7d8] sm:$0xff]
        %v5253 = vld [vmem:[#allocation2 + $0x7e0] sm:$0xff]
        %v5254 = vld [vmem:[#allocation2 + $0x7e8] sm:$0xff]
        %v5255 = vld [vmem:[#allocation2 + $0x7f0] sm:$0xff]
        %v5256 = vld [vmem:[#allocation2 + $0x7f8] sm:$0xff]
        %v5257 = vld [vmem:[#allocation2 + $0x800] sm:$0xff]
        %v5258 = vld [vmem:[#allocation2 + $0x808] sm:$0xff]
        %v5259 = vld [vmem:[#allocation2 + $0x810] sm:$0xff]
        %v5260 = vld [vmem:[#allocation2 + $0x818] sm:$0xff]
        %v5261 = vld [vmem:[#allocation2 + $0x820] sm:$0xff]
        %v5262 = vld [vmem:[#allocation2 + $0x828] sm:$0xff]
        %v5263 = vld [vmem:[#allocation2 + $0x830] sm:$0xff]
        %v5264 = vld [vmem:[#allocation2 + $0x838] sm:$0xff]
        %v5265 = vld [vmem:[#allocation2 + $0x840] sm:$0xff]
        %v5266 = vld [vmem:[#allocation2 + $0x848] sm:$0xff]
        %v5267 = vld [vmem:[#allocation2 + $0x850] sm:$0xff]
        %v5268 = vld [vmem:[#allocation2 + $0x858] sm:$0xff]
        %v5269 = vld [vmem:[#allocation2 + $0x860] sm:$0xff]
        %v5270 = vld [vmem:[#allocation2 + $0x868] sm:$0xff]
        %v5271 = vld [vmem:[#allocation2 + $0x870] sm:$0xff]
        %v5272 = vld [vmem:[#allocation2 + $0x878] sm:$0xff]
        %v5273 = vld [vmem:[#allocation2 + $0x880] sm:$0xff]
        %v5274 = vld [vmem:[#allocation2 + $0x888] sm:$0xff]
        %v5275 = vld [vmem:[#allocation2 + $0x890] sm:$0xff]
        %v5276 = vld [vmem:[#allocation2 + $0x898] sm:$0xff]
        %v5277 = vld [vmem:[#allocation2 + $0x8a0] sm:$0xff]
        %v5278 = vld [vmem:[#allocation2 + $0x8a8] sm:$0xff]
        %v5279 = vld [vmem:[#allocation2 + $0x8b0] sm:$0xff]
        %v5280 = vld [vmem:[#allocation2 + $0x8b8] sm:$0xff]
        %v5281 = vld [vmem:[#allocation2 + $0x8c0] sm:$0xff]
        %v5282 = vld [vmem:[#allocation2 + $0x8c8] sm:$0xff]
        %v5283 = vld [vmem:[#allocation2 + $0x8d0] sm:$0xff]
        %v5284 = vld [vmem:[#allocation2 + $0x8d8] sm:$0xff]
        %v5285 = vld [vmem:[#allocation2 + $0x8e0] sm:$0xff]
        %v5286 = vld [vmem:[#allocation2 + $0x8e8] sm:$0xff]
        %v5287 = vld [vmem:[#allocation2 + $0x8f0] sm:$0xff]
        %v5288 = vld [vmem:[#allocation2 + $0x8f8] sm:$0xff]
        %v5289 = vld [vmem:[#allocation2 + $0x900] sm:$0xff]
        %v5290 = vld [vmem:[#allocation2 + $0x908] sm:$0xff]
        %v5291 = vld [vmem:[#allocation2 + $0x910] sm:$0xff]
        %v5292 = vld [vmem:[#allocation2 + $0x918] sm:$0xff]
        %v5293 = vld [vmem:[#allocation2 + $0x920] sm:$0xff]
        %v5294 = vld [vmem:[#allocation2 + $0x928] sm:$0xff]
        %v5295 = vld [vmem:[#allocation2 + $0x930] sm:$0xff]
        %v5296 = vld [vmem:[#allocation2 + $0x938] sm:$0xff]
        %v5297 = vld [vmem:[#allocation2 + $0x940] sm:$0xff]
        %v5298 = vld [vmem:[#allocation2 + $0x948] sm:$0xff]
        %v5299 = vld [vmem:[#allocation2 + $0x950] sm:$0xff]
        %v5300 = vld [vmem:[#allocation2 + $0x958] sm:$0xff]
        %v5301 = vld [vmem:[#allocation2 + $0x960] sm:$0xff]
        %v5302 = vld [vmem:[#allocation2 + $0x968] sm:$0xff]
        %v5303 = vld [vmem:[#allocation2 + $0x970] sm:$0xff]
        %v5304 = vld [vmem:[#allocation2 + $0x978] sm:$0xff]
        %v5305 = vld [vmem:[#allocation2 + $0x980] sm:$0xff]
        %v5306 = vld [vmem:[#allocation2 + $0x988] sm:$0xff]
        %v5307 = vld [vmem:[#allocation2 + $0x990] sm:$0xff]
        %v5308 = vld [vmem:[#allocation2 + $0x998] sm:$0xff]
        %v5309 = vld [vmem:[#allocation2 + $0x9a0] sm:$0xff]
        %v5310 = vld [vmem:[#allocation2 + $0x9a8] sm:$0xff]
        %v5311 = vld [vmem:[#allocation2 + $0x9b0] sm:$0xff]
        %v5312 = vld [vmem:[#allocation2 + $0x9b8] sm:$0xff]
        %v5313 = vld [vmem:[#allocation2 + $0x9c0] sm:$0xff]
        %v5314 = vld [vmem:[#allocation2 + $0x9c8] sm:$0xff]
        %v5315 = vld [vmem:[#allocation2 + $0x9d0] sm:$0xff]
        %v5316 = vld [vmem:[#allocation2 + $0x9d8] sm:$0xff]
        %v5317 = vld [vmem:[#allocation2 + $0x9e0] sm:$0xff]
        %v5318 = vld [vmem:[#allocation2 + $0x9e8] sm:$0xff]
        %v5319 = vld [vmem:[#allocation2 + $0x9f0] sm:$0xff]
        %v5320 = vld [vmem:[#allocation2 + $0x9f8] sm:$0xff]
        %v5321 = vld [vmem:[#allocation2 + $0xa00] sm:$0xff]
        %v5322 = vld [vmem:[#allocation2 + $0xa08] sm:$0xff]
        %v5323 = vld [vmem:[#allocation2 + $0xa10] sm:$0xff]
        %v5324 = vld [vmem:[#allocation2 + $0xa18] sm:$0xff]
        %v5325 = vld [vmem:[#allocation2 + $0xa20] sm:$0xff]
        %v5326 = vld [vmem:[#allocation2 + $0xa28] sm:$0xff]
        %v5327 = vld [vmem:[#allocation2 + $0xa30] sm:$0xff]
        %v5328 = vld [vmem:[#allocation2 + $0xa38] sm:$0xff]
        %v5329 = vld [vmem:[#allocation2 + $0xa40] sm:$0xff]
        %v5330 = vld [vmem:[#allocation2 + $0xa48] sm:$0xff]
        %v5331 = vld [vmem:[#allocation2 + $0xa50] sm:$0xff]
        %v5332 = vld [vmem:[#allocation2 + $0xa58] sm:$0xff]
        %v5333 = vld [vmem:[#allocation2 + $0xa60] sm:$0xff]
        %v5334 = vld [vmem:[#allocation2 + $0xa68] sm:$0xff]
        %v5335 = vld [vmem:[#allocation2 + $0xa70] sm:$0xff]
        %v5336 = vld [vmem:[#allocation2 + $0xa78] sm:$0xff]
        %v5337 = vld [vmem:[#allocation2 + $0xa80] sm:$0xff]
        %v5338 = vld [vmem:[#allocation2 + $0xa88] sm:$0xff]
        %v5339 = vld [vmem:[#allocation2 + $0xa90] sm:$0xff]
        %v5340 = vld [vmem:[#allocation2 + $0xa98] sm:$0xff]
        %v5341 = vld [vmem:[#allocation2 + $0xaa0] sm:$0xff]
        %v5342 = vld [vmem:[#allocation2 + $0xaa8] sm:$0xff]
        %v5343 = vld [vmem:[#allocation2 + $0xab0] sm:$0xff]
        %v5344 = vld [vmem:[#allocation2 + $0xab8] sm:$0xff]
        %v5345 = vld [vmem:[#allocation2 + $0xac0] sm:$0xff]
        %v5346 = vld [vmem:[#allocation2 + $0xac8] sm:$0xff]
        %v5347 = vld [vmem:[#allocation2 + $0xad0] sm:$0xff]
        %v5348 = vld [vmem:[#allocation2 + $0xad8] sm:$0xff]
        %v5349 = vld [vmem:[#allocation2 + $0xae0] sm:$0xff]
        %v5350 = vld [vmem:[#allocation2 + $0xae8] sm:$0xff]
        %v5351 = vld [vmem:[#allocation2 + $0xaf0] sm:$0xff]
        %v5352 = vld [vmem:[#allocation2 + $0xaf8] sm:$0xff]
        %v5353 = vld [vmem:[#allocation2 + $0xb00] sm:$0xff]
        %v5354 = vld [vmem:[#allocation2 + $0xb08] sm:$0xff]
        %v5355 = vld [vmem:[#allocation2 + $0xb10] sm:$0xff]
        %v5356 = vld [vmem:[#allocation2 + $0xb18] sm:$0xff]
        %v5357 = vld [vmem:[#allocation2 + $0xb20] sm:$0xff]
        %v5358 = vld [vmem:[#allocation2 + $0xb28] sm:$0xff]
        %v5359 = vld [vmem:[#allocation2 + $0xb30] sm:$0xff]
        %v5360 = vld [vmem:[#allocation2 + $0xb38] sm:$0xff]
        %v5361 = vld [vmem:[#allocation2 + $0xb40] sm:$0xff]
        %v5362 = vld [vmem:[#allocation2 + $0xb48] sm:$0xff]
        %v5363 = vld [vmem:[#allocation2 + $0xb50] sm:$0xff]
        %v5364 = vld [vmem:[#allocation2 + $0xb58] sm:$0xff]
        %v5365 = vld [vmem:[#allocation2 + $0xb60] sm:$0xff]
        %v5366 = vld [vmem:[#allocation2 + $0xb68] sm:$0xff]
        %v5367 = vld [vmem:[#allocation2 + $0xb70] sm:$0xff]
        %v5368 = vld [vmem:[#allocation2 + $0xb78] sm:$0xff]
        %v5369 = vld [vmem:[#allocation2 + $0xb80] sm:$0xff]
        %v5370 = vld [vmem:[#allocation2 + $0xb88] sm:$0xff]
        %v5371 = vld [vmem:[#allocation2 + $0xb90] sm:$0xff]
        %v5372 = vld [vmem:[#allocation2 + $0xb98] sm:$0xff]
        %v5373 = vld [vmem:[#allocation2 + $0xba0] sm:$0xff]
        %v5374 = vld [vmem:[#allocation2 + $0xba8] sm:$0xff]
        %v5375 = vld [vmem:[#allocation2 + $0xbb0] sm:$0xff]
        %v5376 = vld [vmem:[#allocation2 + $0xbb8] sm:$0xff]
        %v5377 = vld [vmem:[#allocation2 + $0xbc0] sm:$0xff]
        %v5378 = vld [vmem:[#allocation2 + $0xbc8] sm:$0xff]
        %v5379 = vld [vmem:[#allocation2 + $0xbd0] sm:$0xff]
        %v5380 = vld [vmem:[#allocation2 + $0xbd8] sm:$0xff]
        %v5381 = vld [vmem:[#allocation2 + $0xbe0] sm:$0xff]
        %v5382 = vld [vmem:[#allocation2 + $0xbe8] sm:$0xff]
        %v5383 = vld [vmem:[#allocation2 + $0xbf0] sm:$0xff]
        %v5384 = vld [vmem:[#allocation2 + $0xbf8] sm:$0xff]
        %v5385 = vld [vmem:[#allocation2 + $0xc00] sm:$0xff]
        %v5386 = vld [vmem:[#allocation2 + $0xc08] sm:$0xff]
        %v5387 = vld [vmem:[#allocation2 + $0xc10] sm:$0xff]
        %v5388 = vld [vmem:[#allocation2 + $0xc18] sm:$0xff]
        %v5389 = vld [vmem:[#allocation2 + $0xc20] sm:$0xff]
        %v5390 = vld [vmem:[#allocation2 + $0xc28] sm:$0xff]
        %v5391 = vld [vmem:[#allocation2 + $0xc30] sm:$0xff]
        %v5392 = vld [vmem:[#allocation2 + $0xc38] sm:$0xff]
        %v5393 = vld [vmem:[#allocation2 + $0xc40] sm:$0xff]
        %v5394 = vld [vmem:[#allocation2 + $0xc48] sm:$0xff]
        %v5395 = vld [vmem:[#allocation2 + $0xc50] sm:$0xff]
        %v5396 = vld [vmem:[#allocation2 + $0xc58] sm:$0xff]
        %v5397 = vld [vmem:[#allocation2 + $0xc60] sm:$0xff]
        %v5398 = vld [vmem:[#allocation2 + $0xc68] sm:$0xff]
        %v5399 = vld [vmem:[#allocation2 + $0xc70] sm:$0xff]
        %v5400 = vld [vmem:[#allocation2 + $0xc78] sm:$0xff]
        %v5401 = vld [vmem:[#allocation2 + $0xc80] sm:$0xff]
        %v5402 = vld [vmem:[#allocation2 + $0xc88] sm:$0xff]
        %v5403 = vld [vmem:[#allocation2 + $0xc90] sm:$0xff]
        %v5404 = vld [vmem:[#allocation2 + $0xc98] sm:$0xff]
        %v5405 = vld [vmem:[#allocation2 + $0xca0] sm:$0xff]
        %v5406 = vld [vmem:[#allocation2 + $0xca8] sm:$0xff]
        %v5407 = vld [vmem:[#allocation2 + $0xcb0] sm:$0xff]
        %v5408 = vld [vmem:[#allocation2 + $0xcb8] sm:$0xff]
        %v5409 = vld [vmem:[#allocation2 + $0xcc0] sm:$0xff]
        %v5410 = vld [vmem:[#allocation2 + $0xcc8] sm:$0xff]
        %v5411 = vld [vmem:[#allocation2 + $0xcd0] sm:$0xff]
        %v5412 = vld [vmem:[#allocation2 + $0xcd8] sm:$0xff]
        %v5413 = vld [vmem:[#allocation2 + $0xce0] sm:$0xff]
        %v5414 = vld [vmem:[#allocation2 + $0xce8] sm:$0xff]
        %v5415 = vld [vmem:[#allocation2 + $0xcf0] sm:$0xff]
        %v5416 = vld [vmem:[#allocation2 + $0xcf8] sm:$0xff]
        %v5417 = vld [vmem:[#allocation2 + $0xd00] sm:$0xff]
        %v5418 = vld [vmem:[#allocation2 + $0xd08] sm:$0xff]
        %v5419 = vld [vmem:[#allocation2 + $0xd10] sm:$0xff]
        %v5420 = vld [vmem:[#allocation2 + $0xd18] sm:$0xff]
        %v5421 = vld [vmem:[#allocation2 + $0xd20] sm:$0xff]
        %v5422 = vld [vmem:[#allocation2 + $0xd28] sm:$0xff]
        %v5423 = vld [vmem:[#allocation2 + $0xd30] sm:$0xff]
        %v5424 = vld [vmem:[#allocation2 + $0xd38] sm:$0xff]
        %v5425 = vld [vmem:[#allocation2 + $0xd40] sm:$0xff]
        %v5426 = vld [vmem:[#allocation2 + $0xd48] sm:$0xff]
        %v5427 = vld [vmem:[#allocation2 + $0xd50] sm:$0xff]
        %v5428 = vld [vmem:[#allocation2 + $0xd58] sm:$0xff]
        %v5429 = vld [vmem:[#allocation2 + $0xd60] sm:$0xff]
        %v5430 = vld [vmem:[#allocation2 + $0xd68] sm:$0xff]
        %v5431 = vld [vmem:[#allocation2 + $0xd70] sm:$0xff]
        %v5432 = vld [vmem:[#allocation2 + $0xd78] sm:$0xff]
        %v5433 = vld [vmem:[#allocation2 + $0xd80] sm:$0xff]
        %v5434 = vld [vmem:[#allocation2 + $0xd88] sm:$0xff]
        %v5435 = vld [vmem:[#allocation2 + $0xd90] sm:$0xff]
        %v5436 = vld [vmem:[#allocation2 + $0xd98] sm:$0xff]
        %v5437 = vld [vmem:[#allocation2 + $0xda0] sm:$0xff]
        %v5438 = vld [vmem:[#allocation2 + $0xda8] sm:$0xff]
        %v5439 = vld [vmem:[#allocation2 + $0xdb0] sm:$0xff]
        %v5440 = vld [vmem:[#allocation2 + $0xdb8] sm:$0xff]
        %v5441 = vld [vmem:[#allocation2 + $0xdc0] sm:$0xff]
        %v5442 = vld [vmem:[#allocation2 + $0xdc8] sm:$0xff]
        %v5443 = vld [vmem:[#allocation2 + $0xdd0] sm:$0xff]
        %v5444 = vld [vmem:[#allocation2 + $0xdd8] sm:$0xff]
        %v5445 = vld [vmem:[#allocation2 + $0xde0] sm:$0xff]
        %v5446 = vld [vmem:[#allocation2 + $0xde8] sm:$0xff]
        %v5447 = vld [vmem:[#allocation2 + $0xdf0] sm:$0xff]
        %v5448 = vld [vmem:[#allocation2 + $0xdf8] sm:$0xff]
        %v5449 = vld [vmem:[#allocation2 + $0xe00] sm:$0xff]
        %v5450 = vld [vmem:[#allocation2 + $0xe08] sm:$0xff]
        %v5451 = vld [vmem:[#allocation2 + $0xe10] sm:$0xff]
        %v5452 = vld [vmem:[#allocation2 + $0xe18] sm:$0xff]
        %v5453 = vld [vmem:[#allocation2 + $0xe20] sm:$0xff]
        %v5454 = vld [vmem:[#allocation2 + $0xe28] sm:$0xff]
        %v5455 = vld [vmem:[#allocation2 + $0xe30] sm:$0xff]
        %v5456 = vld [vmem:[#allocation2 + $0xe38] sm:$0xff]
        %v5457 = vld [vmem:[#allocation2 + $0xe40] sm:$0xff]
        %v5458 = vld [vmem:[#allocation2 + $0xe48] sm:$0xff]
        %v5459 = vld [vmem:[#allocation2 + $0xe50] sm:$0xff]
        %v5460 = vld [vmem:[#allocation2 + $0xe58] sm:$0xff]
        %v5461 = vld [vmem:[#allocation2 + $0xe60] sm:$0xff]
        %v5462 = vld [vmem:[#allocation2 + $0xe68] sm:$0xff]
        %v5463 = vld [vmem:[#allocation2 + $0xe70] sm:$0xff]
        %v5464 = vld [vmem:[#allocation2 + $0xe78] sm:$0xff]
        %v5465 = vld [vmem:[#allocation2 + $0xe80] sm:$0xff]
        %v5466 = vld [vmem:[#allocation2 + $0xe88] sm:$0xff]
        %v5467 = vld [vmem:[#allocation2 + $0xe90] sm:$0xff]
        %v5468 = vld [vmem:[#allocation2 + $0xe98] sm:$0xff]
        %v5469 = vld [vmem:[#allocation2 + $0xea0] sm:$0xff]
        %v5470 = vld [vmem:[#allocation2 + $0xea8] sm:$0xff]
        %v5471 = vld [vmem:[#allocation2 + $0xeb0] sm:$0xff]
        %v5472 = vld [vmem:[#allocation2 + $0xeb8] sm:$0xff]
        %v5473 = vld [vmem:[#allocation2 + $0xec0] sm:$0xff]
        %v5474 = vld [vmem:[#allocation2 + $0xec8] sm:$0xff]
        %v5475 = vld [vmem:[#allocation2 + $0xed0] sm:$0xff]
        %v5476 = vld [vmem:[#allocation2 + $0xed8] sm:$0xff]
        %v5477 = vld [vmem:[#allocation2 + $0xee0] sm:$0xff]
        %v5478 = vld [vmem:[#allocation2 + $0xee8] sm:$0xff]
        %v5479 = vld [vmem:[#allocation2 + $0xef0] sm:$0xff]
        %v5480 = vld [vmem:[#allocation2 + $0xef8] sm:$0xff]
        %v5481 = vld [vmem:[#allocation2 + $0xf00] sm:$0xff]
        %v5482 = vld [vmem:[#allocation2 + $0xf08] sm:$0xff]
        %v5483 = vld [vmem:[#allocation2 + $0xf10] sm:$0xff]
        %v5484 = vld [vmem:[#allocation2 + $0xf18] sm:$0xff]
        %v5485 = vld [vmem:[#allocation2 + $0xf20] sm:$0xff]
        %v5486 = vld [vmem:[#allocation2 + $0xf28] sm:$0xff]
        %v5487 = vld [vmem:[#allocation2 + $0xf30] sm:$0xff]
        %v5488 = vld [vmem:[#allocation2 + $0xf38] sm:$0xff]
        %v5489 = vld [vmem:[#allocation2 + $0xf40] sm:$0xff]
        %v5490 = vld [vmem:[#allocation2 + $0xf48] sm:$0xff]
        %v5491 = vld [vmem:[#allocation2 + $0xf50] sm:$0xff]
        %v5492 = vld [vmem:[#allocation2 + $0xf58] sm:$0xff]
        %v5493 = vld [vmem:[#allocation2 + $0xf60] sm:$0xff]
        %v5494 = vld [vmem:[#allocation2 + $0xf68] sm:$0xff]
        %v5495 = vld [vmem:[#allocation2 + $0xf70] sm:$0xff]
        %v5496 = vld [vmem:[#allocation2 + $0xf78] sm:$0xff]
        %v5497 = vld [vmem:[#allocation2 + $0xf80] sm:$0xff]
        %v5498 = vld [vmem:[#allocation2 + $0xf88] sm:$0xff]
        %v5499 = vld [vmem:[#allocation2 + $0xf90] sm:$0xff]
        %v5500 = vld [vmem:[#allocation2 + $0xf98] sm:$0xff]
        %v5501 = vld [vmem:[#allocation2 + $0xfa0] sm:$0xff]
        %v5502 = vld [vmem:[#allocation2 + $0xfa8] sm:$0xff]
        %v5503 = vld [vmem:[#allocation2 + $0xfb0] sm:$0xff]
        %v5504 = vld [vmem:[#allocation2 + $0xfb8] sm:$0xff]
        %v5505 = vld [vmem:[#allocation2 + $0xfc0] sm:$0xff]
        %v5506 = vld [vmem:[#allocation2 + $0xfc8] sm:$0xff]
        %v5507 = vld [vmem:[#allocation2 + $0xfd0] sm:$0xff]
        %v5508 = vld [vmem:[#allocation2 + $0xfd8] sm:$0xff]
        %v5509 = vld [vmem:[#allocation2 + $0xfe0] sm:$0xff]
        %v5510 = vld [vmem:[#allocation2 + $0xfe8] sm:$0xff]
        %v5511 = vld [vmem:[#allocation2 + $0xff0] sm:$0xff]
        %v5512 = vld [vmem:[#allocation2 + $0xff8] sm:$0xff]
        %v5513 = vld [vmem:[#allocation2 + $0x1000] sm:$0xff]
        %v5514 = vld [vmem:[#allocation2 + $0x1008] sm:$0xff]
        %v5515 = vld [vmem:[#allocation2 + $0x1010] sm:$0xff]
        %v5516 = vld [vmem:[#allocation2 + $0x1018] sm:$0xff]
        %v5517 = vld [vmem:[#allocation2 + $0x1020] sm:$0xff]
        %v5518 = vld [vmem:[#allocation2 + $0x1028] sm:$0xff]
        %v5519 = vld [vmem:[#allocation2 + $0x1030] sm:$0xff]
        %v5520 = vld [vmem:[#allocation2 + $0x1038] sm:$0xff]
        %v5521 = vld [vmem:[#allocation2 + $0x1040] sm:$0xff]
        %v5522 = vld [vmem:[#allocation2 + $0x1048] sm:$0xff]
        %v5523 = vld [vmem:[#allocation2 + $0x1050] sm:$0xff]
        %v5524 = vld [vmem:[#allocation2 + $0x1058] sm:$0xff]
        %v5525 = vld [vmem:[#allocation2 + $0x1060] sm:$0xff]
        %v5526 = vld [vmem:[#allocation2 + $0x1068] sm:$0xff]
        %v5527 = vld [vmem:[#allocation2 + $0x1070] sm:$0xff]
        %v5528 = vld [vmem:[#allocation2 + $0x1078] sm:$0xff]
        %v5529 = vld [vmem:[#allocation2 + $0x1080] sm:$0xff]
        %v5530 = vld [vmem:[#allocation2 + $0x1088] sm:$0xff]
        %v5531 = vld [vmem:[#allocation2 + $0x1090] sm:$0xff]
        %v5532 = vld [vmem:[#allocation2 + $0x1098] sm:$0xff]
        %v5533 = vld [vmem:[#allocation2 + $0x10a0] sm:$0xff]
        %v5534 = vld [vmem:[#allocation2 + $0x10a8] sm:$0xff]
        %v5535 = vld [vmem:[#allocation2 + $0x10b0] sm:$0xff]
        %v5536 = vld [vmem:[#allocation2 + $0x10b8] sm:$0xff]
        %v5537 = vld [vmem:[#allocation2 + $0x10c0] sm:$0xff]
        %v5538 = vld [vmem:[#allocation2 + $0x10c8] sm:$0xff]
        %v5539 = vld [vmem:[#allocation2 + $0x10d0] sm:$0xff]
        %v5540 = vld [vmem:[#allocation2 + $0x10d8] sm:$0xff]
        %v5541 = vld [vmem:[#allocation2 + $0x10e0] sm:$0xff]
        %v5542 = vld [vmem:[#allocation2 + $0x10e8] sm:$0xff]
        %v5543 = vld [vmem:[#allocation2 + $0x10f0] sm:$0xff]
        %v5544 = vld [vmem:[#allocation2 + $0x10f8] sm:$0xff]
        %v5545 = vld [vmem:[#allocation2 + $0x1100] sm:$0xff]
        %v5546 = vld [vmem:[#allocation2 + $0x1108] sm:$0xff]
        %v5547 = vld [vmem:[#allocation2 + $0x1110] sm:$0xff]
        %v5548 = vld [vmem:[#allocation2 + $0x1118] sm:$0xff]
        %v5549 = vld [vmem:[#allocation2 + $0x1120] sm:$0xff]
        %v5550 = vld [vmem:[#allocation2 + $0x1128] sm:$0xff]
        %v5551 = vld [vmem:[#allocation2 + $0x1130] sm:$0xff]
        %v5552 = vld [vmem:[#allocation2 + $0x1138] sm:$0xff]
        %v5553 = vld [vmem:[#allocation2 + $0x1140] sm:$0xff]
        %v5554 = vld [vmem:[#allocation2 + $0x1148] sm:$0xff]
        %v5555 = vld [vmem:[#allocation2 + $0x1150] sm:$0xff]
        %v5556 = vld [vmem:[#allocation2 + $0x1158] sm:$0xff]
        %v5557 = vld [vmem:[#allocation2 + $0x1160] sm:$0xff]
        %v5558 = vld [vmem:[#allocation2 + $0x1168] sm:$0xff]
        %v5559 = vld [vmem:[#allocation2 + $0x1170] sm:$0xff]
        %v5560 = vld [vmem:[#allocation2 + $0x1178] sm:$0xff]
        %v5561 = vld [vmem:[#allocation2 + $0x1180] sm:$0xff]
        %v5562 = vld [vmem:[#allocation2 + $0x1188] sm:$0xff]
        %v5563 = vld [vmem:[#allocation2 + $0x1190] sm:$0xff]
        %v5564 = vld [vmem:[#allocation2 + $0x1198] sm:$0xff]
        %v5565 = vld [vmem:[#allocation2 + $0x11a0] sm:$0xff]
        %v5566 = vld [vmem:[#allocation2 + $0x11a8] sm:$0xff]
        %v5567 = vld [vmem:[#allocation2 + $0x11b0] sm:$0xff]
        %v5568 = vld [vmem:[#allocation2 + $0x11b8] sm:$0xff]
        %v5569 = vld [vmem:[#allocation2 + $0x11c0] sm:$0xff]
        %v5570 = vld [vmem:[#allocation2 + $0x11c8] sm:$0xff]
        %v5571 = vld [vmem:[#allocation2 + $0x11d0] sm:$0xff]
        %v5572 = vld [vmem:[#allocation2 + $0x11d8] sm:$0xff]
        %v5573 = vld [vmem:[#allocation2 + $0x11e0] sm:$0xff]
        %v5574 = vld [vmem:[#allocation2 + $0x11e8] sm:$0xff]
        %v5575 = vld [vmem:[#allocation2 + $0x11f0] sm:$0xff]
        %v5576 = vld [vmem:[#allocation2 + $0x11f8] sm:$0xff]
        %v5577 = vld [vmem:[#allocation2 + $0x1200] sm:$0xff]
        %v5578 = vld [vmem:[#allocation2 + $0x1208] sm:$0xff]
        %v5579 = vld [vmem:[#allocation2 + $0x1210] sm:$0xff]
        %v5580 = vld [vmem:[#allocation2 + $0x1218] sm:$0xff]
        %v5581 = vld [vmem:[#allocation2 + $0x1220] sm:$0xff]
        %v5582 = vld [vmem:[#allocation2 + $0x1228] sm:$0xff]
        %v5583 = vld [vmem:[#allocation2 + $0x1230] sm:$0xff]
        %v5584 = vld [vmem:[#allocation2 + $0x1238] sm:$0xff]
        %v5585 = vld [vmem:[#allocation2 + $0x1240] sm:$0xff]
        %v5586 = vld [vmem:[#allocation2 + $0x1248] sm:$0xff]
        %v5587 = vld [vmem:[#allocation2 + $0x1250] sm:$0xff]
        %v5588 = vld [vmem:[#allocation2 + $0x1258] sm:$0xff]
        %v5589 = vld [vmem:[#allocation2 + $0x1260] sm:$0xff]
        %v5590 = vld [vmem:[#allocation2 + $0x1268] sm:$0xff]
        %v5591 = vld [vmem:[#allocation2 + $0x1270] sm:$0xff]
        %v5592 = vld [vmem:[#allocation2 + $0x1278] sm:$0xff]
        %v5593 = vld [vmem:[#allocation2 + $0x1280] sm:$0xff]
        %v5594 = vld [vmem:[#allocation2 + $0x1288] sm:$0xff]
        %v5595 = vld [vmem:[#allocation2 + $0x1290] sm:$0xff]
        %v5596 = vld [vmem:[#allocation2 + $0x1298] sm:$0xff]
        %v5597 = vld [vmem:[#allocation2 + $0x12a0] sm:$0xff]
        %v5598 = vld [vmem:[#allocation2 + $0x12a8] sm:$0xff]
        %v5599 = vld [vmem:[#allocation2 + $0x12b0] sm:$0xff]
        %v5600 = vld [vmem:[#allocation2 + $0x12b8] sm:$0xff]
        %v5601 = vld [vmem:[#allocation2 + $0x12c0] sm:$0xff]
        %v5602 = vld [vmem:[#allocation2 + $0x12c8] sm:$0xff]
        %v5603 = vld [vmem:[#allocation2 + $0x12d0] sm:$0xff]
        %v5604 = vld [vmem:[#allocation2 + $0x12d8] sm:$0xff]
        %v5605 = vld [vmem:[#allocation2 + $0x12e0] sm:$0xff]
        %v5606 = vld [vmem:[#allocation2 + $0x12e8] sm:$0xff]
        %v5607 = vld [vmem:[#allocation2 + $0x12f0] sm:$0xff]
        %v5608 = vld [vmem:[#allocation2 + $0x12f8] sm:$0xff]
        %v5609 = vld [vmem:[#allocation2 + $0x1300] sm:$0xff]
        %v5610 = vld [vmem:[#allocation2 + $0x1308] sm:$0xff]
        %v5611 = vld [vmem:[#allocation2 + $0x1310] sm:$0xff]
        %v5612 = vld [vmem:[#allocation2 + $0x1318] sm:$0xff]
        %v5613 = vld [vmem:[#allocation2 + $0x1320] sm:$0xff]
        %v5614 = vld [vmem:[#allocation2 + $0x1328] sm:$0xff]
        %v5615 = vld [vmem:[#allocation2 + $0x1330] sm:$0xff]
        %v5616 = vld [vmem:[#allocation2 + $0x1338] sm:$0xff]
        %v5617 = vld [vmem:[#allocation2 + $0x1340] sm:$0xff]
        %v5618 = vld [vmem:[#allocation2 + $0x1348] sm:$0xff]
        %v5619 = vld [vmem:[#allocation2 + $0x1350] sm:$0xff]
        %v5620 = vld [vmem:[#allocation2 + $0x1358] sm:$0xff]
        %v5621 = vld [vmem:[#allocation2 + $0x1360] sm:$0xff]
        %v5622 = vld [vmem:[#allocation2 + $0x1368] sm:$0xff]
        %v5623 = vld [vmem:[#allocation2 + $0x1370] sm:$0xff]
        %v5624 = vld [vmem:[#allocation2 + $0x1378] sm:$0xff]
        %v5625 = vld [vmem:[#allocation2 + $0x1380] sm:$0xff]
        %v5626 = vld [vmem:[#allocation2 + $0x1388] sm:$0xff]
        %v5627 = vld [vmem:[#allocation2 + $0x1390] sm:$0xff]
        %v5628 = vld [vmem:[#allocation2 + $0x1398] sm:$0xff]
        %v5629 = vld [vmem:[#allocation2 + $0x13a0] sm:$0xff]
        %v5630 = vld [vmem:[#allocation2 + $0x13a8] sm:$0xff]
        %v5631 = vld [vmem:[#allocation2 + $0x13b0] sm:$0xff]
        %v5632 = vld [vmem:[#allocation2 + $0x13b8] sm:$0xff]
        %v5633 = vld [vmem:[#allocation2 + $0x13c0] sm:$0xff]
        %v5634 = vld [vmem:[#allocation2 + $0x13c8] sm:$0xff]
        %v5635 = vld [vmem:[#allocation2 + $0x13d0] sm:$0xff]
        %v5636 = vld [vmem:[#allocation2 + $0x13d8] sm:$0xff]
        %v5637 = vld [vmem:[#allocation2 + $0x13e0] sm:$0xff]
        %v5638 = vld [vmem:[#allocation2 + $0x13e8] sm:$0xff]
        %v5639 = vld [vmem:[#allocation2 + $0x13f0] sm:$0xff]
        %v5640 = vld [vmem:[#allocation2 + $0x13f8] sm:$0xff]
        %v5641 = vld [vmem:[#allocation2 + $0x1400] sm:$0xff]
        %v5642 = vld [vmem:[#allocation2 + $0x1408] sm:$0xff]
        %v5643 = vld [vmem:[#allocation2 + $0x1410] sm:$0xff]
        %v5644 = vld [vmem:[#allocation2 + $0x1418] sm:$0xff]
        %v5645 = vld [vmem:[#allocation2 + $0x1420] sm:$0xff]
        %v5646 = vld [vmem:[#allocation2 + $0x1428] sm:$0xff]
        %v5647 = vld [vmem:[#allocation2 + $0x1430] sm:$0xff]
        %v5648 = vld [vmem:[#allocation2 + $0x1438] sm:$0xff]
        %v5649 = vld [vmem:[#allocation2 + $0x1440] sm:$0xff]
        %v5650 = vld [vmem:[#allocation2 + $0x1448] sm:$0xff]
        %v5651 = vld [vmem:[#allocation2 + $0x1450] sm:$0xff]
        %v5652 = vld [vmem:[#allocation2 + $0x1458] sm:$0xff]
        %v5653 = vld [vmem:[#allocation2 + $0x1460] sm:$0xff]
        %v5654 = vld [vmem:[#allocation2 + $0x1468] sm:$0xff]
        %v5655 = vld [vmem:[#allocation2 + $0x1470] sm:$0xff]
        %v5656 = vld [vmem:[#allocation2 + $0x1478] sm:$0xff]
        %v5657 = vld [vmem:[#allocation2 + $0x1480] sm:$0xff]
        %v5658 = vld [vmem:[#allocation2 + $0x1488] sm:$0xff]
        %v5659 = vld [vmem:[#allocation2 + $0x1490] sm:$0xff]
        %v5660 = vld [vmem:[#allocation2 + $0x1498] sm:$0xff]
        %v5661 = vld [vmem:[#allocation2 + $0x14a0] sm:$0xff]
        %v5662 = vld [vmem:[#allocation2 + $0x14a8] sm:$0xff]
        %v5663 = vld [vmem:[#allocation2 + $0x14b0] sm:$0xff]
        %v5664 = vld [vmem:[#allocation2 + $0x14b8] sm:$0xff]
        %v5665 = vld [vmem:[#allocation2 + $0x14c0] sm:$0xff]
        %v5666 = vld [vmem:[#allocation2 + $0x14c8] sm:$0xff]
        %v5667 = vld [vmem:[#allocation2 + $0x14d0] sm:$0xff]
        %v5668 = vld [vmem:[#allocation2 + $0x14d8] sm:$0xff]
        %v5669 = vld [vmem:[#allocation2 + $0x14e0] sm:$0xff]
        %v5670 = vld [vmem:[#allocation2 + $0x14e8] sm:$0xff]
        %v5671 = vld [vmem:[#allocation2 + $0x14f0] sm:$0xff]
        %v5672 = vld [vmem:[#allocation2 + $0x14f8] sm:$0xff]
        %v5673 = vld [vmem:[#allocation2 + $0x1500] sm:$0xff]
        %v5674 = vld [vmem:[#allocation2 + $0x1508] sm:$0xff]
        %v5675 = vld [vmem:[#allocation2 + $0x1510] sm:$0xff]
        %v5676 = vld [vmem:[#allocation2 + $0x1518] sm:$0xff]
        %v5677 = vld [vmem:[#allocation2 + $0x1520] sm:$0xff]
        %v5678 = vld [vmem:[#allocation2 + $0x1528] sm:$0xff]
        %v5679 = vld [vmem:[#allocation2 + $0x1530] sm:$0xff]
        %v5680 = vld [vmem:[#allocation2 + $0x1538] sm:$0xff]
        %v5681 = vld [vmem:[#allocation2 + $0x1540] sm:$0xff]
        %v5682 = vld [vmem:[#allocation2 + $0x1548] sm:$0xff]
        %v5683 = vld [vmem:[#allocation2 + $0x1550] sm:$0xff]
        %v5684 = vld [vmem:[#allocation2 + $0x1558] sm:$0xff]
        %v5685 = vld [vmem:[#allocation2 + $0x1560] sm:$0xff]
        %v5686 = vld [vmem:[#allocation2 + $0x1568] sm:$0xff]
        %v5687 = vld [vmem:[#allocation2 + $0x1570] sm:$0xff]
        %v5688 = vld [vmem:[#allocation2 + $0x1578] sm:$0xff]
        %v5689 = vld [vmem:[#allocation2 + $0x1580] sm:$0xff]
        %v5690 = vld [vmem:[#allocation2 + $0x1588] sm:$0xff]
        %v5691 = vld [vmem:[#allocation2 + $0x1590] sm:$0xff]
        %v5692 = vld [vmem:[#allocation2 + $0x1598] sm:$0xff]
        %v5693 = vld [vmem:[#allocation2 + $0x15a0] sm:$0xff]
        %v5694 = vld [vmem:[#allocation2 + $0x15a8] sm:$0xff]
        %v5695 = vld [vmem:[#allocation2 + $0x15b0] sm:$0xff]
        %v5696 = vld [vmem:[#allocation2 + $0x15b8] sm:$0xff]
        %v5697 = vld [vmem:[#allocation2 + $0x15c0] sm:$0xff]
        %v5698 = vld [vmem:[#allocation2 + $0x15c8] sm:$0xff]
        %v5699 = vld [vmem:[#allocation2 + $0x15d0] sm:$0xff]
        %v5700 = vld [vmem:[#allocation2 + $0x15d8] sm:$0xff]
        %v5701 = vld [vmem:[#allocation2 + $0x15e0] sm:$0xff]
        %v5702 = vld [vmem:[#allocation2 + $0x15e8] sm:$0xff]
        %v5703 = vld [vmem:[#allocation2 + $0x15f0] sm:$0xff]
        %v5704 = vld [vmem:[#allocation2 + $0x15f8] sm:$0xff]
        %v5705 = vld [vmem:[#allocation2 + $0x1600] sm:$0xff]
        %v5706 = vld [vmem:[#allocation2 + $0x1608] sm:$0xff]
        %v5707 = vld [vmem:[#allocation2 + $0x1610] sm:$0xff]
        %v5708 = vld [vmem:[#allocation2 + $0x1618] sm:$0xff]
        %v5709 = vld [vmem:[#allocation2 + $0x1620] sm:$0xff]
        %v5710 = vld [vmem:[#allocation2 + $0x1628] sm:$0xff]
        %v5711 = vld [vmem:[#allocation2 + $0x1630] sm:$0xff]
        %v5712 = vld [vmem:[#allocation2 + $0x1638] sm:$0xff]
        %v5713 = vld [vmem:[#allocation2 + $0x1640] sm:$0xff]
        %v5714 = vld [vmem:[#allocation2 + $0x1648] sm:$0xff]
        %v5715 = vld [vmem:[#allocation2 + $0x1650] sm:$0xff]
        %v5716 = vld [vmem:[#allocation2 + $0x1658] sm:$0xff]
        %v5717 = vld [vmem:[#allocation2 + $0x1660] sm:$0xff]
        %v5718 = vld [vmem:[#allocation2 + $0x1668] sm:$0xff]
        %v5719 = vld [vmem:[#allocation2 + $0x1670] sm:$0xff]
        %v5720 = vld [vmem:[#allocation2 + $0x1678] sm:$0xff]
        %v5721 = vld [vmem:[#allocation2 + $0x1680] sm:$0xff]
        %v5722 = vld [vmem:[#allocation2 + $0x1688] sm:$0xff]
        %v5723 = vld [vmem:[#allocation2 + $0x1690] sm:$0xff]
        %v5724 = vld [vmem:[#allocation2 + $0x1698] sm:$0xff]
        %v5725 = vld [vmem:[#allocation2 + $0x16a0] sm:$0xff]
        %v5726 = vld [vmem:[#allocation2 + $0x16a8] sm:$0xff]
        %v5727 = vld [vmem:[#allocation2 + $0x16b0] sm:$0xff]
        %v5728 = vld [vmem:[#allocation2 + $0x16b8] sm:$0xff]
        %v5729 = vld [vmem:[#allocation2 + $0x16c0] sm:$0xff]
        %v5730 = vld [vmem:[#allocation2 + $0x16c8] sm:$0xff]
        %v5731 = vld [vmem:[#allocation2 + $0x16d0] sm:$0xff]
        %v5732 = vld [vmem:[#allocation2 + $0x16d8] sm:$0xff]
        %v5733 = vld [vmem:[#allocation2 + $0x16e0] sm:$0xff]
        %v5734 = vld [vmem:[#allocation2 + $0x16e8] sm:$0xff]
        %v5735 = vld [vmem:[#allocation2 + $0x16f0] sm:$0xff]
        %v5736 = vld [vmem:[#allocation2 + $0x16f8] sm:$0xff]
        %v5737 = vld [vmem:[#allocation2 + $0x1700] sm:$0xff]
        %v5738 = vld [vmem:[#allocation2 + $0x1708] sm:$0xff]
        %vm5739 = vcmask 130048
        %v5741 = vsel %vm5739, %v5000, 0
        %5743 = vmatprep.subr.mxu0 %v5002
        %5744 = vmatpush1.msra.mxu0 %v5001
        %5745 = vmatprep.subr.mxu0 %v5043
        %5746 = vmatpush1.msra.mxu0 %v5042
        %5747 = vmatprep.subr.mxu0 %v5084
        %5748 = vmatpush1.msra.mxu0 %v5083
        %5749 = vmatprep.subr.mxu0 %v5125
        %5750 = vmatpush1.msra.mxu0 %v5124
        %5751 = vmatprep.subr.mxu0 %v5166
        %5752 = vmatpush1.msra.mxu0 %v5165
        %5753 = vmatprep.subr.mxu0 %v5207
        %5754 = vmatpush1.msra.mxu0 %v5206
        %5755 = vmatprep.subr.mxu0 %v5248
        %5756 = vmatpush1.msra.mxu0 %v5247
        %5757 = vmatprep.subr.mxu0 %v5289
        %5758 = vmatpush1.msra.mxu0 %v5288
        %5759 = vmatprep.subr.mxu0 %v5330
        %5760 = vmatpush1.msra.mxu0 %v5329
        %5761 = vmatprep.subr.mxu0 %v5371
        %5762 = vmatpush1.msra.mxu0 %v5370
        %5763 = vmatprep.subr.mxu0 %v5412
        %5764 = vmatpush1.msra.mxu0 %v5411
        %5765 = vmatprep.subr.mxu0 %v5453
        %5766 = vmatpush1.msra.mxu0 %v5452
        %5767 = vmatprep.subr.mxu0 %v5494
        %5768 = vmatpush1.msra.mxu0 %v5493
        %5769 = vmatprep.subr.mxu0 %v5535
        %5770 = vmatpush1.msra.mxu0 %v5534
        %5771 = vmatprep.subr.mxu0 %v5576
        %5772 = vmatpush1.msra.mxu0 %v5575
        %5773 = vmatprep.subr.mxu0 %v5617
        %5774 = vmatpush1.msra.mxu0 %v5616
        %5775 = vmatprep.subr.mxu0 %v5658
        %5776 = vmatpush1.msra.mxu0 %v5657
        %5777 = vmatprep.subr.mxu0 %v5699
        %5778 = vmatpush1.msra.mxu0 %v5698
        %5779 = vmatprep.subr.mxu0 0.0
        %5780 = vmatpush1.msra.mxu0 0.0
        %5781 = vmatprep.subr.mxu0 0.0
        %5782 = vmatpush1.msra.mxu0 0.0
        %5783 = vmatprep.subr.mxu0 0.0
        %5784 = vmatpush1.msra.mxu0 0.0
        %5785 = vmatprep.subr.mxu0 0.0
        %5786 = vmatpush1.msra.mxu0 0.0
        %5787 = vmatprep.subr.mxu0 0.0
        %5788 = vmatpush1.msra.mxu0 0.0
        %5789 = vmatprep.subr.mxu0 0.0
        %5790 = vmatpush1.msra.mxu0 0.0
        %5791 = vmatprep.subr.mxu0 0.0
        %5792 = vmatpush1.msra.mxu0 0.0
        %5793 = vmatprep.subr.mxu0 0.0
        %5794 = vmatpush1.msra.mxu0 0.0
        %5795 = vmatprep.subr.mxu0 0.0
        %5796 = vmatpush1.msra.mxu0 0.0
        %5797 = vmatprep.subr.mxu0 0.0
        %5798 = vmatpush1.msra.mxu0 0.0
        %5799 = vmatprep.subr.mxu0 0.0
        %5800 = vmatpush1.msra.mxu0 0.0
        %5801 = vmatprep.subr.mxu0 0.0
        %5802 = vmatpush1.msra.mxu0 0.0
        %5803 = vmatprep.subr.mxu0 0.0
        %5804 = vmatpush1.msra.mxu0 0.0
        %5805 = vmatprep.subr.mxu0 0.0
        %5806 = vmatpush1.msra.mxu0 0.0
        %5807 = vmatprep.mubr.f32.mxu0 %v5741
        %5808 = vmatmul.mubr.f32.gmra.mrb[0].mxu0 %v4999
        %v5809 = vpop.f32.mrb[0].mxu0
        %v5810 = vadd.f32 0.0, %v5809
        %v5811 = vpop.f32.mrb[0].mxu0
        %v5812 = vadd.f32 0.0, %v5811
        %5813 = vdwg.mxu0
        %5814 = vmatprep.subr.mxu0 %v5004
        %5815 = vmatpush1.msra.mxu0 %v5003
        %5816 = vmatprep.subr.mxu0 %v5045
        %5817 = vmatpush1.msra.mxu0 %v5044
        %5818 = vmatprep.subr.mxu0 %v5086
        %5819 = vmatpush1.msra.mxu0 %v5085
        %5820 = vmatprep.subr.mxu0 %v5127
        %5821 = vmatpush1.msra.mxu0 %v5126
        %5822 = vmatprep.subr.mxu0 %v5168
        %5823 = vmatpush1.msra.mxu0 %v5167
        %5824 = vmatprep.subr.mxu0 %v5209
        %5825 = vmatpush1.msra.mxu0 %v5208
        %5826 = vmatprep.subr.mxu0 %v5250
        %5827 = vmatpush1.msra.mxu0 %v5249
        %5828 = vmatprep.subr.mxu0 %v5291
        %5829 = vmatpush1.msra.mxu0 %v5290
        %5830 = vmatprep.subr.mxu0 %v5332
        %5831 = vmatpush1.msra.mxu0 %v5331
        %5832 = vmatprep.subr.mxu0 %v5373
        %5833 = vmatpush1.msra.mxu0 %v5372
        %5834 = vmatprep.subr.mxu0 %v5414
        %5835 = vmatpush1.msra.mxu0 %v5413
        %5836 = vmatprep.subr.mxu0 %v5455
        %5837 = vmatpush1.msra.mxu0 %v5454
        %5838 = vmatprep.subr.mxu0 %v5496
        %5839 = vmatpush1.msra.mxu0 %v5495
        %5840 = vmatprep.subr.mxu0 %v5537
        %5841 = vmatpush1.msra.mxu0 %v5536
        %5842 = vmatprep.subr.mxu0 %v5578
        %5843 = vmatpush1.msra.mxu0 %v5577
        %5844 = vmatprep.subr.mxu0 %v5619
        %5845 = vmatpush1.msra.mxu0 %v5618
        %5846 = vmatprep.subr.mxu0 %v5660
        %5847 = vmatpush1.msra.mxu0 %v5659
        %5848 = vmatprep.subr.mxu0 %v5701
        %5849 = vmatpush1.msra.mxu0 %v5700
        %5850 = vmatprep.subr.mxu0 0.0
        %5851 = vmatpush1.msra.mxu0 0.0
        %5852 = vmatprep.subr.mxu0 0.0
        %5853 = vmatpush1.msra.mxu0 0.0
        %5854 = vmatprep.subr.mxu0 0.0
        %5855 = vmatpush1.msra.mxu0 0.0
        %5856 = vmatprep.subr.mxu0 0.0
        %5857 = vmatpush1.msra.mxu0 0.0
        %5858 = vmatprep.subr.mxu0 0.0
        %5859 = vmatpush1.msra.mxu0 0.0
        %5860 = vmatprep.subr.mxu0 0.0
        %5861 = vmatpush1.msra.mxu0 0.0
        %5862 = vmatprep.subr.mxu0 0.0
        %5863 = vmatpush1.msra.mxu0 0.0
        %5864 = vmatprep.subr.mxu0 0.0
        %5865 = vmatpush1.msra.mxu0 0.0
        %5866 = vmatprep.subr.mxu0 0.0
        %5867 = vmatpush1.msra.mxu0 0.0
        %5868 = vmatprep.subr.mxu0 0.0
        %5869 = vmatpush1.msra.mxu0 0.0
        %5870 = vmatprep.subr.mxu0 0.0
        %5871 = vmatpush1.msra.mxu0 0.0
        %5872 = vmatprep.subr.mxu0 0.0
        %5873 = vmatpush1.msra.mxu0 0.0
        %5874 = vmatprep.subr.mxu0 0.0
        %5875 = vmatpush1.msra.mxu0 0.0
        %5876 = vmatprep.subr.mxu0 0.0
        %5877 = vmatpush1.msra.mxu0 0.0
        %5878 = vmatprep.mubr.f32.mxu0 %v5741
        %5879 = vmatmul.mubr.f32.gmra.mrb[0].mxu0 %v4999
        %v5880 = vpop.f32.mrb[0].mxu0
        %v5881 = vadd.f32 0.0, %v5880
        %v5882 = vpop.f32.mrb[0].mxu0
        %v5883 = vadd.f32 0.0, %v5882
        %5884 = vdwg.mxu0
        %5885 = vmatprep.subr.mxu0 %v5006
        %5886 = vmatpush1.msra.mxu0 %v5005
        %5887 = vmatprep.subr.mxu0 %v5047
        %5888 = vmatpush1.msra.mxu0 %v5046
        %5889 = vmatprep.subr.mxu0 %v5088
        %5890 = vmatpush1.msra.mxu0 %v5087
        %5891 = vmatprep.subr.mxu0 %v5129
        %5892 = vmatpush1.msra.mxu0 %v5128
        %5893 = vmatprep.subr.mxu0 %v5170
        %5894 = vmatpush1.msra.mxu0 %v5169
        %5895 = vmatprep.subr.mxu0 %v5211
        %5896 = vmatpush1.msra.mxu0 %v5210
        %5897 = vmatprep.subr.mxu0 %v5252
        %5898 = vmatpush1.msra.mxu0 %v5251
        %5899 = vmatprep.subr.mxu0 %v5293
        %5900 = vmatpush1.msra.mxu0 %v5292
        %5901 = vmatprep.subr.mxu0 %v5334
        %5902 = vmatpush1.msra.mxu0 %v5333
        %5903 = vmatprep.subr.mxu0 %v5375
        %5904 = vmatpush1.msra.mxu0 %v5374
        %5905 = vmatprep.subr.mxu0 %v5416
        %5906 = vmatpush1.msra.mxu0 %v5415
        %5907 = vmatprep.subr.mxu0 %v5457
        %5908 = vmatpush1.msra.mxu0 %v5456
        %5909 = vmatprep.subr.mxu0 %v5498
        %5910 = vmatpush1.msra.mxu0 %v5497
        %5911 = vmatprep.subr.mxu0 %v5539
        %5912 = vmatpush1.msra.mxu0 %v5538
        %5913 = vmatprep.subr.mxu0 %v5580
        %5914 = vmatpush1.msra.mxu0 %v5579
        %5915 = vmatprep.subr.mxu0 %v5621
        %5916 = vmatpush1.msra.mxu0 %v5620
        %5917 = vmatprep.subr.mxu0 %v5662
        %5918 = vmatpush1.msra.mxu0 %v5661
        %5919 = vmatprep.subr.mxu0 %v5703
        %5920 = vmatpush1.msra.mxu0 %v5702
        %5921 = vmatprep.subr.mxu0 0.0
        %5922 = vmatpush1.msra.mxu0 0.0
        %5923 = vmatprep.subr.mxu0 0.0
        %5924 = vmatpush1.msra.mxu0 0.0
        %5925 = vmatprep.subr.mxu0 0.0
        %5926 = vmatpush1.msra.mxu0 0.0
        %5927 = vmatprep.subr.mxu0 0.0
        %5928 = vmatpush1.msra.mxu0 0.0
        %5929 = vmatprep.subr.mxu0 0.0
        %5930 = vmatpush1.msra.mxu0 0.0
        %5931 = vmatprep.subr.mxu0 0.0
        %5932 = vmatpush1.msra.mxu0 0.0
        %5933 = vmatprep.subr.mxu0 0.0
        %5934 = vmatpush1.msra.mxu0 0.0
        %5935 = vmatprep.subr.mxu0 0.0
        %5936 = vmatpush1.msra.mxu0 0.0
        %5937 = vmatprep.subr.mxu0 0.0
        %5938 = vmatpush1.msra.mxu0 0.0
        %5939 = vmatprep.subr.mxu0 0.0
        %5940 = vmatpush1.msra.mxu0 0.0
        %5941 = vmatprep.subr.mxu0 0.0
        %5942 = vmatpush1.msra.mxu0 0.0
        %5943 = vmatprep.subr.mxu0 0.0
        %5944 = vmatpush1.msra.mxu0 0.0
        %5945 = vmatprep.subr.mxu0 0.0
        %5946 = vmatpush1.msra.mxu0 0.0
        %5947 = vmatprep.subr.mxu0 0.0
        %5948 = vmatpush1.msra.mxu0 0.0
        %5949 = vmatprep.mubr.f32.mxu0 %v5741
        %5950 = vmatmul.mubr.f32.gmra.mrb[0].mxu0 %v4999
        %v5951 = vpop.f32.mrb[0].mxu0
        %v5952 = vadd.f32 0.0, %v5951
        %v5953 = vpop.f32.mrb[0].mxu0
        %v5954 = vadd.f32 0.0, %v5953
        %5955 = vdwg.mxu0
        %5956 = vmatprep.subr.mxu0 %v5008
        %5957 = vmatpush1.msra.mxu0 %v5007
        %5958 = vmatprep.subr.mxu0 %v5049
        %5959 = vmatpush1.msra.mxu0 %v5048
        %5960 = vmatprep.subr.mxu0 %v5090
        %5961 = vmatpush1.msra.mxu0 %v5089
        %5962 = vmatprep.subr.mxu0 %v5131
        %5963 = vmatpush1.msra.mxu0 %v5130
        %5964 = vmatprep.subr.mxu0 %v5172
        %5965 = vmatpush1.msra.mxu0 %v5171
        %5966 = vmatprep.subr.mxu0 %v5213
        %5967 = vmatpush1.msra.mxu0 %v5212
        %5968 = vmatprep.subr.mxu0 %v5254
        %5969 = vmatpush1.msra.mxu0 %v5253
        %5970 = vmatprep.subr.mxu0 %v5295
        %5971 = vmatpush1.msra.mxu0 %v5294
        %5972 = vmatprep.subr.mxu0 %v5336
        %5973 = vmatpush1.msra.mxu0 %v5335
        %5974 = vmatprep.subr.mxu0 %v5377
        %5975 = vmatpush1.msra.mxu0 %v5376
        %5976 = vmatprep.subr.mxu0 %v5418
        %5977 = vmatpush1.msra.mxu0 %v5417
        %5978 = vmatprep.subr.mxu0 %v5459
        %5979 = vmatpush1.msra.mxu0 %v5458
        %5980 = vmatprep.subr.mxu0 %v5500
        %5981 = vmatpush1.msra.mxu0 %v5499
        %5982 = vmatprep.subr.mxu0 %v5541
        %5983 = vmatpush1.msra.mxu0 %v5540
        %5984 = vmatprep.subr.mxu0 %v5582
        %5985 = vmatpush1.msra.mxu0 %v5581
        %5986 = vmatprep.subr.mxu0 %v5623
        %5987 = vmatpush1.msra.mxu0 %v5622
        %5988 = vmatprep.subr.mxu0 %v5664
        %5989 = vmatpush1.msra.mxu0 %v5663
        %5990 = vmatprep.subr.mxu0 %v5705
        %5991 = vmatpush1.msra.mxu0 %v5704
        %5992 = vmatprep.subr.mxu0 0.0
        %5993 = vmatpush1.msra.mxu0 0.0
        %5994 = vmatprep.subr.mxu0 0.0
        %5995 = vmatpush1.msra.mxu0 0.0
        %5996 = vmatprep.subr.mxu0 0.0
        %5997 = vmatpush1.msra.mxu0 0.0
        %5998 = vmatprep.subr.mxu0 0.0
        %5999 = vmatpush1.msra.mxu0 0.0
        %6000 = vmatprep.subr.mxu0 0.0
        %6001 = vmatpush1.msra.mxu0 0.0
        %6002 = vmatprep.subr.mxu0 0.0
        %6003 = vmatpush1.msra.mxu0 0.0
        %6004 = vmatprep.subr.mxu0 0.0
        %6005 = vmatpush1.msra.mxu0 0.0
        %6006 = vmatprep.subr.mxu0 0.0
        %6007 = vmatpush1.msra.mxu0 0.0
        %6008 = vmatprep.subr.mxu0 0.0
        %6009 = vmatpush1.msra.mxu0 0.0
        %6010 = vmatprep.subr.mxu0 0.0
        %6011 = vmatpush1.msra.mxu0 0.0
        %6012 = vmatprep.subr.mxu0 0.0
        %6013 = vmatpush1.msra.mxu0 0.0
        %6014 = vmatprep.subr.mxu0 0.0
        %6015 = vmatpush1.msra.mxu0 0.0
        %6016 = vmatprep.subr.mxu0 0.0
        %6017 = vmatpush1.msra.mxu0 0.0
        %6018 = vmatprep.subr.mxu0 0.0
        %6019 = vmatpush1.msra.mxu0 0.0
        %6020 = vmatprep.mubr.f32.mxu0 %v5741
        %6021 = vmatmul.mubr.f32.gmra.mrb[0].mxu0 %v4999
        %v6022 = vpop.f32.mrb[0].mxu0
        %v6023 = vadd.f32 0.0, %v6022
        %v6024 = vpop.f32.mrb[0].mxu0
        %v6025 = vadd.f32 0.0, %v6024
        %6026 = vdwg.mxu0
        %6027 = vmatprep.subr.mxu0 %v5010
        %6028 = vmatpush1.msra.mxu0 %v5009
        %6029 = vmatprep.subr.mxu0 %v5051
        %6030 = vmatpush1.msra.mxu0 %v5050
        %6031 = vmatprep.subr.mxu0 %v5092
        %6032 = vmatpush1.msra.mxu0 %v5091
        %6033 = vmatprep.subr.mxu0 %v5133
        %6034 = vmatpush1.msra.mxu0 %v5132
        %6035 = vmatprep.subr.mxu0 %v5174
        %6036 = vmatpush1.msra.mxu0 %v5173
        %6037 = vmatprep.subr.mxu0 %v5215
        %6038 = vmatpush1.msra.mxu0 %v5214
        %6039 = vmatprep.subr.mxu0 %v5256
        %6040 = vmatpush1.msra.mxu0 %v5255
        %6041 = vmatprep.subr.mxu0 %v5297
        %6042 = vmatpush1.msra.mxu0 %v5296
        %6043 = vmatprep.subr.mxu0 %v5338
        %6044 = vmatpush1.msra.mxu0 %v5337
        %6045 = vmatprep.subr.mxu0 %v5379
        %6046 = vmatpush1.msra.mxu0 %v5378
        %6047 = vmatprep.subr.mxu0 %v5420
        %6048 = vmatpush1.msra.mxu0 %v5419
        %6049 = vmatprep.subr.mxu0 %v5461
        %6050 = vmatpush1.msra.mxu0 %v5460
        %6051 = vmatprep.subr.mxu0 %v5502
        %6052 = vmatpush1.msra.mxu0 %v5501
        %6053 = vmatprep.subr.mxu0 %v5543
        %6054 = vmatpush1.msra.mxu0 %v5542
        %6055 = vmatprep.subr.mxu0 %v5584
        %6056 = vmatpush1.msra.mxu0 %v5583
        %6057 = vmatprep.subr.mxu0 %v5625
        %6058 = vmatpush1.msra.mxu0 %v5624
        %6059 = vmatprep.subr.mxu0 %v5666
        %6060 = vmatpush1.msra.mxu0 %v5665
        %6061 = vmatprep.subr.mxu0 %v5707
        %6062 = vmatpush1.msra.mxu0 %v5706
        %6063 = vmatprep.subr.mxu0 0.0
        %6064 = vmatpush1.msra.mxu0 0.0
        %6065 = vmatprep.subr.mxu0 0.0
        %6066 = vmatpush1.msra.mxu0 0.0
        %6067 = vmatprep.subr.mxu0 0.0
        %6068 = vmatpush1.msra.mxu0 0.0
        %6069 = vmatprep.subr.mxu0 0.0
        %6070 = vmatpush1.msra.mxu0 0.0
        %6071 = vmatprep.subr.mxu0 0.0
        %6072 = vmatpush1.msra.mxu0 0.0
        %6073 = vmatprep.subr.mxu0 0.0
        %6074 = vmatpush1.msra.mxu0 0.0
        %6075 = vmatprep.subr.mxu0 0.0
        %6076 = vmatpush1.msra.mxu0 0.0
        %6077 = vmatprep.subr.mxu0 0.0
        %6078 = vmatpush1.msra.mxu0 0.0
        %6079 = vmatprep.subr.mxu0 0.0
        %6080 = vmatpush1.msra.mxu0 0.0
        %6081 = vmatprep.subr.mxu0 0.0
        %6082 = vmatpush1.msra.mxu0 0.0
        %6083 = vmatprep.subr.mxu0 0.0
        %6084 = vmatpush1.msra.mxu0 0.0
        %6085 = vmatprep.subr.mxu0 0.0
        %6086 = vmatpush1.msra.mxu0 0.0
        %6087 = vmatprep.subr.mxu0 0.0
        %6088 = vmatpush1.msra.mxu0 0.0
        %6089 = vmatprep.subr.mxu0 0.0
        %6090 = vmatpush1.msra.mxu0 0.0
        %6091 = vmatprep.mubr.f32.mxu0 %v5741
        %6092 = vmatmul.mubr.f32.gmra.mrb[0].mxu0 %v4999
        %v6093 = vpop.f32.mrb[0].mxu0
        %v6094 = vadd.f32 0.0, %v6093
        %v6095 = vpop.f32.mrb[0].mxu0
        %v6096 = vadd.f32 0.0, %v6095
        %6097 = vdwg.mxu0
        %6098 = vmatprep.subr.mxu0 %v5012
        %6099 = vmatpush1.msra.mxu0 %v5011
        %6100 = vmatprep.subr.mxu0 %v5053
        %6101 = vmatpush1.msra.mxu0 %v5052
        %6102 = vmatprep.subr.mxu0 %v5094
        %6103 = vmatpush1.msra.mxu0 %v5093
        %6104 = vmatprep.subr.mxu0 %v5135
        %6105 = vmatpush1.msra.mxu0 %v5134
        %6106 = vmatprep.subr.mxu0 %v5176
        %6107 = vmatpush1.msra.mxu0 %v5175
        %6108 = vmatprep.subr.mxu0 %v5217
        %6109 = vmatpush1.msra.mxu0 %v5216
        %6110 = vmatprep.subr.mxu0 %v5258
        %6111 = vmatpush1.msra.mxu0 %v5257
        %6112 = vmatprep.subr.mxu0 %v5299
        %6113 = vmatpush1.msra.mxu0 %v5298
        %6114 = vmatprep.subr.mxu0 %v5340
        %6115 = vmatpush1.msra.mxu0 %v5339
        %6116 = vmatprep.subr.mxu0 %v5381
        %6117 = vmatpush1.msra.mxu0 %v5380
        %6118 = vmatprep.subr.mxu0 %v5422
        %6119 = vmatpush1.msra.mxu0 %v5421
        %6120 = vmatprep.subr.mxu0 %v5463
        %6121 = vmatpush1.msra.mxu0 %v5462
        %6122 = vmatprep.subr.mxu0 %v5504
        %6123 = vmatpush1.msra.mxu0 %v5503
        %6124 = vmatprep.subr.mxu0 %v5545
        %6125 = vmatpush1.msra.mxu0 %v5544
        %6126 = vmatprep.subr.mxu0 %v5586
        %6127 = vmatpush1.msra.mxu0 %v5585
        %6128 = vmatprep.subr.mxu0 %v5627
        %6129 = vmatpush1.msra.mxu0 %v5626
        %6130 = vmatprep.subr.mxu0 %v5668
        %6131 = vmatpush1.msra.mxu0 %v5667
        %6132 = vmatprep.subr.mxu0 %v5709
        %6133 = vmatpush1.msra.mxu0 %v5708
        %6134 = vmatprep.subr.mxu0 0.0
        %6135 = vmatpush1.msra.mxu0 0.0
        %6136 = vmatprep.subr.mxu0 0.0
        %6137 = vmatpush1.msra.mxu0 0.0
        %6138 = vmatprep.subr.mxu0 0.0
        %6139 = vmatpush1.msra.mxu0 0.0
        %6140 = vmatprep.subr.mxu0 0.0
        %6141 = vmatpush1.msra.mxu0 0.0
        %6142 = vmatprep.subr.mxu0 0.0
        %6143 = vmatpush1.msra.mxu0 0.0
        %6144 = vmatprep.subr.mxu0 0.0
        %6145 = vmatpush1.msra.mxu0 0.0
        %6146 = vmatprep.subr.mxu0 0.0
        %6147 = vmatpush1.msra.mxu0 0.0
        %6148 = vmatprep.subr.mxu0 0.0
        %6149 = vmatpush1.msra.mxu0 0.0
        %6150 = vmatprep.subr.mxu0 0.0
        %6151 = vmatpush1.msra.mxu0 0.0
        %6152 = vmatprep.subr.mxu0 0.0
        %6153 = vmatpush1.msra.mxu0 0.0
        %6154 = vmatprep.subr.mxu0 0.0
        %6155 = vmatpush1.msra.mxu0 0.0
        %6156 = vmatprep.subr.mxu0 0.0
        %6157 = vmatpush1.msra.mxu0 0.0
        %6158 = vmatprep.subr.mxu0 0.0
        %6159 = vmatpush1.msra.mxu0 0.0
        %6160 = vmatprep.subr.mxu0 0.0
        %6161 = vmatpush1.msra.mxu0 0.0
        %6162 = vmatprep.mubr.f32.mxu0 %v5741
        %6163 = vmatmul.mubr.f32.gmra.mrb[0].mxu0 %v4999
        %v6164 = vpop.f32.mrb[0].mxu0
        %v6165 = vadd.f32 0.0, %v6164
        %v6166 = vpop.f32.mrb[0].mxu0
        %v6167 = vadd.f32 0.0, %v6166
        %6168 = vdwg.mxu0
        %6169 = vmatprep.subr.mxu0 %v5014
        %6170 = vmatpush1.msra.mxu0 %v5013
        %6171 = vmatprep.subr.mxu0 %v5055
        %6172 = vmatpush1.msra.mxu0 %v5054
        %6173 = vmatprep.subr.mxu0 %v5096
        %6174 = vmatpush1.msra.mxu0 %v5095
        %6175 = vmatprep.subr.mxu0 %v5137
        %6176 = vmatpush1.msra.mxu0 %v5136
        %6177 = vmatprep.subr.mxu0 %v5178
        %6178 = vmatpush1.msra.mxu0 %v5177
        %6179 = vmatprep.subr.mxu0 %v5219
        %6180 = vmatpush1.msra.mxu0 %v5218
        %6181 = vmatprep.subr.mxu0 %v5260
        %6182 = vmatpush1.msra.mxu0 %v5259
        %6183 = vmatprep.subr.mxu0 %v5301
        %6184 = vmatpush1.msra.mxu0 %v5300
        %6185 = vmatprep.subr.mxu0 %v5342
        %6186 = vmatpush1.msra.mxu0 %v5341
        %6187 = vmatprep.subr.mxu0 %v5383
        %6188 = vmatpush1.msra.mxu0 %v5382
        %6189 = vmatprep.subr.mxu0 %v5424
        %6190 = vmatpush1.msra.mxu0 %v5423
        %6191 = vmatprep.subr.mxu0 %v5465
        %6192 = vmatpush1.msra.mxu0 %v5464
        %6193 = vmatprep.subr.mxu0 %v5506
        %6194 = vmatpush1.msra.mxu0 %v5505
        %6195 = vmatprep.subr.mxu0 %v5547
        %6196 = vmatpush1.msra.mxu0 %v5546
        %6197 = vmatprep.subr.mxu0 %v5588
        %6198 = vmatpush1.msra.mxu0 %v5587
        %6199 = vmatprep.subr.mxu0 %v5629
        %6200 = vmatpush1.msra.mxu0 %v5628
        %6201 = vmatprep.subr.mxu0 %v5670
        %6202 = vmatpush1.msra.mxu0 %v5669
        %6203 = vmatprep.subr.mxu0 %v5711
        %6204 = vmatpush1.msra.mxu0 %v5710
        %6205 = vmatprep.subr.mxu0 0.0
        %6206 = vmatpush1.msra.mxu0 0.0
        %6207 = vmatprep.subr.mxu0 0.0
        %6208 = vmatpush1.msra.mxu0 0.0
        %6209 = vmatprep.subr.mxu0 0.0
        %6210 = vmatpush1.msra.mxu0 0.0
        %6211 = vmatprep.subr.mxu0 0.0
        %6212 = vmatpush1.msra.mxu0 0.0
        %6213 = vmatprep.subr.mxu0 0.0
        %6214 = vmatpush1.msra.mxu0 0.0
        %6215 = vmatprep.subr.mxu0 0.0
        %6216 = vmatpush1.msra.mxu0 0.0
        %6217 = vmatprep.subr.mxu0 0.0
        %6218 = vmatpush1.msra.mxu0 0.0
        %6219 = vmatprep.subr.mxu0 0.0
        %6220 = vmatpush1.msra.mxu0 0.0
        %6221 = vmatprep.subr.mxu0 0.0
        %6222 = vmatpush1.msra.mxu0 0.0
        %6223 = vmatprep.subr.mxu0 0.0
        %6224 = vmatpush1.msra.mxu0 0.0
        %6225 = vmatprep.subr.mxu0 0.0
        %6226 = vmatpush1.msra.mxu0 0.0
        %6227 = vmatprep.subr.mxu0 0.0
        %6228 = vmatpush1.msra.mxu0 0.0
        %6229 = vmatprep.subr.mxu0 0.0
        %6230 = vmatpush1.msra.mxu0 0.0
        %6231 = vmatprep.subr.mxu0 0.0
        %6232 = vmatpush1.msra.mxu0 0.0
        %6233 = vmatprep.mubr.f32.mxu0 %v5741
        %6234 = vmatmul.mubr.f32.gmra.mrb[0].mxu0 %v4999
        %v6235 = vpop.f32.mrb[0].mxu0
        %v6236 = vadd.f32 0.0, %v6235
        %v6237 = vpop.f32.mrb[0].mxu0
        %v6238 = vadd.f32 0.0, %v6237
        %6239 = vdwg.mxu0
        %6240 = vmatprep.subr.mxu0 %v5016
        %6241 = vmatpush1.msra.mxu0 %v5015
        %6242 = vmatprep.subr.mxu0 %v5057
        %6243 = vmatpush1.msra.mxu0 %v5056
        %6244 = vmatprep.subr.mxu0 %v5098
        %6245 = vmatpush1.msra.mxu0 %v5097
        %6246 = vmatprep.subr.mxu0 %v5139
        %6247 = vmatpush1.msra.mxu0 %v5138
        %6248 = vmatprep.subr.mxu0 %v5180
        %6249 = vmatpush1.msra.mxu0 %v5179
        %6250 = vmatprep.subr.mxu0 %v5221
        %6251 = vmatpush1.msra.mxu0 %v5220
        %6252 = vmatprep.subr.mxu0 %v5262
        %6253 = vmatpush1.msra.mxu0 %v5261
        %6254 = vmatprep.subr.mxu0 %v5303
        %6255 = vmatpush1.msra.mxu0 %v5302
        %6256 = vmatprep.subr.mxu0 %v5344
        %6257 = vmatpush1.msra.mxu0 %v5343
        %6258 = vmatprep.subr.mxu0 %v5385
        %6259 = vmatpush1.msra.mxu0 %v5384
        %6260 = vmatprep.subr.mxu0 %v5426
        %6261 = vmatpush1.msra.mxu0 %v5425
        %6262 = vmatprep.subr.mxu0 %v5467
        %6263 = vmatpush1.msra.mxu0 %v5466
        %6264 = vmatprep.subr.mxu0 %v5508
        %6265 = vmatpush1.msra.mxu0 %v5507
        %6266 = vmatprep.subr.mxu0 %v5549
        %6267 = vmatpush1.msra.mxu0 %v5548
        %6268 = vmatprep.subr.mxu0 %v5590
        %6269 = vmatpush1.msra.mxu0 %v5589
        %6270 = vmatprep.subr.mxu0 %v5631
        %6271 = vmatpush1.msra.mxu0 %v5630
        %6272 = vmatprep.subr.mxu0 %v5672
        %6273 = vmatpush1.msra.mxu0 %v5671
        %6274 = vmatprep.subr.mxu0 %v5713
        %6275 = vmatpush1.msra.mxu0 %v5712
        %6276 = vmatprep.subr.mxu0 0.0
        %6277 = vmatpush1.msra.mxu0 0.0
        %6278 = vmatprep.subr.mxu0 0.0
        %6279 = vmatpush1.msra.mxu0 0.0
        %6280 = vmatprep.subr.mxu0 0.0
        %6281 = vmatpush1.msra.mxu0 0.0
        %6282 = vmatprep.subr.mxu0 0.0
        %6283 = vmatpush1.msra.mxu0 0.0
        %6284 = vmatprep.subr.mxu0 0.0
        %6285 = vmatpush1.msra.mxu0 0.0
        %6286 = vmatprep.subr.mxu0 0.0
        %6287 = vmatpush1.msra.mxu0 0.0
        %6288 = vmatprep.subr.mxu0 0.0
        %6289 = vmatpush1.msra.mxu0 0.0
        %6290 = vmatprep.subr.mxu0 0.0
        %6291 = vmatpush1.msra.mxu0 0.0
        %6292 = vmatprep.subr.mxu0 0.0
        %6293 = vmatpush1.msra.mxu0 0.0
        %6294 = vmatprep.subr.mxu0 0.0
        %6295 = vmatpush1.msra.mxu0 0.0
        %6296 = vmatprep.subr.mxu0 0.0
        %6297 = vmatpush1.msra.mxu0 0.0
        %6298 = vmatprep.subr.mxu0 0.0
        %6299 = vmatpush1.msra.mxu0 0.0
        %6300 = vmatprep.subr.mxu0 0.0
        %6301 = vmatpush1.msra.mxu0 0.0
        %6302 = vmatprep.subr.mxu0 0.0
        %6303 = vmatpush1.msra.mxu0 0.0
        %6304 = vmatprep.mubr.f32.mxu0 %v5741
        %6305 = vmatmul.mubr.f32.gmra.mrb[0].mxu0 %v4999
        %v6306 = vpop.f32.mrb[0].mxu0
        %v6307 = vadd.f32 0.0, %v6306
        %v6308 = vpop.f32.mrb[0].mxu0
        %v6309 = vadd.f32 0.0, %v6308
        %6310 = vdwg.mxu0
        %6311 = vmatprep.subr.mxu0 %v5018
        %6312 = vmatpush1.msra.mxu0 %v5017
        %6313 = vmatprep.subr.mxu0 %v5059
        %6314 = vmatpush1.msra.mxu0 %v5058
        %6315 = vmatprep.subr.mxu0 %v5100
        %6316 = vmatpush1.msra.mxu0 %v5099
        %6317 = vmatprep.subr.mxu0 %v5141
        %6318 = vmatpush1.msra.mxu0 %v5140
        %6319 = vmatprep.subr.mxu0 %v5182
        %6320 = vmatpush1.msra.mxu0 %v5181
        %6321 = vmatprep.subr.mxu0 %v5223
        %6322 = vmatpush1.msra.mxu0 %v5222
        %6323 = vmatprep.subr.mxu0 %v5264
        %6324 = vmatpush1.msra.mxu0 %v5263
        %6325 = vmatprep.subr.mxu0 %v5305
        %6326 = vmatpush1.msra.mxu0 %v5304
        %6327 = vmatprep.subr.mxu0 %v5346
        %6328 = vmatpush1.msra.mxu0 %v5345
        %6329 = vmatprep.subr.mxu0 %v5387
        %6330 = vmatpush1.msra.mxu0 %v5386
        %6331 = vmatprep.subr.mxu0 %v5428
        %6332 = vmatpush1.msra.mxu0 %v5427
        %6333 = vmatprep.subr.mxu0 %v5469
        %6334 = vmatpush1.msra.mxu0 %v5468
        %6335 = vmatprep.subr.mxu0 %v5510
        %6336 = vmatpush1.msra.mxu0 %v5509
        %6337 = vmatprep.subr.mxu0 %v5551
        %6338 = vmatpush1.msra.mxu0 %v5550
        %6339 = vmatprep.subr.mxu0 %v5592
        %6340 = vmatpush1.msra.mxu0 %v5591
        %6341 = vmatprep.subr.mxu0 %v5633
        %6342 = vmatpush1.msra.mxu0 %v5632
        %6343 = vmatprep.subr.mxu0 %v5674
        %6344 = vmatpush1.msra.mxu0 %v5673
        %6345 = vmatprep.subr.mxu0 %v5715
        %6346 = vmatpush1.msra.mxu0 %v5714
        %6347 = vmatprep.subr.mxu0 0.0
        %6348 = vmatpush1.msra.mxu0 0.0
        %6349 = vmatprep.subr.mxu0 0.0
        %6350 = vmatpush1.msra.mxu0 0.0
        %6351 = vmatprep.subr.mxu0 0.0
        %6352 = vmatpush1.msra.mxu0 0.0
        %6353 = vmatprep.subr.mxu0 0.0
        %6354 = vmatpush1.msra.mxu0 0.0
        %6355 = vmatprep.subr.mxu0 0.0
        %6356 = vmatpush1.msra.mxu0 0.0
        %6357 = vmatprep.subr.mxu0 0.0
        %6358 = vmatpush1.msra.mxu0 0.0
        %6359 = vmatprep.subr.mxu0 0.0
        %6360 = vmatpush1.msra.mxu0 0.0
        %6361 = vmatprep.subr.mxu0 0.0
        %6362 = vmatpush1.msra.mxu0 0.0
        %6363 = vmatprep.subr.mxu0 0.0
        %6364 = vmatpush1.msra.mxu0 0.0
        %6365 = vmatprep.subr.mxu0 0.0
        %6366 = vmatpush1.msra.mxu0 0.0
        %6367 = vmatprep.subr.mxu0 0.0
        %6368 = vmatpush1.msra.mxu0 0.0
        %6369 = vmatprep.subr.mxu0 0.0
        %6370 = vmatpush1.msra.mxu0 0.0
        %6371 = vmatprep.subr.mxu0 0.0
        %6372 = vmatpush1.msra.mxu0 0.0
        %6373 = vmatprep.subr.mxu0 0.0
        %6374 = vmatpush1.msra.mxu0 0.0
        %6375 = vmatprep.mubr.f32.mxu0 %v5741
        %6376 = vmatmul.mubr.f32.gmra.mrb[0].mxu0 %v4999
        %v6377 = vpop.f32.mrb[0].mxu0
        %v6378 = vadd.f32 0.0, %v6377
        %v6379 = vpop.f32.mrb[0].mxu0
        %v6380 = vadd.f32 0.0, %v6379
        %6381 = vdwg.mxu0
        %6382 = vmatprep.subr.mxu0 %v5020
        %6383 = vmatpush1.msra.mxu0 %v5019
        %6384 = vmatprep.subr.mxu0 %v5061
        %6385 = vmatpush1.msra.mxu0 %v5060
        %6386 = vmatprep.subr.mxu0 %v5102
        %6387 = vmatpush1.msra.mxu0 %v5101
        %6388 = vmatprep.subr.mxu0 %v5143
        %6389 = vmatpush1.msra.mxu0 %v5142
        %6390 = vmatprep.subr.mxu0 %v5184
        %6391 = vmatpush1.msra.mxu0 %v5183
        %6392 = vmatprep.subr.mxu0 %v5225
        %6393 = vmatpush1.msra.mxu0 %v5224
        %6394 = vmatprep.subr.mxu0 %v5266
        %6395 = vmatpush1.msra.mxu0 %v5265
        %6396 = vmatprep.subr.mxu0 %v5307
        %6397 = vmatpush1.msra.mxu0 %v5306
        %6398 = vmatprep.subr.mxu0 %v5348
        %6399 = vmatpush1.msra.mxu0 %v5347
        %6400 = vmatprep.subr.mxu0 %v5389
        %6401 = vmatpush1.msra.mxu0 %v5388
        %6402 = vmatprep.subr.mxu0 %v5430
        %6403 = vmatpush1.msra.mxu0 %v5429
        %6404 = vmatprep.subr.mxu0 %v5471
        %6405 = vmatpush1.msra.mxu0 %v5470
        %6406 = vmatprep.subr.mxu0 %v5512
        %6407 = vmatpush1.msra.mxu0 %v5511
        %6408 = vmatprep.subr.mxu0 %v5553
        %6409 = vmatpush1.msra.mxu0 %v5552
        %6410 = vmatprep.subr.mxu0 %v5594
        %6411 = vmatpush1.msra.mxu0 %v5593
        %6412 = vmatprep.subr.mxu0 %v5635
        %6413 = vmatpush1.msra.mxu0 %v5634
        %6414 = vmatprep.subr.mxu0 %v5676
        %6415 = vmatpush1.msra.mxu0 %v5675
        %6416 = vmatprep.subr.mxu0 %v5717
        %6417 = vmatpush1.msra.mxu0 %v5716
        %6418 = vmatprep.subr.mxu0 0.0
        %6419 = vmatpush1.msra.mxu0 0.0
        %6420 = vmatprep.subr.mxu0 0.0
        %6421 = vmatpush1.msra.mxu0 0.0
        %6422 = vmatprep.subr.mxu0 0.0
        %6423 = vmatpush1.msra.mxu0 0.0
        %6424 = vmatprep.subr.mxu0 0.0
        %6425 = vmatpush1.msra.mxu0 0.0
        %6426 = vmatprep.subr.mxu0 0.0
        %6427 = vmatpush1.msra.mxu0 0.0
        %6428 = vmatprep.subr.mxu0 0.0
        %6429 = vmatpush1.msra.mxu0 0.0
        %6430 = vmatprep.subr.mxu0 0.0
        %6431 = vmatpush1.msra.mxu0 0.0
        %6432 = vmatprep.subr.mxu0 0.0
        %6433 = vmatpush1.msra.mxu0 0.0
        %6434 = vmatprep.subr.mxu0 0.0
        %6435 = vmatpush1.msra.mxu0 0.0
        %6436 = vmatprep.subr.mxu0 0.0
        %6437 = vmatpush1.msra.mxu0 0.0
        %6438 = vmatprep.subr.mxu0 0.0
        %6439 = vmatpush1.msra.mxu0 0.0
        %6440 = vmatprep.subr.mxu0 0.0
        %6441 = vmatpush1.msra.mxu0 0.0
        %6442 = vmatprep.subr.mxu0 0.0
        %6443 = vmatpush1.msra.mxu0 0.0
        %6444 = vmatprep.subr.mxu0 0.0
        %6445 = vmatpush1.msra.mxu0 0.0
        %6446 = vmatprep.mubr.f32.mxu0 %v5741
        %6447 = vmatmul.mubr.f32.gmra.mrb[0].mxu0 %v4999
        %v6448 = vpop.f32.mrb[0].mxu0
        %v6449 = vadd.f32 0.0, %v6448
        %v6450 = vpop.f32.mrb[0].mxu0
        %v6451 = vadd.f32 0.0, %v6450
        %6452 = vdwg.mxu0
        %6453 = vmatprep.subr.mxu0 %v5022
        %6454 = vmatpush1.msra.mxu0 %v5021
        %6455 = vmatprep.subr.mxu0 %v5063
        %6456 = vmatpush1.msra.mxu0 %v5062
        %6457 = vmatprep.subr.mxu0 %v5104
        %6458 = vmatpush1.msra.mxu0 %v5103
        %6459 = vmatprep.subr.mxu0 %v5145
        %6460 = vmatpush1.msra.mxu0 %v5144
        %6461 = vmatprep.subr.mxu0 %v5186
        %6462 = vmatpush1.msra.mxu0 %v5185
        %6463 = vmatprep.subr.mxu0 %v5227
        %6464 = vmatpush1.msra.mxu0 %v5226
        %6465 = vmatprep.subr.mxu0 %v5268
        %6466 = vmatpush1.msra.mxu0 %v5267
        %6467 = vmatprep.subr.mxu0 %v5309
        %6468 = vmatpush1.msra.mxu0 %v5308
        %6469 = vmatprep.subr.mxu0 %v5350
        %6470 = vmatpush1.msra.mxu0 %v5349
        %6471 = vmatprep.subr.mxu0 %v5391
        %6472 = vmatpush1.msra.mxu0 %v5390
        %6473 = vmatprep.subr.mxu0 %v5432
        %6474 = vmatpush1.msra.mxu0 %v5431
        %6475 = vmatprep.subr.mxu0 %v5473
        %6476 = vmatpush1.msra.mxu0 %v5472
        %6477 = vmatprep.subr.mxu0 %v5514
        %6478 = vmatpush1.msra.mxu0 %v5513
        %6479 = vmatprep.subr.mxu0 %v5555
        %6480 = vmatpush1.msra.mxu0 %v5554
        %6481 = vmatprep.subr.mxu0 %v5596
        %6482 = vmatpush1.msra.mxu0 %v5595
        %6483 = vmatprep.subr.mxu0 %v5637
        %6484 = vmatpush1.msra.mxu0 %v5636
        %6485 = vmatprep.subr.mxu0 %v5678
        %6486 = vmatpush1.msra.mxu0 %v5677
        %6487 = vmatprep.subr.mxu0 %v5719
        %6488 = vmatpush1.msra.mxu0 %v5718
        %6489 = vmatprep.subr.mxu0 0.0
        %6490 = vmatpush1.msra.mxu0 0.0
        %6491 = vmatprep.subr.mxu0 0.0
        %6492 = vmatpush1.msra.mxu0 0.0
        %6493 = vmatprep.subr.mxu0 0.0
        %6494 = vmatpush1.msra.mxu0 0.0
        %6495 = vmatprep.subr.mxu0 0.0
        %6496 = vmatpush1.msra.mxu0 0.0
        %6497 = vmatprep.subr.mxu0 0.0
        %6498 = vmatpush1.msra.mxu0 0.0
        %6499 = vmatprep.subr.mxu0 0.0
        %6500 = vmatpush1.msra.mxu0 0.0
        %6501 = vmatprep.subr.mxu0 0.0
        %6502 = vmatpush1.msra.mxu0 0.0
        %6503 = vmatprep.subr.mxu0 0.0
        %6504 = vmatpush1.msra.mxu0 0.0
        %6505 = vmatprep.subr.mxu0 0.0
        %6506 = vmatpush1.msra.mxu0 0.0
        %6507 = vmatprep.subr.mxu0 0.0
        %6508 = vmatpush1.msra.mxu0 0.0
        %6509 = vmatprep.subr.mxu0 0.0
        %6510 = vmatpush1.msra.mxu0 0.0
        %6511 = vmatprep.subr.mxu0 0.0
        %6512 = vmatpush1.msra.mxu0 0.0
        %6513 = vmatprep.subr.mxu0 0.0
        %6514 = vmatpush1.msra.mxu0 0.0
        %6515 = vmatprep.subr.mxu0 0.0
        %6516 = vmatpush1.msra.mxu0 0.0
        %6517 = vmatprep.mubr.f32.mxu0 %v5741
        %6518 = vmatmul.mubr.f32.gmra.mrb[0].mxu0 %v4999
        %v6519 = vpop.f32.mrb[0].mxu0
        %v6520 = vadd.f32 0.0, %v6519
        %v6521 = vpop.f32.mrb[0].mxu0
        %v6522 = vadd.f32 0.0, %v6521
        %6523 = vdwg.mxu0
        %6524 = vmatprep.subr.mxu0 %v5024
        %6525 = vmatpush1.msra.mxu0 %v5023
        %6526 = vmatprep.subr.mxu0 %v5065
        %6527 = vmatpush1.msra.mxu0 %v5064
        %6528 = vmatprep.subr.mxu0 %v5106
        %6529 = vmatpush1.msra.mxu0 %v5105
        %6530 = vmatprep.subr.mxu0 %v5147
        %6531 = vmatpush1.msra.mxu0 %v5146
        %6532 = vmatprep.subr.mxu0 %v5188
        %6533 = vmatpush1.msra.mxu0 %v5187
        %6534 = vmatprep.subr.mxu0 %v5229
        %6535 = vmatpush1.msra.mxu0 %v5228
        %6536 = vmatprep.subr.mxu0 %v5270
        %6537 = vmatpush1.msra.mxu0 %v5269
        %6538 = vmatprep.subr.mxu0 %v5311
        %6539 = vmatpush1.msra.mxu0 %v5310
        %6540 = vmatprep.subr.mxu0 %v5352
        %6541 = vmatpush1.msra.mxu0 %v5351
        %6542 = vmatprep.subr.mxu0 %v5393
        %6543 = vmatpush1.msra.mxu0 %v5392
        %6544 = vmatprep.subr.mxu0 %v5434
        %6545 = vmatpush1.msra.mxu0 %v5433
        %6546 = vmatprep.subr.mxu0 %v5475
        %6547 = vmatpush1.msra.mxu0 %v5474
        %6548 = vmatprep.subr.mxu0 %v5516
        %6549 = vmatpush1.msra.mxu0 %v5515
        %6550 = vmatprep.subr.mxu0 %v5557
        %6551 = vmatpush1.msra.mxu0 %v5556
        %6552 = vmatprep.subr.mxu0 %v5598
        %6553 = vmatpush1.msra.mxu0 %v5597
        %6554 = vmatprep.subr.mxu0 %v5639
        %6555 = vmatpush1.msra.mxu0 %v5638
        %6556 = vmatprep.subr.mxu0 %v5680
        %6557 = vmatpush1.msra.mxu0 %v5679
        %6558 = vmatprep.subr.mxu0 %v5721
        %6559 = vmatpush1.msra.mxu0 %v5720
        %6560 = vmatprep.subr.mxu0 0.0
        %6561 = vmatpush1.msra.mxu0 0.0
        %6562 = vmatprep.subr.mxu0 0.0
        %6563 = vmatpush1.msra.mxu0 0.0
        %6564 = vmatprep.subr.mxu0 0.0
        %6565 = vmatpush1.msra.mxu0 0.0
        %6566 = vmatprep.subr.mxu0 0.0
        %6567 = vmatpush1.msra.mxu0 0.0
        %6568 = vmatprep.subr.mxu0 0.0
        %6569 = vmatpush1.msra.mxu0 0.0
        %6570 = vmatprep.subr.mxu0 0.0
        %6571 = vmatpush1.msra.mxu0 0.0
        %6572 = vmatprep.subr.mxu0 0.0
        %6573 = vmatpush1.msra.mxu0 0.0
        %6574 = vmatprep.subr.mxu0 0.0
        %6575 = vmatpush1.msra.mxu0 0.0
        %6576 = vmatprep.subr.mxu0 0.0
        %6577 = vmatpush1.msra.mxu0 0.0
        %6578 = vmatprep.subr.mxu0 0.0
        %6579 = vmatpush1.msra.mxu0 0.0
        %6580 = vmatprep.subr.mxu0 0.0
        %6581 = vmatpush1.msra.mxu0 0.0
        %6582 = vmatprep.subr.mxu0 0.0
        %6583 = vmatpush1.msra.mxu0 0.0
        %6584 = vmatprep.subr.mxu0 0.0
        %6585 = vmatpush1.msra.mxu0 0.0
        %6586 = vmatprep.subr.mxu0 0.0
        %6587 = vmatpush1.msra.mxu0 0.0
        %6588 = vmatprep.mubr.f32.mxu0 %v5741
        %6589 = vmatmul.mubr.f32.gmra.mrb[0].mxu0 %v4999
        %v6590 = vpop.f32.mrb[0].mxu0
        %v6591 = vadd.f32 0.0, %v6590
        %v6592 = vpop.f32.mrb[0].mxu0
        %v6593 = vadd.f32 0.0, %v6592
        %6594 = vdwg.mxu0
        %6595 = vmatprep.subr.mxu0 %v5026
        %6596 = vmatpush1.msra.mxu0 %v5025
        %6597 = vmatprep.subr.mxu0 %v5067
        %6598 = vmatpush1.msra.mxu0 %v5066
        %6599 = vmatprep.subr.mxu0 %v5108
        %6600 = vmatpush1.msra.mxu0 %v5107
        %6601 = vmatprep.subr.mxu0 %v5149
        %6602 = vmatpush1.msra.mxu0 %v5148
        %6603 = vmatprep.subr.mxu0 %v5190
        %6604 = vmatpush1.msra.mxu0 %v5189
        %6605 = vmatprep.subr.mxu0 %v5231
        %6606 = vmatpush1.msra.mxu0 %v5230
        %6607 = vmatprep.subr.mxu0 %v5272
        %6608 = vmatpush1.msra.mxu0 %v5271
        %6609 = vmatprep.subr.mxu0 %v5313
        %6610 = vmatpush1.msra.mxu0 %v5312
        %6611 = vmatprep.subr.mxu0 %v5354
        %6612 = vmatpush1.msra.mxu0 %v5353
        %6613 = vmatprep.subr.mxu0 %v5395
        %6614 = vmatpush1.msra.mxu0 %v5394
        %6615 = vmatprep.subr.mxu0 %v5436
        %6616 = vmatpush1.msra.mxu0 %v5435
        %6617 = vmatprep.subr.mxu0 %v5477
        %6618 = vmatpush1.msra.mxu0 %v5476
        %6619 = vmatprep.subr.mxu0 %v5518
        %6620 = vmatpush1.msra.mxu0 %v5517
        %6621 = vmatprep.subr.mxu0 %v5559
        %6622 = vmatpush1.msra.mxu0 %v5558
        %6623 = vmatprep.subr.mxu0 %v5600
        %6624 = vmatpush1.msra.mxu0 %v5599
        %6625 = vmatprep.subr.mxu0 %v5641
        %6626 = vmatpush1.msra.mxu0 %v5640
        %6627 = vmatprep.subr.mxu0 %v5682
        %6628 = vmatpush1.msra.mxu0 %v5681
        %6629 = vmatprep.subr.mxu0 %v5723
        %6630 = vmatpush1.msra.mxu0 %v5722
        %6631 = vmatprep.subr.mxu0 0.0
        %6632 = vmatpush1.msra.mxu0 0.0
        %6633 = vmatprep.subr.mxu0 0.0
        %6634 = vmatpush1.msra.mxu0 0.0
        %6635 = vmatprep.subr.mxu0 0.0
        %6636 = vmatpush1.msra.mxu0 0.0
        %6637 = vmatprep.subr.mxu0 0.0
        %6638 = vmatpush1.msra.mxu0 0.0
        %6639 = vmatprep.subr.mxu0 0.0
        %6640 = vmatpush1.msra.mxu0 0.0
        %6641 = vmatprep.subr.mxu0 0.0
        %6642 = vmatpush1.msra.mxu0 0.0
        %6643 = vmatprep.subr.mxu0 0.0
        %6644 = vmatpush1.msra.mxu0 0.0
        %6645 = vmatprep.subr.mxu0 0.0
        %6646 = vmatpush1.msra.mxu0 0.0
        %6647 = vmatprep.subr.mxu0 0.0
        %6648 = vmatpush1.msra.mxu0 0.0
        %6649 = vmatprep.subr.mxu0 0.0
        %6650 = vmatpush1.msra.mxu0 0.0
        %6651 = vmatprep.subr.mxu0 0.0
        %6652 = vmatpush1.msra.mxu0 0.0
        %6653 = vmatprep.subr.mxu0 0.0
        %6654 = vmatpush1.msra.mxu0 0.0
        %6655 = vmatprep.subr.mxu0 0.0
        %6656 = vmatpush1.msra.mxu0 0.0
        %6657 = vmatprep.subr.mxu0 0.0
        %6658 = vmatpush1.msra.mxu0 0.0
        %6659 = vmatprep.mubr.f32.mxu0 %v5741
        %6660 = vmatmul.mubr.f32.gmra.mrb[0].mxu0 %v4999
        %v6661 = vpop.f32.mrb[0].mxu0
        %v6662 = vadd.f32 0.0, %v6661
        %v6663 = vpop.f32.mrb[0].mxu0
        %v6664 = vadd.f32 0.0, %v6663
        %6665 = vdwg.mxu0
        %6666 = vmatprep.subr.mxu0 %v5028
        %6667 = vmatpush1.msra.mxu0 %v5027
        %6668 = vmatprep.subr.mxu0 %v5069
        %6669 = vmatpush1.msra.mxu0 %v5068
        %6670 = vmatprep.subr.mxu0 %v5110
        %6671 = vmatpush1.msra.mxu0 %v5109
        %6672 = vmatprep.subr.mxu0 %v5151
        %6673 = vmatpush1.msra.mxu0 %v5150
        %6674 = vmatprep.subr.mxu0 %v5192
        %6675 = vmatpush1.msra.mxu0 %v5191
        %6676 = vmatprep.subr.mxu0 %v5233
        %6677 = vmatpush1.msra.mxu0 %v5232
        %6678 = vmatprep.subr.mxu0 %v5274
        %6679 = vmatpush1.msra.mxu0 %v5273
        %6680 = vmatprep.subr.mxu0 %v5315
        %6681 = vmatpush1.msra.mxu0 %v5314
        %6682 = vmatprep.subr.mxu0 %v5356
        %6683 = vmatpush1.msra.mxu0 %v5355
        %6684 = vmatprep.subr.mxu0 %v5397
        %6685 = vmatpush1.msra.mxu0 %v5396
        %6686 = vmatprep.subr.mxu0 %v5438
        %6687 = vmatpush1.msra.mxu0 %v5437
        %6688 = vmatprep.subr.mxu0 %v5479
        %6689 = vmatpush1.msra.mxu0 %v5478
        %6690 = vmatprep.subr.mxu0 %v5520
        %6691 = vmatpush1.msra.mxu0 %v5519
        %6692 = vmatprep.subr.mxu0 %v5561
        %6693 = vmatpush1.msra.mxu0 %v5560
        %6694 = vmatprep.subr.mxu0 %v5602
        %6695 = vmatpush1.msra.mxu0 %v5601
        %6696 = vmatprep.subr.mxu0 %v5643
        %6697 = vmatpush1.msra.mxu0 %v5642
        %6698 = vmatprep.subr.mxu0 %v5684
        %6699 = vmatpush1.msra.mxu0 %v5683
        %6700 = vmatprep.subr.mxu0 %v5725
        %6701 = vmatpush1.msra.mxu0 %v5724
        %6702 = vmatprep.subr.mxu0 0.0
        %6703 = vmatpush1.msra.mxu0 0.0
        %6704 = vmatprep.subr.mxu0 0.0
        %6705 = vmatpush1.msra.mxu0 0.0
        %6706 = vmatprep.subr.mxu0 0.0
        %6707 = vmatpush1.msra.mxu0 0.0
        %6708 = vmatprep.subr.mxu0 0.0
        %6709 = vmatpush1.msra.mxu0 0.0
        %6710 = vmatprep.subr.mxu0 0.0
        %6711 = vmatpush1.msra.mxu0 0.0
        %6712 = vmatprep.subr.mxu0 0.0
        %6713 = vmatpush1.msra.mxu0 0.0
        %6714 = vmatprep.subr.mxu0 0.0
        %6715 = vmatpush1.msra.mxu0 0.0
        %6716 = vmatprep.subr.mxu0 0.0
        %6717 = vmatpush1.msra.mxu0 0.0
        %6718 = vmatprep.subr.mxu0 0.0
        %6719 = vmatpush1.msra.mxu0 0.0
        %6720 = vmatprep.subr.mxu0 0.0
        %6721 = vmatpush1.msra.mxu0 0.0
        %6722 = vmatprep.subr.mxu0 0.0
        %6723 = vmatpush1.msra.mxu0 0.0
        %6724 = vmatprep.subr.mxu0 0.0
        %6725 = vmatpush1.msra.mxu0 0.0
        %6726 = vmatprep.subr.mxu0 0.0
        %6727 = vmatpush1.msra.mxu0 0.0
        %6728 = vmatprep.subr.mxu0 0.0
        %6729 = vmatpush1.msra.mxu0 0.0
        %6730 = vmatprep.mubr.f32.mxu0 %v5741
        %6731 = vmatmul.mubr.f32.gmra.mrb[0].mxu0 %v4999
        %v6732 = vpop.f32.mrb[0].mxu0
        %v6733 = vadd.f32 0.0, %v6732
        %v6734 = vpop.f32.mrb[0].mxu0
        %v6735 = vadd.f32 0.0, %v6734
        %6736 = vdwg.mxu0
        %6737 = vmatprep.subr.mxu0 %v5030
        %6738 = vmatpush1.msra.mxu0 %v5029
        %6739 = vmatprep.subr.mxu0 %v5071
        %6740 = vmatpush1.msra.mxu0 %v5070
        %6741 = vmatprep.subr.mxu0 %v5112
        %6742 = vmatpush1.msra.mxu0 %v5111
        %6743 = vmatprep.subr.mxu0 %v5153
        %6744 = vmatpush1.msra.mxu0 %v5152
        %6745 = vmatprep.subr.mxu0 %v5194
        %6746 = vmatpush1.msra.mxu0 %v5193
        %6747 = vmatprep.subr.mxu0 %v5235
        %6748 = vmatpush1.msra.mxu0 %v5234
        %6749 = vmatprep.subr.mxu0 %v5276
        %6750 = vmatpush1.msra.mxu0 %v5275
        %6751 = vmatprep.subr.mxu0 %v5317
        %6752 = vmatpush1.msra.mxu0 %v5316
        %6753 = vmatprep.subr.mxu0 %v5358
        %6754 = vmatpush1.msra.mxu0 %v5357
        %6755 = vmatprep.subr.mxu0 %v5399
        %6756 = vmatpush1.msra.mxu0 %v5398
        %6757 = vmatprep.subr.mxu0 %v5440
        %6758 = vmatpush1.msra.mxu0 %v5439
        %6759 = vmatprep.subr.mxu0 %v5481
        %6760 = vmatpush1.msra.mxu0 %v5480
        %6761 = vmatprep.subr.mxu0 %v5522
        %6762 = vmatpush1.msra.mxu0 %v5521
        %6763 = vmatprep.subr.mxu0 %v5563
        %6764 = vmatpush1.msra.mxu0 %v5562
        %6765 = vmatprep.subr.mxu0 %v5604
        %6766 = vmatpush1.msra.mxu0 %v5603
        %6767 = vmatprep.subr.mxu0 %v5645
        %6768 = vmatpush1.msra.mxu0 %v5644
        %6769 = vmatprep.subr.mxu0 %v5686
        %6770 = vmatpush1.msra.mxu0 %v5685
        %6771 = vmatprep.subr.mxu0 %v5727
        %6772 = vmatpush1.msra.mxu0 %v5726
        %6773 = vmatprep.subr.mxu0 0.0
        %6774 = vmatpush1.msra.mxu0 0.0
        %6775 = vmatprep.subr.mxu0 0.0
        %6776 = vmatpush1.msra.mxu0 0.0
        %6777 = vmatprep.subr.mxu0 0.0
        %6778 = vmatpush1.msra.mxu0 0.0
        %6779 = vmatprep.subr.mxu0 0.0
        %6780 = vmatpush1.msra.mxu0 0.0
        %6781 = vmatprep.subr.mxu0 0.0
        %6782 = vmatpush1.msra.mxu0 0.0
        %6783 = vmatprep.subr.mxu0 0.0
        %6784 = vmatpush1.msra.mxu0 0.0
        %6785 = vmatprep.subr.mxu0 0.0
        %6786 = vmatpush1.msra.mxu0 0.0
        %6787 = vmatprep.subr.mxu0 0.0
        %6788 = vmatpush1.msra.mxu0 0.0
        %6789 = vmatprep.subr.mxu0 0.0
        %6790 = vmatpush1.msra.mxu0 0.0
        %6791 = vmatprep.subr.mxu0 0.0
        %6792 = vmatpush1.msra.mxu0 0.0
        %6793 = vmatprep.subr.mxu0 0.0
        %6794 = vmatpush1.msra.mxu0 0.0
        %6795 = vmatprep.subr.mxu0 0.0
        %6796 = vmatpush1.msra.mxu0 0.0
        %6797 = vmatprep.subr.mxu0 0.0
        %6798 = vmatpush1.msra.mxu0 0.0
        %6799 = vmatprep.subr.mxu0 0.0
        %6800 = vmatpush1.msra.mxu0 0.0
        %6801 = vmatprep.mubr.f32.mxu0 %v5741
        %6802 = vmatmul.mubr.f32.gmra.mrb[0].mxu0 %v4999
        %v6803 = vpop.f32.mrb[0].mxu0
        %v6804 = vadd.f32 0.0, %v6803
        %v6805 = vpop.f32.mrb[0].mxu0
        %v6806 = vadd.f32 0.0, %v6805
        %6807 = vdwg.mxu0
        %6808 = vmatprep.subr.mxu0 %v5032
        %6809 = vmatpush1.msra.mxu0 %v5031
        %6810 = vmatprep.subr.mxu0 %v5073
        %6811 = vmatpush1.msra.mxu0 %v5072
        %6812 = vmatprep.subr.mxu0 %v5114
        %6813 = vmatpush1.msra.mxu0 %v5113
        %6814 = vmatprep.subr.mxu0 %v5155
        %6815 = vmatpush1.msra.mxu0 %v5154
        %6816 = vmatprep.subr.mxu0 %v5196
        %6817 = vmatpush1.msra.mxu0 %v5195
        %6818 = vmatprep.subr.mxu0 %v5237
        %6819 = vmatpush1.msra.mxu0 %v5236
        %6820 = vmatprep.subr.mxu0 %v5278
        %6821 = vmatpush1.msra.mxu0 %v5277
        %6822 = vmatprep.subr.mxu0 %v5319
        %6823 = vmatpush1.msra.mxu0 %v5318
        %6824 = vmatprep.subr.mxu0 %v5360
        %6825 = vmatpush1.msra.mxu0 %v5359
        %6826 = vmatprep.subr.mxu0 %v5401
        %6827 = vmatpush1.msra.mxu0 %v5400
        %6828 = vmatprep.subr.mxu0 %v5442
        %6829 = vmatpush1.msra.mxu0 %v5441
        %6830 = vmatprep.subr.mxu0 %v5483
        %6831 = vmatpush1.msra.mxu0 %v5482
        %6832 = vmatprep.subr.mxu0 %v5524
        %6833 = vmatpush1.msra.mxu0 %v5523
        %6834 = vmatprep.subr.mxu0 %v5565
        %6835 = vmatpush1.msra.mxu0 %v5564
        %6836 = vmatprep.subr.mxu0 %v5606
        %6837 = vmatpush1.msra.mxu0 %v5605
        %6838 = vmatprep.subr.mxu0 %v5647
        %6839 = vmatpush1.msra.mxu0 %v5646
        %6840 = vmatprep.subr.mxu0 %v5688
        %6841 = vmatpush1.msra.mxu0 %v5687
        %6842 = vmatprep.subr.mxu0 %v5729
        %6843 = vmatpush1.msra.mxu0 %v5728
        %6844 = vmatprep.subr.mxu0 0.0
        %6845 = vmatpush1.msra.mxu0 0.0
        %6846 = vmatprep.subr.mxu0 0.0
        %6847 = vmatpush1.msra.mxu0 0.0
        %6848 = vmatprep.subr.mxu0 0.0
        %6849 = vmatpush1.msra.mxu0 0.0
        %6850 = vmatprep.subr.mxu0 0.0
        %6851 = vmatpush1.msra.mxu0 0.0
        %6852 = vmatprep.subr.mxu0 0.0
        %6853 = vmatpush1.msra.mxu0 0.0
        %6854 = vmatprep.subr.mxu0 0.0
        %6855 = vmatpush1.msra.mxu0 0.0
        %6856 = vmatprep.subr.mxu0 0.0
        %6857 = vmatpush1.msra.mxu0 0.0
        %6858 = vmatprep.subr.mxu0 0.0
        %6859 = vmatpush1.msra.mxu0 0.0
        %6860 = vmatprep.subr.mxu0 0.0
        %6861 = vmatpush1.msra.mxu0 0.0
        %6862 = vmatprep.subr.mxu0 0.0
        %6863 = vmatpush1.msra.mxu0 0.0
        %6864 = vmatprep.subr.mxu0 0.0
        %6865 = vmatpush1.msra.mxu0 0.0
        %6866 = vmatprep.subr.mxu0 0.0
        %6867 = vmatpush1.msra.mxu0 0.0
        %6868 = vmatprep.subr.mxu0 0.0
        %6869 = vmatpush1.msra.mxu0 0.0
        %6870 = vmatprep.subr.mxu0 0.0
        %6871 = vmatpush1.msra.mxu0 0.0
        %6872 = vmatprep.mubr.f32.mxu0 %v5741
        %6873 = vmatmul.mubr.f32.gmra.mrb[0].mxu0 %v4999
        %v6874 = vpop.f32.mrb[0].mxu0
        %v6875 = vadd.f32 0.0, %v6874
        %v6876 = vpop.f32.mrb[0].mxu0
        %v6877 = vadd.f32 0.0, %v6876
        %6878 = vdwg.mxu0
        %6879 = vmatprep.subr.mxu0 %v5034
        %6880 = vmatpush1.msra.mxu0 %v5033
        %6881 = vmatprep.subr.mxu0 %v5075
        %6882 = vmatpush1.msra.mxu0 %v5074
        %6883 = vmatprep.subr.mxu0 %v5116
        %6884 = vmatpush1.msra.mxu0 %v5115
        %6885 = vmatprep.subr.mxu0 %v5157
        %6886 = vmatpush1.msra.mxu0 %v5156
        %6887 = vmatprep.subr.mxu0 %v5198
        %6888 = vmatpush1.msra.mxu0 %v5197
        %6889 = vmatprep.subr.mxu0 %v5239
        %6890 = vmatpush1.msra.mxu0 %v5238
        %6891 = vmatprep.subr.mxu0 %v5280
        %6892 = vmatpush1.msra.mxu0 %v5279
        %6893 = vmatprep.subr.mxu0 %v5321
        %6894 = vmatpush1.msra.mxu0 %v5320
        %6895 = vmatprep.subr.mxu0 %v5362
        %6896 = vmatpush1.msra.mxu0 %v5361
        %6897 = vmatprep.subr.mxu0 %v5403
        %6898 = vmatpush1.msra.mxu0 %v5402
        %6899 = vmatprep.subr.mxu0 %v5444
        %6900 = vmatpush1.msra.mxu0 %v5443
        %6901 = vmatprep.subr.mxu0 %v5485
        %6902 = vmatpush1.msra.mxu0 %v5484
        %6903 = vmatprep.subr.mxu0 %v5526
        %6904 = vmatpush1.msra.mxu0 %v5525
        %6905 = vmatprep.subr.mxu0 %v5567
        %6906 = vmatpush1.msra.mxu0 %v5566
        %6907 = vmatprep.subr.mxu0 %v5608
        %6908 = vmatpush1.msra.mxu0 %v5607
        %6909 = vmatprep.subr.mxu0 %v5649
        %6910 = vmatpush1.msra.mxu0 %v5648
        %6911 = vmatprep.subr.mxu0 %v5690
        %6912 = vmatpush1.msra.mxu0 %v5689
        %6913 = vmatprep.subr.mxu0 %v5731
        %6914 = vmatpush1.msra.mxu0 %v5730
        %6915 = vmatprep.subr.mxu0 0.0
        %6916 = vmatpush1.msra.mxu0 0.0
        %6917 = vmatprep.subr.mxu0 0.0
        %6918 = vmatpush1.msra.mxu0 0.0
        %6919 = vmatprep.subr.mxu0 0.0
        %6920 = vmatpush1.msra.mxu0 0.0
        %6921 = vmatprep.subr.mxu0 0.0
        %6922 = vmatpush1.msra.mxu0 0.0
        %6923 = vmatprep.subr.mxu0 0.0
        %6924 = vmatpush1.msra.mxu0 0.0
        %6925 = vmatprep.subr.mxu0 0.0
        %6926 = vmatpush1.msra.mxu0 0.0
        %6927 = vmatprep.subr.mxu0 0.0
        %6928 = vmatpush1.msra.mxu0 0.0
        %6929 = vmatprep.subr.mxu0 0.0
        %6930 = vmatpush1.msra.mxu0 0.0
        %6931 = vmatprep.subr.mxu0 0.0
        %6932 = vmatpush1.msra.mxu0 0.0
        %6933 = vmatprep.subr.mxu0 0.0
        %6934 = vmatpush1.msra.mxu0 0.0
        %6935 = vmatprep.subr.mxu0 0.0
        %6936 = vmatpush1.msra.mxu0 0.0
        %6937 = vmatprep.subr.mxu0 0.0
        %6938 = vmatpush1.msra.mxu0 0.0
        %6939 = vmatprep.subr.mxu0 0.0
        %6940 = vmatpush1.msra.mxu0 0.0
        %6941 = vmatprep.subr.mxu0 0.0
        %6942 = vmatpush1.msra.mxu0 0.0
        %6943 = vmatprep.mubr.f32.mxu0 %v5741
        %6944 = vmatmul.mubr.f32.gmra.mrb[0].mxu0 %v4999
        %v6945 = vpop.f32.mrb[0].mxu0
        %v6946 = vadd.f32 0.0, %v6945
        %v6947 = vpop.f32.mrb[0].mxu0
        %v6948 = vadd.f32 0.0, %v6947
        %6949 = vdwg.mxu0
        %6950 = vmatprep.subr.mxu0 %v5036
        %6951 = vmatpush1.msra.mxu0 %v5035
        %6952 = vmatprep.subr.mxu0 %v5077
        %6953 = vmatpush1.msra.mxu0 %v5076
        %6954 = vmatprep.subr.mxu0 %v5118
        %6955 = vmatpush1.msra.mxu0 %v5117
        %6956 = vmatprep.subr.mxu0 %v5159
        %6957 = vmatpush1.msra.mxu0 %v5158
        %6958 = vmatprep.subr.mxu0 %v5200
        %6959 = vmatpush1.msra.mxu0 %v5199
        %6960 = vmatprep.subr.mxu0 %v5241
        %6961 = vmatpush1.msra.mxu0 %v5240
        %6962 = vmatprep.subr.mxu0 %v5282
        %6963 = vmatpush1.msra.mxu0 %v5281
        %6964 = vmatprep.subr.mxu0 %v5323
        %6965 = vmatpush1.msra.mxu0 %v5322
        %6966 = vmatprep.subr.mxu0 %v5364
        %6967 = vmatpush1.msra.mxu0 %v5363
        %6968 = vmatprep.subr.mxu0 %v5405
        %6969 = vmatpush1.msra.mxu0 %v5404
        %6970 = vmatprep.subr.mxu0 %v5446
        %6971 = vmatpush1.msra.mxu0 %v5445
        %6972 = vmatprep.subr.mxu0 %v5487
        %6973 = vmatpush1.msra.mxu0 %v5486
        %6974 = vmatprep.subr.mxu0 %v5528
        %6975 = vmatpush1.msra.mxu0 %v5527
        %6976 = vmatprep.subr.mxu0 %v5569
        %6977 = vmatpush1.msra.mxu0 %v5568
        %6978 = vmatprep.subr.mxu0 %v5610
        %6979 = vmatpush1.msra.mxu0 %v5609
        %6980 = vmatprep.subr.mxu0 %v5651
        %6981 = vmatpush1.msra.mxu0 %v5650
        %6982 = vmatprep.subr.mxu0 %v5692
        %6983 = vmatpush1.msra.mxu0 %v5691
        %6984 = vmatprep.subr.mxu0 %v5733
        %6985 = vmatpush1.msra.mxu0 %v5732
        %6986 = vmatprep.subr.mxu0 0.0
        %6987 = vmatpush1.msra.mxu0 0.0
        %6988 = vmatprep.subr.mxu0 0.0
        %6989 = vmatpush1.msra.mxu0 0.0
        %6990 = vmatprep.subr.mxu0 0.0
        %6991 = vmatpush1.msra.mxu0 0.0
        %6992 = vmatprep.subr.mxu0 0.0
        %6993 = vmatpush1.msra.mxu0 0.0
        %6994 = vmatprep.subr.mxu0 0.0
        %6995 = vmatpush1.msra.mxu0 0.0
        %6996 = vmatprep.subr.mxu0 0.0
        %6997 = vmatpush1.msra.mxu0 0.0
        %6998 = vmatprep.subr.mxu0 0.0
        %6999 = vmatpush1.msra.mxu0 0.0
        %7000 = vmatprep.subr.mxu0 0.0
        %7001 = vmatpush1.msra.mxu0 0.0
        %7002 = vmatprep.subr.mxu0 0.0
        %7003 = vmatpush1.msra.mxu0 0.0
        %7004 = vmatprep.subr.mxu0 0.0
        %7005 = vmatpush1.msra.mxu0 0.0
        %7006 = vmatprep.subr.mxu0 0.0
        %7007 = vmatpush1.msra.mxu0 0.0
        %7008 = vmatprep.subr.mxu0 0.0
        %7009 = vmatpush1.msra.mxu0 0.0
        %7010 = vmatprep.subr.mxu0 0.0
        %7011 = vmatpush1.msra.mxu0 0.0
        %7012 = vmatprep.subr.mxu0 0.0
        %7013 = vmatpush1.msra.mxu0 0.0
        %7014 = vmatprep.mubr.f32.mxu0 %v5741
        %7015 = vmatmul.mubr.f32.gmra.mrb[0].mxu0 %v4999
        %v7016 = vpop.f32.mrb[0].mxu0
        %v7017 = vadd.f32 0.0, %v7016
        %v7018 = vpop.f32.mrb[0].mxu0
        %v7019 = vadd.f32 0.0, %v7018
        %7020 = vdwg.mxu0
        %7021 = vmatprep.subr.mxu0 %v5038
        %7022 = vmatpush1.msra.mxu0 %v5037
        %7023 = vmatprep.subr.mxu0 %v5079
        %7024 = vmatpush1.msra.mxu0 %v5078
        %7025 = vmatprep.subr.mxu0 %v5120
        %7026 = vmatpush1.msra.mxu0 %v5119
        %7027 = vmatprep.subr.mxu0 %v5161
        %7028 = vmatpush1.msra.mxu0 %v5160
        %7029 = vmatprep.subr.mxu0 %v5202
        %7030 = vmatpush1.msra.mxu0 %v5201
        %7031 = vmatprep.subr.mxu0 %v5243
        %7032 = vmatpush1.msra.mxu0 %v5242
        %7033 = vmatprep.subr.mxu0 %v5284
        %7034 = vmatpush1.msra.mxu0 %v5283
        %7035 = vmatprep.subr.mxu0 %v5325
        %7036 = vmatpush1.msra.mxu0 %v5324
        %7037 = vmatprep.subr.mxu0 %v5366
        %7038 = vmatpush1.msra.mxu0 %v5365
        %7039 = vmatprep.subr.mxu0 %v5407
        %7040 = vmatpush1.msra.mxu0 %v5406
        %7041 = vmatprep.subr.mxu0 %v5448
        %7042 = vmatpush1.msra.mxu0 %v5447
        %7043 = vmatprep.subr.mxu0 %v5489
        %7044 = vmatpush1.msra.mxu0 %v5488
        %7045 = vmatprep.subr.mxu0 %v5530
        %7046 = vmatpush1.msra.mxu0 %v5529
        %7047 = vmatprep.subr.mxu0 %v5571
        %7048 = vmatpush1.msra.mxu0 %v5570
        %7049 = vmatprep.subr.mxu0 %v5612
        %7050 = vmatpush1.msra.mxu0 %v5611
        %7051 = vmatprep.subr.mxu0 %v5653
        %7052 = vmatpush1.msra.mxu0 %v5652
        %7053 = vmatprep.subr.mxu0 %v5694
        %7054 = vmatpush1.msra.mxu0 %v5693
        %7055 = vmatprep.subr.mxu0 %v5735
        %7056 = vmatpush1.msra.mxu0 %v5734
        %7057 = vmatprep.subr.mxu0 0.0
        %7058 = vmatpush1.msra.mxu0 0.0
        %7059 = vmatprep.subr.mxu0 0.0
        %7060 = vmatpush1.msra.mxu0 0.0
        %7061 = vmatprep.subr.mxu0 0.0
        %7062 = vmatpush1.msra.mxu0 0.0
        %7063 = vmatprep.subr.mxu0 0.0
        %7064 = vmatpush1.msra.mxu0 0.0
        %7065 = vmatprep.subr.mxu0 0.0
        %7066 = vmatpush1.msra.mxu0 0.0
        %7067 = vmatprep.subr.mxu0 0.0
        %7068 = vmatpush1.msra.mxu0 0.0
        %7069 = vmatprep.subr.mxu0 0.0
        %7070 = vmatpush1.msra.mxu0 0.0
        %7071 = vmatprep.subr.mxu0 0.0
        %7072 = vmatpush1.msra.mxu0 0.0
        %7073 = vmatprep.subr.mxu0 0.0
        %7074 = vmatpush1.msra.mxu0 0.0
        %7075 = vmatprep.subr.mxu0 0.0
        %7076 = vmatpush1.msra.mxu0 0.0
        %7077 = vmatprep.subr.mxu0 0.0
        %7078 = vmatpush1.msra.mxu0 0.0
        %7079 = vmatprep.subr.mxu0 0.0
        %7080 = vmatpush1.msra.mxu0 0.0
        %7081 = vmatprep.subr.mxu0 0.0
        %7082 = vmatpush1.msra.mxu0 0.0
        %7083 = vmatprep.subr.mxu0 0.0
        %7084 = vmatpush1.msra.mxu0 0.0
        %7085 = vmatprep.mubr.f32.mxu0 %v5741
        %7086 = vmatmul.mubr.f32.gmra.mrb[0].mxu0 %v4999
        %v7087 = vpop.f32.mrb[0].mxu0
        %v7088 = vadd.f32 0.0, %v7087
        %v7089 = vpop.f32.mrb[0].mxu0
        %v7090 = vadd.f32 0.0, %v7089
        %7091 = vdwg.mxu0
        %7092 = vmatprep.subr.mxu0 %v5040
        %7093 = vmatpush1.msra.mxu0 %v5039
        %7094 = vmatprep.subr.mxu0 %v5081
        %7095 = vmatpush1.msra.mxu0 %v5080
        %7096 = vmatprep.subr.mxu0 %v5122
        %7097 = vmatpush1.msra.mxu0 %v5121
        %7098 = vmatprep.subr.mxu0 %v5163
        %7099 = vmatpush1.msra.mxu0 %v5162
        %7100 = vmatprep.subr.mxu0 %v5204
        %7101 = vmatpush1.msra.mxu0 %v5203
        %7102 = vmatprep.subr.mxu0 %v5245
        %7103 = vmatpush1.msra.mxu0 %v5244
        %7104 = vmatprep.subr.mxu0 %v5286
        %7105 = vmatpush1.msra.mxu0 %v5285
        %7106 = vmatprep.subr.mxu0 %v5327
        %7107 = vmatpush1.msra.mxu0 %v5326
        %7108 = vmatprep.subr.mxu0 %v5368
        %7109 = vmatpush1.msra.mxu0 %v5367
        %7110 = vmatprep.subr.mxu0 %v5409
        %7111 = vmatpush1.msra.mxu0 %v5408
        %7112 = vmatprep.subr.mxu0 %v5450
        %7113 = vmatpush1.msra.mxu0 %v5449
        %7114 = vmatprep.subr.mxu0 %v5491
        %7115 = vmatpush1.msra.mxu0 %v5490
        %7116 = vmatprep.subr.mxu0 %v5532
        %7117 = vmatpush1.msra.mxu0 %v5531
        %7118 = vmatprep.subr.mxu0 %v5573
        %7119 = vmatpush1.msra.mxu0 %v5572
        %7120 = vmatprep.subr.mxu0 %v5614
        %7121 = vmatpush1.msra.mxu0 %v5613
        %7122 = vmatprep.subr.mxu0 %v5655
        %7123 = vmatpush1.msra.mxu0 %v5654
        %7124 = vmatprep.subr.mxu0 %v5696
        %7125 = vmatpush1.msra.mxu0 %v5695
        %7126 = vmatprep.subr.mxu0 %v5737
        %7127 = vmatpush1.msra.mxu0 %v5736
        %7128 = vmatprep.subr.mxu0 0.0
        %7129 = vmatpush1.msra.mxu0 0.0
        %7130 = vmatprep.subr.mxu0 0.0
        %7131 = vmatpush1.msra.mxu0 0.0
        %7132 = vmatprep.subr.mxu0 0.0
        %7133 = vmatpush1.msra.mxu0 0.0
        %7134 = vmatprep.subr.mxu0 0.0
        %7135 = vmatpush1.msra.mxu0 0.0
        %7136 = vmatprep.subr.mxu0 0.0
        %7137 = vmatpush1.msra.mxu0 0.0
        %7138 = vmatprep.subr.mxu0 0.0
        %7139 = vmatpush1.msra.mxu0 0.0
        %7140 = vmatprep.subr.mxu0 0.0
        %7141 = vmatpush1.msra.mxu0 0.0
        %7142 = vmatprep.subr.mxu0 0.0
        %7143 = vmatpush1.msra.mxu0 0.0
        %7144 = vmatprep.subr.mxu0 0.0
        %7145 = vmatpush1.msra.mxu0 0.0
        %7146 = vmatprep.subr.mxu0 0.0
        %7147 = vmatpush1.msra.mxu0 0.0
        %7148 = vmatprep.subr.mxu0 0.0
        %7149 = vmatpush1.msra.mxu0 0.0
        %7150 = vmatprep.subr.mxu0 0.0
        %7151 = vmatpush1.msra.mxu0 0.0
        %7152 = vmatprep.subr.mxu0 0.0
        %7153 = vmatpush1.msra.mxu0 0.0
        %7154 = vmatprep.subr.mxu0 0.0
        %7155 = vmatpush1.msra.mxu0 0.0
        %7156 = vmatprep.mubr.f32.mxu0 %v5741
        %7157 = vmatmul.mubr.f32.gmra.mrb[0].mxu0 %v4999
        %v7158 = vpop.f32.mrb[0].mxu0
        %v7159 = vadd.f32 0.0, %v7158
        %v7160 = vpop.f32.mrb[0].mxu0
        %v7161 = vadd.f32 0.0, %v7160
        %7162 = vdwg.mxu0
        %7163 = vmatprep.subr.mxu0 0.0
        %7164 = vmatpush1.msra.mxu0 %v5041
        %7165 = vmatprep.subr.mxu0 0.0
        %7166 = vmatpush1.msra.mxu0 %v5082
        %7167 = vmatprep.subr.mxu0 0.0
        %7168 = vmatpush1.msra.mxu0 %v5123
        %7169 = vmatprep.subr.mxu0 0.0
        %7170 = vmatpush1.msra.mxu0 %v5164
        %7171 = vmatprep.subr.mxu0 0.0
        %7172 = vmatpush1.msra.mxu0 %v5205
        %7173 = vmatprep.subr.mxu0 0.0
        %7174 = vmatpush1.msra.mxu0 %v5246
        %7175 = vmatprep.subr.mxu0 0.0
        %7176 = vmatpush1.msra.mxu0 %v5287
        %7177 = vmatprep.subr.mxu0 0.0
        %7178 = vmatpush1.msra.mxu0 %v5328
        %7179 = vmatprep.subr.mxu0 0.0
        %7180 = vmatpush1.msra.mxu0 %v5369
        %7181 = vmatprep.subr.mxu0 0.0
        %7182 = vmatpush1.msra.mxu0 %v5410
        %7183 = vmatprep.subr.mxu0 0.0
        %7184 = vmatpush1.msra.mxu0 %v5451
        %7185 = vmatprep.subr.mxu0 0.0
        %7186 = vmatpush1.msra.mxu0 %v5492
        %7187 = vmatprep.subr.mxu0 0.0
        %7188 = vmatpush1.msra.mxu0 %v5533
        %7189 = vmatprep.subr.mxu0 0.0
        %7190 = vmatpush1.msra.mxu0 %v5574
        %7191 = vmatprep.subr.mxu0 0.0
        %7192 = vmatpush1.msra.mxu0 %v5615
        %7193 = vmatprep.subr.mxu0 0.0
        %7194 = vmatpush1.msra.mxu0 %v5656
        %7195 = vmatprep.subr.mxu0 0.0
        %7196 = vmatpush1.msra.mxu0 %v5697
        %7197 = vmatprep.subr.mxu0 0.0
        %7198 = vmatpush1.msra.mxu0 %v5738
        %7199 = vmatprep.subr.mxu0 0.0
        %7200 = vmatpush1.msra.mxu0 0.0
        %7201 = vmatprep.subr.mxu0 0.0
        %7202 = vmatpush1.msra.mxu0 0.0
        %7203 = vmatprep.subr.mxu0 0.0
        %7204 = vmatpush1.msra.mxu0 0.0
        %7205 = vmatprep.subr.mxu0 0.0
        %7206 = vmatpush1.msra.mxu0 0.0
        %7207 = vmatprep.subr.mxu0 0.0
        %7208 = vmatpush1.msra.mxu0 0.0
        %7209 = vmatprep.subr.mxu0 0.0
        %7210 = vmatpush1.msra.mxu0 0.0
        %7211 = vmatprep.subr.mxu0 0.0
        %7212 = vmatpush1.msra.mxu0 0.0
        %7213 = vmatprep.subr.mxu0 0.0
        %7214 = vmatpush1.msra.mxu0 0.0
        %7215 = vmatprep.subr.mxu0 0.0
        %7216 = vmatpush1.msra.mxu0 0.0
        %7217 = vmatprep.subr.mxu0 0.0
        %7218 = vmatpush1.msra.mxu0 0.0
        %7219 = vmatprep.subr.mxu0 0.0
        %7220 = vmatpush1.msra.mxu0 0.0
        %7221 = vmatprep.subr.mxu0 0.0
        %7222 = vmatpush1.msra.mxu0 0.0
        %7223 = vmatprep.subr.mxu0 0.0
        %7224 = vmatpush1.msra.mxu0 0.0
        %7225 = vmatprep.subr.mxu0 0.0
        %7226 = vmatpush1.msra.mxu0 0.0
        %7227 = vmatprep.mubr.f32.mxu0 %v5741
        %7228 = vmatmul.mubr.f32.gmra.mrb[0].mxu0 %v4999
        %v7229 = vpop.f32.mrb[0].mxu0
        %v7230 = vadd.f32 0.0, %v7229
        %v7231 = vpop.f32.mrb[0].mxu0
        %7232 = vdwg.mxu0
        %7233 = vst [vmem:[%s239] sm:$0xff] %v5810
        %7234 = vst [vmem:[%s239 + $0x8] sm:$0xff] %v5812
        %7235 = vst [vmem:[%s239 + $0x10] sm:$0xff] %v5881
        %7236 = vst [vmem:[%s239 + $0x18] sm:$0xff] %v5883
        %7237 = vst [vmem:[%s239 + $0x20] sm:$0xff] %v5952
        %7238 = vst [vmem:[%s239 + $0x28] sm:$0xff] %v5954
        %7239 = vst [vmem:[%s239 + $0x30] sm:$0xff] %v6023
        %7240 = vst [vmem:[%s239 + $0x38] sm:$0xff] %v6025
        %7241 = vst [vmem:[%s239 + $0x40] sm:$0xff] %v6094
        %7242 = vst [vmem:[%s239 + $0x48] sm:$0xff] %v6096
        %7243 = vst [vmem:[%s239 + $0x50] sm:$0xff] %v6165
        %7244 = vst [vmem:[%s239 + $0x58] sm:$0xff] %v6167
        %7245 = vst [vmem:[%s239 + $0x60] sm:$0xff] %v6236
        %7246 = vst [vmem:[%s239 + $0x68] sm:$0xff] %v6238
        %7247 = vst [vmem:[%s239 + $0x70] sm:$0xff] %v6307
        %7248 = vst [vmem:[%s239 + $0x78] sm:$0xff] %v6309
        %7249 = vst [vmem:[%s239 + $0x80] sm:$0xff] %v6378
        %7250 = vst [vmem:[%s239 + $0x88] sm:$0xff] %v6380
        %7251 = vst [vmem:[%s239 + $0x90] sm:$0xff] %v6449
        %7252 = vst [vmem:[%s239 + $0x98] sm:$0xff] %v6451
        %7253 = vst [vmem:[%s239 + $0xa0] sm:$0xff] %v6520
        %7254 = vst [vmem:[%s239 + $0xa8] sm:$0xff] %v6522
        %7255 = vst [vmem:[%s239 + $0xb0] sm:$0xff] %v6591
        %7256 = vst [vmem:[%s239 + $0xb8] sm:$0xff] %v6593
        %7257 = vst [vmem:[%s239 + $0xc0] sm:$0xff] %v6662
        %7258 = vst [vmem:[%s239 + $0xc8] sm:$0xff] %v6664
        %7259 = vst [vmem:[%s239 + $0xd0] sm:$0xff] %v6733
        %7260 = vst [vmem:[%s239 + $0xd8] sm:$0xff] %v6735
        %7261 = vst [vmem:[%s239 + $0xe0] sm:$0xff] %v6804
        %7262 = vst [vmem:[%s239 + $0xe8] sm:$0xff] %v6806
        %7263 = vst [vmem:[%s239 + $0xf0] sm:$0xff] %v6875
        %7264 = vst [vmem:[%s239 + $0xf8] sm:$0xff] %v6877
        %7265 = vst [vmem:[%s239 + $0x100] sm:$0xff] %v6946
        %7266 = vst [vmem:[%s239 + $0x108] sm:$0xff] %v6948
        %7267 = vst [vmem:[%s239 + $0x110] sm:$0xff] %v7017
        %7268 = vst [vmem:[%s239 + $0x118] sm:$0xff] %v7019
        %7269 = vst [vmem:[%s239 + $0x120] sm:$0xff] %v7088
        %7270 = vst [vmem:[%s239 + $0x128] sm:$0xff] %v7090
        %7271 = vst [vmem:[%s239 + $0x130] sm:$0xff] %v7159
        %7272 = vst [vmem:[%s239 + $0x138] sm:$0xff] %v7161
        %7273 = vst.msk [vmem:[%s239 + $0x140] sm:$0xff] %vm372, %v7230
        %v7274 = vld [vmem:[#allocation6] sm:$0xff]
        %v7275 = vld [vmem:[#allocation6 + $0x8] sm:$0xff]
        %v7276 = vld [vmem:[#allocation6 + $0x10] sm:$0xff]
        %v7277 = vld [vmem:[#allocation6 + $0x18] sm:$0xff]
        %v7278 = vld [vmem:[#allocation6 + $0x20] sm:$0xff]
        %v7279 = vld [vmem:[#allocation6 + $0x28] sm:$0x1]
        %v7286 = vlaneseq
        %v7287 = vshrl.u32 %v7286, 7
        %v7288 = vsub.s32 0, %v7287
        %v7289 = vrot.slane %v7274, %v7288
        %v7290 = vlaneseq
        %v7291 = vshrl.u32 %v7290, 7
        %v7292 = vsub.s32 1, %v7291
        %v7293 = vrot.slane %v7274, %v7292
        %v7294 = vlaneseq
        %v7295 = vshrl.u32 %v7294, 7
        %v7296 = vsub.s32 2, %v7295
        %v7297 = vrot.slane %v7274, %v7296
        %v7298 = vlaneseq
        %v7299 = vshrl.u32 %v7298, 7
        %v7300 = vsub.s32 3, %v7299
        %v7301 = vrot.slane %v7274, %v7300
        %v7302 = vlaneseq
        %v7303 = vshrl.u32 %v7302, 7
        %v7304 = vsub.s32 4, %v7303
        %v7305 = vrot.slane %v7274, %v7304
        %v7306 = vlaneseq
        %v7307 = vshrl.u32 %v7306, 7
        %v7308 = vsub.s32 5, %v7307
        %v7309 = vrot.slane %v7274, %v7308
        %v7310 = vlaneseq
        %v7311 = vshrl.u32 %v7310, 7
        %v7312 = vsub.s32 6, %v7311
        %v7313 = vrot.slane %v7274, %v7312
        %v7314 = vlaneseq
        %v7315 = vshrl.u32 %v7314, 7
        %v7316 = vsub.s32 7, %v7315
        %v7317 = vrot.slane %v7274, %v7316
        %v7318 = vlaneseq
        %v7319 = vshrl.u32 %v7318, 7
        %v7320 = vsub.s32 0, %v7319
        %v7321 = vrot.slane %v7275, %v7320
        %v7322 = vlaneseq
        %v7323 = vshrl.u32 %v7322, 7
        %v7324 = vsub.s32 1, %v7323
        %v7325 = vrot.slane %v7275, %v7324
        %v7326 = vlaneseq
        %v7327 = vshrl.u32 %v7326, 7
        %v7328 = vsub.s32 2, %v7327
        %v7329 = vrot.slane %v7275, %v7328
        %v7330 = vlaneseq
        %v7331 = vshrl.u32 %v7330, 7
        %v7332 = vsub.s32 3, %v7331
        %v7333 = vrot.slane %v7275, %v7332
        %v7334 = vlaneseq
        %v7335 = vshrl.u32 %v7334, 7
        %v7336 = vsub.s32 4, %v7335
        %v7337 = vrot.slane %v7275, %v7336
        %v7338 = vlaneseq
        %v7339 = vshrl.u32 %v7338, 7
        %v7340 = vsub.s32 5, %v7339
        %v7341 = vrot.slane %v7275, %v7340
        %v7342 = vlaneseq
        %v7343 = vshrl.u32 %v7342, 7
        %v7344 = vsub.s32 6, %v7343
        %v7345 = vrot.slane %v7275, %v7344
        %v7346 = vlaneseq
        %v7347 = vshrl.u32 %v7346, 7
        %v7348 = vsub.s32 7, %v7347
        %v7349 = vrot.slane %v7275, %v7348
        %v7350 = vlaneseq
        %v7351 = vshrl.u32 %v7350, 7
        %v7352 = vsub.s32 0, %v7351
        %v7353 = vrot.slane %v7276, %v7352
        %v7354 = vlaneseq
        %v7355 = vshrl.u32 %v7354, 7
        %v7356 = vsub.s32 1, %v7355
        %v7357 = vrot.slane %v7276, %v7356
        %v7358 = vlaneseq
        %v7359 = vshrl.u32 %v7358, 7
        %v7360 = vsub.s32 2, %v7359
        %v7361 = vrot.slane %v7276, %v7360
        %v7362 = vlaneseq
        %v7363 = vshrl.u32 %v7362, 7
        %v7364 = vsub.s32 3, %v7363
        %v7365 = vrot.slane %v7276, %v7364
        %v7366 = vlaneseq
        %v7367 = vshrl.u32 %v7366, 7
        %v7368 = vsub.s32 4, %v7367
        %v7369 = vrot.slane %v7276, %v7368
        %v7370 = vlaneseq
        %v7371 = vshrl.u32 %v7370, 7
        %v7372 = vsub.s32 5, %v7371
        %v7373 = vrot.slane %v7276, %v7372
        %v7374 = vlaneseq
        %v7375 = vshrl.u32 %v7374, 7
        %v7376 = vsub.s32 6, %v7375
        %v7377 = vrot.slane %v7276, %v7376
        %v7378 = vlaneseq
        %v7379 = vshrl.u32 %v7378, 7
        %v7380 = vsub.s32 7, %v7379
        %v7381 = vrot.slane %v7276, %v7380
        %v7382 = vlaneseq
        %v7383 = vshrl.u32 %v7382, 7
        %v7384 = vsub.s32 0, %v7383
        %v7385 = vrot.slane %v7277, %v7384
        %v7386 = vlaneseq
        %v7387 = vshrl.u32 %v7386, 7
        %v7388 = vsub.s32 1, %v7387
        %v7389 = vrot.slane %v7277, %v7388
        %v7390 = vlaneseq
        %v7391 = vshrl.u32 %v7390, 7
        %v7392 = vsub.s32 2, %v7391
        %v7393 = vrot.slane %v7277, %v7392
        %v7394 = vlaneseq
        %v7395 = vshrl.u32 %v7394, 7
        %v7396 = vsub.s32 3, %v7395
        %v7397 = vrot.slane %v7277, %v7396
        %v7398 = vlaneseq
        %v7399 = vshrl.u32 %v7398, 7
        %v7400 = vsub.s32 4, %v7399
        %v7401 = vrot.slane %v7277, %v7400
        %v7402 = vlaneseq
        %v7403 = vshrl.u32 %v7402, 7
        %v7404 = vsub.s32 5, %v7403
        %v7405 = vrot.slane %v7277, %v7404
        %v7406 = vlaneseq
        %v7407 = vshrl.u32 %v7406, 7
        %v7408 = vsub.s32 6, %v7407
        %v7409 = vrot.slane %v7277, %v7408
        %v7410 = vlaneseq
        %v7411 = vshrl.u32 %v7410, 7
        %v7412 = vsub.s32 7, %v7411
        %v7413 = vrot.slane %v7277, %v7412
        %v7414 = vlaneseq
        %v7415 = vshrl.u32 %v7414, 7
        %v7416 = vsub.s32 0, %v7415
        %v7417 = vrot.slane %v7278, %v7416
        %v7418 = vlaneseq
        %v7419 = vshrl.u32 %v7418, 7
        %v7420 = vsub.s32 1, %v7419
        %v7421 = vrot.slane %v7278, %v7420
        %v7422 = vlaneseq
        %v7423 = vshrl.u32 %v7422, 7
        %v7424 = vsub.s32 2, %v7423
        %v7425 = vrot.slane %v7278, %v7424
        %v7426 = vlaneseq
        %v7427 = vshrl.u32 %v7426, 7
        %v7428 = vsub.s32 3, %v7427
        %v7429 = vrot.slane %v7278, %v7428
        %v7430 = vlaneseq
        %v7431 = vshrl.u32 %v7430, 7
        %v7432 = vsub.s32 4, %v7431
        %v7433 = vrot.slane %v7278, %v7432
        %v7434 = vlaneseq
        %v7435 = vshrl.u32 %v7434, 7
        %v7436 = vsub.s32 5, %v7435
        %v7437 = vrot.slane %v7278, %v7436
        %v7438 = vlaneseq
        %v7439 = vshrl.u32 %v7438, 7
        %v7440 = vsub.s32 6, %v7439
        %v7441 = vrot.slane %v7278, %v7440
        %v7442 = vlaneseq
        %v7443 = vshrl.u32 %v7442, 7
        %v7444 = vsub.s32 7, %v7443
        %v7445 = vrot.slane %v7278, %v7444
        %v7446 = vlaneseq
        %v7447 = vshrl.u32 %v7446, 7
        %v7448 = vsub.s32 0, %v7447
        %v7449 = vrot.slane %v7279, %v7448
        %v7491 = vmul.f32 %v5810, %v7289
        %v7492 = vmul.f32 %v5812, %v7293
        %v7493 = vmul.f32 %v5881, %v7297
        %v7494 = vmul.f32 %v5883, %v7301
        %v7495 = vmul.f32 %v5952, %v7305
        %v7496 = vmul.f32 %v5954, %v7309
        %v7497 = vmul.f32 %v6023, %v7313
        %v7498 = vmul.f32 %v6025, %v7317
        %v7499 = vmul.f32 %v6094, %v7321
        %v7500 = vmul.f32 %v6096, %v7325
        %v7501 = vmul.f32 %v6165, %v7329
        %v7502 = vmul.f32 %v6167, %v7333
        %v7503 = vmul.f32 %v6236, %v7337
        %v7504 = vmul.f32 %v6238, %v7341
        %v7505 = vmul.f32 %v6307, %v7345
        %v7506 = vmul.f32 %v6309, %v7349
        %v7507 = vmul.f32 %v6378, %v7353
        %v7508 = vmul.f32 %v6380, %v7357
        %v7509 = vmul.f32 %v6449, %v7361
        %v7510 = vmul.f32 %v6451, %v7365
        %v7511 = vmul.f32 %v6520, %v7369
        %v7512 = vmul.f32 %v6522, %v7373
        %v7513 = vmul.f32 %v6591, %v7377
        %v7514 = vmul.f32 %v6593, %v7381
        %v7515 = vmul.f32 %v6662, %v7385
        %v7516 = vmul.f32 %v6664, %v7389
        %v7517 = vmul.f32 %v6733, %v7393
        %v7518 = vmul.f32 %v6735, %v7397
        %v7519 = vmul.f32 %v6804, %v7401
        %v7520 = vmul.f32 %v6806, %v7405
        %v7521 = vmul.f32 %v6875, %v7409
        %v7522 = vmul.f32 %v6877, %v7413
        %v7523 = vmul.f32 %v6946, %v7417
        %v7524 = vmul.f32 %v6948, %v7421
        %v7525 = vmul.f32 %v7017, %v7425
        %v7526 = vmul.f32 %v7019, %v7429
        %v7527 = vmul.f32 %v7088, %v7433
        %v7528 = vmul.f32 %v7090, %v7437
        %v7529 = vmul.f32 %v7159, %v7441
        %v7530 = vmul.f32 %v7161, %v7445
        %v7531 = vmul.f32 %v7230, %v7449
        %v7532 = vadd.f32 %v7491, %v7492
        %v7533 = vadd.f32 %v7532, %v7493
        %v7534 = vadd.f32 %v7533, %v7494
        %v7535 = vadd.f32 %v7534, %v7495
        %v7536 = vadd.f32 %v7535, %v7496
        %v7537 = vadd.f32 %v7536, %v7497
        %v7538 = vadd.f32 %v7537, %v7498
        %v7539 = vadd.f32 %v7538, %v7499
        %v7540 = vadd.f32 %v7539, %v7500
        %v7541 = vadd.f32 %v7540, %v7501
        %v7542 = vadd.f32 %v7541, %v7502
        %v7543 = vadd.f32 %v7542, %v7503
        %v7544 = vadd.f32 %v7543, %v7504
        %v7545 = vadd.f32 %v7544, %v7505
        %v7546 = vadd.f32 %v7545, %v7506
        %v7547 = vadd.f32 %v7546, %v7507
        %v7548 = vadd.f32 %v7547, %v7508
        %v7549 = vadd.f32 %v7548, %v7509
        %v7550 = vadd.f32 %v7549, %v7510
        %v7551 = vadd.f32 %v7550, %v7511
        %v7552 = vadd.f32 %v7551, %v7512
        %v7553 = vadd.f32 %v7552, %v7513
        %v7554 = vadd.f32 %v7553, %v7514
        %v7555 = vadd.f32 %v7554, %v7515
        %v7556 = vadd.f32 %v7555, %v7516
        %v7557 = vadd.f32 %v7556, %v7517
        %v7558 = vadd.f32 %v7557, %v7518
        %v7559 = vadd.f32 %v7558, %v7519
        %v7560 = vadd.f32 %v7559, %v7520
        %v7561 = vadd.f32 %v7560, %v7521
        %v7562 = vadd.f32 %v7561, %v7522
        %v7563 = vadd.f32 %v7562, %v7523
        %v7564 = vadd.f32 %v7563, %v7524
        %v7565 = vadd.f32 %v7564, %v7525
        %v7566 = vadd.f32 %v7565, %v7526
        %v7567 = vadd.f32 %v7566, %v7527
        %v7568 = vadd.f32 %v7567, %v7528
        %v7569 = vadd.f32 %v7568, %v7529
        %v7570 = vadd.f32 %v7569, %v7530
        %v7571 = vsel %vm372, %v7531, 0.0
        %v7572 = vadd.f32 %v7570, %v7571
        %7573 = vadd.xlane.f32.xlu0 %v7572
        %v7574 = vpop.xlane.xlu0 %7573
        %vm7575 = vcmask 7168
        %7576 = vst.msk [vmem:[%s249] sm:$0xff] %vm7575, %v7574
        %v7577 = vmul.f32 %v7491, %v7491
        %v7578 = vmul.f32 %v7492, %v7492
        %v7579 = vmul.f32 %v7493, %v7493
        %v7580 = vmul.f32 %v7494, %v7494
        %v7581 = vmul.f32 %v7495, %v7495
        %v7582 = vmul.f32 %v7496, %v7496
        %v7583 = vmul.f32 %v7497, %v7497
        %v7584 = vmul.f32 %v7498, %v7498
        %v7585 = vmul.f32 %v7499, %v7499
        %v7586 = vmul.f32 %v7500, %v7500
        %v7587 = vmul.f32 %v7501, %v7501
        %v7588 = vmul.f32 %v7502, %v7502
        %v7589 = vmul.f32 %v7503, %v7503
        %v7590 = vmul.f32 %v7504, %v7504
        %v7591 = vmul.f32 %v7505, %v7505
        %v7592 = vmul.f32 %v7506, %v7506
        %v7593 = vmul.f32 %v7507, %v7507
        %v7594 = vmul.f32 %v7508, %v7508
        %v7595 = vmul.f32 %v7509, %v7509
        %v7596 = vmul.f32 %v7510, %v7510
        %v7597 = vmul.f32 %v7511, %v7511
        %v7598 = vmul.f32 %v7512, %v7512
        %v7599 = vmul.f32 %v7513, %v7513
        %v7600 = vmul.f32 %v7514, %v7514
        %v7601 = vmul.f32 %v7515, %v7515
        %v7602 = vmul.f32 %v7516, %v7516
        %v7603 = vmul.f32 %v7517, %v7517
        %v7604 = vmul.f32 %v7518, %v7518
        %v7605 = vmul.f32 %v7519, %v7519
        %v7606 = vmul.f32 %v7520, %v7520
        %v7607 = vmul.f32 %v7521, %v7521
        %v7608 = vmul.f32 %v7522, %v7522
        %v7609 = vmul.f32 %v7523, %v7523
        %v7610 = vmul.f32 %v7524, %v7524
        %v7611 = vmul.f32 %v7525, %v7525
        %v7612 = vmul.f32 %v7526, %v7526
        %v7613 = vmul.f32 %v7527, %v7527
        %v7614 = vmul.f32 %v7528, %v7528
        %v7615 = vmul.f32 %v7529, %v7529
        %v7616 = vmul.f32 %v7530, %v7530
        %v7617 = vmul.f32 %v7531, %v7531
        %v7618 = vadd.f32 %v7577, %v7578
        %v7619 = vadd.f32 %v7618, %v7579
        %v7620 = vadd.f32 %v7619, %v7580
        %v7621 = vadd.f32 %v7620, %v7581
        %v7622 = vadd.f32 %v7621, %v7582
        %v7623 = vadd.f32 %v7622, %v7583
        %v7624 = vadd.f32 %v7623, %v7584
        %v7625 = vadd.f32 %v7624, %v7585
        %v7626 = vadd.f32 %v7625, %v7586
        %v7627 = vadd.f32 %v7626, %v7587
        %v7628 = vadd.f32 %v7627, %v7588
        %v7629 = vadd.f32 %v7628, %v7589
        %v7630 = vadd.f32 %v7629, %v7590
        %v7631 = vadd.f32 %v7630, %v7591
        %v7632 = vadd.f32 %v7631, %v7592
        %v7633 = vadd.f32 %v7632, %v7593
        %v7634 = vadd.f32 %v7633, %v7594
        %v7635 = vadd.f32 %v7634, %v7595
        %v7636 = vadd.f32 %v7635, %v7596
        %v7637 = vadd.f32 %v7636, %v7597
        %v7638 = vadd.f32 %v7637, %v7598
        %v7639 = vadd.f32 %v7638, %v7599
        %v7640 = vadd.f32 %v7639, %v7600
        %v7641 = vadd.f32 %v7640, %v7601
        %v7642 = vadd.f32 %v7641, %v7602
        %v7643 = vadd.f32 %v7642, %v7603
        %v7644 = vadd.f32 %v7643, %v7604
        %v7645 = vadd.f32 %v7644, %v7605
        %v7646 = vadd.f32 %v7645, %v7606
        %v7647 = vadd.f32 %v7646, %v7607
        %v7648 = vadd.f32 %v7647, %v7608
        %v7649 = vadd.f32 %v7648, %v7609
        %v7650 = vadd.f32 %v7649, %v7610
        %v7651 = vadd.f32 %v7650, %v7611
        %v7652 = vadd.f32 %v7651, %v7612
        %v7653 = vadd.f32 %v7652, %v7613
        %v7654 = vadd.f32 %v7653, %v7614
        %v7655 = vadd.f32 %v7654, %v7615
        %v7656 = vadd.f32 %v7655, %v7616
        %v7657 = vsel %vm372, %v7617, 0.0
        %v7658 = vadd.f32 %v7656, %v7657
        %7659 = vadd.xlane.f32.xlu0 %v7658
        %v7660 = vpop.xlane.xlu0 %7659
        %vm7661 = vcmask 15368
        %7662 = vst.msk [vmem:[%s249] sm:$0xff] %vm7661, %v7660
        %s7663 = sand.u32 %s97, 1
        %s7664 = scalar_lea.sflag [#allocation5], %s7663
        %s7665 = sand.u32 %s97, 1
        %s7666 = smul.addr %s7665, 328
        %s7667 = scalar_lea.vmem [#allocation9], %s7666
        %p7668 = scmp.lt.s32.totalorder %s21, 1
        %s7669 = scalar_select %p7668, %s21, 1
        %s7670 = smul.addr %s7669, 8
        %s7671 = scalar_lea.vmem %s4, %s7670
        // Predicated region
        $region45: #{tpu_custom_call.1} parent=31 // pred_check
          %p7672 = pneg %p107
        $region46: #{tpu_custom_call.1} parent=31 // pred_check_branch
          %7674 = sbr.rel (%p7672) target = $region48
        $region47: #{tpu_custom_call.1} parent=31 // pred_region
          %s7676 = ssub.s32 5248, 5248
          %7677 = vsyncadd %s7664, %s7676
          %s7678 = smul.addr %s21, 41
          %s7679 = smul.addr %s7678, 128
          %s7680 = scalar_lea.hbm %s3, %s7679
          %s7682 = sshll.u32 %s7667, 4
          %s7683 = int_to_ptr.vmem [resolvable:$true] %s7682
          %7685 = dma.vmem_to_hbm [thread:$0]  %s7683, 5248, %s7680, %s7664
        $region48: #{tpu_custom_call.1} parent=31 // pred_fallthru
          _
        // Predicated region
        $region49: #{tpu_custom_call.1} parent=31 // pred_check
          %p7686 = pneg %p133
        $region50: #{tpu_custom_call.1} parent=31 // pred_check_branch
          %7688 = sbr.rel (%p7686) target = $region52
        $region51: #{tpu_custom_call.1} parent=31 // pred_region
          _
        $region52: #{tpu_custom_call.1} parent=31 // pred_fallthru
          _
      $region32: #{tpu_custom_call.1} parent=5 // pred_fallthru
        _
      %p7689 = scmp.le.s32.totalorder 2, %s16
      // Predicated region
      $region53: #{tpu_custom_call.1} parent=5 // pred_check
        %p7690 = pneg %p7689
      $region54: #{tpu_custom_call.1} parent=5 // pred_check_branch
        %7692 = sbr.rel (%p7690) target = $region56
      $region55: #{tpu_custom_call.1} parent=5 // pred_region
        %s7693 = ssub.s32 %s16, 2
        // Predicated region
        $region57: #{tpu_custom_call.1} parent=55 // pred_check
          %p7694 = pneg %p113
        $region58: #{tpu_custom_call.1} parent=55 // pred_check_branch
          %7696 = sbr.rel (%p7694) target = $region60
        $region59: #{tpu_custom_call.1} parent=55 // pred_region
          %s7697 = sand.u32 %s98, 1
          %s7698 = scalar_lea.sflag [#allocation5], %s7697
          %s7699 = sand.u32 %s98, 1
          %s7700 = smul.addr %s7699, 328
          %s7701 = scalar_lea.vmem [#allocation9], %s7700
          %7702 = dma.done %s7698, 5248
        $region60: #{tpu_custom_call.1} parent=55 // pred_fallthru
          _
        // Predicated region
        $region61: #{tpu_custom_call.1} parent=55 // pred_check
          %p7703 = pneg %p139
        $region62: #{tpu_custom_call.1} parent=55 // pred_check_branch
          %7705 = sbr.rel (%p7703) target = $region64
        $region63: #{tpu_custom_call.1} parent=55 // pred_region
          %p7706 = scmp.lt.s32.totalorder %s22, 1
          %s7707 = scalar_select %p7706, %s22, 1
          %s7708 = smul.addr %s7707, 8
          %s7709 = scalar_lea.vmem %s4, %s7708
        $region64: #{tpu_custom_call.1} parent=55 // pred_fallthru
          _
      $region56: #{tpu_custom_call.1} parent=5 // pred_fallthru
        _
    $region6: #{tpu_custom_call.1} parent=1 // loop_footer
      %s20 = sadd.s32 1, %s16
    $region7: #{tpu_custom_call.1} parent=1 // loop_footer_branch
      %15 = sbr.rel target = $region3
    $region8: #{tpu_custom_call.1} parent=1 // loop_exit
      _
    %7710 = vsyncpa [#allocation4], 1
    %s7711 = scalar_lea.sflag [#allocation4], 1
    %7712 = vsyncpa %s7711, 1
    %7713 = vsyncpa [#allocation7], 1
    %7714 = vsyncpa [#allocation5], 1
    %s7715 = scalar_lea.sflag [#allocation5], 1
    %7716 = vsyncpa %s7715, 1

</llo_original>
